<compile_context>
chip_gen: v7x
topology: tpu7x:2x2x1
jax: 0.10.0
libtpu: 0.0.40
codegen_flags: <defaults>
</compile_context>

<pallas_src>
import functools
import numpy as np
import jax
import jax.numpy as jnp
from jax import lax
from jax.experimental import pallas as pl
from jax.experimental.pallas import tpu as pltpu

D_MODEL = 32
N_HEAD = 4
DIM_FF = 64
NUM_LAYERS = 2
EPS = 1e-5  # PyTorch LayerNorm default eps

# ---- static row layout of the packed weight slabs --------------------------
_R_ATT = D_MODEL + 8                                   # 40 rows: W (32) + bias row + pad
_OFF_SA_WO = 0                                          # self-attn out-proj W
_OFF_SA_BO = D_MODEL                                    # 32: self-attn out-proj bias
_OFF_CA_WO = _R_ATT                                     # 40: cross-attn out-proj W
_OFF_CA_BO = _R_ATT + D_MODEL                           # 72: cross-attn out-proj bias
_OFF_W2 = 2 * _R_ATT                                    # 80: FFN linear2 W (F x D)
_OFF_B2 = 2 * _R_ATT + DIM_FF                           # 144: FFN linear2 bias
_OFF_LN = 2 * _R_ATT + DIM_FF + 8                       # 152: ln1_g, ln1_b, ... ln3_b
_R32_LAYER = 2 * _R_ATT + (DIM_FF + 8) + 8              # 160 rows per layer in width-32 slab


# ----------------------------- fused kernel ---------------------------------

def _decoder_kernel(mem_ref, pos_ref, w96_ref, w32_ref, w64_ref, out_ref, *,
                    batch, seq, nhead, num_layers):
    D = mem_ref.shape[-1]
    BS = batch * seq
    dh = D // nhead
    F = w64_ref.shape[-1]

    mem = mem_ref[...]                       # (B*S, D)
    pos = pos_ref[...]                       # (B*S, D)
    mem_pos = mem + pos                      # reused by cross-attention every layer

    def mm(a, b):
        # plain 2-D matmul with f32 accumulation on the MXU
        return jnp.dot(a, b, preferred_element_type=jnp.float32)

    def layer_norm(x, g, b):
        mu = jnp.mean(x, axis=-1, keepdims=True)
        var = jnp.mean(x * x, axis=-1, keepdims=True) - mu * mu   # single-pass variance
        return (x - mu) * lax.rsqrt(var + EPS) * g + b

    def attend(q_flat, k_flat, v_flat, wo, bo):
        # q/k/v: (B*S, D) already projected (+bias); Q is pre-scaled via packed
        # weights.  wo: (D, D) pre-transposed, bo: (1, D).
        q = q_flat.reshape(batch, seq, D)
        k = k_flat.reshape(batch, seq, D)
        v = v_flat.reshape(batch, seq, D)
        # Per-head QK^T, then a single batched softmax across heads:
        scores = [
            jnp.einsum('bqd,bkd->bqk',
                       q[:, :, h * dh:(h + 1) * dh],
                       k[:, :, h * dh:(h + 1) * dh],
                       preferred_element_type=jnp.float32)
            for h in range(nhead)]
        s = jnp.concatenate(scores, axis=1)                       # (B, H*S, S)
        s = s - jnp.max(s, axis=-1, keepdims=True)
        p = jnp.exp(s)
        p = p * pl.reciprocal(jnp.sum(p, axis=-1, keepdims=True), approx=True)
        # Accumulate each head through its K=8 slice of the out-projection
        # (avoids a cross-lane concat of the head contexts).
        out = bo                                                  # (1, D) broadcast
        for h in range(nhead):
            ph = p[:, h * seq:(h + 1) * seq, :]                   # (B, S, S)
            ctx = jnp.einsum('bqk,bkd->bqd', ph,
                             v[:, :, h * dh:(h + 1) * dh],
                             preferred_element_type=jnp.float32)  # (B, S, dh)
            out = out + mm(ctx.reshape(BS, dh), wo[h * dh:(h + 1) * dh, :])
        return out                                                # (B*S, D)

    x = mem
    for l in range(num_layers):                                   # static unroll
        base = l * _R32_LAYER
        ln = w32_ref[base + _OFF_LN: base + _OFF_LN + 8, :]       # (8, D) ln params

        # ---- self-attention: q = k = x + pos, v = x ------------------------
        blk = w96_ref[2 * l + 0]                                  # (D+8, 3D)
        w_in, b_in = blk[:D, :], blk[D:D + 1, :]
        qk = mm(x + pos, w_in[:, :2 * D]) + b_in[:, :2 * D]       # fused Q|K matmul
        v = mm(x, w_in[:, 2 * D:]) + b_in[:, 2 * D:]
        wo = w32_ref[base + _OFF_SA_WO: base + _OFF_SA_WO + D, :]
        bo = w32_ref[base + _OFF_SA_BO: base + _OFF_SA_BO + 1, :]
        sa = attend(qk[:, :D], qk[:, D:], v, wo, bo)
        x = layer_norm(x + sa, ln[0:1], ln[1:2])

        # ---- cross-attention: q = x + pos, k = mem + pos, v = mem ----------
        blk = w96_ref[2 * l + 1]
        w_in, b_in = blk[:D, :], blk[D:D + 1, :]
        q = mm(x + pos, w_in[:, :D]) + b_in[:, :D]
        k = mm(mem_pos, w_in[:, D:2 * D]) + b_in[:, D:2 * D]
        v = mm(mem, w_in[:, 2 * D:]) + b_in[:, 2 * D:]
        wo = w32_ref[base + _OFF_CA_WO: base + _OFF_CA_WO + D, :]
        bo = w32_ref[base + _OFF_CA_BO: base + _OFF_CA_BO + 1, :]
        ca = attend(q, k, v, wo, bo)
        x = layer_norm(x + ca, ln[2:3], ln[3:4])

        # ---- feed-forward ----------------------------------------------------
        fblk = w64_ref[l]                                         # (D+8, F)
        w1, b1 = fblk[:D, :], fblk[D:D + 1, :]
        w2 = w32_ref[base + _OFF_W2: base + _OFF_W2 + F, :]
        b2 = w32_ref[base + _OFF_B2: base + _OFF_B2 + 1, :]
        h1 = jnp.maximum(mm(x, w1) + b1, 0.0)
        ff = mm(h1, w2) + b2
        x = layer_norm(x + ff, ln[4:5], ln[5:6])

    fin = w32_ref[num_layers * _R32_LAYER: num_layers * _R32_LAYER + 2, :]
    out_ref[...] = layer_norm(x, fin[0:1], fin[1:2])


# ----------------------------- wrapper ---------------------------------------

def transformer_decoder0(memory, pos, packed_params):
    """TransformerDecoder0.forward (return_intermediate=False, eval mode)."""
    B, S, D = memory.shape
    args = [memory.reshape(B * S, D), pos.reshape(B * S, D)] + list(packed_params)
    vmem = pl.BlockSpec(memory_space=pltpu.MemorySpace.VMEM)
    out = pl.pallas_call(
        functools.partial(_decoder_kernel, batch=B, seq=S,
                          nhead=N_HEAD, num_layers=NUM_LAYERS),
        in_specs=[vmem] * len(args),
        out_specs=vmem,
        out_shape=jax.ShapeDtypeStruct((B * S, D), jnp.float32),
    )(*args)
    return out.reshape(B, S, D)


# -------------------- host-side one-time weight preparation ------------------

def pack_params(layer_params, norm_params):
    """Pre-transpose to x@W layout, fuse QKV, fold the 1/sqrt(dh) query scale
    into the packed Q weight/bias, and pack everything into three contiguous
    slabs sliced with static 8-aligned row offsets in the kernel."""
    D, F, L, H = D_MODEL, DIM_FF, NUM_LAYERS, N_HEAD
    dh = D // H
    scale = dh ** -0.5

    def in_block(w, b):
        # w: (3, D, D) PyTorch (out, in) layout; b: (3, D).
        wt = jnp.concatenate([w[0].T * scale, w[1].T, w[2].T], axis=1)   # (D, 3D)
        bt = jnp.concatenate([b[0] * scale, b[1], b[2]])                 # (3D,)
        blk = jnp.zeros((_R_ATT, 3 * D), jnp.float32)
        return blk.at[:D].set(wt).at[D].set(bt)                          # (D+8, 3D)

    # slab96: (2L, D+8, 3D) -> [2l] = self-attn in-proj, [2l+1] = cross-attn in-proj
    w96 = jnp.stack(
        [blk for p in layer_params
         for blk in (in_block(p[0], p[1]), in_block(p[4], p[5]))], axis=0)

    # slab32: (L*160 + 8, D) -> out-proj W/b, FFN2 W/b, LayerNorm rows, final LN
    w32 = jnp.zeros((L * _R32_LAYER + 8, D), jnp.float32)
    for l, p in enumerate(layer_params):
        (sa_w, sa_b, sa_wo, sa_bo, ca_w, ca_b, ca_wo, ca_bo,
         ln_g, ln_b, w1, b1, w2, b2) = p
        base = l * _R32_LAYER
        w32 = w32.at[base + _OFF_SA_WO: base + _OFF_SA_WO + D].set(sa_wo.T)
        w32 = w32.at[base + _OFF_SA_BO].set(sa_bo.reshape(D))
        w32 = w32.at[base + _OFF_CA_WO: base + _OFF_CA_WO + D].set(ca_wo.T)
        w32 = w32.at[base + _OFF_CA_BO].set(ca_bo.reshape(D))
        w32 = w32.at[base + _OFF_W2: base + _OFF_W2 + F].set(w2.T)
        w32 = w32.at[base + _OFF_B2].set(b2.reshape(D))
        for i in range(3):
            w32 = w32.at[base + _OFF_LN + 2 * i].set(ln_g[i])
            w32 = w32.at[base + _OFF_LN + 2 * i + 1].set(ln_b[i])
    w32 = w32.at[L * _R32_LAYER].set(norm_params[0].reshape(D))
    w32 = w32.at[L * _R32_LAYER + 1].set(norm_params[1].reshape(D))

    # slab64: (L, D+8, F) -> FFN1 W + bias row
    w64 = jnp.stack(
        [jnp.zeros((_R_ATT, F), jnp.float32).at[:D].set(p[10].T).at[D].set(p[11].reshape(F))
         for p in layer_params], axis=0)

    return [w96, w32, w64]


# ---------------- parameter init (deterministic, synthetic) ------------------

def init_params(key):
    D, F = D_MODEL, DIM_FF
    layer_params = []
    lkeys = jax.random.split(key, NUM_LAYERS)
    for lk in lkeys:
        ks = jax.random.split(lk, 10)
        nrm = lambda k, shape, s: jax.random.normal(k, shape, jnp.float32) * s
        p = (
            nrm(ks[0], (3, D, D), D ** -0.5),          # sa in-proj W (q,k,v)
            nrm(ks[1], (3, D), 0.01),                  # sa in-proj b
            nrm(ks[2], (D, D), D ** -0.5),             # sa out-proj W
            nrm(ks[3], (1, D), 0.01),                  # sa out-proj b
            nrm(ks[4], (3, D, D), D ** -0.5),          # ca in-proj W
            nrm(ks[5], (3, D), 0.01),                  # ca in-proj b
            nrm(ks[6], (D, D), D ** -0.5),             # ca out-proj W
            nrm(ks[7], (1, D), 0.01),                  # ca out-proj b
            jnp.ones((3, D), jnp.float32),             # LN1/2/3 gamma
            jnp.zeros((3, D), jnp.float32),            # LN1/2/3 beta
            nrm(ks[8], (F, D), D ** -0.5),             # linear1 W
            jnp.zeros((1, F), jnp.float32),            # linear1 b
            nrm(ks[9], (D, F), F ** -0.5),             # linear2 W
            jnp.zeros((1, D), jnp.float32),            # linear2 b
        )
        layer_params.append(p)
    norm_params = (jnp.ones((1, D), jnp.float32), jnp.zeros((1, D), jnp.float32))
    return layer_params, norm_params


# ---------------- plain-JAX reference (for correctness check) ----------------

def _mha_ref(q_in, k_in, v_in, w, b, wo, bo, nhead):
    B, S, D = q_in.shape
    dh = D // nhead
    q = jnp.einsum('bsd,ed->bse', q_in, w[0]) + b[0]
    k = jnp.einsum('bsd,ed->bse', k_in, w[1]) + b[1]
    v = jnp.einsum('bsd,ed->bse', v_in, w[2]) + b[2]
    qh = q.reshape(B, S, nhead, dh).transpose(0, 2, 1, 3) * (dh ** -0.5)
    kh = k.reshape(B, S, nhead, dh).transpose(0, 2, 1, 3)
    vh = v.reshape(B, S, nhead, dh).transpose(0, 2, 1, 3)
    p = jax.nn.softmax(jnp.einsum('bhqd,bhkd->bhqk', qh, kh), axis=-1)
    o = jnp.einsum('bhqk,bhkd->bhqd', p, vh).transpose(0, 2, 1, 3).reshape(B, S, D)
    return jnp.einsum('bsd,ed->bse', o, wo) + bo


def decoder_ref(memory, pos, layer_params, norm_params):
    def ln(x, g, b):
        mu = x.mean(-1, keepdims=True)
        var = ((x - mu) ** 2).mean(-1, keepdims=True)
        return (x - mu) / jnp.sqrt(var + EPS) * g + b

    out = memory
    for p in layer_params:
        (sa_w, sa_b, sa_wo, sa_bo, ca_w, ca_b, ca_wo, ca_bo,
         ln_g, ln_b, w1, b1, w2, b2) = p
        qk = out + pos
        sa = _mha_ref(qk, qk, out, sa_w, sa_b, sa_wo, sa_bo, N_HEAD)
        x = ln(out + sa, ln_g[0], ln_b[0])
        ca = _mha_ref(x + pos, memory + pos, memory, ca_w, ca_b, ca_wo, ca_bo, N_HEAD)
        x = ln(x + ca, ln_g[1], ln_b[1])
        ff = jnp.einsum('bsf,df->bsd',
                        jnp.maximum(jnp.einsum('bsd,fd->bsf', x, w1) + b1, 0.0), w2) + b2
        out = ln(x + ff, ln_g[2], ln_b[2])
    g, b = norm_params
    return ln(out, g[0], b[0])


if __name__ == "__main__":
    key = jax.random.PRNGKey(0)
    k_mem, k_pos, k_par = jax.random.split(key, 3)

    B, S = 2, 16
    # layout: (B, S, D); equivalent to PyTorch's (S, B, D) transposed.
    memory = jax.random.normal(k_mem, (B, S, D_MODEL), jnp.float32)
    pos = jax.random.normal(k_pos, (B, S, D_MODEL), jnp.float32)

    layer_params, norm_params = init_params(k_par)
    packed = pack_params(layer_params, norm_params)

    out = jax.block_until_ready(transformer_decoder0(memory, pos, packed))

    ref = jax.block_until_ready(decoder_ref(memory, pos, layer_params, norm_params))
    np.testing.assert_allclose(np.asarray(out), np.asarray(ref), rtol=2e-2, atol=2e-2)

    print("KERNEL_OK")
</pallas_src>

<mosaic_0001>
module attributes {stable_mosaic.version = 11 : i64} {
  func.func @_decoder_kernel(%arg0: memref<32x32xf32, #tpu.memory_space<vmem>>, %arg1: memref<32x32xf32, #tpu.memory_space<vmem>>, %arg2: memref<4x40x96xf32, #tpu.memory_space<vmem>>, %arg3: memref<328x32xf32, #tpu.memory_space<vmem>>, %arg4: memref<2x40x64xf32, #tpu.memory_space<vmem>>, %arg5: memref<32x32xf32, #tpu.memory_space<vmem>>) attributes {dimension_semantics = [], scalar_prefetch = 0 : i64, scratch_operands = 0 : i64, tpu.core_type = #tpu.core_type<tc>} {
    %c0 = arith.constant 0 : index
    %c0_0 = arith.constant 0 : index
    %0 = vector.load %arg0[%c0, %c0_0] : memref<32x32xf32, #tpu.memory_space<vmem>>, vector<32x32xf32>
    %c0_1 = arith.constant 0 : index
    %c0_2 = arith.constant 0 : index
    %1 = vector.load %arg1[%c0_1, %c0_2] : memref<32x32xf32, #tpu.memory_space<vmem>>, vector<32x32xf32>
    %2 = arith.addf %0, %1 : vector<32x32xf32>
    %c152 = arith.constant 152 : index
    %c0_3 = arith.constant 0 : index
    %3 = vector.load %arg3[%c152, %c0_3] : memref<328x32xf32, #tpu.memory_space<vmem>>, vector<8x32xf32>
    %c0_4 = arith.constant 0 : index
    %c0_5 = arith.constant 0 : index
    %c0_6 = arith.constant 0 : index
    %4 = vector.load %arg2[%c0_4, %c0_5, %c0_6] : memref<4x40x96xf32, #tpu.memory_space<vmem>>, vector<1x40x96xf32>
    %5 = vector.shape_cast %4 : vector<1x40x96xf32> to vector<40x96xf32>
    %6 = vector.extract_strided_slice %5 {offsets = [0, 0], sizes = [32, 96], strides = [1, 1]} : vector<40x96xf32> to vector<32x96xf32>
    %7 = vector.extract_strided_slice %5 {offsets = [32, 0], sizes = [1, 96], strides = [1, 1]} : vector<40x96xf32> to vector<1x96xf32>
    %8 = arith.addf %0, %1 : vector<32x32xf32>
    %9 = vector.extract_strided_slice %6 {offsets = [0, 0], sizes = [32, 64], strides = [1, 1]} : vector<32x96xf32> to vector<32x64xf32>
    %cst = arith.constant dense<0.000000e+00> : vector<32x64xf32>
    %10 = tpu.matmul %8, %9, %cst {dimension_numbers = #tpu.dot_dimension_numbers<[1], [0], [0], [1], [0, 0, 1, 1], [], []>} : vector<32x32xf32>, vector<32x64xf32>, vector<32x64xf32> -> vector<32x64xf32>
    %11 = vector.extract_strided_slice %7 {offsets = [0, 0], sizes = [1, 64], strides = [1, 1]} : vector<1x96xf32> to vector<1x64xf32>
    %12 = vector.broadcast %11 : vector<1x64xf32> to vector<32x64xf32>
    %13 = arith.addf %10, %12 : vector<32x64xf32>
    %14 = vector.extract_strided_slice %6 {offsets = [0, 64], sizes = [32, 32], strides = [1, 1]} : vector<32x96xf32> to vector<32x32xf32>
    %cst_7 = arith.constant dense<0.000000e+00> : vector<32x32xf32>
    %15 = tpu.matmul %0, %14, %cst_7 {dimension_numbers = #tpu.dot_dimension_numbers<[1], [0], [0], [1], [0, 0, 1, 1], [], []>} : vector<32x32xf32>, vector<32x32xf32>, vector<32x32xf32> -> vector<32x32xf32>
    %16 = vector.extract_strided_slice %7 {offsets = [0, 64], sizes = [1, 32], strides = [1, 1]} : vector<1x96xf32> to vector<1x32xf32>
    %17 = vector.broadcast %16 : vector<1x32xf32> to vector<32x32xf32>
    %18 = arith.addf %15, %17 : vector<32x32xf32>
    %c0_8 = arith.constant 0 : index
    %c0_9 = arith.constant 0 : index
    %19 = vector.load %arg3[%c0_8, %c0_9] : memref<328x32xf32, #tpu.memory_space<vmem>>, vector<32x32xf32>
    %c32 = arith.constant 32 : index
    %c0_10 = arith.constant 0 : index
    %20 = vector.load %arg3[%c32, %c0_10] : memref<328x32xf32, #tpu.memory_space<vmem>>, vector<1x32xf32>
    %21 = vector.extract_strided_slice %13 {offsets = [0, 0], sizes = [32, 32], strides = [1, 1]} : vector<32x64xf32> to vector<32x32xf32>
    %22 = vector.extract_strided_slice %13 {offsets = [0, 32], sizes = [32, 32], strides = [1, 1]} : vector<32x64xf32> to vector<32x32xf32>
    %23 = vector.shape_cast %21 : vector<32x32xf32> to vector<2x16x32xf32>
    %24 = vector.shape_cast %22 : vector<32x32xf32> to vector<2x16x32xf32>
    %25 = vector.shape_cast %18 : vector<32x32xf32> to vector<2x16x32xf32>
    %26 = vector.extract_strided_slice %23 {offsets = [0, 0, 0], sizes = [2, 16, 8], strides = [1, 1, 1]} : vector<2x16x32xf32> to vector<2x16x8xf32>
    %27 = vector.extract_strided_slice %24 {offsets = [0, 0, 0], sizes = [2, 16, 8], strides = [1, 1, 1]} : vector<2x16x32xf32> to vector<2x16x8xf32>
    "tpu.trace_start"() <{level = 10 : i32, message = "bqd,bkd->bqk"}> : () -> ()
    %cst_11 = arith.constant dense<0.000000e+00> : vector<2x16x16xf32>
    %28 = tpu.matmul %26, %27, %cst_11 {dimension_numbers = #tpu.dot_dimension_numbers<[2], [2], [1], [1], [0, 0, 0, 1, 1, 1], [0], [0]>} : vector<2x16x8xf32>, vector<2x16x8xf32>, vector<2x16x16xf32> -> vector<2x16x16xf32>
    "tpu.trace_stop"() : () -> ()
    %29 = vector.extract_strided_slice %23 {offsets = [0, 0, 8], sizes = [2, 16, 8], strides = [1, 1, 1]} : vector<2x16x32xf32> to vector<2x16x8xf32>
    %30 = vector.extract_strided_slice %24 {offsets = [0, 0, 8], sizes = [2, 16, 8], strides = [1, 1, 1]} : vector<2x16x32xf32> to vector<2x16x8xf32>
    "tpu.trace_start"() <{level = 10 : i32, message = "bqd,bkd->bqk"}> : () -> ()
    %cst_12 = arith.constant dense<0.000000e+00> : vector<2x16x16xf32>
    %31 = tpu.matmul %29, %30, %cst_12 {dimension_numbers = #tpu.dot_dimension_numbers<[2], [2], [1], [1], [0, 0, 0, 1, 1, 1], [0], [0]>} : vector<2x16x8xf32>, vector<2x16x8xf32>, vector<2x16x16xf32> -> vector<2x16x16xf32>
    "tpu.trace_stop"() : () -> ()
    %32 = vector.extract_strided_slice %23 {offsets = [0, 0, 16], sizes = [2, 16, 8], strides = [1, 1, 1]} : vector<2x16x32xf32> to vector<2x16x8xf32>
    %33 = vector.extract_strided_slice %24 {offsets = [0, 0, 16], sizes = [2, 16, 8], strides = [1, 1, 1]} : vector<2x16x32xf32> to vector<2x16x8xf32>
    "tpu.trace_start"() <{level = 10 : i32, message = "bqd,bkd->bqk"}> : () -> ()
    %cst_13 = arith.constant dense<0.000000e+00> : vector<2x16x16xf32>
    %34 = tpu.matmul %32, %33, %cst_13 {dimension_numbers = #tpu.dot_dimension_numbers<[2], [2], [1], [1], [0, 0, 0, 1, 1, 1], [0], [0]>} : vector<2x16x8xf32>, vector<2x16x8xf32>, vector<2x16x16xf32> -> vector<2x16x16xf32>
    "tpu.trace_stop"() : () -> ()
    %35 = vector.extract_strided_slice %23 {offsets = [0, 0, 24], sizes = [2, 16, 8], strides = [1, 1, 1]} : vector<2x16x32xf32> to vector<2x16x8xf32>
    %36 = vector.extract_strided_slice %24 {offsets = [0, 0, 24], sizes = [2, 16, 8], strides = [1, 1, 1]} : vector<2x16x32xf32> to vector<2x16x8xf32>
    "tpu.trace_start"() <{level = 10 : i32, message = "bqd,bkd->bqk"}> : () -> ()
    %cst_14 = arith.constant dense<0.000000e+00> : vector<2x16x16xf32>
    %37 = tpu.matmul %35, %36, %cst_14 {dimension_numbers = #tpu.dot_dimension_numbers<[2], [2], [1], [1], [0, 0, 0, 1, 1, 1], [0], [0]>} : vector<2x16x8xf32>, vector<2x16x8xf32>, vector<2x16x16xf32> -> vector<2x16x16xf32>
    "tpu.trace_stop"() : () -> ()
    %38 = tpu.concatenate %28, %31, %34, %37 in 1 : vector<2x16x16xf32>, vector<2x16x16xf32>, vector<2x16x16xf32>, vector<2x16x16xf32> -> vector<2x64x16xf32>
    %cst_15 = arith.constant dense<0xFF800000> : vector<2x64xf32>
    %39 = vector.multi_reduction <maximumf>, %38, %cst_15 [2] : vector<2x64x16xf32> to vector<2x64xf32>
    %40 = vector.shape_cast %39 : vector<2x64xf32> to vector<2x64x1xf32>
    %41 = vector.broadcast %40 : vector<2x64x1xf32> to vector<2x64x16xf32>
    %42 = arith.subf %38, %41 : vector<2x64x16xf32>
    %43 = math.exp %42 : vector<2x64x16xf32>
    %cst_16 = arith.constant dense<0.000000e+00> : vector<2x64xf32>
    %44 = vector.multi_reduction <add>, %43, %cst_16 [2] : vector<2x64x16xf32> to vector<2x64xf32>
    %45 = vector.shape_cast %44 : vector<2x64xf32> to vector<2x64x1xf32>
    %46 = tpu.reciprocal %45 {approx = true} : vector<2x64x1xf32> -> vector<2x64x1xf32>
    %47 = vector.broadcast %46 : vector<2x64x1xf32> to vector<2x64x16xf32>
    %48 = arith.mulf %43, %47 : vector<2x64x16xf32>
    %49 = vector.extract_strided_slice %48 {offsets = [0, 0, 0], sizes = [2, 16, 16], strides = [1, 1, 1]} : vector<2x64x16xf32> to vector<2x16x16xf32>
    %50 = vector.extract_strided_slice %25 {offsets = [0, 0, 0], sizes = [2, 16, 8], strides = [1, 1, 1]} : vector<2x16x32xf32> to vector<2x16x8xf32>
    "tpu.trace_start"() <{level = 10 : i32, message = "bqk,bkd->bqd"}> : () -> ()
    %cst_17 = arith.constant dense<0.000000e+00> : vector<2x16x8xf32>
    %51 = tpu.matmul %49, %50, %cst_17 {dimension_numbers = #tpu.dot_dimension_numbers<[2], [1], [1], [2], [0, 0, 0, 1, 1, 2], [0], [0]>} : vector<2x16x16xf32>, vector<2x16x8xf32>, vector<2x16x8xf32> -> vector<2x16x8xf32>
    "tpu.trace_stop"() : () -> ()
    %52 = vector.shape_cast %51 : vector<2x16x8xf32> to vector<32x8xf32>
    %53 = vector.extract_strided_slice %19 {offsets = [0, 0], sizes = [8, 32], strides = [1, 1]} : vector<32x32xf32> to vector<8x32xf32>
    %cst_18 = arith.constant dense<0.000000e+00> : vector<32x32xf32>
    %54 = tpu.matmul %52, %53, %cst_18 {dimension_numbers = #tpu.dot_dimension_numbers<[1], [0], [0], [1], [0, 0, 1, 1], [], []>} : vector<32x8xf32>, vector<8x32xf32>, vector<32x32xf32> -> vector<32x32xf32>
    %55 = vector.broadcast %20 : vector<1x32xf32> to vector<32x32xf32>
    %56 = arith.addf %55, %54 : vector<32x32xf32>
    %57 = vector.extract_strided_slice %48 {offsets = [0, 16, 0], sizes = [2, 16, 16], strides = [1, 1, 1]} : vector<2x64x16xf32> to vector<2x16x16xf32>
    %58 = vector.extract_strided_slice %25 {offsets = [0, 0, 8], sizes = [2, 16, 8], strides = [1, 1, 1]} : vector<2x16x32xf32> to vector<2x16x8xf32>
    "tpu.trace_start"() <{level = 10 : i32, message = "bqk,bkd->bqd"}> : () -> ()
    %cst_19 = arith.constant dense<0.000000e+00> : vector<2x16x8xf32>
    %59 = tpu.matmul %57, %58, %cst_19 {dimension_numbers = #tpu.dot_dimension_numbers<[2], [1], [1], [2], [0, 0, 0, 1, 1, 2], [0], [0]>} : vector<2x16x16xf32>, vector<2x16x8xf32>, vector<2x16x8xf32> -> vector<2x16x8xf32>
    "tpu.trace_stop"() : () -> ()
    %60 = vector.shape_cast %59 : vector<2x16x8xf32> to vector<32x8xf32>
    %61 = vector.extract_strided_slice %19 {offsets = [8, 0], sizes = [8, 32], strides = [1, 1]} : vector<32x32xf32> to vector<8x32xf32>
    %cst_20 = arith.constant dense<0.000000e+00> : vector<32x32xf32>
    %62 = tpu.matmul %60, %61, %cst_20 {dimension_numbers = #tpu.dot_dimension_numbers<[1], [0], [0], [1], [0, 0, 1, 1], [], []>} : vector<32x8xf32>, vector<8x32xf32>, vector<32x32xf32> -> vector<32x32xf32>
    %63 = arith.addf %56, %62 : vector<32x32xf32>
    %64 = vector.extract_strided_slice %48 {offsets = [0, 32, 0], sizes = [2, 16, 16], strides = [1, 1, 1]} : vector<2x64x16xf32> to vector<2x16x16xf32>
    %65 = vector.extract_strided_slice %25 {offsets = [0, 0, 16], sizes = [2, 16, 8], strides = [1, 1, 1]} : vector<2x16x32xf32> to vector<2x16x8xf32>
    "tpu.trace_start"() <{level = 10 : i32, message = "bqk,bkd->bqd"}> : () -> ()
    %cst_21 = arith.constant dense<0.000000e+00> : vector<2x16x8xf32>
    %66 = tpu.matmul %64, %65, %cst_21 {dimension_numbers = #tpu.dot_dimension_numbers<[2], [1], [1], [2], [0, 0, 0, 1, 1, 2], [0], [0]>} : vector<2x16x16xf32>, vector<2x16x8xf32>, vector<2x16x8xf32> -> vector<2x16x8xf32>
    "tpu.trace_stop"() : () -> ()
    %67 = vector.shape_cast %66 : vector<2x16x8xf32> to vector<32x8xf32>
    %68 = vector.extract_strided_slice %19 {offsets = [16, 0], sizes = [8, 32], strides = [1, 1]} : vector<32x32xf32> to vector<8x32xf32>
    %cst_22 = arith.constant dense<0.000000e+00> : vector<32x32xf32>
    %69 = tpu.matmul %67, %68, %cst_22 {dimension_numbers = #tpu.dot_dimension_numbers<[1], [0], [0], [1], [0, 0, 1, 1], [], []>} : vector<32x8xf32>, vector<8x32xf32>, vector<32x32xf32> -> vector<32x32xf32>
    %70 = arith.addf %63, %69 : vector<32x32xf32>
    %71 = vector.extract_strided_slice %48 {offsets = [0, 48, 0], sizes = [2, 16, 16], strides = [1, 1, 1]} : vector<2x64x16xf32> to vector<2x16x16xf32>
    %72 = vector.extract_strided_slice %25 {offsets = [0, 0, 24], sizes = [2, 16, 8], strides = [1, 1, 1]} : vector<2x16x32xf32> to vector<2x16x8xf32>
    "tpu.trace_start"() <{level = 10 : i32, message = "bqk,bkd->bqd"}> : () -> ()
    %cst_23 = arith.constant dense<0.000000e+00> : vector<2x16x8xf32>
    %73 = tpu.matmul %71, %72, %cst_23 {dimension_numbers = #tpu.dot_dimension_numbers<[2], [1], [1], [2], [0, 0, 0, 1, 1, 2], [0], [0]>} : vector<2x16x16xf32>, vector<2x16x8xf32>, vector<2x16x8xf32> -> vector<2x16x8xf32>
    "tpu.trace_stop"() : () -> ()
    %74 = vector.shape_cast %73 : vector<2x16x8xf32> to vector<32x8xf32>
    %75 = vector.extract_strided_slice %19 {offsets = [24, 0], sizes = [8, 32], strides = [1, 1]} : vector<32x32xf32> to vector<8x32xf32>
    %cst_24 = arith.constant dense<0.000000e+00> : vector<32x32xf32>
    %76 = tpu.matmul %74, %75, %cst_24 {dimension_numbers = #tpu.dot_dimension_numbers<[1], [0], [0], [1], [0, 0, 1, 1], [], []>} : vector<32x8xf32>, vector<8x32xf32>, vector<32x32xf32> -> vector<32x32xf32>
    %77 = arith.addf %70, %76 : vector<32x32xf32>
    %78 = arith.addf %0, %77 : vector<32x32xf32>
    %79 = vector.extract_strided_slice %3 {offsets = [0, 0], sizes = [1, 32], strides = [1, 1]} : vector<8x32xf32> to vector<1x32xf32>
    %80 = vector.extract_strided_slice %3 {offsets = [1, 0], sizes = [1, 32], strides = [1, 1]} : vector<8x32xf32> to vector<1x32xf32>
    %cst_25 = arith.constant dense<0.000000e+00> : vector<32xf32>
    %81 = vector.multi_reduction <add>, %78, %cst_25 [1] : vector<32x32xf32> to vector<32xf32>
    %82 = vector.shape_cast %81 : vector<32xf32> to vector<32x1xf32>
    %cst_26 = arith.constant 3.200000e+01 : f32
    %83 = vector.broadcast %cst_26 : f32 to vector<32x1xf32>
    %84 = arith.divf %82, %83 : vector<32x1xf32>
    %85 = arith.mulf %78, %78 : vector<32x32xf32>
    %cst_27 = arith.constant dense<0.000000e+00> : vector<32xf32>
    %86 = vector.multi_reduction <add>, %85, %cst_27 [1] : vector<32x32xf32> to vector<32xf32>
    %87 = vector.shape_cast %86 : vector<32xf32> to vector<32x1xf32>
    %cst_28 = arith.constant 3.200000e+01 : f32
    %88 = vector.broadcast %cst_28 : f32 to vector<32x1xf32>
    %89 = arith.divf %87, %88 : vector<32x1xf32>
    %90 = arith.mulf %84, %84 : vector<32x1xf32>
    %91 = arith.subf %89, %90 : vector<32x1xf32>
    %92 = vector.broadcast %84 : vector<32x1xf32> to vector<32x32xf32>
    %93 = arith.subf %78, %92 : vector<32x32xf32>
    %cst_29 = arith.constant 9.99999974E-6 : f32
    %94 = vector.broadcast %cst_29 : f32 to vector<32x1xf32>
    %95 = arith.addf %91, %94 : vector<32x1xf32>
    %96 = math.rsqrt %95 : vector<32x1xf32>
    %97 = vector.broadcast %96 : vector<32x1xf32> to vector<32x32xf32>
    %98 = arith.mulf %93, %97 : vector<32x32xf32>
    %99 = vector.broadcast %79 : vector<1x32xf32> to vector<32x32xf32>
    %100 = arith.mulf %98, %99 : vector<32x32xf32>
    %101 = vector.broadcast %80 : vector<1x32xf32> to vector<32x32xf32>
    %102 = arith.addf %100, %101 : vector<32x32xf32>
    %c1 = arith.constant 1 : index
    %c0_30 = arith.constant 0 : index
    %c0_31 = arith.constant 0 : index
    %103 = vector.load %arg2[%c1, %c0_30, %c0_31] : memref<4x40x96xf32, #tpu.memory_space<vmem>>, vector<1x40x96xf32>
    %104 = vector.shape_cast %103 : vector<1x40x96xf32> to vector<40x96xf32>
    %105 = vector.extract_strided_slice %104 {offsets = [0, 0], sizes = [32, 96], strides = [1, 1]} : vector<40x96xf32> to vector<32x96xf32>
    %106 = vector.extract_strided_slice %104 {offsets = [32, 0], sizes = [1, 96], strides = [1, 1]} : vector<40x96xf32> to vector<1x96xf32>
    %107 = arith.addf %102, %1 : vector<32x32xf32>
    %108 = vector.extract_strided_slice %105 {offsets = [0, 0], sizes = [32, 32], strides = [1, 1]} : vector<32x96xf32> to vector<32x32xf32>
    %cst_32 = arith.constant dense<0.000000e+00> : vector<32x32xf32>
    %109 = tpu.matmul %107, %108, %cst_32 {dimension_numbers = #tpu.dot_dimension_numbers<[1], [0], [0], [1], [0, 0, 1, 1], [], []>} : vector<32x32xf32>, vector<32x32xf32>, vector<32x32xf32> -> vector<32x32xf32>
    %110 = vector.extract_strided_slice %106 {offsets = [0, 0], sizes = [1, 32], strides = [1, 1]} : vector<1x96xf32> to vector<1x32xf32>
    %111 = vector.broadcast %110 : vector<1x32xf32> to vector<32x32xf32>
    %112 = arith.addf %109, %111 : vector<32x32xf32>
    %113 = vector.extract_strided_slice %105 {offsets = [0, 32], sizes = [32, 32], strides = [1, 1]} : vector<32x96xf32> to vector<32x32xf32>
    %cst_33 = arith.constant dense<0.000000e+00> : vector<32x32xf32>
    %114 = tpu.matmul %2, %113, %cst_33 {dimension_numbers = #tpu.dot_dimension_numbers<[1], [0], [0], [1], [0, 0, 1, 1], [], []>} : vector<32x32xf32>, vector<32x32xf32>, vector<32x32xf32> -> vector<32x32xf32>
    %115 = vector.extract_strided_slice %106 {offsets = [0, 32], sizes = [1, 32], strides = [1, 1]} : vector<1x96xf32> to vector<1x32xf32>
    %116 = vector.broadcast %115 : vector<1x32xf32> to vector<32x32xf32>
    %117 = arith.addf %114, %116 : vector<32x32xf32>
    %118 = vector.extract_strided_slice %105 {offsets = [0, 64], sizes = [32, 32], strides = [1, 1]} : vector<32x96xf32> to vector<32x32xf32>
    %cst_34 = arith.constant dense<0.000000e+00> : vector<32x32xf32>
    %119 = tpu.matmul %0, %118, %cst_34 {dimension_numbers = #tpu.dot_dimension_numbers<[1], [0], [0], [1], [0, 0, 1, 1], [], []>} : vector<32x32xf32>, vector<32x32xf32>, vector<32x32xf32> -> vector<32x32xf32>
    %120 = vector.extract_strided_slice %106 {offsets = [0, 64], sizes = [1, 32], strides = [1, 1]} : vector<1x96xf32> to vector<1x32xf32>
    %121 = vector.broadcast %120 : vector<1x32xf32> to vector<32x32xf32>
    %122 = arith.addf %119, %121 : vector<32x32xf32>
    %c40 = arith.constant 40 : index
    %c0_35 = arith.constant 0 : index
    %123 = vector.load %arg3[%c40, %c0_35] : memref<328x32xf32, #tpu.memory_space<vmem>>, vector<32x32xf32>
    %c72 = arith.constant 72 : index
    %c0_36 = arith.constant 0 : index
    %124 = vector.load %arg3[%c72, %c0_36] : memref<328x32xf32, #tpu.memory_space<vmem>>, vector<1x32xf32>
    %125 = vector.shape_cast %112 : vector<32x32xf32> to vector<2x16x32xf32>
    %126 = vector.shape_cast %117 : vector<32x32xf32> to vector<2x16x32xf32>
    %127 = vector.shape_cast %122 : vector<32x32xf32> to vector<2x16x32xf32>
    %128 = vector.extract_strided_slice %125 {offsets = [0, 0, 0], sizes = [2, 16, 8], strides = [1, 1, 1]} : vector<2x16x32xf32> to vector<2x16x8xf32>
    %129 = vector.extract_strided_slice %126 {offsets = [0, 0, 0], sizes = [2, 16, 8], strides = [1, 1, 1]} : vector<2x16x32xf32> to vector<2x16x8xf32>
    "tpu.trace_start"() <{level = 10 : i32, message = "bqd,bkd->bqk"}> : () -> ()
    %cst_37 = arith.constant dense<0.000000e+00> : vector<2x16x16xf32>
    %130 = tpu.matmul %128, %129, %cst_37 {dimension_numbers = #tpu.dot_dimension_numbers<[2], [2], [1], [1], [0, 0, 0, 1, 1, 1], [0], [0]>} : vector<2x16x8xf32>, vector<2x16x8xf32>, vector<2x16x16xf32> -> vector<2x16x16xf32>
    "tpu.trace_stop"() : () -> ()
    %131 = vector.extract_strided_slice %125 {offsets = [0, 0, 8], sizes = [2, 16, 8], strides = [1, 1, 1]} : vector<2x16x32xf32> to vector<2x16x8xf32>
    %132 = vector.extract_strided_slice %126 {offsets = [0, 0, 8], sizes = [2, 16, 8], strides = [1, 1, 1]} : vector<2x16x32xf32> to vector<2x16x8xf32>
    "tpu.trace_start"() <{level = 10 : i32, message = "bqd,bkd->bqk"}> : () -> ()
    %cst_38 = arith.constant dense<0.000000e+00> : vector<2x16x16xf32>
    %133 = tpu.matmul %131, %132, %cst_38 {dimension_numbers = #tpu.dot_dimension_numbers<[2], [2], [1], [1], [0, 0, 0, 1, 1, 1], [0], [0]>} : vector<2x16x8xf32>, vector<2x16x8xf32>, vector<2x16x16xf32> -> vector<2x16x16xf32>
    "tpu.trace_stop"() : () -> ()
    %134 = vector.extract_strided_slice %125 {offsets = [0, 0, 16], sizes = [2, 16, 8], strides = [1, 1, 1]} : vector<2x16x32xf32> to vector<2x16x8xf32>
    %135 = vector.extract_strided_slice %126 {offsets = [0, 0, 16], sizes = [2, 16, 8], strides = [1, 1, 1]} : vector<2x16x32xf32> to vector<2x16x8xf32>
    "tpu.trace_start"() <{level = 10 : i32, message = "bqd,bkd->bqk"}> : () -> ()
    %cst_39 = arith.constant dense<0.000000e+00> : vector<2x16x16xf32>
    %136 = tpu.matmul %134, %135, %cst_39 {dimension_numbers = #tpu.dot_dimension_numbers<[2], [2], [1], [1], [0, 0, 0, 1, 1, 1], [0], [0]>} : vector<2x16x8xf32>, vector<2x16x8xf32>, vector<2x16x16xf32> -> vector<2x16x16xf32>
    "tpu.trace_stop"() : () -> ()
    %137 = vector.extract_strided_slice %125 {offsets = [0, 0, 24], sizes = [2, 16, 8], strides = [1, 1, 1]} : vector<2x16x32xf32> to vector<2x16x8xf32>
    %138 = vector.extract_strided_slice %126 {offsets = [0, 0, 24], sizes = [2, 16, 8], strides = [1, 1, 1]} : vector<2x16x32xf32> to vector<2x16x8xf32>
    "tpu.trace_start"() <{level = 10 : i32, message = "bqd,bkd->bqk"}> : () -> ()
    %cst_40 = arith.constant dense<0.000000e+00> : vector<2x16x16xf32>
    %139 = tpu.matmul %137, %138, %cst_40 {dimension_numbers = #tpu.dot_dimension_numbers<[2], [2], [1], [1], [0, 0, 0, 1, 1, 1], [0], [0]>} : vector<2x16x8xf32>, vector<2x16x8xf32>, vector<2x16x16xf32> -> vector<2x16x16xf32>
    "tpu.trace_stop"() : () -> ()
    %140 = tpu.concatenate %130, %133, %136, %139 in 1 : vector<2x16x16xf32>, vector<2x16x16xf32>, vector<2x16x16xf32>, vector<2x16x16xf32> -> vector<2x64x16xf32>
    %cst_41 = arith.constant dense<0xFF800000> : vector<2x64xf32>
    %141 = vector.multi_reduction <maximumf>, %140, %cst_41 [2] : vector<2x64x16xf32> to vector<2x64xf32>
    %142 = vector.shape_cast %141 : vector<2x64xf32> to vector<2x64x1xf32>
    %143 = vector.broadcast %142 : vector<2x64x1xf32> to vector<2x64x16xf32>
    %144 = arith.subf %140, %143 : vector<2x64x16xf32>
    %145 = math.exp %144 : vector<2x64x16xf32>
    %cst_42 = arith.constant dense<0.000000e+00> : vector<2x64xf32>
    %146 = vector.multi_reduction <add>, %145, %cst_42 [2] : vector<2x64x16xf32> to vector<2x64xf32>
    %147 = vector.shape_cast %146 : vector<2x64xf32> to vector<2x64x1xf32>
    %148 = tpu.reciprocal %147 {approx = true} : vector<2x64x1xf32> -> vector<2x64x1xf32>
    %149 = vector.broadcast %148 : vector<2x64x1xf32> to vector<2x64x16xf32>
    %150 = arith.mulf %145, %149 : vector<2x64x16xf32>
    %151 = vector.extract_strided_slice %150 {offsets = [0, 0, 0], sizes = [2, 16, 16], strides = [1, 1, 1]} : vector<2x64x16xf32> to vector<2x16x16xf32>
    %152 = vector.extract_strided_slice %127 {offsets = [0, 0, 0], sizes = [2, 16, 8], strides = [1, 1, 1]} : vector<2x16x32xf32> to vector<2x16x8xf32>
    "tpu.trace_start"() <{level = 10 : i32, message = "bqk,bkd->bqd"}> : () -> ()
    %cst_43 = arith.constant dense<0.000000e+00> : vector<2x16x8xf32>
    %153 = tpu.matmul %151, %152, %cst_43 {dimension_numbers = #tpu.dot_dimension_numbers<[2], [1], [1], [2], [0, 0, 0, 1, 1, 2], [0], [0]>} : vector<2x16x16xf32>, vector<2x16x8xf32>, vector<2x16x8xf32> -> vector<2x16x8xf32>
    "tpu.trace_stop"() : () -> ()
    %154 = vector.shape_cast %153 : vector<2x16x8xf32> to vector<32x8xf32>
    %155 = vector.extract_strided_slice %123 {offsets = [0, 0], sizes = [8, 32], strides = [1, 1]} : vector<32x32xf32> to vector<8x32xf32>
    %cst_44 = arith.constant dense<0.000000e+00> : vector<32x32xf32>
    %156 = tpu.matmul %154, %155, %cst_44 {dimension_numbers = #tpu.dot_dimension_numbers<[1], [0], [0], [1], [0, 0, 1, 1], [], []>} : vector<32x8xf32>, vector<8x32xf32>, vector<32x32xf32> -> vector<32x32xf32>
    %157 = vector.broadcast %124 : vector<1x32xf32> to vector<32x32xf32>
    %158 = arith.addf %157, %156 : vector<32x32xf32>
    %159 = vector.extract_strided_slice %150 {offsets = [0, 16, 0], sizes = [2, 16, 16], strides = [1, 1, 1]} : vector<2x64x16xf32> to vector<2x16x16xf32>
    %160 = vector.extract_strided_slice %127 {offsets = [0, 0, 8], sizes = [2, 16, 8], strides = [1, 1, 1]} : vector<2x16x32xf32> to vector<2x16x8xf32>
    "tpu.trace_start"() <{level = 10 : i32, message = "bqk,bkd->bqd"}> : () -> ()
    %cst_45 = arith.constant dense<0.000000e+00> : vector<2x16x8xf32>
    %161 = tpu.matmul %159, %160, %cst_45 {dimension_numbers = #tpu.dot_dimension_numbers<[2], [1], [1], [2], [0, 0, 0, 1, 1, 2], [0], [0]>} : vector<2x16x16xf32>, vector<2x16x8xf32>, vector<2x16x8xf32> -> vector<2x16x8xf32>
    "tpu.trace_stop"() : () -> ()
    %162 = vector.shape_cast %161 : vector<2x16x8xf32> to vector<32x8xf32>
    %163 = vector.extract_strided_slice %123 {offsets = [8, 0], sizes = [8, 32], strides = [1, 1]} : vector<32x32xf32> to vector<8x32xf32>
    %cst_46 = arith.constant dense<0.000000e+00> : vector<32x32xf32>
    %164 = tpu.matmul %162, %163, %cst_46 {dimension_numbers = #tpu.dot_dimension_numbers<[1], [0], [0], [1], [0, 0, 1, 1], [], []>} : vector<32x8xf32>, vector<8x32xf32>, vector<32x32xf32> -> vector<32x32xf32>
    %165 = arith.addf %158, %164 : vector<32x32xf32>
    %166 = vector.extract_strided_slice %150 {offsets = [0, 32, 0], sizes = [2, 16, 16], strides = [1, 1, 1]} : vector<2x64x16xf32> to vector<2x16x16xf32>
    %167 = vector.extract_strided_slice %127 {offsets = [0, 0, 16], sizes = [2, 16, 8], strides = [1, 1, 1]} : vector<2x16x32xf32> to vector<2x16x8xf32>
    "tpu.trace_start"() <{level = 10 : i32, message = "bqk,bkd->bqd"}> : () -> ()
    %cst_47 = arith.constant dense<0.000000e+00> : vector<2x16x8xf32>
    %168 = tpu.matmul %166, %167, %cst_47 {dimension_numbers = #tpu.dot_dimension_numbers<[2], [1], [1], [2], [0, 0, 0, 1, 1, 2], [0], [0]>} : vector<2x16x16xf32>, vector<2x16x8xf32>, vector<2x16x8xf32> -> vector<2x16x8xf32>
    "tpu.trace_stop"() : () -> ()
    %169 = vector.shape_cast %168 : vector<2x16x8xf32> to vector<32x8xf32>
    %170 = vector.extract_strided_slice %123 {offsets = [16, 0], sizes = [8, 32], strides = [1, 1]} : vector<32x32xf32> to vector<8x32xf32>
    %cst_48 = arith.constant dense<0.000000e+00> : vector<32x32xf32>
    %171 = tpu.matmul %169, %170, %cst_48 {dimension_numbers = #tpu.dot_dimension_numbers<[1], [0], [0], [1], [0, 0, 1, 1], [], []>} : vector<32x8xf32>, vector<8x32xf32>, vector<32x32xf32> -> vector<32x32xf32>
    %172 = arith.addf %165, %171 : vector<32x32xf32>
    %173 = vector.extract_strided_slice %150 {offsets = [0, 48, 0], sizes = [2, 16, 16], strides = [1, 1, 1]} : vector<2x64x16xf32> to vector<2x16x16xf32>
    %174 = vector.extract_strided_slice %127 {offsets = [0, 0, 24], sizes = [2, 16, 8], strides = [1, 1, 1]} : vector<2x16x32xf32> to vector<2x16x8xf32>
    "tpu.trace_start"() <{level = 10 : i32, message = "bqk,bkd->bqd"}> : () -> ()
    %cst_49 = arith.constant dense<0.000000e+00> : vector<2x16x8xf32>
    %175 = tpu.matmul %173, %174, %cst_49 {dimension_numbers = #tpu.dot_dimension_numbers<[2], [1], [1], [2], [0, 0, 0, 1, 1, 2], [0], [0]>} : vector<2x16x16xf32>, vector<2x16x8xf32>, vector<2x16x8xf32> -> vector<2x16x8xf32>
    "tpu.trace_stop"() : () -> ()
    %176 = vector.shape_cast %175 : vector<2x16x8xf32> to vector<32x8xf32>
    %177 = vector.extract_strided_slice %123 {offsets = [24, 0], sizes = [8, 32], strides = [1, 1]} : vector<32x32xf32> to vector<8x32xf32>
    %cst_50 = arith.constant dense<0.000000e+00> : vector<32x32xf32>
    %178 = tpu.matmul %176, %177, %cst_50 {dimension_numbers = #tpu.dot_dimension_numbers<[1], [0], [0], [1], [0, 0, 1, 1], [], []>} : vector<32x8xf32>, vector<8x32xf32>, vector<32x32xf32> -> vector<32x32xf32>
    %179 = arith.addf %172, %178 : vector<32x32xf32>
    %180 = arith.addf %102, %179 : vector<32x32xf32>
    %181 = vector.extract_strided_slice %3 {offsets = [2, 0], sizes = [1, 32], strides = [1, 1]} : vector<8x32xf32> to vector<1x32xf32>
    %182 = vector.extract_strided_slice %3 {offsets = [3, 0], sizes = [1, 32], strides = [1, 1]} : vector<8x32xf32> to vector<1x32xf32>
    %cst_51 = arith.constant dense<0.000000e+00> : vector<32xf32>
    %183 = vector.multi_reduction <add>, %180, %cst_51 [1] : vector<32x32xf32> to vector<32xf32>
    %184 = vector.shape_cast %183 : vector<32xf32> to vector<32x1xf32>
    %cst_52 = arith.constant 3.200000e+01 : f32
    %185 = vector.broadcast %cst_52 : f32 to vector<32x1xf32>
    %186 = arith.divf %184, %185 : vector<32x1xf32>
    %187 = arith.mulf %180, %180 : vector<32x32xf32>
    %cst_53 = arith.constant dense<0.000000e+00> : vector<32xf32>
    %188 = vector.multi_reduction <add>, %187, %cst_53 [1] : vector<32x32xf32> to vector<32xf32>
    %189 = vector.shape_cast %188 : vector<32xf32> to vector<32x1xf32>
    %cst_54 = arith.constant 3.200000e+01 : f32
    %190 = vector.broadcast %cst_54 : f32 to vector<32x1xf32>
    %191 = arith.divf %189, %190 : vector<32x1xf32>
    %192 = arith.mulf %186, %186 : vector<32x1xf32>
    %193 = arith.subf %191, %192 : vector<32x1xf32>
    %194 = vector.broadcast %186 : vector<32x1xf32> to vector<32x32xf32>
    %195 = arith.subf %180, %194 : vector<32x32xf32>
    %cst_55 = arith.constant 9.99999974E-6 : f32
    %196 = vector.broadcast %cst_55 : f32 to vector<32x1xf32>
    %197 = arith.addf %193, %196 : vector<32x1xf32>
    %198 = math.rsqrt %197 : vector<32x1xf32>
    %199 = vector.broadcast %198 : vector<32x1xf32> to vector<32x32xf32>
    %200 = arith.mulf %195, %199 : vector<32x32xf32>
    %201 = vector.broadcast %181 : vector<1x32xf32> to vector<32x32xf32>
    %202 = arith.mulf %200, %201 : vector<32x32xf32>
    %203 = vector.broadcast %182 : vector<1x32xf32> to vector<32x32xf32>
    %204 = arith.addf %202, %203 : vector<32x32xf32>
    %c0_56 = arith.constant 0 : index
    %c0_57 = arith.constant 0 : index
    %c0_58 = arith.constant 0 : index
    %205 = vector.load %arg4[%c0_56, %c0_57, %c0_58] : memref<2x40x64xf32, #tpu.memory_space<vmem>>, vector<1x40x64xf32>
    %206 = vector.shape_cast %205 : vector<1x40x64xf32> to vector<40x64xf32>
    %207 = vector.extract_strided_slice %206 {offsets = [0, 0], sizes = [32, 64], strides = [1, 1]} : vector<40x64xf32> to vector<32x64xf32>
    %208 = vector.extract_strided_slice %206 {offsets = [32, 0], sizes = [1, 64], strides = [1, 1]} : vector<40x64xf32> to vector<1x64xf32>
    %c80 = arith.constant 80 : index
    %c0_59 = arith.constant 0 : index
    %209 = vector.load %arg3[%c80, %c0_59] : memref<328x32xf32, #tpu.memory_space<vmem>>, vector<64x32xf32>
    %c144 = arith.constant 144 : index
    %c0_60 = arith.constant 0 : index
    %210 = vector.load %arg3[%c144, %c0_60] : memref<328x32xf32, #tpu.memory_space<vmem>>, vector<1x32xf32>
    %cst_61 = arith.constant dense<0.000000e+00> : vector<32x64xf32>
    %211 = tpu.matmul %204, %207, %cst_61 {dimension_numbers = #tpu.dot_dimension_numbers<[1], [0], [0], [1], [0, 0, 1, 1], [], []>} : vector<32x32xf32>, vector<32x64xf32>, vector<32x64xf32> -> vector<32x64xf32>
    %212 = vector.broadcast %208 : vector<1x64xf32> to vector<32x64xf32>
    %213 = arith.addf %211, %212 : vector<32x64xf32>
    %cst_62 = arith.constant 0.000000e+00 : f32
    %214 = vector.broadcast %cst_62 : f32 to vector<32x64xf32>
    %215 = arith.maximumf %213, %214 : vector<32x64xf32>
    %cst_63 = arith.constant dense<0.000000e+00> : vector<32x32xf32>
    %216 = tpu.matmul %215, %209, %cst_63 {dimension_numbers = #tpu.dot_dimension_numbers<[1], [0], [0], [1], [0, 0, 1, 1], [], []>} : vector<32x64xf32>, vector<64x32xf32>, vector<32x32xf32> -> vector<32x32xf32>
    %217 = vector.broadcast %210 : vector<1x32xf32> to vector<32x32xf32>
    %218 = arith.addf %216, %217 : vector<32x32xf32>
    %219 = arith.addf %204, %218 : vector<32x32xf32>
    %220 = vector.extract_strided_slice %3 {offsets = [4, 0], sizes = [1, 32], strides = [1, 1]} : vector<8x32xf32> to vector<1x32xf32>
    %221 = vector.extract_strided_slice %3 {offsets = [5, 0], sizes = [1, 32], strides = [1, 1]} : vector<8x32xf32> to vector<1x32xf32>
    %cst_64 = arith.constant dense<0.000000e+00> : vector<32xf32>
    %222 = vector.multi_reduction <add>, %219, %cst_64 [1] : vector<32x32xf32> to vector<32xf32>
    %223 = vector.shape_cast %222 : vector<32xf32> to vector<32x1xf32>
    %cst_65 = arith.constant 3.200000e+01 : f32
    %224 = vector.broadcast %cst_65 : f32 to vector<32x1xf32>
    %225 = arith.divf %223, %224 : vector<32x1xf32>
    %226 = arith.mulf %219, %219 : vector<32x32xf32>
    %cst_66 = arith.constant dense<0.000000e+00> : vector<32xf32>
    %227 = vector.multi_reduction <add>, %226, %cst_66 [1] : vector<32x32xf32> to vector<32xf32>
    %228 = vector.shape_cast %227 : vector<32xf32> to vector<32x1xf32>
    %cst_67 = arith.constant 3.200000e+01 : f32
    %229 = vector.broadcast %cst_67 : f32 to vector<32x1xf32>
    %230 = arith.divf %228, %229 : vector<32x1xf32>
    %231 = arith.mulf %225, %225 : vector<32x1xf32>
    %232 = arith.subf %230, %231 : vector<32x1xf32>
    %233 = vector.broadcast %225 : vector<32x1xf32> to vector<32x32xf32>
    %234 = arith.subf %219, %233 : vector<32x32xf32>
    %cst_68 = arith.constant 9.99999974E-6 : f32
    %235 = vector.broadcast %cst_68 : f32 to vector<32x1xf32>
    %236 = arith.addf %232, %235 : vector<32x1xf32>
    %237 = math.rsqrt %236 : vector<32x1xf32>
    %238 = vector.broadcast %237 : vector<32x1xf32> to vector<32x32xf32>
    %239 = arith.mulf %234, %238 : vector<32x32xf32>
    %240 = vector.broadcast %220 : vector<1x32xf32> to vector<32x32xf32>
    %241 = arith.mulf %239, %240 : vector<32x32xf32>
    %242 = vector.broadcast %221 : vector<1x32xf32> to vector<32x32xf32>
    %243 = arith.addf %241, %242 : vector<32x32xf32>
    %c312 = arith.constant 312 : index
    %c0_69 = arith.constant 0 : index
    %244 = vector.load %arg3[%c312, %c0_69] : memref<328x32xf32, #tpu.memory_space<vmem>>, vector<8x32xf32>
    %c2 = arith.constant 2 : index
    %c0_70 = arith.constant 0 : index
    %c0_71 = arith.constant 0 : index
    %245 = vector.load %arg2[%c2, %c0_70, %c0_71] : memref<4x40x96xf32, #tpu.memory_space<vmem>>, vector<1x40x96xf32>
    %246 = vector.shape_cast %245 : vector<1x40x96xf32> to vector<40x96xf32>
    %247 = vector.extract_strided_slice %246 {offsets = [0, 0], sizes = [32, 96], strides = [1, 1]} : vector<40x96xf32> to vector<32x96xf32>
    %248 = vector.extract_strided_slice %246 {offsets = [32, 0], sizes = [1, 96], strides = [1, 1]} : vector<40x96xf32> to vector<1x96xf32>
    %249 = arith.addf %243, %1 : vector<32x32xf32>
    %250 = vector.extract_strided_slice %247 {offsets = [0, 0], sizes = [32, 64], strides = [1, 1]} : vector<32x96xf32> to vector<32x64xf32>
    %cst_72 = arith.constant dense<0.000000e+00> : vector<32x64xf32>
    %251 = tpu.matmul %249, %250, %cst_72 {dimension_numbers = #tpu.dot_dimension_numbers<[1], [0], [0], [1], [0, 0, 1, 1], [], []>} : vector<32x32xf32>, vector<32x64xf32>, vector<32x64xf32> -> vector<32x64xf32>
    %252 = vector.extract_strided_slice %248 {offsets = [0, 0], sizes = [1, 64], strides = [1, 1]} : vector<1x96xf32> to vector<1x64xf32>
    %253 = vector.broadcast %252 : vector<1x64xf32> to vector<32x64xf32>
    %254 = arith.addf %251, %253 : vector<32x64xf32>
    %255 = vector.extract_strided_slice %247 {offsets = [0, 64], sizes = [32, 32], strides = [1, 1]} : vector<32x96xf32> to vector<32x32xf32>
    %cst_73 = arith.constant dense<0.000000e+00> : vector<32x32xf32>
    %256 = tpu.matmul %243, %255, %cst_73 {dimension_numbers = #tpu.dot_dimension_numbers<[1], [0], [0], [1], [0, 0, 1, 1], [], []>} : vector<32x32xf32>, vector<32x32xf32>, vector<32x32xf32> -> vector<32x32xf32>
    %257 = vector.extract_strided_slice %248 {offsets = [0, 64], sizes = [1, 32], strides = [1, 1]} : vector<1x96xf32> to vector<1x32xf32>
    %258 = vector.broadcast %257 : vector<1x32xf32> to vector<32x32xf32>
    %259 = arith.addf %256, %258 : vector<32x32xf32>
    %c160 = arith.constant 160 : index
    %c0_74 = arith.constant 0 : index
    %260 = vector.load %arg3[%c160, %c0_74] : memref<328x32xf32, #tpu.memory_space<vmem>>, vector<32x32xf32>
    %c192 = arith.constant 192 : index
    %c0_75 = arith.constant 0 : index
    %261 = vector.load %arg3[%c192, %c0_75] : memref<328x32xf32, #tpu.memory_space<vmem>>, vector<1x32xf32>
    %262 = vector.extract_strided_slice %254 {offsets = [0, 0], sizes = [32, 32], strides = [1, 1]} : vector<32x64xf32> to vector<32x32xf32>
    %263 = vector.extract_strided_slice %254 {offsets = [0, 32], sizes = [32, 32], strides = [1, 1]} : vector<32x64xf32> to vector<32x32xf32>
    %264 = vector.shape_cast %262 : vector<32x32xf32> to vector<2x16x32xf32>
    %265 = vector.shape_cast %263 : vector<32x32xf32> to vector<2x16x32xf32>
    %266 = vector.shape_cast %259 : vector<32x32xf32> to vector<2x16x32xf32>
    %267 = vector.extract_strided_slice %264 {offsets = [0, 0, 0], sizes = [2, 16, 8], strides = [1, 1, 1]} : vector<2x16x32xf32> to vector<2x16x8xf32>
    %268 = vector.extract_strided_slice %265 {offsets = [0, 0, 0], sizes = [2, 16, 8], strides = [1, 1, 1]} : vector<2x16x32xf32> to vector<2x16x8xf32>
    "tpu.trace_start"() <{level = 10 : i32, message = "bqd,bkd->bqk"}> : () -> ()
    %cst_76 = arith.constant dense<0.000000e+00> : vector<2x16x16xf32>
    %269 = tpu.matmul %267, %268, %cst_76 {dimension_numbers = #tpu.dot_dimension_numbers<[2], [2], [1], [1], [0, 0, 0, 1, 1, 1], [0], [0]>} : vector<2x16x8xf32>, vector<2x16x8xf32>, vector<2x16x16xf32> -> vector<2x16x16xf32>
    "tpu.trace_stop"() : () -> ()
    %270 = vector.extract_strided_slice %264 {offsets = [0, 0, 8], sizes = [2, 16, 8], strides = [1, 1, 1]} : vector<2x16x32xf32> to vector<2x16x8xf32>
    %271 = vector.extract_strided_slice %265 {offsets = [0, 0, 8], sizes = [2, 16, 8], strides = [1, 1, 1]} : vector<2x16x32xf32> to vector<2x16x8xf32>
    "tpu.trace_start"() <{level = 10 : i32, message = "bqd,bkd->bqk"}> : () -> ()
    %cst_77 = arith.constant dense<0.000000e+00> : vector<2x16x16xf32>
    %272 = tpu.matmul %270, %271, %cst_77 {dimension_numbers = #tpu.dot_dimension_numbers<[2], [2], [1], [1], [0, 0, 0, 1, 1, 1], [0], [0]>} : vector<2x16x8xf32>, vector<2x16x8xf32>, vector<2x16x16xf32> -> vector<2x16x16xf32>
    "tpu.trace_stop"() : () -> ()
    %273 = vector.extract_strided_slice %264 {offsets = [0, 0, 16], sizes = [2, 16, 8], strides = [1, 1, 1]} : vector<2x16x32xf32> to vector<2x16x8xf32>
    %274 = vector.extract_strided_slice %265 {offsets = [0, 0, 16], sizes = [2, 16, 8], strides = [1, 1, 1]} : vector<2x16x32xf32> to vector<2x16x8xf32>
    "tpu.trace_start"() <{level = 10 : i32, message = "bqd,bkd->bqk"}> : () -> ()
    %cst_78 = arith.constant dense<0.000000e+00> : vector<2x16x16xf32>
    %275 = tpu.matmul %273, %274, %cst_78 {dimension_numbers = #tpu.dot_dimension_numbers<[2], [2], [1], [1], [0, 0, 0, 1, 1, 1], [0], [0]>} : vector<2x16x8xf32>, vector<2x16x8xf32>, vector<2x16x16xf32> -> vector<2x16x16xf32>
    "tpu.trace_stop"() : () -> ()
    %276 = vector.extract_strided_slice %264 {offsets = [0, 0, 24], sizes = [2, 16, 8], strides = [1, 1, 1]} : vector<2x16x32xf32> to vector<2x16x8xf32>
    %277 = vector.extract_strided_slice %265 {offsets = [0, 0, 24], sizes = [2, 16, 8], strides = [1, 1, 1]} : vector<2x16x32xf32> to vector<2x16x8xf32>
    "tpu.trace_start"() <{level = 10 : i32, message = "bqd,bkd->bqk"}> : () -> ()
    %cst_79 = arith.constant dense<0.000000e+00> : vector<2x16x16xf32>
    %278 = tpu.matmul %276, %277, %cst_79 {dimension_numbers = #tpu.dot_dimension_numbers<[2], [2], [1], [1], [0, 0, 0, 1, 1, 1], [0], [0]>} : vector<2x16x8xf32>, vector<2x16x8xf32>, vector<2x16x16xf32> -> vector<2x16x16xf32>
    "tpu.trace_stop"() : () -> ()
    %279 = tpu.concatenate %269, %272, %275, %278 in 1 : vector<2x16x16xf32>, vector<2x16x16xf32>, vector<2x16x16xf32>, vector<2x16x16xf32> -> vector<2x64x16xf32>
    %cst_80 = arith.constant dense<0xFF800000> : vector<2x64xf32>
    %280 = vector.multi_reduction <maximumf>, %279, %cst_80 [2] : vector<2x64x16xf32> to vector<2x64xf32>
    %281 = vector.shape_cast %280 : vector<2x64xf32> to vector<2x64x1xf32>
    %282 = vector.broadcast %281 : vector<2x64x1xf32> to vector<2x64x16xf32>
    %283 = arith.subf %279, %282 : vector<2x64x16xf32>
    %284 = math.exp %283 : vector<2x64x16xf32>
    %cst_81 = arith.constant dense<0.000000e+00> : vector<2x64xf32>
    %285 = vector.multi_reduction <add>, %284, %cst_81 [2] : vector<2x64x16xf32> to vector<2x64xf32>
    %286 = vector.shape_cast %285 : vector<2x64xf32> to vector<2x64x1xf32>
    %287 = tpu.reciprocal %286 {approx = true} : vector<2x64x1xf32> -> vector<2x64x1xf32>
    %288 = vector.broadcast %287 : vector<2x64x1xf32> to vector<2x64x16xf32>
    %289 = arith.mulf %284, %288 : vector<2x64x16xf32>
    %290 = vector.extract_strided_slice %289 {offsets = [0, 0, 0], sizes = [2, 16, 16], strides = [1, 1, 1]} : vector<2x64x16xf32> to vector<2x16x16xf32>
    %291 = vector.extract_strided_slice %266 {offsets = [0, 0, 0], sizes = [2, 16, 8], strides = [1, 1, 1]} : vector<2x16x32xf32> to vector<2x16x8xf32>
    "tpu.trace_start"() <{level = 10 : i32, message = "bqk,bkd->bqd"}> : () -> ()
    %cst_82 = arith.constant dense<0.000000e+00> : vector<2x16x8xf32>
    %292 = tpu.matmul %290, %291, %cst_82 {dimension_numbers = #tpu.dot_dimension_numbers<[2], [1], [1], [2], [0, 0, 0, 1, 1, 2], [0], [0]>} : vector<2x16x16xf32>, vector<2x16x8xf32>, vector<2x16x8xf32> -> vector<2x16x8xf32>
    "tpu.trace_stop"() : () -> ()
    %293 = vector.shape_cast %292 : vector<2x16x8xf32> to vector<32x8xf32>
    %294 = vector.extract_strided_slice %260 {offsets = [0, 0], sizes = [8, 32], strides = [1, 1]} : vector<32x32xf32> to vector<8x32xf32>
    %cst_83 = arith.constant dense<0.000000e+00> : vector<32x32xf32>
    %295 = tpu.matmul %293, %294, %cst_83 {dimension_numbers = #tpu.dot_dimension_numbers<[1], [0], [0], [1], [0, 0, 1, 1], [], []>} : vector<32x8xf32>, vector<8x32xf32>, vector<32x32xf32> -> vector<32x32xf32>
    %296 = vector.broadcast %261 : vector<1x32xf32> to vector<32x32xf32>
    %297 = arith.addf %296, %295 : vector<32x32xf32>
    %298 = vector.extract_strided_slice %289 {offsets = [0, 16, 0], sizes = [2, 16, 16], strides = [1, 1, 1]} : vector<2x64x16xf32> to vector<2x16x16xf32>
    %299 = vector.extract_strided_slice %266 {offsets = [0, 0, 8], sizes = [2, 16, 8], strides = [1, 1, 1]} : vector<2x16x32xf32> to vector<2x16x8xf32>
    "tpu.trace_start"() <{level = 10 : i32, message = "bqk,bkd->bqd"}> : () -> ()
    %cst_84 = arith.constant dense<0.000000e+00> : vector<2x16x8xf32>
    %300 = tpu.matmul %298, %299, %cst_84 {dimension_numbers = #tpu.dot_dimension_numbers<[2], [1], [1], [2], [0, 0, 0, 1, 1, 2], [0], [0]>} : vector<2x16x16xf32>, vector<2x16x8xf32>, vector<2x16x8xf32> -> vector<2x16x8xf32>
    "tpu.trace_stop"() : () -> ()
    %301 = vector.shape_cast %300 : vector<2x16x8xf32> to vector<32x8xf32>
    %302 = vector.extract_strided_slice %260 {offsets = [8, 0], sizes = [8, 32], strides = [1, 1]} : vector<32x32xf32> to vector<8x32xf32>
    %cst_85 = arith.constant dense<0.000000e+00> : vector<32x32xf32>
    %303 = tpu.matmul %301, %302, %cst_85 {dimension_numbers = #tpu.dot_dimension_numbers<[1], [0], [0], [1], [0, 0, 1, 1], [], []>} : vector<32x8xf32>, vector<8x32xf32>, vector<32x32xf32> -> vector<32x32xf32>
    %304 = arith.addf %297, %303 : vector<32x32xf32>
    %305 = vector.extract_strided_slice %289 {offsets = [0, 32, 0], sizes = [2, 16, 16], strides = [1, 1, 1]} : vector<2x64x16xf32> to vector<2x16x16xf32>
    %306 = vector.extract_strided_slice %266 {offsets = [0, 0, 16], sizes = [2, 16, 8], strides = [1, 1, 1]} : vector<2x16x32xf32> to vector<2x16x8xf32>
    "tpu.trace_start"() <{level = 10 : i32, message = "bqk,bkd->bqd"}> : () -> ()
    %cst_86 = arith.constant dense<0.000000e+00> : vector<2x16x8xf32>
    %307 = tpu.matmul %305, %306, %cst_86 {dimension_numbers = #tpu.dot_dimension_numbers<[2], [1], [1], [2], [0, 0, 0, 1, 1, 2], [0], [0]>} : vector<2x16x16xf32>, vector<2x16x8xf32>, vector<2x16x8xf32> -> vector<2x16x8xf32>
    "tpu.trace_stop"() : () -> ()
    %308 = vector.shape_cast %307 : vector<2x16x8xf32> to vector<32x8xf32>
    %309 = vector.extract_strided_slice %260 {offsets = [16, 0], sizes = [8, 32], strides = [1, 1]} : vector<32x32xf32> to vector<8x32xf32>
    %cst_87 = arith.constant dense<0.000000e+00> : vector<32x32xf32>
    %310 = tpu.matmul %308, %309, %cst_87 {dimension_numbers = #tpu.dot_dimension_numbers<[1], [0], [0], [1], [0, 0, 1, 1], [], []>} : vector<32x8xf32>, vector<8x32xf32>, vector<32x32xf32> -> vector<32x32xf32>
    %311 = arith.addf %304, %310 : vector<32x32xf32>
    %312 = vector.extract_strided_slice %289 {offsets = [0, 48, 0], sizes = [2, 16, 16], strides = [1, 1, 1]} : vector<2x64x16xf32> to vector<2x16x16xf32>
    %313 = vector.extract_strided_slice %266 {offsets = [0, 0, 24], sizes = [2, 16, 8], strides = [1, 1, 1]} : vector<2x16x32xf32> to vector<2x16x8xf32>
    "tpu.trace_start"() <{level = 10 : i32, message = "bqk,bkd->bqd"}> : () -> ()
    %cst_88 = arith.constant dense<0.000000e+00> : vector<2x16x8xf32>
    %314 = tpu.matmul %312, %313, %cst_88 {dimension_numbers = #tpu.dot_dimension_numbers<[2], [1], [1], [2], [0, 0, 0, 1, 1, 2], [0], [0]>} : vector<2x16x16xf32>, vector<2x16x8xf32>, vector<2x16x8xf32> -> vector<2x16x8xf32>
    "tpu.trace_stop"() : () -> ()
    %315 = vector.shape_cast %314 : vector<2x16x8xf32> to vector<32x8xf32>
    %316 = vector.extract_strided_slice %260 {offsets = [24, 0], sizes = [8, 32], strides = [1, 1]} : vector<32x32xf32> to vector<8x32xf32>
    %cst_89 = arith.constant dense<0.000000e+00> : vector<32x32xf32>
    %317 = tpu.matmul %315, %316, %cst_89 {dimension_numbers = #tpu.dot_dimension_numbers<[1], [0], [0], [1], [0, 0, 1, 1], [], []>} : vector<32x8xf32>, vector<8x32xf32>, vector<32x32xf32> -> vector<32x32xf32>
    %318 = arith.addf %311, %317 : vector<32x32xf32>
    %319 = arith.addf %243, %318 : vector<32x32xf32>
    %320 = vector.extract_strided_slice %244 {offsets = [0, 0], sizes = [1, 32], strides = [1, 1]} : vector<8x32xf32> to vector<1x32xf32>
    %321 = vector.extract_strided_slice %244 {offsets = [1, 0], sizes = [1, 32], strides = [1, 1]} : vector<8x32xf32> to vector<1x32xf32>
    %cst_90 = arith.constant dense<0.000000e+00> : vector<32xf32>
    %322 = vector.multi_reduction <add>, %319, %cst_90 [1] : vector<32x32xf32> to vector<32xf32>
    %323 = vector.shape_cast %322 : vector<32xf32> to vector<32x1xf32>
    %cst_91 = arith.constant 3.200000e+01 : f32
    %324 = vector.broadcast %cst_91 : f32 to vector<32x1xf32>
    %325 = arith.divf %323, %324 : vector<32x1xf32>
    %326 = arith.mulf %319, %319 : vector<32x32xf32>
    %cst_92 = arith.constant dense<0.000000e+00> : vector<32xf32>
    %327 = vector.multi_reduction <add>, %326, %cst_92 [1] : vector<32x32xf32> to vector<32xf32>
    %328 = vector.shape_cast %327 : vector<32xf32> to vector<32x1xf32>
    %cst_93 = arith.constant 3.200000e+01 : f32
    %329 = vector.broadcast %cst_93 : f32 to vector<32x1xf32>
    %330 = arith.divf %328, %329 : vector<32x1xf32>
    %331 = arith.mulf %325, %325 : vector<32x1xf32>
    %332 = arith.subf %330, %331 : vector<32x1xf32>
    %333 = vector.broadcast %325 : vector<32x1xf32> to vector<32x32xf32>
    %334 = arith.subf %319, %333 : vector<32x32xf32>
    %cst_94 = arith.constant 9.99999974E-6 : f32
    %335 = vector.broadcast %cst_94 : f32 to vector<32x1xf32>
    %336 = arith.addf %332, %335 : vector<32x1xf32>
    %337 = math.rsqrt %336 : vector<32x1xf32>
    %338 = vector.broadcast %337 : vector<32x1xf32> to vector<32x32xf32>
    %339 = arith.mulf %334, %338 : vector<32x32xf32>
    %340 = vector.broadcast %320 : vector<1x32xf32> to vector<32x32xf32>
    %341 = arith.mulf %339, %340 : vector<32x32xf32>
    %342 = vector.broadcast %321 : vector<1x32xf32> to vector<32x32xf32>
    %343 = arith.addf %341, %342 : vector<32x32xf32>
    %c3 = arith.constant 3 : index
    %c0_95 = arith.constant 0 : index
    %c0_96 = arith.constant 0 : index
    %344 = vector.load %arg2[%c3, %c0_95, %c0_96] : memref<4x40x96xf32, #tpu.memory_space<vmem>>, vector<1x40x96xf32>
    %345 = vector.shape_cast %344 : vector<1x40x96xf32> to vector<40x96xf32>
    %346 = vector.extract_strided_slice %345 {offsets = [0, 0], sizes = [32, 96], strides = [1, 1]} : vector<40x96xf32> to vector<32x96xf32>
    %347 = vector.extract_strided_slice %345 {offsets = [32, 0], sizes = [1, 96], strides = [1, 1]} : vector<40x96xf32> to vector<1x96xf32>
    %348 = arith.addf %343, %1 : vector<32x32xf32>
    %349 = vector.extract_strided_slice %346 {offsets = [0, 0], sizes = [32, 32], strides = [1, 1]} : vector<32x96xf32> to vector<32x32xf32>
    %cst_97 = arith.constant dense<0.000000e+00> : vector<32x32xf32>
    %350 = tpu.matmul %348, %349, %cst_97 {dimension_numbers = #tpu.dot_dimension_numbers<[1], [0], [0], [1], [0, 0, 1, 1], [], []>} : vector<32x32xf32>, vector<32x32xf32>, vector<32x32xf32> -> vector<32x32xf32>
    %351 = vector.extract_strided_slice %347 {offsets = [0, 0], sizes = [1, 32], strides = [1, 1]} : vector<1x96xf32> to vector<1x32xf32>
    %352 = vector.broadcast %351 : vector<1x32xf32> to vector<32x32xf32>
    %353 = arith.addf %350, %352 : vector<32x32xf32>
    %354 = vector.extract_strided_slice %346 {offsets = [0, 32], sizes = [32, 32], strides = [1, 1]} : vector<32x96xf32> to vector<32x32xf32>
    %cst_98 = arith.constant dense<0.000000e+00> : vector<32x32xf32>
    %355 = tpu.matmul %2, %354, %cst_98 {dimension_numbers = #tpu.dot_dimension_numbers<[1], [0], [0], [1], [0, 0, 1, 1], [], []>} : vector<32x32xf32>, vector<32x32xf32>, vector<32x32xf32> -> vector<32x32xf32>
    %356 = vector.extract_strided_slice %347 {offsets = [0, 32], sizes = [1, 32], strides = [1, 1]} : vector<1x96xf32> to vector<1x32xf32>
    %357 = vector.broadcast %356 : vector<1x32xf32> to vector<32x32xf32>
    %358 = arith.addf %355, %357 : vector<32x32xf32>
    %359 = vector.extract_strided_slice %346 {offsets = [0, 64], sizes = [32, 32], strides = [1, 1]} : vector<32x96xf32> to vector<32x32xf32>
    %cst_99 = arith.constant dense<0.000000e+00> : vector<32x32xf32>
    %360 = tpu.matmul %0, %359, %cst_99 {dimension_numbers = #tpu.dot_dimension_numbers<[1], [0], [0], [1], [0, 0, 1, 1], [], []>} : vector<32x32xf32>, vector<32x32xf32>, vector<32x32xf32> -> vector<32x32xf32>
    %361 = vector.extract_strided_slice %347 {offsets = [0, 64], sizes = [1, 32], strides = [1, 1]} : vector<1x96xf32> to vector<1x32xf32>
    %362 = vector.broadcast %361 : vector<1x32xf32> to vector<32x32xf32>
    %363 = arith.addf %360, %362 : vector<32x32xf32>
    %c200 = arith.constant 200 : index
    %c0_100 = arith.constant 0 : index
    %364 = vector.load %arg3[%c200, %c0_100] : memref<328x32xf32, #tpu.memory_space<vmem>>, vector<32x32xf32>
    %c232 = arith.constant 232 : index
    %c0_101 = arith.constant 0 : index
    %365 = vector.load %arg3[%c232, %c0_101] : memref<328x32xf32, #tpu.memory_space<vmem>>, vector<1x32xf32>
    %366 = vector.shape_cast %353 : vector<32x32xf32> to vector<2x16x32xf32>
    %367 = vector.shape_cast %358 : vector<32x32xf32> to vector<2x16x32xf32>
    %368 = vector.shape_cast %363 : vector<32x32xf32> to vector<2x16x32xf32>
    %369 = vector.extract_strided_slice %366 {offsets = [0, 0, 0], sizes = [2, 16, 8], strides = [1, 1, 1]} : vector<2x16x32xf32> to vector<2x16x8xf32>
    %370 = vector.extract_strided_slice %367 {offsets = [0, 0, 0], sizes = [2, 16, 8], strides = [1, 1, 1]} : vector<2x16x32xf32> to vector<2x16x8xf32>
    "tpu.trace_start"() <{level = 10 : i32, message = "bqd,bkd->bqk"}> : () -> ()
    %cst_102 = arith.constant dense<0.000000e+00> : vector<2x16x16xf32>
    %371 = tpu.matmul %369, %370, %cst_102 {dimension_numbers = #tpu.dot_dimension_numbers<[2], [2], [1], [1], [0, 0, 0, 1, 1, 1], [0], [0]>} : vector<2x16x8xf32>, vector<2x16x8xf32>, vector<2x16x16xf32> -> vector<2x16x16xf32>
    "tpu.trace_stop"() : () -> ()
    %372 = vector.extract_strided_slice %366 {offsets = [0, 0, 8], sizes = [2, 16, 8], strides = [1, 1, 1]} : vector<2x16x32xf32> to vector<2x16x8xf32>
    %373 = vector.extract_strided_slice %367 {offsets = [0, 0, 8], sizes = [2, 16, 8], strides = [1, 1, 1]} : vector<2x16x32xf32> to vector<2x16x8xf32>
    "tpu.trace_start"() <{level = 10 : i32, message = "bqd,bkd->bqk"}> : () -> ()
    %cst_103 = arith.constant dense<0.000000e+00> : vector<2x16x16xf32>
    %374 = tpu.matmul %372, %373, %cst_103 {dimension_numbers = #tpu.dot_dimension_numbers<[2], [2], [1], [1], [0, 0, 0, 1, 1, 1], [0], [0]>} : vector<2x16x8xf32>, vector<2x16x8xf32>, vector<2x16x16xf32> -> vector<2x16x16xf32>
    "tpu.trace_stop"() : () -> ()
    %375 = vector.extract_strided_slice %366 {offsets = [0, 0, 16], sizes = [2, 16, 8], strides = [1, 1, 1]} : vector<2x16x32xf32> to vector<2x16x8xf32>
    %376 = vector.extract_strided_slice %367 {offsets = [0, 0, 16], sizes = [2, 16, 8], strides = [1, 1, 1]} : vector<2x16x32xf32> to vector<2x16x8xf32>
    "tpu.trace_start"() <{level = 10 : i32, message = "bqd,bkd->bqk"}> : () -> ()
    %cst_104 = arith.constant dense<0.000000e+00> : vector<2x16x16xf32>
    %377 = tpu.matmul %375, %376, %cst_104 {dimension_numbers = #tpu.dot_dimension_numbers<[2], [2], [1], [1], [0, 0, 0, 1, 1, 1], [0], [0]>} : vector<2x16x8xf32>, vector<2x16x8xf32>, vector<2x16x16xf32> -> vector<2x16x16xf32>
    "tpu.trace_stop"() : () -> ()
    %378 = vector.extract_strided_slice %366 {offsets = [0, 0, 24], sizes = [2, 16, 8], strides = [1, 1, 1]} : vector<2x16x32xf32> to vector<2x16x8xf32>
    %379 = vector.extract_strided_slice %367 {offsets = [0, 0, 24], sizes = [2, 16, 8], strides = [1, 1, 1]} : vector<2x16x32xf32> to vector<2x16x8xf32>
    "tpu.trace_start"() <{level = 10 : i32, message = "bqd,bkd->bqk"}> : () -> ()
    %cst_105 = arith.constant dense<0.000000e+00> : vector<2x16x16xf32>
    %380 = tpu.matmul %378, %379, %cst_105 {dimension_numbers = #tpu.dot_dimension_numbers<[2], [2], [1], [1], [0, 0, 0, 1, 1, 1], [0], [0]>} : vector<2x16x8xf32>, vector<2x16x8xf32>, vector<2x16x16xf32> -> vector<2x16x16xf32>
    "tpu.trace_stop"() : () -> ()
    %381 = tpu.concatenate %371, %374, %377, %380 in 1 : vector<2x16x16xf32>, vector<2x16x16xf32>, vector<2x16x16xf32>, vector<2x16x16xf32> -> vector<2x64x16xf32>
    %cst_106 = arith.constant dense<0xFF800000> : vector<2x64xf32>
    %382 = vector.multi_reduction <maximumf>, %381, %cst_106 [2] : vector<2x64x16xf32> to vector<2x64xf32>
    %383 = vector.shape_cast %382 : vector<2x64xf32> to vector<2x64x1xf32>
    %384 = vector.broadcast %383 : vector<2x64x1xf32> to vector<2x64x16xf32>
    %385 = arith.subf %381, %384 : vector<2x64x16xf32>
    %386 = math.exp %385 : vector<2x64x16xf32>
    %cst_107 = arith.constant dense<0.000000e+00> : vector<2x64xf32>
    %387 = vector.multi_reduction <add>, %386, %cst_107 [2] : vector<2x64x16xf32> to vector<2x64xf32>
    %388 = vector.shape_cast %387 : vector<2x64xf32> to vector<2x64x1xf32>
    %389 = tpu.reciprocal %388 {approx = true} : vector<2x64x1xf32> -> vector<2x64x1xf32>
    %390 = vector.broadcast %389 : vector<2x64x1xf32> to vector<2x64x16xf32>
    %391 = arith.mulf %386, %390 : vector<2x64x16xf32>
    %392 = vector.extract_strided_slice %391 {offsets = [0, 0, 0], sizes = [2, 16, 16], strides = [1, 1, 1]} : vector<2x64x16xf32> to vector<2x16x16xf32>
    %393 = vector.extract_strided_slice %368 {offsets = [0, 0, 0], sizes = [2, 16, 8], strides = [1, 1, 1]} : vector<2x16x32xf32> to vector<2x16x8xf32>
    "tpu.trace_start"() <{level = 10 : i32, message = "bqk,bkd->bqd"}> : () -> ()
    %cst_108 = arith.constant dense<0.000000e+00> : vector<2x16x8xf32>
    %394 = tpu.matmul %392, %393, %cst_108 {dimension_numbers = #tpu.dot_dimension_numbers<[2], [1], [1], [2], [0, 0, 0, 1, 1, 2], [0], [0]>} : vector<2x16x16xf32>, vector<2x16x8xf32>, vector<2x16x8xf32> -> vector<2x16x8xf32>
    "tpu.trace_stop"() : () -> ()
    %395 = vector.shape_cast %394 : vector<2x16x8xf32> to vector<32x8xf32>
    %396 = vector.extract_strided_slice %364 {offsets = [0, 0], sizes = [8, 32], strides = [1, 1]} : vector<32x32xf32> to vector<8x32xf32>
    %cst_109 = arith.constant dense<0.000000e+00> : vector<32x32xf32>
    %397 = tpu.matmul %395, %396, %cst_109 {dimension_numbers = #tpu.dot_dimension_numbers<[1], [0], [0], [1], [0, 0, 1, 1], [], []>} : vector<32x8xf32>, vector<8x32xf32>, vector<32x32xf32> -> vector<32x32xf32>
    %398 = vector.broadcast %365 : vector<1x32xf32> to vector<32x32xf32>
    %399 = arith.addf %398, %397 : vector<32x32xf32>
    %400 = vector.extract_strided_slice %391 {offsets = [0, 16, 0], sizes = [2, 16, 16], strides = [1, 1, 1]} : vector<2x64x16xf32> to vector<2x16x16xf32>
    %401 = vector.extract_strided_slice %368 {offsets = [0, 0, 8], sizes = [2, 16, 8], strides = [1, 1, 1]} : vector<2x16x32xf32> to vector<2x16x8xf32>
    "tpu.trace_start"() <{level = 10 : i32, message = "bqk,bkd->bqd"}> : () -> ()
    %cst_110 = arith.constant dense<0.000000e+00> : vector<2x16x8xf32>
    %402 = tpu.matmul %400, %401, %cst_110 {dimension_numbers = #tpu.dot_dimension_numbers<[2], [1], [1], [2], [0, 0, 0, 1, 1, 2], [0], [0]>} : vector<2x16x16xf32>, vector<2x16x8xf32>, vector<2x16x8xf32> -> vector<2x16x8xf32>
    "tpu.trace_stop"() : () -> ()
    %403 = vector.shape_cast %402 : vector<2x16x8xf32> to vector<32x8xf32>
    %404 = vector.extract_strided_slice %364 {offsets = [8, 0], sizes = [8, 32], strides = [1, 1]} : vector<32x32xf32> to vector<8x32xf32>
    %cst_111 = arith.constant dense<0.000000e+00> : vector<32x32xf32>
    %405 = tpu.matmul %403, %404, %cst_111 {dimension_numbers = #tpu.dot_dimension_numbers<[1], [0], [0], [1], [0, 0, 1, 1], [], []>} : vector<32x8xf32>, vector<8x32xf32>, vector<32x32xf32> -> vector<32x32xf32>
    %406 = arith.addf %399, %405 : vector<32x32xf32>
    %407 = vector.extract_strided_slice %391 {offsets = [0, 32, 0], sizes = [2, 16, 16], strides = [1, 1, 1]} : vector<2x64x16xf32> to vector<2x16x16xf32>
    %408 = vector.extract_strided_slice %368 {offsets = [0, 0, 16], sizes = [2, 16, 8], strides = [1, 1, 1]} : vector<2x16x32xf32> to vector<2x16x8xf32>
    "tpu.trace_start"() <{level = 10 : i32, message = "bqk,bkd->bqd"}> : () -> ()
    %cst_112 = arith.constant dense<0.000000e+00> : vector<2x16x8xf32>
    %409 = tpu.matmul %407, %408, %cst_112 {dimension_numbers = #tpu.dot_dimension_numbers<[2], [1], [1], [2], [0, 0, 0, 1, 1, 2], [0], [0]>} : vector<2x16x16xf32>, vector<2x16x8xf32>, vector<2x16x8xf32> -> vector<2x16x8xf32>
    "tpu.trace_stop"() : () -> ()
    %410 = vector.shape_cast %409 : vector<2x16x8xf32> to vector<32x8xf32>
    %411 = vector.extract_strided_slice %364 {offsets = [16, 0], sizes = [8, 32], strides = [1, 1]} : vector<32x32xf32> to vector<8x32xf32>
    %cst_113 = arith.constant dense<0.000000e+00> : vector<32x32xf32>
    %412 = tpu.matmul %410, %411, %cst_113 {dimension_numbers = #tpu.dot_dimension_numbers<[1], [0], [0], [1], [0, 0, 1, 1], [], []>} : vector<32x8xf32>, vector<8x32xf32>, vector<32x32xf32> -> vector<32x32xf32>
    %413 = arith.addf %406, %412 : vector<32x32xf32>
    %414 = vector.extract_strided_slice %391 {offsets = [0, 48, 0], sizes = [2, 16, 16], strides = [1, 1, 1]} : vector<2x64x16xf32> to vector<2x16x16xf32>
    %415 = vector.extract_strided_slice %368 {offsets = [0, 0, 24], sizes = [2, 16, 8], strides = [1, 1, 1]} : vector<2x16x32xf32> to vector<2x16x8xf32>
    "tpu.trace_start"() <{level = 10 : i32, message = "bqk,bkd->bqd"}> : () -> ()
    %cst_114 = arith.constant dense<0.000000e+00> : vector<2x16x8xf32>
    %416 = tpu.matmul %414, %415, %cst_114 {dimension_numbers = #tpu.dot_dimension_numbers<[2], [1], [1], [2], [0, 0, 0, 1, 1, 2], [0], [0]>} : vector<2x16x16xf32>, vector<2x16x8xf32>, vector<2x16x8xf32> -> vector<2x16x8xf32>
    "tpu.trace_stop"() : () -> ()
    %417 = vector.shape_cast %416 : vector<2x16x8xf32> to vector<32x8xf32>
    %418 = vector.extract_strided_slice %364 {offsets = [24, 0], sizes = [8, 32], strides = [1, 1]} : vector<32x32xf32> to vector<8x32xf32>
    %cst_115 = arith.constant dense<0.000000e+00> : vector<32x32xf32>
    %419 = tpu.matmul %417, %418, %cst_115 {dimension_numbers = #tpu.dot_dimension_numbers<[1], [0], [0], [1], [0, 0, 1, 1], [], []>} : vector<32x8xf32>, vector<8x32xf32>, vector<32x32xf32> -> vector<32x32xf32>
    %420 = arith.addf %413, %419 : vector<32x32xf32>
    %421 = arith.addf %343, %420 : vector<32x32xf32>
    %422 = vector.extract_strided_slice %244 {offsets = [2, 0], sizes = [1, 32], strides = [1, 1]} : vector<8x32xf32> to vector<1x32xf32>
    %423 = vector.extract_strided_slice %244 {offsets = [3, 0], sizes = [1, 32], strides = [1, 1]} : vector<8x32xf32> to vector<1x32xf32>
    %cst_116 = arith.constant dense<0.000000e+00> : vector<32xf32>
    %424 = vector.multi_reduction <add>, %421, %cst_116 [1] : vector<32x32xf32> to vector<32xf32>
    %425 = vector.shape_cast %424 : vector<32xf32> to vector<32x1xf32>
    %cst_117 = arith.constant 3.200000e+01 : f32
    %426 = vector.broadcast %cst_117 : f32 to vector<32x1xf32>
    %427 = arith.divf %425, %426 : vector<32x1xf32>
    %428 = arith.mulf %421, %421 : vector<32x32xf32>
    %cst_118 = arith.constant dense<0.000000e+00> : vector<32xf32>
    %429 = vector.multi_reduction <add>, %428, %cst_118 [1] : vector<32x32xf32> to vector<32xf32>
    %430 = vector.shape_cast %429 : vector<32xf32> to vector<32x1xf32>
    %cst_119 = arith.constant 3.200000e+01 : f32
    %431 = vector.broadcast %cst_119 : f32 to vector<32x1xf32>
    %432 = arith.divf %430, %431 : vector<32x1xf32>
    %433 = arith.mulf %427, %427 : vector<32x1xf32>
    %434 = arith.subf %432, %433 : vector<32x1xf32>
    %435 = vector.broadcast %427 : vector<32x1xf32> to vector<32x32xf32>
    %436 = arith.subf %421, %435 : vector<32x32xf32>
    %cst_120 = arith.constant 9.99999974E-6 : f32
    %437 = vector.broadcast %cst_120 : f32 to vector<32x1xf32>
    %438 = arith.addf %434, %437 : vector<32x1xf32>
    %439 = math.rsqrt %438 : vector<32x1xf32>
    %440 = vector.broadcast %439 : vector<32x1xf32> to vector<32x32xf32>
    %441 = arith.mulf %436, %440 : vector<32x32xf32>
    %442 = vector.broadcast %422 : vector<1x32xf32> to vector<32x32xf32>
    %443 = arith.mulf %441, %442 : vector<32x32xf32>
    %444 = vector.broadcast %423 : vector<1x32xf32> to vector<32x32xf32>
    %445 = arith.addf %443, %444 : vector<32x32xf32>
    %c1_121 = arith.constant 1 : index
    %c0_122 = arith.constant 0 : index
    %c0_123 = arith.constant 0 : index
    %446 = vector.load %arg4[%c1_121, %c0_122, %c0_123] : memref<2x40x64xf32, #tpu.memory_space<vmem>>, vector<1x40x64xf32>
    %447 = vector.shape_cast %446 : vector<1x40x64xf32> to vector<40x64xf32>
    %448 = vector.extract_strided_slice %447 {offsets = [0, 0], sizes = [32, 64], strides = [1, 1]} : vector<40x64xf32> to vector<32x64xf32>
    %449 = vector.extract_strided_slice %447 {offsets = [32, 0], sizes = [1, 64], strides = [1, 1]} : vector<40x64xf32> to vector<1x64xf32>
    %c240 = arith.constant 240 : index
    %c0_124 = arith.constant 0 : index
    %450 = vector.load %arg3[%c240, %c0_124] : memref<328x32xf32, #tpu.memory_space<vmem>>, vector<64x32xf32>
    %c304 = arith.constant 304 : index
    %c0_125 = arith.constant 0 : index
    %451 = vector.load %arg3[%c304, %c0_125] : memref<328x32xf32, #tpu.memory_space<vmem>>, vector<1x32xf32>
    %cst_126 = arith.constant dense<0.000000e+00> : vector<32x64xf32>
    %452 = tpu.matmul %445, %448, %cst_126 {dimension_numbers = #tpu.dot_dimension_numbers<[1], [0], [0], [1], [0, 0, 1, 1], [], []>} : vector<32x32xf32>, vector<32x64xf32>, vector<32x64xf32> -> vector<32x64xf32>
    %453 = vector.broadcast %449 : vector<1x64xf32> to vector<32x64xf32>
    %454 = arith.addf %452, %453 : vector<32x64xf32>
    %cst_127 = arith.constant 0.000000e+00 : f32
    %455 = vector.broadcast %cst_127 : f32 to vector<32x64xf32>
    %456 = arith.maximumf %454, %455 : vector<32x64xf32>
    %cst_128 = arith.constant dense<0.000000e+00> : vector<32x32xf32>
    %457 = tpu.matmul %456, %450, %cst_128 {dimension_numbers = #tpu.dot_dimension_numbers<[1], [0], [0], [1], [0, 0, 1, 1], [], []>} : vector<32x64xf32>, vector<64x32xf32>, vector<32x32xf32> -> vector<32x32xf32>
    %458 = vector.broadcast %451 : vector<1x32xf32> to vector<32x32xf32>
    %459 = arith.addf %457, %458 : vector<32x32xf32>
    %460 = arith.addf %445, %459 : vector<32x32xf32>
    %461 = vector.extract_strided_slice %244 {offsets = [4, 0], sizes = [1, 32], strides = [1, 1]} : vector<8x32xf32> to vector<1x32xf32>
    %462 = vector.extract_strided_slice %244 {offsets = [5, 0], sizes = [1, 32], strides = [1, 1]} : vector<8x32xf32> to vector<1x32xf32>
    %cst_129 = arith.constant dense<0.000000e+00> : vector<32xf32>
    %463 = vector.multi_reduction <add>, %460, %cst_129 [1] : vector<32x32xf32> to vector<32xf32>
    %464 = vector.shape_cast %463 : vector<32xf32> to vector<32x1xf32>
    %cst_130 = arith.constant 3.200000e+01 : f32
    %465 = vector.broadcast %cst_130 : f32 to vector<32x1xf32>
    %466 = arith.divf %464, %465 : vector<32x1xf32>
    %467 = arith.mulf %460, %460 : vector<32x32xf32>
    %cst_131 = arith.constant dense<0.000000e+00> : vector<32xf32>
    %468 = vector.multi_reduction <add>, %467, %cst_131 [1] : vector<32x32xf32> to vector<32xf32>
    %469 = vector.shape_cast %468 : vector<32xf32> to vector<32x1xf32>
    %cst_132 = arith.constant 3.200000e+01 : f32
    %470 = vector.broadcast %cst_132 : f32 to vector<32x1xf32>
    %471 = arith.divf %469, %470 : vector<32x1xf32>
    %472 = arith.mulf %466, %466 : vector<32x1xf32>
    %473 = arith.subf %471, %472 : vector<32x1xf32>
    %474 = vector.broadcast %466 : vector<32x1xf32> to vector<32x32xf32>
    %475 = arith.subf %460, %474 : vector<32x32xf32>
    %cst_133 = arith.constant 9.99999974E-6 : f32
    %476 = vector.broadcast %cst_133 : f32 to vector<32x1xf32>
    %477 = arith.addf %473, %476 : vector<32x1xf32>
    %478 = math.rsqrt %477 : vector<32x1xf32>
    %479 = vector.broadcast %478 : vector<32x1xf32> to vector<32x32xf32>
    %480 = arith.mulf %475, %479 : vector<32x32xf32>
    %481 = vector.broadcast %461 : vector<1x32xf32> to vector<32x32xf32>
    %482 = arith.mulf %480, %481 : vector<32x32xf32>
    %483 = vector.broadcast %462 : vector<1x32xf32> to vector<32x32xf32>
    %484 = arith.addf %482, %483 : vector<32x32xf32>
    %c320 = arith.constant 320 : index
    %c0_134 = arith.constant 0 : index
    %485 = vector.load %arg3[%c320, %c0_134] : memref<328x32xf32, #tpu.memory_space<vmem>>, vector<2x32xf32>
    %486 = vector.extract_strided_slice %485 {offsets = [0, 0], sizes = [1, 32], strides = [1, 1]} : vector<2x32xf32> to vector<1x32xf32>
    %487 = vector.extract_strided_slice %485 {offsets = [1, 0], sizes = [1, 32], strides = [1, 1]} : vector<2x32xf32> to vector<1x32xf32>
    %cst_135 = arith.constant dense<0.000000e+00> : vector<32xf32>
    %488 = vector.multi_reduction <add>, %484, %cst_135 [1] : vector<32x32xf32> to vector<32xf32>
    %489 = vector.shape_cast %488 : vector<32xf32> to vector<32x1xf32>
    %cst_136 = arith.constant 3.200000e+01 : f32
    %490 = vector.broadcast %cst_136 : f32 to vector<32x1xf32>
    %491 = arith.divf %489, %490 : vector<32x1xf32>
    %492 = arith.mulf %484, %484 : vector<32x32xf32>
    %cst_137 = arith.constant dense<0.000000e+00> : vector<32xf32>
    %493 = vector.multi_reduction <add>, %492, %cst_137 [1] : vector<32x32xf32> to vector<32xf32>
    %494 = vector.shape_cast %493 : vector<32xf32> to vector<32x1xf32>
    %cst_138 = arith.constant 3.200000e+01 : f32
    %495 = vector.broadcast %cst_138 : f32 to vector<32x1xf32>
    %496 = arith.divf %494, %495 : vector<32x1xf32>
    %497 = arith.mulf %491, %491 : vector<32x1xf32>
    %498 = arith.subf %496, %497 : vector<32x1xf32>
    %499 = vector.broadcast %491 : vector<32x1xf32> to vector<32x32xf32>
    %500 = arith.subf %484, %499 : vector<32x32xf32>
    %cst_139 = arith.constant 9.99999974E-6 : f32
    %501 = vector.broadcast %cst_139 : f32 to vector<32x1xf32>
    %502 = arith.addf %498, %501 : vector<32x1xf32>
    %503 = math.rsqrt %502 : vector<32x1xf32>
    %504 = vector.broadcast %503 : vector<32x1xf32> to vector<32x32xf32>
    %505 = arith.mulf %500, %504 : vector<32x32xf32>
    %506 = vector.broadcast %486 : vector<1x32xf32> to vector<32x32xf32>
    %507 = arith.mulf %505, %506 : vector<32x32xf32>
    %508 = vector.broadcast %487 : vector<1x32xf32> to vector<32x32xf32>
    %509 = arith.addf %507, %508 : vector<32x32xf32>
    %c0_140 = arith.constant 0 : index
    %c0_141 = arith.constant 0 : index
    %510 = vector.load %arg5[%c0_140, %c0_141] : memref<32x32xf32, #tpu.memory_space<vmem>>, vector<32x32xf32>
    tpu.vector_store %arg5[%c0_140, %c0_141], %509 {strides = array<i32>} : memref<32x32xf32, #tpu.memory_space<vmem>>, vector<32x32xf32>,
    return
  }
}

</mosaic_0001>

<llo_original>
// kernel: tpu_custom_call.1
$region0: #{tpu_custom_call.1}
  #allocation0 [shape = 'u32[]', space=smem, size = 0x4, offset = 0x4, fixed_abs, tag = 'smem constant byte address 0x4 - core index']
  #allocation1 [shape = 'u32[144,128]{1,0:T(1,128)}', space=vmem, size = 0x12000, scoped, tag = 'internal scratch']
  %s0 = inlined_call_operand.vmem [shape: f32[32,32], index: 0, kind: input, shape index: {}]
  %s1 = inlined_call_operand.vmem [shape: f32[32,32], index: 1, kind: input, shape index: {}]
  %s2 = inlined_call_operand.vmem [shape: f32[4,40,96], index: 2, kind: input, shape index: {}]
  %s3 = inlined_call_operand.vmem [shape: f32[328,32], index: 3, kind: input, shape index: {}]
  %s4 = inlined_call_operand.vmem [shape: f32[2,40,64], index: 4, kind: input, shape index: {}]
  %s5 = inlined_call_operand.hbm [shape: f32[32,32], index: 5, kind: output, shape index: {}]
  %s6 = sld [smem:[#allocation0]]
  $region30: #{tpu_custom_call.1} parent=0
    _
  %s8 = ssub.s32 1, %s6
  %s9 = scalar_select 0, %s8, %s6
  $region1: #{tpu_custom_call.1} parent=0
    #allocation2 [shape = 'u8[16384]{0}', space=vmem, size = 0x4000, scoped, tag = 'output window, operand 0, single buffered']
    #allocation3 [shape = 's32[1]{0}', space=sflag, size = 0x4, scoped, tag = 'scoped memory for tpu_custom_call.1']
    %10 = vsyncpa [#allocation3], 0
    // Predicated region
    $region2: #{tpu_custom_call.1} parent=1 // pred_check
      _
    $region3: #{tpu_custom_call.1} parent=1 // pred_check_branch
      %12 = sbr.rel (0) target = $region5
    $region4: #{tpu_custom_call.1} parent=1 // pred_region
      _
    $region5: #{tpu_custom_call.1} parent=1 // pred_fallthru
      _
    // Predicated region
    $region6: #{tpu_custom_call.1} parent=1 // pred_check
      _
    $region7: #{tpu_custom_call.1} parent=1 // pred_check_branch
      %14 = sbr.rel (0) target = $region9
    $region8: #{tpu_custom_call.1} parent=1 // pred_region
      _
    $region9: #{tpu_custom_call.1} parent=1 // pred_fallthru
      _
    // Predicated region
    $region10: #{tpu_custom_call.1} parent=1 // pred_check
      _
    $region11: #{tpu_custom_call.1} parent=1 // pred_check_branch
      %16 = sbr.rel (0) target = $region13
    $region12: #{tpu_custom_call.1} parent=1 // pred_region
      _
    $region13: #{tpu_custom_call.1} parent=1 // pred_fallthru
      _
    // Predicated region
    $region14: #{tpu_custom_call.1} parent=1 // pred_check
      _
    $region15: #{tpu_custom_call.1} parent=1 // pred_check_branch
      %18 = sbr.rel (0) target = $region17
    $region16: #{tpu_custom_call.1} parent=1 // pred_region
      _
    $region17: #{tpu_custom_call.1} parent=1 // pred_fallthru
      _
    // Predicated region
    $region18: #{tpu_custom_call.1} parent=1 // pred_check
      _
    $region19: #{tpu_custom_call.1} parent=1 // pred_check_branch
      %20 = sbr.rel (0) target = $region21
    $region20: #{tpu_custom_call.1} parent=1 // pred_region
      _
    $region21: #{tpu_custom_call.1} parent=1 // pred_fallthru
      _
    %v21 = vld [vmem:[%s0] sm:$0xff]
    %v22 = vld [vmem:[%s0 + $0x8] sm:$0xff]
    %v23 = vld [vmem:[%s0 + $0x10] sm:$0xff]
    %v24 = vld [vmem:[%s0 + $0x18] sm:$0xff]
    %v25 = vld [vmem:[%s1] sm:$0xff]
    %v26 = vld [vmem:[%s1 + $0x8] sm:$0xff]
    %v27 = vld [vmem:[%s1 + $0x10] sm:$0xff]
    %v28 = vld [vmem:[%s1 + $0x18] sm:$0xff]
    %v29 = vadd.f32 %v21, %v25
    %v30 = vadd.f32 %v22, %v26
    %v31 = vadd.f32 %v23, %v27
    %v32 = vadd.f32 %v24, %v28
    %v33 = vld [vmem:[%s3 + $0x98] sm:$0xff]
    %v34 = vld [vmem:[%s2] sm:$0xff]
    %v35 = vld [vmem:[%s2 + $0x8] sm:$0xff]
    %v36 = vld [vmem:[%s2 + $0x10] sm:$0xff]
    %v37 = vld [vmem:[%s2 + $0x18] sm:$0xff]
    %v38 = vld [vmem:[%s2 + $0x20] sm:$0xff]
    %v39 = vlaneseq
    %v40 = vshrl.u32 %v39, 7
    %v41 = vsub.s32 0, %v40
    %v42 = vrot.slane %v38, %v41
    %vm43 = vcmask 261120
    %v45 = vsel %vm43, %v29, 0
    %v48 = vsel %vm43, %v30, 0
    %v51 = vsel %vm43, %v31, 0
    %v54 = vsel %vm43, %v32, 0
    %56 = vmatprep.subr.mxu0 0.0
    %57 = vmatpush1.msra.mxu0 %v34
    %58 = vmatprep.subr.mxu0 0.0
    %59 = vmatpush1.msra.mxu0 %v35
    %60 = vmatprep.subr.mxu0 0.0
    %61 = vmatpush1.msra.mxu0 %v36
    %62 = vmatprep.subr.mxu0 0.0
    %63 = vmatpush1.msra.mxu0 %v37
    %64 = vmatprep.subr.mxu0 0.0
    %65 = vmatpush1.msra.mxu0 0.0
    %66 = vmatprep.subr.mxu0 0.0
    %67 = vmatpush1.msra.mxu0 0.0
    %68 = vmatprep.subr.mxu0 0.0
    %69 = vmatpush1.msra.mxu0 0.0
    %70 = vmatprep.subr.mxu0 0.0
    %71 = vmatpush1.msra.mxu0 0.0
    %72 = vmatprep.subr.mxu0 0.0
    %73 = vmatpush1.msra.mxu0 0.0
    %74 = vmatprep.subr.mxu0 0.0
    %75 = vmatpush1.msra.mxu0 0.0
    %76 = vmatprep.subr.mxu0 0.0
    %77 = vmatpush1.msra.mxu0 0.0
    %78 = vmatprep.subr.mxu0 0.0
    %79 = vmatpush1.msra.mxu0 0.0
    %80 = vmatprep.subr.mxu0 0.0
    %81 = vmatpush1.msra.mxu0 0.0
    %82 = vmatprep.subr.mxu0 0.0
    %83 = vmatpush1.msra.mxu0 0.0
    %84 = vmatprep.subr.mxu0 0.0
    %85 = vmatpush1.msra.mxu0 0.0
    %86 = vmatprep.subr.mxu0 0.0
    %87 = vmatpush1.msra.mxu0 0.0
    %88 = vmatprep.subr.mxu0 0.0
    %89 = vmatpush1.msra.mxu0 0.0
    %90 = vmatprep.subr.mxu0 0.0
    %91 = vmatpush1.msra.mxu0 0.0
    %92 = vmatprep.subr.mxu0 0.0
    %93 = vmatpush1.msra.mxu0 0.0
    %94 = vmatprep.subr.mxu0 0.0
    %95 = vmatpush1.msra.mxu0 0.0
    %96 = vmatprep.subr.mxu0 0.0
    %97 = vmatpush1.msra.mxu0 0.0
    %98 = vmatprep.subr.mxu0 0.0
    %99 = vmatpush1.msra.mxu0 0.0
    %100 = vmatprep.subr.mxu0 0.0
    %101 = vmatpush1.msra.mxu0 0.0
    %102 = vmatprep.subr.mxu0 0.0
    %103 = vmatpush1.msra.mxu0 0.0
    %104 = vmatprep.subr.mxu0 0.0
    %105 = vmatpush1.msra.mxu0 0.0
    %106 = vmatprep.subr.mxu0 0.0
    %107 = vmatpush1.msra.mxu0 0.0
    %108 = vmatprep.subr.mxu0 0.0
    %109 = vmatpush1.msra.mxu0 0.0
    %110 = vmatprep.subr.mxu0 0.0
    %111 = vmatpush1.msra.mxu0 0.0
    %112 = vmatprep.subr.mxu0 0.0
    %113 = vmatpush1.msra.mxu0 0.0
    %114 = vmatprep.subr.mxu0 0.0
    %115 = vmatpush1.msra.mxu0 0.0
    %116 = vmatprep.subr.mxu0 0.0
    %117 = vmatpush1.msra.mxu0 0.0
    %118 = vmatprep.subr.mxu0 0.0
    %119 = vmatpush1.msra.mxu0 0.0
    %120 = vmatprep.mubr.f32.mxu0 0.0
    %121 = vmatmul.mubr.f32.gmra.mrb[0].mxu0 %v45
    %v122 = vpop.f32.mrb[0].mxu0
    %v123 = vadd.f32 %v42, %v122
    %v124 = vpop.f32.mrb[0].mxu0
    %125 = vmatprep.mubr.f32.mxu0 0.0
    %126 = vmatmul.mubr.f32.gmra.mrb[0].mxu0 %v48
    %v127 = vpop.f32.mrb[0].mxu0
    %v128 = vadd.f32 %v42, %v127
    %v129 = vpop.f32.mrb[0].mxu0
    %130 = vmatprep.mubr.f32.mxu0 0.0
    %131 = vmatmul.mubr.f32.gmra.mrb[0].mxu0 %v51
    %v132 = vpop.f32.mrb[0].mxu0
    %v133 = vadd.f32 %v42, %v132
    %v134 = vpop.f32.mrb[0].mxu0
    %135 = vmatprep.mubr.f32.mxu0 0.0
    %136 = vmatmul.mubr.f32.gmra.mrb[0].mxu0 %v54
    %v137 = vpop.f32.mrb[0].mxu0
    %v138 = vadd.f32 %v42, %v137
    %v139 = vpop.f32.mrb[0].mxu0
    %140 = vdwg.mxu0
    %145 = vrot.lane.b32.xlu0 %v34, 64
    %v146 = vpop.permute.xlu0 %145
    %147 = vrot.lane.b32.xlu0 %v35, 64
    %v148 = vpop.permute.xlu0 %147
    %149 = vrot.lane.b32.xlu0 %v36, 64
    %v150 = vpop.permute.xlu0 %149
    %151 = vrot.lane.b32.xlu0 %v37, 64
    %v152 = vpop.permute.xlu0 %151
    %158 = vrot.lane.b32.xlu0 %v42, 64
    %v159 = vpop.permute.xlu0 %158
    %v162 = vsel %vm43, %v21, 0
    %v165 = vsel %vm43, %v22, 0
    %v168 = vsel %vm43, %v23, 0
    %v171 = vsel %vm43, %v24, 0
    %173 = vmatprep.subr.mxu0 0.0
    %174 = vmatpush1.msra.mxu0 %v146
    %175 = vmatprep.subr.mxu0 0.0
    %176 = vmatpush1.msra.mxu0 %v148
    %177 = vmatprep.subr.mxu0 0.0
    %178 = vmatpush1.msra.mxu0 %v150
    %179 = vmatprep.subr.mxu0 0.0
    %180 = vmatpush1.msra.mxu0 %v152
    %181 = vmatprep.subr.mxu0 0.0
    %182 = vmatpush1.msra.mxu0 0.0
    %183 = vmatprep.subr.mxu0 0.0
    %184 = vmatpush1.msra.mxu0 0.0
    %185 = vmatprep.subr.mxu0 0.0
    %186 = vmatpush1.msra.mxu0 0.0
    %187 = vmatprep.subr.mxu0 0.0
    %188 = vmatpush1.msra.mxu0 0.0
    %189 = vmatprep.subr.mxu0 0.0
    %190 = vmatpush1.msra.mxu0 0.0
    %191 = vmatprep.subr.mxu0 0.0
    %192 = vmatpush1.msra.mxu0 0.0
    %193 = vmatprep.subr.mxu0 0.0
    %194 = vmatpush1.msra.mxu0 0.0
    %195 = vmatprep.subr.mxu0 0.0
    %196 = vmatpush1.msra.mxu0 0.0
    %197 = vmatprep.subr.mxu0 0.0
    %198 = vmatpush1.msra.mxu0 0.0
    %199 = vmatprep.subr.mxu0 0.0
    %200 = vmatpush1.msra.mxu0 0.0
    %201 = vmatprep.subr.mxu0 0.0
    %202 = vmatpush1.msra.mxu0 0.0
    %203 = vmatprep.subr.mxu0 0.0
    %204 = vmatpush1.msra.mxu0 0.0
    %205 = vmatprep.subr.mxu0 0.0
    %206 = vmatpush1.msra.mxu0 0.0
    %207 = vmatprep.subr.mxu0 0.0
    %208 = vmatpush1.msra.mxu0 0.0
    %209 = vmatprep.subr.mxu0 0.0
    %210 = vmatpush1.msra.mxu0 0.0
    %211 = vmatprep.subr.mxu0 0.0
    %212 = vmatpush1.msra.mxu0 0.0
    %213 = vmatprep.subr.mxu0 0.0
    %214 = vmatpush1.msra.mxu0 0.0
    %215 = vmatprep.subr.mxu0 0.0
    %216 = vmatpush1.msra.mxu0 0.0
    %217 = vmatprep.subr.mxu0 0.0
    %218 = vmatpush1.msra.mxu0 0.0
    %219 = vmatprep.subr.mxu0 0.0
    %220 = vmatpush1.msra.mxu0 0.0
    %221 = vmatprep.subr.mxu0 0.0
    %222 = vmatpush1.msra.mxu0 0.0
    %223 = vmatprep.subr.mxu0 0.0
    %224 = vmatpush1.msra.mxu0 0.0
    %225 = vmatprep.subr.mxu0 0.0
    %226 = vmatpush1.msra.mxu0 0.0
    %227 = vmatprep.subr.mxu0 0.0
    %228 = vmatpush1.msra.mxu0 0.0
    %229 = vmatprep.subr.mxu0 0.0
    %230 = vmatpush1.msra.mxu0 0.0
    %231 = vmatprep.subr.mxu0 0.0
    %232 = vmatpush1.msra.mxu0 0.0
    %233 = vmatprep.subr.mxu0 0.0
    %234 = vmatpush1.msra.mxu0 0.0
    %235 = vmatprep.subr.mxu0 0.0
    %236 = vmatpush1.msra.mxu0 0.0
    %237 = vmatprep.mubr.f32.mxu0 0.0
    %238 = vmatmul.mubr.f32.gmra.mrb[0].mxu0 %v162
    %v239 = vpop.f32.mrb[0].mxu0
    %v240 = vadd.f32 %v159, %v239
    %v241 = vpop.f32.mrb[0].mxu0
    %242 = vmatprep.mubr.f32.mxu0 0.0
    %243 = vmatmul.mubr.f32.gmra.mrb[0].mxu0 %v165
    %v244 = vpop.f32.mrb[0].mxu0
    %v245 = vadd.f32 %v159, %v244
    %v246 = vpop.f32.mrb[0].mxu0
    %247 = vmatprep.mubr.f32.mxu0 0.0
    %248 = vmatmul.mubr.f32.gmra.mrb[0].mxu0 %v168
    %v249 = vpop.f32.mrb[0].mxu0
    %v250 = vadd.f32 %v159, %v249
    %v251 = vpop.f32.mrb[0].mxu0
    %252 = vmatprep.mubr.f32.mxu0 0.0
    %253 = vmatmul.mubr.f32.gmra.mrb[0].mxu0 %v171
    %v254 = vpop.f32.mrb[0].mxu0
    %v255 = vadd.f32 %v159, %v254
    %v256 = vpop.f32.mrb[0].mxu0
    %257 = vdwg.mxu0
    %v258 = vld [vmem:[%s3] sm:$0xff]
    %v259 = vld [vmem:[%s3 + $0x8] sm:$0xff]
    %v260 = vld [vmem:[%s3 + $0x10] sm:$0xff]
    %v261 = vld [vmem:[%s3 + $0x18] sm:$0xff]
    %v262 = vld [vmem:[%s3 + $0x20] sm:$0x1]
    %265 = vrot.lane.b32.xlu0 %v123, 96
    %v266 = vpop.permute.xlu0 %265
    %267 = vrot.lane.b32.xlu0 %v128, 96
    %v268 = vpop.permute.xlu0 %267
    %vm269 = vcmask 64512
    %v270 = vsel %vm269, %v123, 0
    %v272 = vsel %vm269, %v128, 0
    %v274 = vsel %vm269, %v266, 0
    %v276 = vsel %vm269, %v268, 0
    %278 = vmatprep.subr.mxu0 0.0
    %279 = vmatpush1.xpose.msra.mxu0 %v274
    %280 = vmatprep.subr.mxu0 0.0
    %281 = vmatpush1.xpose.msra.mxu0 %v276
    %282 = vmatprep.subr.mxu0 0.0
    %283 = vmatpush1.xpose.msra.mxu0 0.0
    %284 = vmatprep.subr.mxu0 0.0
    %285 = vmatpush1.xpose.msra.mxu0 0.0
    %286 = vmatprep.subr.mxu0 0.0
    %287 = vmatpush1.xpose.msra.mxu0 0.0
    %288 = vmatprep.subr.mxu0 0.0
    %289 = vmatpush1.xpose.msra.mxu0 0.0
    %290 = vmatprep.subr.mxu0 0.0
    %291 = vmatpush1.xpose.msra.mxu0 0.0
    %292 = vmatprep.subr.mxu0 0.0
    %293 = vmatpush1.xpose.msra.mxu0 0.0
    %294 = vmatprep.subr.mxu0 0.0
    %295 = vmatpush1.xpose.msra.mxu0 0.0
    %296 = vmatprep.subr.mxu0 0.0
    %297 = vmatpush1.xpose.msra.mxu0 0.0
    %298 = vmatprep.subr.mxu0 0.0
    %299 = vmatpush1.xpose.msra.mxu0 0.0
    %300 = vmatprep.subr.mxu0 0.0
    %301 = vmatpush1.xpose.msra.mxu0 0.0
    %302 = vmatprep.subr.mxu0 0.0
    %303 = vmatpush1.xpose.msra.mxu0 0.0
    %304 = vmatprep.subr.mxu0 0.0
    %305 = vmatpush1.xpose.msra.mxu0 0.0
    %306 = vmatprep.subr.mxu0 0.0
    %307 = vmatpush1.xpose.msra.mxu0 0.0
    %308 = vmatprep.subr.mxu0 0.0
    %309 = vmatpush1.xpose.msra.mxu0 0.0
    %310 = vmatprep.subr.mxu0 0.0
    %311 = vmatpush1.xpose.msra.mxu0 0.0
    %312 = vmatprep.subr.mxu0 0.0
    %313 = vmatpush1.xpose.msra.mxu0 0.0
    %314 = vmatprep.subr.mxu0 0.0
    %315 = vmatpush1.xpose.msra.mxu0 0.0
    %316 = vmatprep.subr.mxu0 0.0
    %317 = vmatpush1.xpose.msra.mxu0 0.0
    %318 = vmatprep.subr.mxu0 0.0
    %319 = vmatpush1.xpose.msra.mxu0 0.0
    %320 = vmatprep.subr.mxu0 0.0
    %321 = vmatpush1.xpose.msra.mxu0 0.0
    %322 = vmatprep.subr.mxu0 0.0
    %323 = vmatpush1.xpose.msra.mxu0 0.0
    %324 = vmatprep.subr.mxu0 0.0
    %325 = vmatpush1.xpose.msra.mxu0 0.0
    %326 = vmatprep.subr.mxu0 0.0
    %327 = vmatpush1.xpose.msra.mxu0 0.0
    %328 = vmatprep.subr.mxu0 0.0
    %329 = vmatpush1.xpose.msra.mxu0 0.0
    %330 = vmatprep.subr.mxu0 0.0
    %331 = vmatpush1.xpose.msra.mxu0 0.0
    %332 = vmatprep.subr.mxu0 0.0
    %333 = vmatpush1.xpose.msra.mxu0 0.0
    %334 = vmatprep.subr.mxu0 0.0
    %335 = vmatpush1.xpose.msra.mxu0 0.0
    %336 = vmatprep.subr.mxu0 0.0
    %337 = vmatpush1.xpose.msra.mxu0 0.0
    %338 = vmatprep.subr.mxu0 0.0
    %339 = vmatpush1.xpose.msra.mxu0 0.0
    %340 = vmatprep.subr.mxu0 0.0
    %341 = vmatpush1.xpose.msra.mxu0 0.0
    %342 = vmatprep.mubr.f32.mxu0 0.0
    %343 = vmatmul.mubr.f32.gmra.mrb[0].mxu0 %v270
    %v344 = vpop.f32.mrb[0].mxu0
    %v345 = vadd.f32 0.0, %v344
    %v346 = vpop.f32.mrb[0].mxu0
    %347 = vmatprep.mubr.f32.mxu0 0.0
    %348 = vmatmul.mubr.f32.gmra.mrb[0].mxu0 %v272
    %v349 = vpop.f32.mrb[0].mxu0
    %v350 = vadd.f32 0.0, %v349
    %v351 = vpop.f32.mrb[0].mxu0
    %352 = vdwg.mxu0
    %355 = vrot.lane.b32.xlu0 %v133, 96
    %v356 = vpop.permute.xlu0 %355
    %357 = vrot.lane.b32.xlu0 %v138, 96
    %v358 = vpop.permute.xlu0 %357
    %v359 = vsel %vm269, %v133, 0
    %v361 = vsel %vm269, %v138, 0
    %v363 = vsel %vm269, %v356, 0
    %v365 = vsel %vm269, %v358, 0
    %367 = vmatprep.subr.mxu0 0.0
    %368 = vmatpush1.xpose.msra.mxu0 %v363
    %369 = vmatprep.subr.mxu0 0.0
    %370 = vmatpush1.xpose.msra.mxu0 %v365
    %371 = vmatprep.subr.mxu0 0.0
    %372 = vmatpush1.xpose.msra.mxu0 0.0
    %373 = vmatprep.subr.mxu0 0.0
    %374 = vmatpush1.xpose.msra.mxu0 0.0
    %375 = vmatprep.subr.mxu0 0.0
    %376 = vmatpush1.xpose.msra.mxu0 0.0
    %377 = vmatprep.subr.mxu0 0.0
    %378 = vmatpush1.xpose.msra.mxu0 0.0
    %379 = vmatprep.subr.mxu0 0.0
    %380 = vmatpush1.xpose.msra.mxu0 0.0
    %381 = vmatprep.subr.mxu0 0.0
    %382 = vmatpush1.xpose.msra.mxu0 0.0
    %383 = vmatprep.subr.mxu0 0.0
    %384 = vmatpush1.xpose.msra.mxu0 0.0
    %385 = vmatprep.subr.mxu0 0.0
    %386 = vmatpush1.xpose.msra.mxu0 0.0
    %387 = vmatprep.subr.mxu0 0.0
    %388 = vmatpush1.xpose.msra.mxu0 0.0
    %389 = vmatprep.subr.mxu0 0.0
    %390 = vmatpush1.xpose.msra.mxu0 0.0
    %391 = vmatprep.subr.mxu0 0.0
    %392 = vmatpush1.xpose.msra.mxu0 0.0
    %393 = vmatprep.subr.mxu0 0.0
    %394 = vmatpush1.xpose.msra.mxu0 0.0
    %395 = vmatprep.subr.mxu0 0.0
    %396 = vmatpush1.xpose.msra.mxu0 0.0
    %397 = vmatprep.subr.mxu0 0.0
    %398 = vmatpush1.xpose.msra.mxu0 0.0
    %399 = vmatprep.subr.mxu0 0.0
    %400 = vmatpush1.xpose.msra.mxu0 0.0
    %401 = vmatprep.subr.mxu0 0.0
    %402 = vmatpush1.xpose.msra.mxu0 0.0
    %403 = vmatprep.subr.mxu0 0.0
    %404 = vmatpush1.xpose.msra.mxu0 0.0
    %405 = vmatprep.subr.mxu0 0.0
    %406 = vmatpush1.xpose.msra.mxu0 0.0
    %407 = vmatprep.subr.mxu0 0.0
    %408 = vmatpush1.xpose.msra.mxu0 0.0
    %409 = vmatprep.subr.mxu0 0.0
    %410 = vmatpush1.xpose.msra.mxu0 0.0
    %411 = vmatprep.subr.mxu0 0.0
    %412 = vmatpush1.xpose.msra.mxu0 0.0
    %413 = vmatprep.subr.mxu0 0.0
    %414 = vmatpush1.xpose.msra.mxu0 0.0
    %415 = vmatprep.subr.mxu0 0.0
    %416 = vmatpush1.xpose.msra.mxu0 0.0
    %417 = vmatprep.subr.mxu0 0.0
    %418 = vmatpush1.xpose.msra.mxu0 0.0
    %419 = vmatprep.subr.mxu0 0.0
    %420 = vmatpush1.xpose.msra.mxu0 0.0
    %421 = vmatprep.subr.mxu0 0.0
    %422 = vmatpush1.xpose.msra.mxu0 0.0
    %423 = vmatprep.subr.mxu0 0.0
    %424 = vmatpush1.xpose.msra.mxu0 0.0
    %425 = vmatprep.subr.mxu0 0.0
    %426 = vmatpush1.xpose.msra.mxu0 0.0
    %427 = vmatprep.subr.mxu0 0.0
    %428 = vmatpush1.xpose.msra.mxu0 0.0
    %429 = vmatprep.subr.mxu0 0.0
    %430 = vmatpush1.xpose.msra.mxu0 0.0
    %431 = vmatprep.mubr.f32.mxu0 0.0
    %432 = vmatmul.mubr.f32.gmra.mrb[0].mxu0 %v359
    %v433 = vpop.f32.mrb[0].mxu0
    %v434 = vadd.f32 0.0, %v433
    %v435 = vpop.f32.mrb[0].mxu0
    %436 = vmatprep.mubr.f32.mxu0 0.0
    %437 = vmatmul.mubr.f32.gmra.mrb[0].mxu0 %v361
    %v438 = vpop.f32.mrb[0].mxu0
    %v439 = vadd.f32 0.0, %v438
    %v440 = vpop.f32.mrb[0].mxu0
    %441 = vdwg.mxu0
    %442 = vrot.lane.b32.xlu0 %v123, 120
    %v443 = vpop.permute.xlu0 %442
    %444 = vrot.lane.b32.xlu0 %v128, 120
    %v445 = vpop.permute.xlu0 %444
    %446 = vrot.lane.b32.xlu0 %v123, 88
    %v447 = vpop.permute.xlu0 %446
    %448 = vrot.lane.b32.xlu0 %v128, 88
    %v449 = vpop.permute.xlu0 %448
    %v450 = vsel %vm269, %v443, 0
    %v452 = vsel %vm269, %v445, 0
    %v454 = vsel %vm269, %v447, 0
    %v456 = vsel %vm269, %v449, 0
    %458 = vmatprep.subr.mxu0 0.0
    %459 = vmatpush1.xpose.msra.mxu0 %v454
    %460 = vmatprep.subr.mxu0 0.0
    %461 = vmatpush1.xpose.msra.mxu0 %v456
    %462 = vmatprep.subr.mxu0 0.0
    %463 = vmatpush1.xpose.msra.mxu0 0.0
    %464 = vmatprep.subr.mxu0 0.0
    %465 = vmatpush1.xpose.msra.mxu0 0.0
    %466 = vmatprep.subr.mxu0 0.0
    %467 = vmatpush1.xpose.msra.mxu0 0.0
    %468 = vmatprep.subr.mxu0 0.0
    %469 = vmatpush1.xpose.msra.mxu0 0.0
    %470 = vmatprep.subr.mxu0 0.0
    %471 = vmatpush1.xpose.msra.mxu0 0.0
    %472 = vmatprep.subr.mxu0 0.0
    %473 = vmatpush1.xpose.msra.mxu0 0.0
    %474 = vmatprep.subr.mxu0 0.0
    %475 = vmatpush1.xpose.msra.mxu0 0.0
    %476 = vmatprep.subr.mxu0 0.0
    %477 = vmatpush1.xpose.msra.mxu0 0.0
    %478 = vmatprep.subr.mxu0 0.0
    %479 = vmatpush1.xpose.msra.mxu0 0.0
    %480 = vmatprep.subr.mxu0 0.0
    %481 = vmatpush1.xpose.msra.mxu0 0.0
    %482 = vmatprep.subr.mxu0 0.0
    %483 = vmatpush1.xpose.msra.mxu0 0.0
    %484 = vmatprep.subr.mxu0 0.0
    %485 = vmatpush1.xpose.msra.mxu0 0.0
    %486 = vmatprep.subr.mxu0 0.0
    %487 = vmatpush1.xpose.msra.mxu0 0.0
    %488 = vmatprep.subr.mxu0 0.0
    %489 = vmatpush1.xpose.msra.mxu0 0.0
    %490 = vmatprep.subr.mxu0 0.0
    %491 = vmatpush1.xpose.msra.mxu0 0.0
    %492 = vmatprep.subr.mxu0 0.0
    %493 = vmatpush1.xpose.msra.mxu0 0.0
    %494 = vmatprep.subr.mxu0 0.0
    %495 = vmatpush1.xpose.msra.mxu0 0.0
    %496 = vmatprep.subr.mxu0 0.0
    %497 = vmatpush1.xpose.msra.mxu0 0.0
    %498 = vmatprep.subr.mxu0 0.0
    %499 = vmatpush1.xpose.msra.mxu0 0.0
    %500 = vmatprep.subr.mxu0 0.0
    %501 = vmatpush1.xpose.msra.mxu0 0.0
    %502 = vmatprep.subr.mxu0 0.0
    %503 = vmatpush1.xpose.msra.mxu0 0.0
    %504 = vmatprep.subr.mxu0 0.0
    %505 = vmatpush1.xpose.msra.mxu0 0.0
    %506 = vmatprep.subr.mxu0 0.0
    %507 = vmatpush1.xpose.msra.mxu0 0.0
    %508 = vmatprep.subr.mxu0 0.0
    %509 = vmatpush1.xpose.msra.mxu0 0.0
    %510 = vmatprep.subr.mxu0 0.0
    %511 = vmatpush1.xpose.msra.mxu0 0.0
    %512 = vmatprep.subr.mxu0 0.0
    %513 = vmatpush1.xpose.msra.mxu0 0.0
    %514 = vmatprep.subr.mxu0 0.0
    %515 = vmatpush1.xpose.msra.mxu0 0.0
    %516 = vmatprep.subr.mxu0 0.0
    %517 = vmatpush1.xpose.msra.mxu0 0.0
    %518 = vmatprep.subr.mxu0 0.0
    %519 = vmatpush1.xpose.msra.mxu0 0.0
    %520 = vmatprep.subr.mxu0 0.0
    %521 = vmatpush1.xpose.msra.mxu0 0.0
    %522 = vmatprep.mubr.f32.mxu0 0.0
    %523 = vmatmul.mubr.f32.gmra.mrb[0].mxu0 %v450
    %v524 = vpop.f32.mrb[0].mxu0
    %v525 = vadd.f32 0.0, %v524
    %v526 = vpop.f32.mrb[0].mxu0
    %527 = vmatprep.mubr.f32.mxu0 0.0
    %528 = vmatmul.mubr.f32.gmra.mrb[0].mxu0 %v452
    %v529 = vpop.f32.mrb[0].mxu0
    %v530 = vadd.f32 0.0, %v529
    %v531 = vpop.f32.mrb[0].mxu0
    %532 = vdwg.mxu0
    %533 = vrot.lane.b32.xlu0 %v133, 120
    %v534 = vpop.permute.xlu0 %533
    %535 = vrot.lane.b32.xlu0 %v138, 120
    %v536 = vpop.permute.xlu0 %535
    %537 = vrot.lane.b32.xlu0 %v133, 88
    %v538 = vpop.permute.xlu0 %537
    %539 = vrot.lane.b32.xlu0 %v138, 88
    %v540 = vpop.permute.xlu0 %539
    %v541 = vsel %vm269, %v534, 0
    %v543 = vsel %vm269, %v536, 0
    %v545 = vsel %vm269, %v538, 0
    %v547 = vsel %vm269, %v540, 0
    %549 = vmatprep.subr.mxu0 0.0
    %550 = vmatpush1.xpose.msra.mxu0 %v545
    %551 = vmatprep.subr.mxu0 0.0
    %552 = vmatpush1.xpose.msra.mxu0 %v547
    %553 = vmatprep.subr.mxu0 0.0
    %554 = vmatpush1.xpose.msra.mxu0 0.0
    %555 = vmatprep.subr.mxu0 0.0
    %556 = vmatpush1.xpose.msra.mxu0 0.0
    %557 = vmatprep.subr.mxu0 0.0
    %558 = vmatpush1.xpose.msra.mxu0 0.0
    %559 = vmatprep.subr.mxu0 0.0
    %560 = vmatpush1.xpose.msra.mxu0 0.0
    %561 = vmatprep.subr.mxu0 0.0
    %562 = vmatpush1.xpose.msra.mxu0 0.0
    %563 = vmatprep.subr.mxu0 0.0
    %564 = vmatpush1.xpose.msra.mxu0 0.0
    %565 = vmatprep.subr.mxu0 0.0
    %566 = vmatpush1.xpose.msra.mxu0 0.0
    %567 = vmatprep.subr.mxu0 0.0
    %568 = vmatpush1.xpose.msra.mxu0 0.0
    %569 = vmatprep.subr.mxu0 0.0
    %570 = vmatpush1.xpose.msra.mxu0 0.0
    %571 = vmatprep.subr.mxu0 0.0
    %572 = vmatpush1.xpose.msra.mxu0 0.0
    %573 = vmatprep.subr.mxu0 0.0
    %574 = vmatpush1.xpose.msra.mxu0 0.0
    %575 = vmatprep.subr.mxu0 0.0
    %576 = vmatpush1.xpose.msra.mxu0 0.0
    %577 = vmatprep.subr.mxu0 0.0
    %578 = vmatpush1.xpose.msra.mxu0 0.0
    %579 = vmatprep.subr.mxu0 0.0
    %580 = vmatpush1.xpose.msra.mxu0 0.0
    %581 = vmatprep.subr.mxu0 0.0
    %582 = vmatpush1.xpose.msra.mxu0 0.0
    %583 = vmatprep.subr.mxu0 0.0
    %584 = vmatpush1.xpose.msra.mxu0 0.0
    %585 = vmatprep.subr.mxu0 0.0
    %586 = vmatpush1.xpose.msra.mxu0 0.0
    %587 = vmatprep.subr.mxu0 0.0
    %588 = vmatpush1.xpose.msra.mxu0 0.0
    %589 = vmatprep.subr.mxu0 0.0
    %590 = vmatpush1.xpose.msra.mxu0 0.0
    %591 = vmatprep.subr.mxu0 0.0
    %592 = vmatpush1.xpose.msra.mxu0 0.0
    %593 = vmatprep.subr.mxu0 0.0
    %594 = vmatpush1.xpose.msra.mxu0 0.0
    %595 = vmatprep.subr.mxu0 0.0
    %596 = vmatpush1.xpose.msra.mxu0 0.0
    %597 = vmatprep.subr.mxu0 0.0
    %598 = vmatpush1.xpose.msra.mxu0 0.0
    %599 = vmatprep.subr.mxu0 0.0
    %600 = vmatpush1.xpose.msra.mxu0 0.0
    %601 = vmatprep.subr.mxu0 0.0
    %602 = vmatpush1.xpose.msra.mxu0 0.0
    %603 = vmatprep.subr.mxu0 0.0
    %604 = vmatpush1.xpose.msra.mxu0 0.0
    %605 = vmatprep.subr.mxu0 0.0
    %606 = vmatpush1.xpose.msra.mxu0 0.0
    %607 = vmatprep.subr.mxu0 0.0
    %608 = vmatpush1.xpose.msra.mxu0 0.0
    %609 = vmatprep.subr.mxu0 0.0
    %610 = vmatpush1.xpose.msra.mxu0 0.0
    %611 = vmatprep.subr.mxu0 0.0
    %612 = vmatpush1.xpose.msra.mxu0 0.0
    %613 = vmatprep.mubr.f32.mxu0 0.0
    %614 = vmatmul.mubr.f32.gmra.mrb[0].mxu0 %v541
    %v615 = vpop.f32.mrb[0].mxu0
    %v616 = vadd.f32 0.0, %v615
    %v617 = vpop.f32.mrb[0].mxu0
    %618 = vmatprep.mubr.f32.mxu0 0.0
    %619 = vmatmul.mubr.f32.gmra.mrb[0].mxu0 %v543
    %v620 = vpop.f32.mrb[0].mxu0
    %v621 = vadd.f32 0.0, %v620
    %v622 = vpop.f32.mrb[0].mxu0
    %623 = vdwg.mxu0
    %624 = vrot.lane.b32.xlu0 %v123, 112
    %v625 = vpop.permute.xlu0 %624
    %626 = vrot.lane.b32.xlu0 %v128, 112
    %v627 = vpop.permute.xlu0 %626
    %628 = vrot.lane.b32.xlu0 %v123, 80
    %v629 = vpop.permute.xlu0 %628
    %630 = vrot.lane.b32.xlu0 %v128, 80
    %v631 = vpop.permute.xlu0 %630
    %v632 = vsel %vm269, %v625, 0
    %v634 = vsel %vm269, %v627, 0
    %v636 = vsel %vm269, %v629, 0
    %v638 = vsel %vm269, %v631, 0
    %640 = vmatprep.subr.mxu0 0.0
    %641 = vmatpush1.xpose.msra.mxu0 %v636
    %642 = vmatprep.subr.mxu0 0.0
    %643 = vmatpush1.xpose.msra.mxu0 %v638
    %644 = vmatprep.subr.mxu0 0.0
    %645 = vmatpush1.xpose.msra.mxu0 0.0
    %646 = vmatprep.subr.mxu0 0.0
    %647 = vmatpush1.xpose.msra.mxu0 0.0
    %648 = vmatprep.subr.mxu0 0.0
    %649 = vmatpush1.xpose.msra.mxu0 0.0
    %650 = vmatprep.subr.mxu0 0.0
    %651 = vmatpush1.xpose.msra.mxu0 0.0
    %652 = vmatprep.subr.mxu0 0.0
    %653 = vmatpush1.xpose.msra.mxu0 0.0
    %654 = vmatprep.subr.mxu0 0.0
    %655 = vmatpush1.xpose.msra.mxu0 0.0
    %656 = vmatprep.subr.mxu0 0.0
    %657 = vmatpush1.xpose.msra.mxu0 0.0
    %658 = vmatprep.subr.mxu0 0.0
    %659 = vmatpush1.xpose.msra.mxu0 0.0
    %660 = vmatprep.subr.mxu0 0.0
    %661 = vmatpush1.xpose.msra.mxu0 0.0
    %662 = vmatprep.subr.mxu0 0.0
    %663 = vmatpush1.xpose.msra.mxu0 0.0
    %664 = vmatprep.subr.mxu0 0.0
    %665 = vmatpush1.xpose.msra.mxu0 0.0
    %666 = vmatprep.subr.mxu0 0.0
    %667 = vmatpush1.xpose.msra.mxu0 0.0
    %668 = vmatprep.subr.mxu0 0.0
    %669 = vmatpush1.xpose.msra.mxu0 0.0
    %670 = vmatprep.subr.mxu0 0.0
    %671 = vmatpush1.xpose.msra.mxu0 0.0
    %672 = vmatprep.subr.mxu0 0.0
    %673 = vmatpush1.xpose.msra.mxu0 0.0
    %674 = vmatprep.subr.mxu0 0.0
    %675 = vmatpush1.xpose.msra.mxu0 0.0
    %676 = vmatprep.subr.mxu0 0.0
    %677 = vmatpush1.xpose.msra.mxu0 0.0
    %678 = vmatprep.subr.mxu0 0.0
    %679 = vmatpush1.xpose.msra.mxu0 0.0
    %680 = vmatprep.subr.mxu0 0.0
    %681 = vmatpush1.xpose.msra.mxu0 0.0
    %682 = vmatprep.subr.mxu0 0.0
    %683 = vmatpush1.xpose.msra.mxu0 0.0
    %684 = vmatprep.subr.mxu0 0.0
    %685 = vmatpush1.xpose.msra.mxu0 0.0
    %686 = vmatprep.subr.mxu0 0.0
    %687 = vmatpush1.xpose.msra.mxu0 0.0
    %688 = vmatprep.subr.mxu0 0.0
    %689 = vmatpush1.xpose.msra.mxu0 0.0
    %690 = vmatprep.subr.mxu0 0.0
    %691 = vmatpush1.xpose.msra.mxu0 0.0
    %692 = vmatprep.subr.mxu0 0.0
    %693 = vmatpush1.xpose.msra.mxu0 0.0
    %694 = vmatprep.subr.mxu0 0.0
    %695 = vmatpush1.xpose.msra.mxu0 0.0
    %696 = vmatprep.subr.mxu0 0.0
    %697 = vmatpush1.xpose.msra.mxu0 0.0
    %698 = vmatprep.subr.mxu0 0.0
    %699 = vmatpush1.xpose.msra.mxu0 0.0
    %700 = vmatprep.subr.mxu0 0.0
    %701 = vmatpush1.xpose.msra.mxu0 0.0
    %702 = vmatprep.subr.mxu0 0.0
    %703 = vmatpush1.xpose.msra.mxu0 0.0
    %704 = vmatprep.mubr.f32.mxu0 0.0
    %705 = vmatmul.mubr.f32.gmra.mrb[0].mxu0 %v632
    %v706 = vpop.f32.mrb[0].mxu0
    %v707 = vadd.f32 0.0, %v706
    %v708 = vpop.f32.mrb[0].mxu0
    %709 = vmatprep.mubr.f32.mxu0 0.0
    %710 = vmatmul.mubr.f32.gmra.mrb[0].mxu0 %v634
    %v711 = vpop.f32.mrb[0].mxu0
    %v712 = vadd.f32 0.0, %v711
    %v713 = vpop.f32.mrb[0].mxu0
    %714 = vdwg.mxu0
    %715 = vrot.lane.b32.xlu0 %v133, 112
    %v716 = vpop.permute.xlu0 %715
    %717 = vrot.lane.b32.xlu0 %v138, 112
    %v718 = vpop.permute.xlu0 %717
    %719 = vrot.lane.b32.xlu0 %v133, 80
    %v720 = vpop.permute.xlu0 %719
    %721 = vrot.lane.b32.xlu0 %v138, 80
    %v722 = vpop.permute.xlu0 %721
    %v723 = vsel %vm269, %v716, 0
    %v725 = vsel %vm269, %v718, 0
    %v727 = vsel %vm269, %v720, 0
    %v729 = vsel %vm269, %v722, 0
    %731 = vmatprep.subr.mxu0 0.0
    %732 = vmatpush1.xpose.msra.mxu0 %v727
    %733 = vmatprep.subr.mxu0 0.0
    %734 = vmatpush1.xpose.msra.mxu0 %v729
    %735 = vmatprep.subr.mxu0 0.0
    %736 = vmatpush1.xpose.msra.mxu0 0.0
    %737 = vmatprep.subr.mxu0 0.0
    %738 = vmatpush1.xpose.msra.mxu0 0.0
    %739 = vmatprep.subr.mxu0 0.0
    %740 = vmatpush1.xpose.msra.mxu0 0.0
    %741 = vmatprep.subr.mxu0 0.0
    %742 = vmatpush1.xpose.msra.mxu0 0.0
    %743 = vmatprep.subr.mxu0 0.0
    %744 = vmatpush1.xpose.msra.mxu0 0.0
    %745 = vmatprep.subr.mxu0 0.0
    %746 = vmatpush1.xpose.msra.mxu0 0.0
    %747 = vmatprep.subr.mxu0 0.0
    %748 = vmatpush1.xpose.msra.mxu0 0.0
    %749 = vmatprep.subr.mxu0 0.0
    %750 = vmatpush1.xpose.msra.mxu0 0.0
    %751 = vmatprep.subr.mxu0 0.0
    %752 = vmatpush1.xpose.msra.mxu0 0.0
    %753 = vmatprep.subr.mxu0 0.0
    %754 = vmatpush1.xpose.msra.mxu0 0.0
    %755 = vmatprep.subr.mxu0 0.0
    %756 = vmatpush1.xpose.msra.mxu0 0.0
    %757 = vmatprep.subr.mxu0 0.0
    %758 = vmatpush1.xpose.msra.mxu0 0.0
    %759 = vmatprep.subr.mxu0 0.0
    %760 = vmatpush1.xpose.msra.mxu0 0.0
    %761 = vmatprep.subr.mxu0 0.0
    %762 = vmatpush1.xpose.msra.mxu0 0.0
    %763 = vmatprep.subr.mxu0 0.0
    %764 = vmatpush1.xpose.msra.mxu0 0.0
    %765 = vmatprep.subr.mxu0 0.0
    %766 = vmatpush1.xpose.msra.mxu0 0.0
    %767 = vmatprep.subr.mxu0 0.0
    %768 = vmatpush1.xpose.msra.mxu0 0.0
    %769 = vmatprep.subr.mxu0 0.0
    %770 = vmatpush1.xpose.msra.mxu0 0.0
    %771 = vmatprep.subr.mxu0 0.0
    %772 = vmatpush1.xpose.msra.mxu0 0.0
    %773 = vmatprep.subr.mxu0 0.0
    %774 = vmatpush1.xpose.msra.mxu0 0.0
    %775 = vmatprep.subr.mxu0 0.0
    %776 = vmatpush1.xpose.msra.mxu0 0.0
    %777 = vmatprep.subr.mxu0 0.0
    %778 = vmatpush1.xpose.msra.mxu0 0.0
    %779 = vmatprep.subr.mxu0 0.0
    %780 = vmatpush1.xpose.msra.mxu0 0.0
    %781 = vmatprep.subr.mxu0 0.0
    %782 = vmatpush1.xpose.msra.mxu0 0.0
    %783 = vmatprep.subr.mxu0 0.0
    %784 = vmatpush1.xpose.msra.mxu0 0.0
    %785 = vmatprep.subr.mxu0 0.0
    %786 = vmatpush1.xpose.msra.mxu0 0.0
    %787 = vmatprep.subr.mxu0 0.0
    %788 = vmatpush1.xpose.msra.mxu0 0.0
    %789 = vmatprep.subr.mxu0 0.0
    %790 = vmatpush1.xpose.msra.mxu0 0.0
    %791 = vmatprep.subr.mxu0 0.0
    %792 = vmatpush1.xpose.msra.mxu0 0.0
    %793 = vmatprep.subr.mxu0 0.0
    %794 = vmatpush1.xpose.msra.mxu0 0.0
    %795 = vmatprep.mubr.f32.mxu0 0.0
    %796 = vmatmul.mubr.f32.gmra.mrb[0].mxu0 %v723
    %v797 = vpop.f32.mrb[0].mxu0
    %v798 = vadd.f32 0.0, %v797
    %v799 = vpop.f32.mrb[0].mxu0
    %800 = vmatprep.mubr.f32.mxu0 0.0
    %801 = vmatmul.mubr.f32.gmra.mrb[0].mxu0 %v725
    %v802 = vpop.f32.mrb[0].mxu0
    %v803 = vadd.f32 0.0, %v802
    %v804 = vpop.f32.mrb[0].mxu0
    %805 = vdwg.mxu0
    %806 = vrot.lane.b32.xlu0 %v123, 104
    %v807 = vpop.permute.xlu0 %806
    %808 = vrot.lane.b32.xlu0 %v128, 104
    %v809 = vpop.permute.xlu0 %808
    %810 = vrot.lane.b32.xlu0 %v123, 72
    %v811 = vpop.permute.xlu0 %810
    %812 = vrot.lane.b32.xlu0 %v128, 72
    %v813 = vpop.permute.xlu0 %812
    %v814 = vsel %vm269, %v807, 0
    %v816 = vsel %vm269, %v809, 0
    %v818 = vsel %vm269, %v811, 0
    %v820 = vsel %vm269, %v813, 0
    %822 = vmatprep.subr.mxu0 0.0
    %823 = vmatpush1.xpose.msra.mxu0 %v818
    %824 = vmatprep.subr.mxu0 0.0
    %825 = vmatpush1.xpose.msra.mxu0 %v820
    %826 = vmatprep.subr.mxu0 0.0
    %827 = vmatpush1.xpose.msra.mxu0 0.0
    %828 = vmatprep.subr.mxu0 0.0
    %829 = vmatpush1.xpose.msra.mxu0 0.0
    %830 = vmatprep.subr.mxu0 0.0
    %831 = vmatpush1.xpose.msra.mxu0 0.0
    %832 = vmatprep.subr.mxu0 0.0
    %833 = vmatpush1.xpose.msra.mxu0 0.0
    %834 = vmatprep.subr.mxu0 0.0
    %835 = vmatpush1.xpose.msra.mxu0 0.0
    %836 = vmatprep.subr.mxu0 0.0
    %837 = vmatpush1.xpose.msra.mxu0 0.0
    %838 = vmatprep.subr.mxu0 0.0
    %839 = vmatpush1.xpose.msra.mxu0 0.0
    %840 = vmatprep.subr.mxu0 0.0
    %841 = vmatpush1.xpose.msra.mxu0 0.0
    %842 = vmatprep.subr.mxu0 0.0
    %843 = vmatpush1.xpose.msra.mxu0 0.0
    %844 = vmatprep.subr.mxu0 0.0
    %845 = vmatpush1.xpose.msra.mxu0 0.0
    %846 = vmatprep.subr.mxu0 0.0
    %847 = vmatpush1.xpose.msra.mxu0 0.0
    %848 = vmatprep.subr.mxu0 0.0
    %849 = vmatpush1.xpose.msra.mxu0 0.0
    %850 = vmatprep.subr.mxu0 0.0
    %851 = vmatpush1.xpose.msra.mxu0 0.0
    %852 = vmatprep.subr.mxu0 0.0
    %853 = vmatpush1.xpose.msra.mxu0 0.0
    %854 = vmatprep.subr.mxu0 0.0
    %855 = vmatpush1.xpose.msra.mxu0 0.0
    %856 = vmatprep.subr.mxu0 0.0
    %857 = vmatpush1.xpose.msra.mxu0 0.0
    %858 = vmatprep.subr.mxu0 0.0
    %859 = vmatpush1.xpose.msra.mxu0 0.0
    %860 = vmatprep.subr.mxu0 0.0
    %861 = vmatpush1.xpose.msra.mxu0 0.0
    %862 = vmatprep.subr.mxu0 0.0
    %863 = vmatpush1.xpose.msra.mxu0 0.0
    %864 = vmatprep.subr.mxu0 0.0
    %865 = vmatpush1.xpose.msra.mxu0 0.0
    %866 = vmatprep.subr.mxu0 0.0
    %867 = vmatpush1.xpose.msra.mxu0 0.0
    %868 = vmatprep.subr.mxu0 0.0
    %869 = vmatpush1.xpose.msra.mxu0 0.0
    %870 = vmatprep.subr.mxu0 0.0
    %871 = vmatpush1.xpose.msra.mxu0 0.0
    %872 = vmatprep.subr.mxu0 0.0
    %873 = vmatpush1.xpose.msra.mxu0 0.0
    %874 = vmatprep.subr.mxu0 0.0
    %875 = vmatpush1.xpose.msra.mxu0 0.0
    %876 = vmatprep.subr.mxu0 0.0
    %877 = vmatpush1.xpose.msra.mxu0 0.0
    %878 = vmatprep.subr.mxu0 0.0
    %879 = vmatpush1.xpose.msra.mxu0 0.0
    %880 = vmatprep.subr.mxu0 0.0
    %881 = vmatpush1.xpose.msra.mxu0 0.0
    %882 = vmatprep.subr.mxu0 0.0
    %883 = vmatpush1.xpose.msra.mxu0 0.0
    %884 = vmatprep.subr.mxu0 0.0
    %885 = vmatpush1.xpose.msra.mxu0 0.0
    %886 = vmatprep.mubr.f32.mxu0 0.0
    %887 = vmatmul.mubr.f32.gmra.mrb[0].mxu0 %v814
    %v888 = vpop.f32.mrb[0].mxu0
    %v889 = vadd.f32 0.0, %v888
    %v890 = vpop.f32.mrb[0].mxu0
    %891 = vmatprep.mubr.f32.mxu0 0.0
    %892 = vmatmul.mubr.f32.gmra.mrb[0].mxu0 %v816
    %v893 = vpop.f32.mrb[0].mxu0
    %v894 = vadd.f32 0.0, %v893
    %v895 = vpop.f32.mrb[0].mxu0
    %896 = vdwg.mxu0
    %897 = vrot.lane.b32.xlu0 %v133, 104
    %v898 = vpop.permute.xlu0 %897
    %899 = vrot.lane.b32.xlu0 %v138, 104
    %v900 = vpop.permute.xlu0 %899
    %901 = vrot.lane.b32.xlu0 %v133, 72
    %v902 = vpop.permute.xlu0 %901
    %903 = vrot.lane.b32.xlu0 %v138, 72
    %v904 = vpop.permute.xlu0 %903
    %v905 = vsel %vm269, %v898, 0
    %v907 = vsel %vm269, %v900, 0
    %v909 = vsel %vm269, %v902, 0
    %v911 = vsel %vm269, %v904, 0
    %913 = vmatprep.subr.mxu0 0.0
    %914 = vmatpush1.xpose.msra.mxu0 %v909
    %915 = vmatprep.subr.mxu0 0.0
    %916 = vmatpush1.xpose.msra.mxu0 %v911
    %917 = vmatprep.subr.mxu0 0.0
    %918 = vmatpush1.xpose.msra.mxu0 0.0
    %919 = vmatprep.subr.mxu0 0.0
    %920 = vmatpush1.xpose.msra.mxu0 0.0
    %921 = vmatprep.subr.mxu0 0.0
    %922 = vmatpush1.xpose.msra.mxu0 0.0
    %923 = vmatprep.subr.mxu0 0.0
    %924 = vmatpush1.xpose.msra.mxu0 0.0
    %925 = vmatprep.subr.mxu0 0.0
    %926 = vmatpush1.xpose.msra.mxu0 0.0
    %927 = vmatprep.subr.mxu0 0.0
    %928 = vmatpush1.xpose.msra.mxu0 0.0
    %929 = vmatprep.subr.mxu0 0.0
    %930 = vmatpush1.xpose.msra.mxu0 0.0
    %931 = vmatprep.subr.mxu0 0.0
    %932 = vmatpush1.xpose.msra.mxu0 0.0
    %933 = vmatprep.subr.mxu0 0.0
    %934 = vmatpush1.xpose.msra.mxu0 0.0
    %935 = vmatprep.subr.mxu0 0.0
    %936 = vmatpush1.xpose.msra.mxu0 0.0
    %937 = vmatprep.subr.mxu0 0.0
    %938 = vmatpush1.xpose.msra.mxu0 0.0
    %939 = vmatprep.subr.mxu0 0.0
    %940 = vmatpush1.xpose.msra.mxu0 0.0
    %941 = vmatprep.subr.mxu0 0.0
    %942 = vmatpush1.xpose.msra.mxu0 0.0
    %943 = vmatprep.subr.mxu0 0.0
    %944 = vmatpush1.xpose.msra.mxu0 0.0
    %945 = vmatprep.subr.mxu0 0.0
    %946 = vmatpush1.xpose.msra.mxu0 0.0
    %947 = vmatprep.subr.mxu0 0.0
    %948 = vmatpush1.xpose.msra.mxu0 0.0
    %949 = vmatprep.subr.mxu0 0.0
    %950 = vmatpush1.xpose.msra.mxu0 0.0
    %951 = vmatprep.subr.mxu0 0.0
    %952 = vmatpush1.xpose.msra.mxu0 0.0
    %953 = vmatprep.subr.mxu0 0.0
    %954 = vmatpush1.xpose.msra.mxu0 0.0
    %955 = vmatprep.subr.mxu0 0.0
    %956 = vmatpush1.xpose.msra.mxu0 0.0
    %957 = vmatprep.subr.mxu0 0.0
    %958 = vmatpush1.xpose.msra.mxu0 0.0
    %959 = vmatprep.subr.mxu0 0.0
    %960 = vmatpush1.xpose.msra.mxu0 0.0
    %961 = vmatprep.subr.mxu0 0.0
    %962 = vmatpush1.xpose.msra.mxu0 0.0
    %963 = vmatprep.subr.mxu0 0.0
    %964 = vmatpush1.xpose.msra.mxu0 0.0
    %965 = vmatprep.subr.mxu0 0.0
    %966 = vmatpush1.xpose.msra.mxu0 0.0
    %967 = vmatprep.subr.mxu0 0.0
    %968 = vmatpush1.xpose.msra.mxu0 0.0
    %969 = vmatprep.subr.mxu0 0.0
    %970 = vmatpush1.xpose.msra.mxu0 0.0
    %971 = vmatprep.subr.mxu0 0.0
    %972 = vmatpush1.xpose.msra.mxu0 0.0
    %973 = vmatprep.subr.mxu0 0.0
    %974 = vmatpush1.xpose.msra.mxu0 0.0
    %975 = vmatprep.subr.mxu0 0.0
    %976 = vmatpush1.xpose.msra.mxu0 0.0
    %977 = vmatprep.mubr.f32.mxu0 0.0
    %978 = vmatmul.mubr.f32.gmra.mrb[0].mxu0 %v905
    %v979 = vpop.f32.mrb[0].mxu0
    %v980 = vadd.f32 0.0, %v979
    %v981 = vpop.f32.mrb[0].mxu0
    %982 = vmatprep.mubr.f32.mxu0 0.0
    %983 = vmatmul.mubr.f32.gmra.mrb[0].mxu0 %v907
    %v984 = vpop.f32.mrb[0].mxu0
    %v985 = vadd.f32 0.0, %v984
    %v986 = vpop.f32.mrb[0].mxu0
    %987 = vdwg.mxu0
    %vm988 = vcmask 130048
    %v989 = vsel %vm988, %v345, -inf
    %990 = vmax.xlane.f32.xlu0 %v989
    %v991 = vpop.xlane.xlu0 %990
    %v992 = vsel %vm988, %v350, -inf
    %993 = vmax.xlane.f32.xlu0 %v992
    %v994 = vpop.xlane.xlu0 %993
    %v995 = vsel %vm988, %v525, -inf
    %996 = vmax.xlane.f32.xlu0 %v995
    %v997 = vpop.xlane.xlu0 %996
    %v998 = vsel %vm988, %v530, -inf
    %999 = vmax.xlane.f32.xlu0 %v998
    %v1000 = vpop.xlane.xlu0 %999
    %v1001 = vsel %vm988, %v707, -inf
    %1002 = vmax.xlane.f32.xlu0 %v1001
    %v1003 = vpop.xlane.xlu0 %1002
    %v1004 = vsel %vm988, %v712, -inf
    %1005 = vmax.xlane.f32.xlu0 %v1004
    %v1006 = vpop.xlane.xlu0 %1005
    %v1007 = vsel %vm988, %v889, -inf
    %1008 = vmax.xlane.f32.xlu0 %v1007
    %v1009 = vpop.xlane.xlu0 %1008
    %v1010 = vsel %vm988, %v894, -inf
    %1011 = vmax.xlane.f32.xlu0 %v1010
    %v1012 = vpop.xlane.xlu0 %1011
    %v1013 = vsel %vm988, %v434, -inf
    %1014 = vmax.xlane.f32.xlu0 %v1013
    %v1015 = vpop.xlane.xlu0 %1014
    %v1016 = vsel %vm988, %v439, -inf
    %1017 = vmax.xlane.f32.xlu0 %v1016
    %v1018 = vpop.xlane.xlu0 %1017
    %v1019 = vsel %vm988, %v616, -inf
    %1020 = vmax.xlane.f32.xlu0 %v1019
    %v1021 = vpop.xlane.xlu0 %1020
    %v1022 = vsel %vm988, %v621, -inf
    %1023 = vmax.xlane.f32.xlu0 %v1022
    %v1024 = vpop.xlane.xlu0 %1023
    %v1025 = vsel %vm988, %v798, -inf
    %1026 = vmax.xlane.f32.xlu0 %v1025
    %v1027 = vpop.xlane.xlu0 %1026
    %v1028 = vsel %vm988, %v803, -inf
    %1029 = vmax.xlane.f32.xlu0 %v1028
    %v1030 = vpop.xlane.xlu0 %1029
    %v1031 = vsel %vm988, %v980, -inf
    %1032 = vmax.xlane.f32.xlu0 %v1031
    %v1033 = vpop.xlane.xlu0 %1032
    %v1034 = vsel %vm988, %v985, -inf
    %1035 = vmax.xlane.f32.xlu0 %v1034
    %v1036 = vpop.xlane.xlu0 %1035
    %v1037 = vsub.f32 %v345, %v991
    %v1038 = vsub.f32 %v350, %v994
    %v1039 = vsub.f32 %v525, %v997
    %v1040 = vsub.f32 %v530, %v1000
    %v1041 = vsub.f32 %v707, %v1003
    %v1042 = vsub.f32 %v712, %v1006
    %v1043 = vsub.f32 %v889, %v1009
    %v1044 = vsub.f32 %v894, %v1012
    %v1045 = vsub.f32 %v434, %v1015
    %v1046 = vsub.f32 %v439, %v1018
    %v1047 = vsub.f32 %v616, %v1021
    %v1048 = vsub.f32 %v621, %v1024
    %v1049 = vsub.f32 %v798, %v1027
    %v1050 = vsub.f32 %v803, %v1030
    %v1051 = vsub.f32 %v980, %v1033
    %v1052 = vsub.f32 %v985, %v1036
    %v1053 = vmul.f32 %v1037, 1.442695
    %v1054 = vpow.pop %v1053
    %v1055 = vmul.f32 %v1038, 1.442695
    %v1056 = vpow.pop %v1055
    %v1057 = vmul.f32 %v1039, 1.442695
    %v1058 = vpow.pop %v1057
    %v1059 = vmul.f32 %v1040, 1.442695
    %v1060 = vpow.pop %v1059
    %v1061 = vmul.f32 %v1041, 1.442695
    %v1062 = vpow.pop %v1061
    %v1063 = vmul.f32 %v1042, 1.442695
    %v1064 = vpow.pop %v1063
    %v1065 = vmul.f32 %v1043, 1.442695
    %v1066 = vpow.pop %v1065
    %v1067 = vmul.f32 %v1044, 1.442695
    %v1068 = vpow.pop %v1067
    %v1069 = vmul.f32 %v1045, 1.442695
    %v1070 = vpow.pop %v1069
    %v1071 = vmul.f32 %v1046, 1.442695
    %v1072 = vpow.pop %v1071
    %v1073 = vmul.f32 %v1047, 1.442695
    %v1074 = vpow.pop %v1073
    %v1075 = vmul.f32 %v1048, 1.442695
    %v1076 = vpow.pop %v1075
    %v1077 = vmul.f32 %v1049, 1.442695
    %v1078 = vpow.pop %v1077
    %v1079 = vmul.f32 %v1050, 1.442695
    %v1080 = vpow.pop %v1079
    %v1081 = vmul.f32 %v1051, 1.442695
    %v1082 = vpow.pop %v1081
    %v1083 = vmul.f32 %v1052, 1.442695
    %v1084 = vpow.pop %v1083
    %v1085 = vsel %vm988, %v1054, 0.0
    %1086 = vadd.xlane.f32.xlu0 %v1085
    %v1087 = vpop.xlane.xlu0 %1086
    %v1088 = vsel %vm988, %v1056, 0.0
    %1089 = vadd.xlane.f32.xlu0 %v1088
    %v1090 = vpop.xlane.xlu0 %1089
    %v1091 = vsel %vm988, %v1058, 0.0
    %1092 = vadd.xlane.f32.xlu0 %v1091
    %v1093 = vpop.xlane.xlu0 %1092
    %v1094 = vsel %vm988, %v1060, 0.0
    %1095 = vadd.xlane.f32.xlu0 %v1094
    %v1096 = vpop.xlane.xlu0 %1095
    %v1097 = vsel %vm988, %v1062, 0.0
    %1098 = vadd.xlane.f32.xlu0 %v1097
    %v1099 = vpop.xlane.xlu0 %1098
    %v1100 = vsel %vm988, %v1064, 0.0
    %1101 = vadd.xlane.f32.xlu0 %v1100
    %v1102 = vpop.xlane.xlu0 %1101
    %v1103 = vsel %vm988, %v1066, 0.0
    %1104 = vadd.xlane.f32.xlu0 %v1103
    %v1105 = vpop.xlane.xlu0 %1104
    %v1106 = vsel %vm988, %v1068, 0.0
    %1107 = vadd.xlane.f32.xlu0 %v1106
    %v1108 = vpop.xlane.xlu0 %1107
    %v1109 = vsel %vm988, %v1070, 0.0
    %1110 = vadd.xlane.f32.xlu0 %v1109
    %v1111 = vpop.xlane.xlu0 %1110
    %v1112 = vsel %vm988, %v1072, 0.0
    %1113 = vadd.xlane.f32.xlu0 %v1112
    %v1114 = vpop.xlane.xlu0 %1113
    %v1115 = vsel %vm988, %v1074, 0.0
    %1116 = vadd.xlane.f32.xlu0 %v1115
    %v1117 = vpop.xlane.xlu0 %1116
    %v1118 = vsel %vm988, %v1076, 0.0
    %1119 = vadd.xlane.f32.xlu0 %v1118
    %v1120 = vpop.xlane.xlu0 %1119
    %v1121 = vsel %vm988, %v1078, 0.0
    %1122 = vadd.xlane.f32.xlu0 %v1121
    %v1123 = vpop.xlane.xlu0 %1122
    %v1124 = vsel %vm988, %v1080, 0.0
    %1125 = vadd.xlane.f32.xlu0 %v1124
    %v1126 = vpop.xlane.xlu0 %1125
    %v1127 = vsel %vm988, %v1082, 0.0
    %1128 = vadd.xlane.f32.xlu0 %v1127
    %v1129 = vpop.xlane.xlu0 %1128
    %v1130 = vsel %vm988, %v1084, 0.0
    %1131 = vadd.xlane.f32.xlu0 %v1130
    %v1132 = vpop.xlane.xlu0 %1131
    %v1133 = vrcp.pop %v1087
    %v1134 = vrcp.pop %v1090
    %v1135 = vrcp.pop %v1093
    %v1136 = vrcp.pop %v1096
    %v1137 = vrcp.pop %v1099
    %v1138 = vrcp.pop %v1102
    %v1139 = vrcp.pop %v1105
    %v1140 = vrcp.pop %v1108
    %v1141 = vrcp.pop %v1111
    %v1142 = vrcp.pop %v1114
    %v1143 = vrcp.pop %v1117
    %v1144 = vrcp.pop %v1120
    %v1145 = vrcp.pop %v1123
    %v1146 = vrcp.pop %v1126
    %v1147 = vrcp.pop %v1129
    %v1148 = vrcp.pop %v1132
    %v1149 = vmul.f32 %v1054, %v1133
    %v1150 = vmul.f32 %v1056, %v1134
    %v1151 = vmul.f32 %v1058, %v1135
    %v1152 = vmul.f32 %v1060, %v1136
    %v1153 = vmul.f32 %v1062, %v1137
    %v1154 = vmul.f32 %v1064, %v1138
    %v1155 = vmul.f32 %v1066, %v1139
    %v1156 = vmul.f32 %v1068, %v1140
    %v1157 = vmul.f32 %v1070, %v1141
    %v1158 = vmul.f32 %v1072, %v1142
    %v1159 = vmul.f32 %v1074, %v1143
    %v1160 = vmul.f32 %v1076, %v1144
    %v1161 = vmul.f32 %v1078, %v1145
    %v1162 = vmul.f32 %v1080, %v1146
    %v1163 = vmul.f32 %v1082, %v1147
    %v1164 = vmul.f32 %v1084, %v1148
    %v1166 = vsel %vm988, %v1149, 0
    %v1169 = vsel %vm988, %v1150, 0
    %1171 = vmatprep.subr.mxu0 0.0
    %1172 = vmatpush1.msra.mxu0 %v240
    %1173 = vmatprep.subr.mxu0 0.0
    %1174 = vmatpush1.msra.mxu0 %v245
    %1175 = vmatprep.subr.mxu0 0.0
    %1176 = vmatpush1.msra.mxu0 0.0
    %1177 = vmatprep.subr.mxu0 0.0
    %1178 = vmatpush1.msra.mxu0 0.0
    %1179 = vmatprep.subr.mxu0 0.0
    %1180 = vmatpush1.msra.mxu0 0.0
    %1181 = vmatprep.subr.mxu0 0.0
    %1182 = vmatpush1.msra.mxu0 0.0
    %1183 = vmatprep.subr.mxu0 0.0
    %1184 = vmatpush1.msra.mxu0 0.0
    %1185 = vmatprep.subr.mxu0 0.0
    %1186 = vmatpush1.msra.mxu0 0.0
    %1187 = vmatprep.subr.mxu0 0.0
    %1188 = vmatpush1.msra.mxu0 0.0
    %1189 = vmatprep.subr.mxu0 0.0
    %1190 = vmatpush1.msra.mxu0 0.0
    %1191 = vmatprep.subr.mxu0 0.0
    %1192 = vmatpush1.msra.mxu0 0.0
    %1193 = vmatprep.subr.mxu0 0.0
    %1194 = vmatpush1.msra.mxu0 0.0
    %1195 = vmatprep.subr.mxu0 0.0
    %1196 = vmatpush1.msra.mxu0 0.0
    %1197 = vmatprep.subr.mxu0 0.0
    %1198 = vmatpush1.msra.mxu0 0.0
    %1199 = vmatprep.subr.mxu0 0.0
    %1200 = vmatpush1.msra.mxu0 0.0
    %1201 = vmatprep.subr.mxu0 0.0
    %1202 = vmatpush1.msra.mxu0 0.0
    %1203 = vmatprep.subr.mxu0 0.0
    %1204 = vmatpush1.msra.mxu0 0.0
    %1205 = vmatprep.subr.mxu0 0.0
    %1206 = vmatpush1.msra.mxu0 0.0
    %1207 = vmatprep.subr.mxu0 0.0
    %1208 = vmatpush1.msra.mxu0 0.0
    %1209 = vmatprep.subr.mxu0 0.0
    %1210 = vmatpush1.msra.mxu0 0.0
    %1211 = vmatprep.subr.mxu0 0.0
    %1212 = vmatpush1.msra.mxu0 0.0
    %1213 = vmatprep.subr.mxu0 0.0
    %1214 = vmatpush1.msra.mxu0 0.0
    %1215 = vmatprep.subr.mxu0 0.0
    %1216 = vmatpush1.msra.mxu0 0.0
    %1217 = vmatprep.subr.mxu0 0.0
    %1218 = vmatpush1.msra.mxu0 0.0
    %1219 = vmatprep.subr.mxu0 0.0
    %1220 = vmatpush1.msra.mxu0 0.0
    %1221 = vmatprep.subr.mxu0 0.0
    %1222 = vmatpush1.msra.mxu0 0.0
    %1223 = vmatprep.subr.mxu0 0.0
    %1224 = vmatpush1.msra.mxu0 0.0
    %1225 = vmatprep.subr.mxu0 0.0
    %1226 = vmatpush1.msra.mxu0 0.0
    %1227 = vmatprep.subr.mxu0 0.0
    %1228 = vmatpush1.msra.mxu0 0.0
    %1229 = vmatprep.subr.mxu0 0.0
    %1230 = vmatpush1.msra.mxu0 0.0
    %1231 = vmatprep.subr.mxu0 0.0
    %1232 = vmatpush1.msra.mxu0 0.0
    %1233 = vmatprep.subr.mxu0 0.0
    %1234 = vmatpush1.msra.mxu0 0.0
    %1235 = vmatprep.mubr.f32.mxu0 0.0
    %1236 = vmatmul.mubr.f32.gmra.mrb[0].mxu0 %v1166
    %v1237 = vpop.f32.mrb[0].mxu0
    %v1238 = vadd.f32 0.0, %v1237
    %v1239 = vpop.f32.mrb[0].mxu0
    %1240 = vmatprep.mubr.f32.mxu0 0.0
    %1241 = vmatmul.mubr.f32.gmra.mrb[0].mxu0 %v1169
    %v1242 = vpop.f32.mrb[0].mxu0
    %v1243 = vadd.f32 0.0, %v1242
    %v1244 = vpop.f32.mrb[0].mxu0
    %1245 = vdwg.mxu0
    %v1247 = vsel %vm988, %v1157, 0
    %v1250 = vsel %vm988, %v1158, 0
    %1252 = vmatprep.subr.mxu0 0.0
    %1253 = vmatpush1.msra.mxu0 %v250
    %1254 = vmatprep.subr.mxu0 0.0
    %1255 = vmatpush1.msra.mxu0 %v255
    %1256 = vmatprep.subr.mxu0 0.0
    %1257 = vmatpush1.msra.mxu0 0.0
    %1258 = vmatprep.subr.mxu0 0.0
    %1259 = vmatpush1.msra.mxu0 0.0
    %1260 = vmatprep.subr.mxu0 0.0
    %1261 = vmatpush1.msra.mxu0 0.0
    %1262 = vmatprep.subr.mxu0 0.0
    %1263 = vmatpush1.msra.mxu0 0.0
    %1264 = vmatprep.subr.mxu0 0.0
    %1265 = vmatpush1.msra.mxu0 0.0
    %1266 = vmatprep.subr.mxu0 0.0
    %1267 = vmatpush1.msra.mxu0 0.0
    %1268 = vmatprep.subr.mxu0 0.0
    %1269 = vmatpush1.msra.mxu0 0.0
    %1270 = vmatprep.subr.mxu0 0.0
    %1271 = vmatpush1.msra.mxu0 0.0
    %1272 = vmatprep.subr.mxu0 0.0
    %1273 = vmatpush1.msra.mxu0 0.0
    %1274 = vmatprep.subr.mxu0 0.0
    %1275 = vmatpush1.msra.mxu0 0.0
    %1276 = vmatprep.subr.mxu0 0.0
    %1277 = vmatpush1.msra.mxu0 0.0
    %1278 = vmatprep.subr.mxu0 0.0
    %1279 = vmatpush1.msra.mxu0 0.0
    %1280 = vmatprep.subr.mxu0 0.0
    %1281 = vmatpush1.msra.mxu0 0.0
    %1282 = vmatprep.subr.mxu0 0.0
    %1283 = vmatpush1.msra.mxu0 0.0
    %1284 = vmatprep.subr.mxu0 0.0
    %1285 = vmatpush1.msra.mxu0 0.0
    %1286 = vmatprep.subr.mxu0 0.0
    %1287 = vmatpush1.msra.mxu0 0.0
    %1288 = vmatprep.subr.mxu0 0.0
    %1289 = vmatpush1.msra.mxu0 0.0
    %1290 = vmatprep.subr.mxu0 0.0
    %1291 = vmatpush1.msra.mxu0 0.0
    %1292 = vmatprep.subr.mxu0 0.0
    %1293 = vmatpush1.msra.mxu0 0.0
    %1294 = vmatprep.subr.mxu0 0.0
    %1295 = vmatpush1.msra.mxu0 0.0
    %1296 = vmatprep.subr.mxu0 0.0
    %1297 = vmatpush1.msra.mxu0 0.0
    %1298 = vmatprep.subr.mxu0 0.0
    %1299 = vmatpush1.msra.mxu0 0.0
    %1300 = vmatprep.subr.mxu0 0.0
    %1301 = vmatpush1.msra.mxu0 0.0
    %1302 = vmatprep.subr.mxu0 0.0
    %1303 = vmatpush1.msra.mxu0 0.0
    %1304 = vmatprep.subr.mxu0 0.0
    %1305 = vmatpush1.msra.mxu0 0.0
    %1306 = vmatprep.subr.mxu0 0.0
    %1307 = vmatpush1.msra.mxu0 0.0
    %1308 = vmatprep.subr.mxu0 0.0
    %1309 = vmatpush1.msra.mxu0 0.0
    %1310 = vmatprep.subr.mxu0 0.0
    %1311 = vmatpush1.msra.mxu0 0.0
    %1312 = vmatprep.subr.mxu0 0.0
    %1313 = vmatpush1.msra.mxu0 0.0
    %1314 = vmatprep.subr.mxu0 0.0
    %1315 = vmatpush1.msra.mxu0 0.0
    %1316 = vmatprep.mubr.f32.mxu0 0.0
    %1317 = vmatmul.mubr.f32.gmra.mrb[0].mxu0 %v1247
    %v1318 = vpop.f32.mrb[0].mxu0
    %v1319 = vadd.f32 0.0, %v1318
    %v1320 = vpop.f32.mrb[0].mxu0
    %1321 = vmatprep.mubr.f32.mxu0 0.0
    %1322 = vmatmul.mubr.f32.gmra.mrb[0].mxu0 %v1250
    %v1323 = vpop.f32.mrb[0].mxu0
    %v1324 = vadd.f32 0.0, %v1323
    %v1325 = vpop.f32.mrb[0].mxu0
    %1326 = vdwg.mxu0
    %v1328 = vsel %vm269, %v1238, 0
    %v1331 = vsel %vm269, %v1243, 0
    %v1334 = vsel %vm269, %v1319, 0
    %v1337 = vsel %vm269, %v1324, 0
    %1339 = vmatprep.subr.mxu0 0.0
    %1340 = vmatpush1.msra.mxu0 %v258
    %1341 = vmatprep.subr.mxu0 0.0
    %1342 = vmatpush1.msra.mxu0 0.0
    %1343 = vmatprep.subr.mxu0 0.0
    %1344 = vmatpush1.msra.mxu0 0.0
    %1345 = vmatprep.subr.mxu0 0.0
    %1346 = vmatpush1.msra.mxu0 0.0
    %1347 = vmatprep.subr.mxu0 0.0
    %1348 = vmatpush1.msra.mxu0 0.0
    %1349 = vmatprep.subr.mxu0 0.0
    %1350 = vmatpush1.msra.mxu0 0.0
    %1351 = vmatprep.subr.mxu0 0.0
    %1352 = vmatpush1.msra.mxu0 0.0
    %1353 = vmatprep.subr.mxu0 0.0
    %1354 = vmatpush1.msra.mxu0 0.0
    %1355 = vmatprep.subr.mxu0 0.0
    %1356 = vmatpush1.msra.mxu0 0.0
    %1357 = vmatprep.subr.mxu0 0.0
    %1358 = vmatpush1.msra.mxu0 0.0
    %1359 = vmatprep.subr.mxu0 0.0
    %1360 = vmatpush1.msra.mxu0 0.0
    %1361 = vmatprep.subr.mxu0 0.0
    %1362 = vmatpush1.msra.mxu0 0.0
    %1363 = vmatprep.subr.mxu0 0.0
    %1364 = vmatpush1.msra.mxu0 0.0
    %1365 = vmatprep.subr.mxu0 0.0
    %1366 = vmatpush1.msra.mxu0 0.0
    %1367 = vmatprep.subr.mxu0 0.0
    %1368 = vmatpush1.msra.mxu0 0.0
    %1369 = vmatprep.subr.mxu0 0.0
    %1370 = vmatpush1.msra.mxu0 0.0
    %1371 = vmatprep.subr.mxu0 0.0
    %1372 = vmatpush1.msra.mxu0 0.0
    %1373 = vmatprep.subr.mxu0 0.0
    %1374 = vmatpush1.msra.mxu0 0.0
    %1375 = vmatprep.subr.mxu0 0.0
    %1376 = vmatpush1.msra.mxu0 0.0
    %1377 = vmatprep.subr.mxu0 0.0
    %1378 = vmatpush1.msra.mxu0 0.0
    %1379 = vmatprep.subr.mxu0 0.0
    %1380 = vmatpush1.msra.mxu0 0.0
    %1381 = vmatprep.subr.mxu0 0.0
    %1382 = vmatpush1.msra.mxu0 0.0
    %1383 = vmatprep.subr.mxu0 0.0
    %1384 = vmatpush1.msra.mxu0 0.0
    %1385 = vmatprep.subr.mxu0 0.0
    %1386 = vmatpush1.msra.mxu0 0.0
    %1387 = vmatprep.subr.mxu0 0.0
    %1388 = vmatpush1.msra.mxu0 0.0
    %1389 = vmatprep.subr.mxu0 0.0
    %1390 = vmatpush1.msra.mxu0 0.0
    %1391 = vmatprep.subr.mxu0 0.0
    %1392 = vmatpush1.msra.mxu0 0.0
    %1393 = vmatprep.subr.mxu0 0.0
    %1394 = vmatpush1.msra.mxu0 0.0
    %1395 = vmatprep.subr.mxu0 0.0
    %1396 = vmatpush1.msra.mxu0 0.0
    %1397 = vmatprep.subr.mxu0 0.0
    %1398 = vmatpush1.msra.mxu0 0.0
    %1399 = vmatprep.subr.mxu0 0.0
    %1400 = vmatpush1.msra.mxu0 0.0
    %1401 = vmatprep.subr.mxu0 0.0
    %1402 = vmatpush1.msra.mxu0 0.0
    %1403 = vmatprep.mubr.f32.mxu0 0.0
    %1404 = vmatmul.mubr.f32.gmra.mrb[0].mxu0 %v1328
    %v1405 = vpop.f32.mrb[0].mxu0
    %v1406 = vadd.f32 0.0, %v1405
    %v1407 = vpop.f32.mrb[0].mxu0
    %1408 = vmatprep.mubr.f32.mxu0 0.0
    %1409 = vmatmul.mubr.f32.gmra.mrb[0].mxu0 %v1331
    %v1410 = vpop.f32.mrb[0].mxu0
    %v1411 = vadd.f32 0.0, %v1410
    %v1412 = vpop.f32.mrb[0].mxu0
    %1413 = vmatprep.mubr.f32.mxu0 0.0
    %1414 = vmatmul.mubr.f32.gmra.mrb[0].mxu0 %v1334
    %v1415 = vpop.f32.mrb[0].mxu0
    %v1416 = vadd.f32 0.0, %v1415
    %v1417 = vpop.f32.mrb[0].mxu0
    %1418 = vmatprep.mubr.f32.mxu0 0.0
    %1419 = vmatmul.mubr.f32.gmra.mrb[0].mxu0 %v1337
    %v1420 = vpop.f32.mrb[0].mxu0
    %v1421 = vadd.f32 0.0, %v1420
    %v1422 = vpop.f32.mrb[0].mxu0
    %1423 = vdwg.mxu0
    %v1424 = vlaneseq
    %v1425 = vshrl.u32 %v1424, 7
    %v1426 = vsub.s32 0, %v1425
    %v1427 = vrot.slane %v262, %v1426
    %v1428 = vadd.f32 %v1427, %v1406
    %v1429 = vadd.f32 %v1427, %v1411
    %v1430 = vadd.f32 %v1427, %v1416
    %v1431 = vadd.f32 %v1427, %v1421
    %1434 = vrot.lane.b32.xlu0 %v240, 120
    %v1435 = vpop.permute.xlu0 %1434
    %1436 = vrot.lane.b32.xlu0 %v245, 120
    %v1437 = vpop.permute.xlu0 %1436
    %v1441 = vsel %vm988, %v1151, 0
    %v1444 = vsel %vm988, %v1152, 0
    %1446 = vmatprep.subr.mxu0 0.0
    %1447 = vmatpush1.msra.mxu0 %v1435
    %1448 = vmatprep.subr.mxu0 0.0
    %1449 = vmatpush1.msra.mxu0 %v1437
    %1450 = vmatprep.subr.mxu0 0.0
    %1451 = vmatpush1.msra.mxu0 0.0
    %1452 = vmatprep.subr.mxu0 0.0
    %1453 = vmatpush1.msra.mxu0 0.0
    %1454 = vmatprep.subr.mxu0 0.0
    %1455 = vmatpush1.msra.mxu0 0.0
    %1456 = vmatprep.subr.mxu0 0.0
    %1457 = vmatpush1.msra.mxu0 0.0
    %1458 = vmatprep.subr.mxu0 0.0
    %1459 = vmatpush1.msra.mxu0 0.0
    %1460 = vmatprep.subr.mxu0 0.0
    %1461 = vmatpush1.msra.mxu0 0.0
    %1462 = vmatprep.subr.mxu0 0.0
    %1463 = vmatpush1.msra.mxu0 0.0
    %1464 = vmatprep.subr.mxu0 0.0
    %1465 = vmatpush1.msra.mxu0 0.0
    %1466 = vmatprep.subr.mxu0 0.0
    %1467 = vmatpush1.msra.mxu0 0.0
    %1468 = vmatprep.subr.mxu0 0.0
    %1469 = vmatpush1.msra.mxu0 0.0
    %1470 = vmatprep.subr.mxu0 0.0
    %1471 = vmatpush1.msra.mxu0 0.0
    %1472 = vmatprep.subr.mxu0 0.0
    %1473 = vmatpush1.msra.mxu0 0.0
    %1474 = vmatprep.subr.mxu0 0.0
    %1475 = vmatpush1.msra.mxu0 0.0
    %1476 = vmatprep.subr.mxu0 0.0
    %1477 = vmatpush1.msra.mxu0 0.0
    %1478 = vmatprep.subr.mxu0 0.0
    %1479 = vmatpush1.msra.mxu0 0.0
    %1480 = vmatprep.subr.mxu0 0.0
    %1481 = vmatpush1.msra.mxu0 0.0
    %1482 = vmatprep.subr.mxu0 0.0
    %1483 = vmatpush1.msra.mxu0 0.0
    %1484 = vmatprep.subr.mxu0 0.0
    %1485 = vmatpush1.msra.mxu0 0.0
    %1486 = vmatprep.subr.mxu0 0.0
    %1487 = vmatpush1.msra.mxu0 0.0
    %1488 = vmatprep.subr.mxu0 0.0
    %1489 = vmatpush1.msra.mxu0 0.0
    %1490 = vmatprep.subr.mxu0 0.0
    %1491 = vmatpush1.msra.mxu0 0.0
    %1492 = vmatprep.subr.mxu0 0.0
    %1493 = vmatpush1.msra.mxu0 0.0
    %1494 = vmatprep.subr.mxu0 0.0
    %1495 = vmatpush1.msra.mxu0 0.0
    %1496 = vmatprep.subr.mxu0 0.0
    %1497 = vmatpush1.msra.mxu0 0.0
    %1498 = vmatprep.subr.mxu0 0.0
    %1499 = vmatpush1.msra.mxu0 0.0
    %1500 = vmatprep.subr.mxu0 0.0
    %1501 = vmatpush1.msra.mxu0 0.0
    %1502 = vmatprep.subr.mxu0 0.0
    %1503 = vmatpush1.msra.mxu0 0.0
    %1504 = vmatprep.subr.mxu0 0.0
    %1505 = vmatpush1.msra.mxu0 0.0
    %1506 = vmatprep.subr.mxu0 0.0
    %1507 = vmatpush1.msra.mxu0 0.0
    %1508 = vmatprep.subr.mxu0 0.0
    %1509 = vmatpush1.msra.mxu0 0.0
    %1510 = vmatprep.mubr.f32.mxu0 0.0
    %1511 = vmatmul.mubr.f32.gmra.mrb[0].mxu0 %v1441
    %v1512 = vpop.f32.mrb[0].mxu0
    %v1513 = vadd.f32 0.0, %v1512
    %v1514 = vpop.f32.mrb[0].mxu0
    %1515 = vmatprep.mubr.f32.mxu0 0.0
    %1516 = vmatmul.mubr.f32.gmra.mrb[0].mxu0 %v1444
    %v1517 = vpop.f32.mrb[0].mxu0
    %v1518 = vadd.f32 0.0, %v1517
    %v1519 = vpop.f32.mrb[0].mxu0
    %1520 = vdwg.mxu0
    %1523 = vrot.lane.b32.xlu0 %v250, 120
    %v1524 = vpop.permute.xlu0 %1523
    %1525 = vrot.lane.b32.xlu0 %v255, 120
    %v1526 = vpop.permute.xlu0 %1525
    %v1530 = vsel %vm988, %v1159, 0
    %v1533 = vsel %vm988, %v1160, 0
    %1535 = vmatprep.subr.mxu0 0.0
    %1536 = vmatpush1.msra.mxu0 %v1524
    %1537 = vmatprep.subr.mxu0 0.0
    %1538 = vmatpush1.msra.mxu0 %v1526
    %1539 = vmatprep.subr.mxu0 0.0
    %1540 = vmatpush1.msra.mxu0 0.0
    %1541 = vmatprep.subr.mxu0 0.0
    %1542 = vmatpush1.msra.mxu0 0.0
    %1543 = vmatprep.subr.mxu0 0.0
    %1544 = vmatpush1.msra.mxu0 0.0
    %1545 = vmatprep.subr.mxu0 0.0
    %1546 = vmatpush1.msra.mxu0 0.0
    %1547 = vmatprep.subr.mxu0 0.0
    %1548 = vmatpush1.msra.mxu0 0.0
    %1549 = vmatprep.subr.mxu0 0.0
    %1550 = vmatpush1.msra.mxu0 0.0
    %1551 = vmatprep.subr.mxu0 0.0
    %1552 = vmatpush1.msra.mxu0 0.0
    %1553 = vmatprep.subr.mxu0 0.0
    %1554 = vmatpush1.msra.mxu0 0.0
    %1555 = vmatprep.subr.mxu0 0.0
    %1556 = vmatpush1.msra.mxu0 0.0
    %1557 = vmatprep.subr.mxu0 0.0
    %1558 = vmatpush1.msra.mxu0 0.0
    %1559 = vmatprep.subr.mxu0 0.0
    %1560 = vmatpush1.msra.mxu0 0.0
    %1561 = vmatprep.subr.mxu0 0.0
    %1562 = vmatpush1.msra.mxu0 0.0
    %1563 = vmatprep.subr.mxu0 0.0
    %1564 = vmatpush1.msra.mxu0 0.0
    %1565 = vmatprep.subr.mxu0 0.0
    %1566 = vmatpush1.msra.mxu0 0.0
    %1567 = vmatprep.subr.mxu0 0.0
    %1568 = vmatpush1.msra.mxu0 0.0
    %1569 = vmatprep.subr.mxu0 0.0
    %1570 = vmatpush1.msra.mxu0 0.0
    %1571 = vmatprep.subr.mxu0 0.0
    %1572 = vmatpush1.msra.mxu0 0.0
    %1573 = vmatprep.subr.mxu0 0.0
    %1574 = vmatpush1.msra.mxu0 0.0
    %1575 = vmatprep.subr.mxu0 0.0
    %1576 = vmatpush1.msra.mxu0 0.0
    %1577 = vmatprep.subr.mxu0 0.0
    %1578 = vmatpush1.msra.mxu0 0.0
    %1579 = vmatprep.subr.mxu0 0.0
    %1580 = vmatpush1.msra.mxu0 0.0
    %1581 = vmatprep.subr.mxu0 0.0
    %1582 = vmatpush1.msra.mxu0 0.0
    %1583 = vmatprep.subr.mxu0 0.0
    %1584 = vmatpush1.msra.mxu0 0.0
    %1585 = vmatprep.subr.mxu0 0.0
    %1586 = vmatpush1.msra.mxu0 0.0
    %1587 = vmatprep.subr.mxu0 0.0
    %1588 = vmatpush1.msra.mxu0 0.0
    %1589 = vmatprep.subr.mxu0 0.0
    %1590 = vmatpush1.msra.mxu0 0.0
    %1591 = vmatprep.subr.mxu0 0.0
    %1592 = vmatpush1.msra.mxu0 0.0
    %1593 = vmatprep.subr.mxu0 0.0
    %1594 = vmatpush1.msra.mxu0 0.0
    %1595 = vmatprep.subr.mxu0 0.0
    %1596 = vmatpush1.msra.mxu0 0.0
    %1597 = vmatprep.subr.mxu0 0.0
    %1598 = vmatpush1.msra.mxu0 0.0
    %1599 = vmatprep.mubr.f32.mxu0 0.0
    %1600 = vmatmul.mubr.f32.gmra.mrb[0].mxu0 %v1530
    %v1601 = vpop.f32.mrb[0].mxu0
    %v1602 = vadd.f32 0.0, %v1601
    %v1603 = vpop.f32.mrb[0].mxu0
    %1604 = vmatprep.mubr.f32.mxu0 0.0
    %1605 = vmatmul.mubr.f32.gmra.mrb[0].mxu0 %v1533
    %v1606 = vpop.f32.mrb[0].mxu0
    %v1607 = vadd.f32 0.0, %v1606
    %v1608 = vpop.f32.mrb[0].mxu0
    %1609 = vdwg.mxu0
    %v1611 = vsel %vm269, %v1513, 0
    %v1614 = vsel %vm269, %v1518, 0
    %v1617 = vsel %vm269, %v1602, 0
    %v1620 = vsel %vm269, %v1607, 0
    %1622 = vmatprep.subr.mxu0 0.0
    %1623 = vmatpush1.msra.mxu0 %v259
    %1624 = vmatprep.subr.mxu0 0.0
    %1625 = vmatpush1.msra.mxu0 0.0
    %1626 = vmatprep.subr.mxu0 0.0
    %1627 = vmatpush1.msra.mxu0 0.0
    %1628 = vmatprep.subr.mxu0 0.0
    %1629 = vmatpush1.msra.mxu0 0.0
    %1630 = vmatprep.subr.mxu0 0.0
    %1631 = vmatpush1.msra.mxu0 0.0
    %1632 = vmatprep.subr.mxu0 0.0
    %1633 = vmatpush1.msra.mxu0 0.0
    %1634 = vmatprep.subr.mxu0 0.0
    %1635 = vmatpush1.msra.mxu0 0.0
    %1636 = vmatprep.subr.mxu0 0.0
    %1637 = vmatpush1.msra.mxu0 0.0
    %1638 = vmatprep.subr.mxu0 0.0
    %1639 = vmatpush1.msra.mxu0 0.0
    %1640 = vmatprep.subr.mxu0 0.0
    %1641 = vmatpush1.msra.mxu0 0.0
    %1642 = vmatprep.subr.mxu0 0.0
    %1643 = vmatpush1.msra.mxu0 0.0
    %1644 = vmatprep.subr.mxu0 0.0
    %1645 = vmatpush1.msra.mxu0 0.0
    %1646 = vmatprep.subr.mxu0 0.0
    %1647 = vmatpush1.msra.mxu0 0.0
    %1648 = vmatprep.subr.mxu0 0.0
    %1649 = vmatpush1.msra.mxu0 0.0
    %1650 = vmatprep.subr.mxu0 0.0
    %1651 = vmatpush1.msra.mxu0 0.0
    %1652 = vmatprep.subr.mxu0 0.0
    %1653 = vmatpush1.msra.mxu0 0.0
    %1654 = vmatprep.subr.mxu0 0.0
    %1655 = vmatpush1.msra.mxu0 0.0
    %1656 = vmatprep.subr.mxu0 0.0
    %1657 = vmatpush1.msra.mxu0 0.0
    %1658 = vmatprep.subr.mxu0 0.0
    %1659 = vmatpush1.msra.mxu0 0.0
    %1660 = vmatprep.subr.mxu0 0.0
    %1661 = vmatpush1.msra.mxu0 0.0
    %1662 = vmatprep.subr.mxu0 0.0
    %1663 = vmatpush1.msra.mxu0 0.0
    %1664 = vmatprep.subr.mxu0 0.0
    %1665 = vmatpush1.msra.mxu0 0.0
    %1666 = vmatprep.subr.mxu0 0.0
    %1667 = vmatpush1.msra.mxu0 0.0
    %1668 = vmatprep.subr.mxu0 0.0
    %1669 = vmatpush1.msra.mxu0 0.0
    %1670 = vmatprep.subr.mxu0 0.0
    %1671 = vmatpush1.msra.mxu0 0.0
    %1672 = vmatprep.subr.mxu0 0.0
    %1673 = vmatpush1.msra.mxu0 0.0
    %1674 = vmatprep.subr.mxu0 0.0
    %1675 = vmatpush1.msra.mxu0 0.0
    %1676 = vmatprep.subr.mxu0 0.0
    %1677 = vmatpush1.msra.mxu0 0.0
    %1678 = vmatprep.subr.mxu0 0.0
    %1679 = vmatpush1.msra.mxu0 0.0
    %1680 = vmatprep.subr.mxu0 0.0
    %1681 = vmatpush1.msra.mxu0 0.0
    %1682 = vmatprep.subr.mxu0 0.0
    %1683 = vmatpush1.msra.mxu0 0.0
    %1684 = vmatprep.subr.mxu0 0.0
    %1685 = vmatpush1.msra.mxu0 0.0
    %1686 = vmatprep.mubr.f32.mxu0 0.0
    %1687 = vmatmul.mubr.f32.gmra.mrb[0].mxu0 %v1611
    %v1688 = vpop.f32.mrb[0].mxu0
    %v1689 = vadd.f32 0.0, %v1688
    %v1690 = vpop.f32.mrb[0].mxu0
    %1691 = vmatprep.mubr.f32.mxu0 0.0
    %1692 = vmatmul.mubr.f32.gmra.mrb[0].mxu0 %v1614
    %v1693 = vpop.f32.mrb[0].mxu0
    %v1694 = vadd.f32 0.0, %v1693
    %v1695 = vpop.f32.mrb[0].mxu0
    %1696 = vmatprep.mubr.f32.mxu0 0.0
    %1697 = vmatmul.mubr.f32.gmra.mrb[0].mxu0 %v1617
    %v1698 = vpop.f32.mrb[0].mxu0
    %v1699 = vadd.f32 0.0, %v1698
    %v1700 = vpop.f32.mrb[0].mxu0
    %1701 = vmatprep.mubr.f32.mxu0 0.0
    %1702 = vmatmul.mubr.f32.gmra.mrb[0].mxu0 %v1620
    %v1703 = vpop.f32.mrb[0].mxu0
    %v1704 = vadd.f32 0.0, %v1703
    %v1705 = vpop.f32.mrb[0].mxu0
    %1706 = vdwg.mxu0
    %v1707 = vadd.f32 %v1428, %v1689
    %v1708 = vadd.f32 %v1429, %v1694
    %v1709 = vadd.f32 %v1430, %v1699
    %v1710 = vadd.f32 %v1431, %v1704
    %1711 = vrot.lane.b32.xlu0 %v240, 112
    %v1712 = vpop.permute.xlu0 %1711
    %1713 = vrot.lane.b32.xlu0 %v245, 112
    %v1714 = vpop.permute.xlu0 %1713
    %v1718 = vsel %vm988, %v1153, 0
    %v1721 = vsel %vm988, %v1154, 0
    %1723 = vmatprep.subr.mxu0 0.0
    %1724 = vmatpush1.msra.mxu0 %v1712
    %1725 = vmatprep.subr.mxu0 0.0
    %1726 = vmatpush1.msra.mxu0 %v1714
    %1727 = vmatprep.subr.mxu0 0.0
    %1728 = vmatpush1.msra.mxu0 0.0
    %1729 = vmatprep.subr.mxu0 0.0
    %1730 = vmatpush1.msra.mxu0 0.0
    %1731 = vmatprep.subr.mxu0 0.0
    %1732 = vmatpush1.msra.mxu0 0.0
    %1733 = vmatprep.subr.mxu0 0.0
    %1734 = vmatpush1.msra.mxu0 0.0
    %1735 = vmatprep.subr.mxu0 0.0
    %1736 = vmatpush1.msra.mxu0 0.0
    %1737 = vmatprep.subr.mxu0 0.0
    %1738 = vmatpush1.msra.mxu0 0.0
    %1739 = vmatprep.subr.mxu0 0.0
    %1740 = vmatpush1.msra.mxu0 0.0
    %1741 = vmatprep.subr.mxu0 0.0
    %1742 = vmatpush1.msra.mxu0 0.0
    %1743 = vmatprep.subr.mxu0 0.0
    %1744 = vmatpush1.msra.mxu0 0.0
    %1745 = vmatprep.subr.mxu0 0.0
    %1746 = vmatpush1.msra.mxu0 0.0
    %1747 = vmatprep.subr.mxu0 0.0
    %1748 = vmatpush1.msra.mxu0 0.0
    %1749 = vmatprep.subr.mxu0 0.0
    %1750 = vmatpush1.msra.mxu0 0.0
    %1751 = vmatprep.subr.mxu0 0.0
    %1752 = vmatpush1.msra.mxu0 0.0
    %1753 = vmatprep.subr.mxu0 0.0
    %1754 = vmatpush1.msra.mxu0 0.0
    %1755 = vmatprep.subr.mxu0 0.0
    %1756 = vmatpush1.msra.mxu0 0.0
    %1757 = vmatprep.subr.mxu0 0.0
    %1758 = vmatpush1.msra.mxu0 0.0
    %1759 = vmatprep.subr.mxu0 0.0
    %1760 = vmatpush1.msra.mxu0 0.0
    %1761 = vmatprep.subr.mxu0 0.0
    %1762 = vmatpush1.msra.mxu0 0.0
    %1763 = vmatprep.subr.mxu0 0.0
    %1764 = vmatpush1.msra.mxu0 0.0
    %1765 = vmatprep.subr.mxu0 0.0
    %1766 = vmatpush1.msra.mxu0 0.0
    %1767 = vmatprep.subr.mxu0 0.0
    %1768 = vmatpush1.msra.mxu0 0.0
    %1769 = vmatprep.subr.mxu0 0.0
    %1770 = vmatpush1.msra.mxu0 0.0
    %1771 = vmatprep.subr.mxu0 0.0
    %1772 = vmatpush1.msra.mxu0 0.0
    %1773 = vmatprep.subr.mxu0 0.0
    %1774 = vmatpush1.msra.mxu0 0.0
    %1775 = vmatprep.subr.mxu0 0.0
    %1776 = vmatpush1.msra.mxu0 0.0
    %1777 = vmatprep.subr.mxu0 0.0
    %1778 = vmatpush1.msra.mxu0 0.0
    %1779 = vmatprep.subr.mxu0 0.0
    %1780 = vmatpush1.msra.mxu0 0.0
    %1781 = vmatprep.subr.mxu0 0.0
    %1782 = vmatpush1.msra.mxu0 0.0
    %1783 = vmatprep.subr.mxu0 0.0
    %1784 = vmatpush1.msra.mxu0 0.0
    %1785 = vmatprep.subr.mxu0 0.0
    %1786 = vmatpush1.msra.mxu0 0.0
    %1787 = vmatprep.mubr.f32.mxu0 0.0
    %1788 = vmatmul.mubr.f32.gmra.mrb[0].mxu0 %v1718
    %v1789 = vpop.f32.mrb[0].mxu0
    %v1790 = vadd.f32 0.0, %v1789
    %v1791 = vpop.f32.mrb[0].mxu0
    %1792 = vmatprep.mubr.f32.mxu0 0.0
    %1793 = vmatmul.mubr.f32.gmra.mrb[0].mxu0 %v1721
    %v1794 = vpop.f32.mrb[0].mxu0
    %v1795 = vadd.f32 0.0, %v1794
    %v1796 = vpop.f32.mrb[0].mxu0
    %1797 = vdwg.mxu0
    %1798 = vrot.lane.b32.xlu0 %v250, 112
    %v1799 = vpop.permute.xlu0 %1798
    %1800 = vrot.lane.b32.xlu0 %v255, 112
    %v1801 = vpop.permute.xlu0 %1800
    %v1805 = vsel %vm988, %v1161, 0
    %v1808 = vsel %vm988, %v1162, 0
    %1810 = vmatprep.subr.mxu0 0.0
    %1811 = vmatpush1.msra.mxu0 %v1799
    %1812 = vmatprep.subr.mxu0 0.0
    %1813 = vmatpush1.msra.mxu0 %v1801
    %1814 = vmatprep.subr.mxu0 0.0
    %1815 = vmatpush1.msra.mxu0 0.0
    %1816 = vmatprep.subr.mxu0 0.0
    %1817 = vmatpush1.msra.mxu0 0.0
    %1818 = vmatprep.subr.mxu0 0.0
    %1819 = vmatpush1.msra.mxu0 0.0
    %1820 = vmatprep.subr.mxu0 0.0
    %1821 = vmatpush1.msra.mxu0 0.0
    %1822 = vmatprep.subr.mxu0 0.0
    %1823 = vmatpush1.msra.mxu0 0.0
    %1824 = vmatprep.subr.mxu0 0.0
    %1825 = vmatpush1.msra.mxu0 0.0
    %1826 = vmatprep.subr.mxu0 0.0
    %1827 = vmatpush1.msra.mxu0 0.0
    %1828 = vmatprep.subr.mxu0 0.0
    %1829 = vmatpush1.msra.mxu0 0.0
    %1830 = vmatprep.subr.mxu0 0.0
    %1831 = vmatpush1.msra.mxu0 0.0
    %1832 = vmatprep.subr.mxu0 0.0
    %1833 = vmatpush1.msra.mxu0 0.0
    %1834 = vmatprep.subr.mxu0 0.0
    %1835 = vmatpush1.msra.mxu0 0.0
    %1836 = vmatprep.subr.mxu0 0.0
    %1837 = vmatpush1.msra.mxu0 0.0
    %1838 = vmatprep.subr.mxu0 0.0
    %1839 = vmatpush1.msra.mxu0 0.0
    %1840 = vmatprep.subr.mxu0 0.0
    %1841 = vmatpush1.msra.mxu0 0.0
    %1842 = vmatprep.subr.mxu0 0.0
    %1843 = vmatpush1.msra.mxu0 0.0
    %1844 = vmatprep.subr.mxu0 0.0
    %1845 = vmatpush1.msra.mxu0 0.0
    %1846 = vmatprep.subr.mxu0 0.0
    %1847 = vmatpush1.msra.mxu0 0.0
    %1848 = vmatprep.subr.mxu0 0.0
    %1849 = vmatpush1.msra.mxu0 0.0
    %1850 = vmatprep.subr.mxu0 0.0
    %1851 = vmatpush1.msra.mxu0 0.0
    %1852 = vmatprep.subr.mxu0 0.0
    %1853 = vmatpush1.msra.mxu0 0.0
    %1854 = vmatprep.subr.mxu0 0.0
    %1855 = vmatpush1.msra.mxu0 0.0
    %1856 = vmatprep.subr.mxu0 0.0
    %1857 = vmatpush1.msra.mxu0 0.0
    %1858 = vmatprep.subr.mxu0 0.0
    %1859 = vmatpush1.msra.mxu0 0.0
    %1860 = vmatprep.subr.mxu0 0.0
    %1861 = vmatpush1.msra.mxu0 0.0
    %1862 = vmatprep.subr.mxu0 0.0
    %1863 = vmatpush1.msra.mxu0 0.0
    %1864 = vmatprep.subr.mxu0 0.0
    %1865 = vmatpush1.msra.mxu0 0.0
    %1866 = vmatprep.subr.mxu0 0.0
    %1867 = vmatpush1.msra.mxu0 0.0
    %1868 = vmatprep.subr.mxu0 0.0
    %1869 = vmatpush1.msra.mxu0 0.0
    %1870 = vmatprep.subr.mxu0 0.0
    %1871 = vmatpush1.msra.mxu0 0.0
    %1872 = vmatprep.subr.mxu0 0.0
    %1873 = vmatpush1.msra.mxu0 0.0
    %1874 = vmatprep.mubr.f32.mxu0 0.0
    %1875 = vmatmul.mubr.f32.gmra.mrb[0].mxu0 %v1805
    %v1876 = vpop.f32.mrb[0].mxu0
    %v1877 = vadd.f32 0.0, %v1876
    %v1878 = vpop.f32.mrb[0].mxu0
    %1879 = vmatprep.mubr.f32.mxu0 0.0
    %1880 = vmatmul.mubr.f32.gmra.mrb[0].mxu0 %v1808
    %v1881 = vpop.f32.mrb[0].mxu0
    %v1882 = vadd.f32 0.0, %v1881
    %v1883 = vpop.f32.mrb[0].mxu0
    %1884 = vdwg.mxu0
    %v1886 = vsel %vm269, %v1790, 0
    %v1889 = vsel %vm269, %v1795, 0
    %v1892 = vsel %vm269, %v1877, 0
    %v1895 = vsel %vm269, %v1882, 0
    %1897 = vmatprep.subr.mxu0 0.0
    %1898 = vmatpush1.msra.mxu0 %v260
    %1899 = vmatprep.subr.mxu0 0.0
    %1900 = vmatpush1.msra.mxu0 0.0
    %1901 = vmatprep.subr.mxu0 0.0
    %1902 = vmatpush1.msra.mxu0 0.0
    %1903 = vmatprep.subr.mxu0 0.0
    %1904 = vmatpush1.msra.mxu0 0.0
    %1905 = vmatprep.subr.mxu0 0.0
    %1906 = vmatpush1.msra.mxu0 0.0
    %1907 = vmatprep.subr.mxu0 0.0
    %1908 = vmatpush1.msra.mxu0 0.0
    %1909 = vmatprep.subr.mxu0 0.0
    %1910 = vmatpush1.msra.mxu0 0.0
    %1911 = vmatprep.subr.mxu0 0.0
    %1912 = vmatpush1.msra.mxu0 0.0
    %1913 = vmatprep.subr.mxu0 0.0
    %1914 = vmatpush1.msra.mxu0 0.0
    %1915 = vmatprep.subr.mxu0 0.0
    %1916 = vmatpush1.msra.mxu0 0.0
    %1917 = vmatprep.subr.mxu0 0.0
    %1918 = vmatpush1.msra.mxu0 0.0
    %1919 = vmatprep.subr.mxu0 0.0
    %1920 = vmatpush1.msra.mxu0 0.0
    %1921 = vmatprep.subr.mxu0 0.0
    %1922 = vmatpush1.msra.mxu0 0.0
    %1923 = vmatprep.subr.mxu0 0.0
    %1924 = vmatpush1.msra.mxu0 0.0
    %1925 = vmatprep.subr.mxu0 0.0
    %1926 = vmatpush1.msra.mxu0 0.0
    %1927 = vmatprep.subr.mxu0 0.0
    %1928 = vmatpush1.msra.mxu0 0.0
    %1929 = vmatprep.subr.mxu0 0.0
    %1930 = vmatpush1.msra.mxu0 0.0
    %1931 = vmatprep.subr.mxu0 0.0
    %1932 = vmatpush1.msra.mxu0 0.0
    %1933 = vmatprep.subr.mxu0 0.0
    %1934 = vmatpush1.msra.mxu0 0.0
    %1935 = vmatprep.subr.mxu0 0.0
    %1936 = vmatpush1.msra.mxu0 0.0
    %1937 = vmatprep.subr.mxu0 0.0
    %1938 = vmatpush1.msra.mxu0 0.0
    %1939 = vmatprep.subr.mxu0 0.0
    %1940 = vmatpush1.msra.mxu0 0.0
    %1941 = vmatprep.subr.mxu0 0.0
    %1942 = vmatpush1.msra.mxu0 0.0
    %1943 = vmatprep.subr.mxu0 0.0
    %1944 = vmatpush1.msra.mxu0 0.0
    %1945 = vmatprep.subr.mxu0 0.0
    %1946 = vmatpush1.msra.mxu0 0.0
    %1947 = vmatprep.subr.mxu0 0.0
    %1948 = vmatpush1.msra.mxu0 0.0
    %1949 = vmatprep.subr.mxu0 0.0
    %1950 = vmatpush1.msra.mxu0 0.0
    %1951 = vmatprep.subr.mxu0 0.0
    %1952 = vmatpush1.msra.mxu0 0.0
    %1953 = vmatprep.subr.mxu0 0.0
    %1954 = vmatpush1.msra.mxu0 0.0
    %1955 = vmatprep.subr.mxu0 0.0
    %1956 = vmatpush1.msra.mxu0 0.0
    %1957 = vmatprep.subr.mxu0 0.0
    %1958 = vmatpush1.msra.mxu0 0.0
    %1959 = vmatprep.subr.mxu0 0.0
    %1960 = vmatpush1.msra.mxu0 0.0
    %1961 = vmatprep.mubr.f32.mxu0 0.0
    %1962 = vmatmul.mubr.f32.gmra.mrb[0].mxu0 %v1886
    %v1963 = vpop.f32.mrb[0].mxu0
    %v1964 = vadd.f32 0.0, %v1963
    %v1965 = vpop.f32.mrb[0].mxu0
    %1966 = vmatprep.mubr.f32.mxu0 0.0
    %1967 = vmatmul.mubr.f32.gmra.mrb[0].mxu0 %v1889
    %v1968 = vpop.f32.mrb[0].mxu0
    %v1969 = vadd.f32 0.0, %v1968
    %v1970 = vpop.f32.mrb[0].mxu0
    %1971 = vmatprep.mubr.f32.mxu0 0.0
    %1972 = vmatmul.mubr.f32.gmra.mrb[0].mxu0 %v1892
    %v1973 = vpop.f32.mrb[0].mxu0
    %v1974 = vadd.f32 0.0, %v1973
    %v1975 = vpop.f32.mrb[0].mxu0
    %1976 = vmatprep.mubr.f32.mxu0 0.0
    %1977 = vmatmul.mubr.f32.gmra.mrb[0].mxu0 %v1895
    %v1978 = vpop.f32.mrb[0].mxu0
    %v1979 = vadd.f32 0.0, %v1978
    %v1980 = vpop.f32.mrb[0].mxu0
    %1981 = vdwg.mxu0
    %v1982 = vadd.f32 %v1707, %v1964
    %v1983 = vadd.f32 %v1708, %v1969
    %v1984 = vadd.f32 %v1709, %v1974
    %v1985 = vadd.f32 %v1710, %v1979
    %1986 = vrot.lane.b32.xlu0 %v240, 104
    %v1987 = vpop.permute.xlu0 %1986
    %1988 = vrot.lane.b32.xlu0 %v245, 104
    %v1989 = vpop.permute.xlu0 %1988
    %v1993 = vsel %vm988, %v1155, 0
    %v1996 = vsel %vm988, %v1156, 0
    %1998 = vmatprep.subr.mxu0 0.0
    %1999 = vmatpush1.msra.mxu0 %v1987
    %2000 = vmatprep.subr.mxu0 0.0
    %2001 = vmatpush1.msra.mxu0 %v1989
    %2002 = vmatprep.subr.mxu0 0.0
    %2003 = vmatpush1.msra.mxu0 0.0
    %2004 = vmatprep.subr.mxu0 0.0
    %2005 = vmatpush1.msra.mxu0 0.0
    %2006 = vmatprep.subr.mxu0 0.0
    %2007 = vmatpush1.msra.mxu0 0.0
    %2008 = vmatprep.subr.mxu0 0.0
    %2009 = vmatpush1.msra.mxu0 0.0
    %2010 = vmatprep.subr.mxu0 0.0
    %2011 = vmatpush1.msra.mxu0 0.0
    %2012 = vmatprep.subr.mxu0 0.0
    %2013 = vmatpush1.msra.mxu0 0.0
    %2014 = vmatprep.subr.mxu0 0.0
    %2015 = vmatpush1.msra.mxu0 0.0
    %2016 = vmatprep.subr.mxu0 0.0
    %2017 = vmatpush1.msra.mxu0 0.0
    %2018 = vmatprep.subr.mxu0 0.0
    %2019 = vmatpush1.msra.mxu0 0.0
    %2020 = vmatprep.subr.mxu0 0.0
    %2021 = vmatpush1.msra.mxu0 0.0
    %2022 = vmatprep.subr.mxu0 0.0
    %2023 = vmatpush1.msra.mxu0 0.0
    %2024 = vmatprep.subr.mxu0 0.0
    %2025 = vmatpush1.msra.mxu0 0.0
    %2026 = vmatprep.subr.mxu0 0.0
    %2027 = vmatpush1.msra.mxu0 0.0
    %2028 = vmatprep.subr.mxu0 0.0
    %2029 = vmatpush1.msra.mxu0 0.0
    %2030 = vmatprep.subr.mxu0 0.0
    %2031 = vmatpush1.msra.mxu0 0.0
    %2032 = vmatprep.subr.mxu0 0.0
    %2033 = vmatpush1.msra.mxu0 0.0
    %2034 = vmatprep.subr.mxu0 0.0
    %2035 = vmatpush1.msra.mxu0 0.0
    %2036 = vmatprep.subr.mxu0 0.0
    %2037 = vmatpush1.msra.mxu0 0.0
    %2038 = vmatprep.subr.mxu0 0.0
    %2039 = vmatpush1.msra.mxu0 0.0
    %2040 = vmatprep.subr.mxu0 0.0
    %2041 = vmatpush1.msra.mxu0 0.0
    %2042 = vmatprep.subr.mxu0 0.0
    %2043 = vmatpush1.msra.mxu0 0.0
    %2044 = vmatprep.subr.mxu0 0.0
    %2045 = vmatpush1.msra.mxu0 0.0
    %2046 = vmatprep.subr.mxu0 0.0
    %2047 = vmatpush1.msra.mxu0 0.0
    %2048 = vmatprep.subr.mxu0 0.0
    %2049 = vmatpush1.msra.mxu0 0.0
    %2050 = vmatprep.subr.mxu0 0.0
    %2051 = vmatpush1.msra.mxu0 0.0
    %2052 = vmatprep.subr.mxu0 0.0
    %2053 = vmatpush1.msra.mxu0 0.0
    %2054 = vmatprep.subr.mxu0 0.0
    %2055 = vmatpush1.msra.mxu0 0.0
    %2056 = vmatprep.subr.mxu0 0.0
    %2057 = vmatpush1.msra.mxu0 0.0
    %2058 = vmatprep.subr.mxu0 0.0
    %2059 = vmatpush1.msra.mxu0 0.0
    %2060 = vmatprep.subr.mxu0 0.0
    %2061 = vmatpush1.msra.mxu0 0.0
    %2062 = vmatprep.mubr.f32.mxu0 0.0
    %2063 = vmatmul.mubr.f32.gmra.mrb[0].mxu0 %v1993
    %v2064 = vpop.f32.mrb[0].mxu0
    %v2065 = vadd.f32 0.0, %v2064
    %v2066 = vpop.f32.mrb[0].mxu0
    %2067 = vmatprep.mubr.f32.mxu0 0.0
    %2068 = vmatmul.mubr.f32.gmra.mrb[0].mxu0 %v1996
    %v2069 = vpop.f32.mrb[0].mxu0
    %v2070 = vadd.f32 0.0, %v2069
    %v2071 = vpop.f32.mrb[0].mxu0
    %2072 = vdwg.mxu0
    %2073 = vrot.lane.b32.xlu0 %v250, 104
    %v2074 = vpop.permute.xlu0 %2073
    %2075 = vrot.lane.b32.xlu0 %v255, 104
    %v2076 = vpop.permute.xlu0 %2075
    %v2080 = vsel %vm988, %v1163, 0
    %v2083 = vsel %vm988, %v1164, 0
    %2085 = vmatprep.subr.mxu0 0.0
    %2086 = vmatpush1.msra.mxu0 %v2074
    %2087 = vmatprep.subr.mxu0 0.0
    %2088 = vmatpush1.msra.mxu0 %v2076
    %2089 = vmatprep.subr.mxu0 0.0
    %2090 = vmatpush1.msra.mxu0 0.0
    %2091 = vmatprep.subr.mxu0 0.0
    %2092 = vmatpush1.msra.mxu0 0.0
    %2093 = vmatprep.subr.mxu0 0.0
    %2094 = vmatpush1.msra.mxu0 0.0
    %2095 = vmatprep.subr.mxu0 0.0
    %2096 = vmatpush1.msra.mxu0 0.0
    %2097 = vmatprep.subr.mxu0 0.0
    %2098 = vmatpush1.msra.mxu0 0.0
    %2099 = vmatprep.subr.mxu0 0.0
    %2100 = vmatpush1.msra.mxu0 0.0
    %2101 = vmatprep.subr.mxu0 0.0
    %2102 = vmatpush1.msra.mxu0 0.0
    %2103 = vmatprep.subr.mxu0 0.0
    %2104 = vmatpush1.msra.mxu0 0.0
    %2105 = vmatprep.subr.mxu0 0.0
    %2106 = vmatpush1.msra.mxu0 0.0
    %2107 = vmatprep.subr.mxu0 0.0
    %2108 = vmatpush1.msra.mxu0 0.0
    %2109 = vmatprep.subr.mxu0 0.0
    %2110 = vmatpush1.msra.mxu0 0.0
    %2111 = vmatprep.subr.mxu0 0.0
    %2112 = vmatpush1.msra.mxu0 0.0
    %2113 = vmatprep.subr.mxu0 0.0
    %2114 = vmatpush1.msra.mxu0 0.0
    %2115 = vmatprep.subr.mxu0 0.0
    %2116 = vmatpush1.msra.mxu0 0.0
    %2117 = vmatprep.subr.mxu0 0.0
    %2118 = vmatpush1.msra.mxu0 0.0
    %2119 = vmatprep.subr.mxu0 0.0
    %2120 = vmatpush1.msra.mxu0 0.0
    %2121 = vmatprep.subr.mxu0 0.0
    %2122 = vmatpush1.msra.mxu0 0.0
    %2123 = vmatprep.subr.mxu0 0.0
    %2124 = vmatpush1.msra.mxu0 0.0
    %2125 = vmatprep.subr.mxu0 0.0
    %2126 = vmatpush1.msra.mxu0 0.0
    %2127 = vmatprep.subr.mxu0 0.0
    %2128 = vmatpush1.msra.mxu0 0.0
    %2129 = vmatprep.subr.mxu0 0.0
    %2130 = vmatpush1.msra.mxu0 0.0
    %2131 = vmatprep.subr.mxu0 0.0
    %2132 = vmatpush1.msra.mxu0 0.0
    %2133 = vmatprep.subr.mxu0 0.0
    %2134 = vmatpush1.msra.mxu0 0.0
    %2135 = vmatprep.subr.mxu0 0.0
    %2136 = vmatpush1.msra.mxu0 0.0
    %2137 = vmatprep.subr.mxu0 0.0
    %2138 = vmatpush1.msra.mxu0 0.0
    %2139 = vmatprep.subr.mxu0 0.0
    %2140 = vmatpush1.msra.mxu0 0.0
    %2141 = vmatprep.subr.mxu0 0.0
    %2142 = vmatpush1.msra.mxu0 0.0
    %2143 = vmatprep.subr.mxu0 0.0
    %2144 = vmatpush1.msra.mxu0 0.0
    %2145 = vmatprep.subr.mxu0 0.0
    %2146 = vmatpush1.msra.mxu0 0.0
    %2147 = vmatprep.subr.mxu0 0.0
    %2148 = vmatpush1.msra.mxu0 0.0
    %2149 = vmatprep.mubr.f32.mxu0 0.0
    %2150 = vmatmul.mubr.f32.gmra.mrb[0].mxu0 %v2080
    %v2151 = vpop.f32.mrb[0].mxu0
    %v2152 = vadd.f32 0.0, %v2151
    %v2153 = vpop.f32.mrb[0].mxu0
    %2154 = vmatprep.mubr.f32.mxu0 0.0
    %2155 = vmatmul.mubr.f32.gmra.mrb[0].mxu0 %v2083
    %v2156 = vpop.f32.mrb[0].mxu0
    %v2157 = vadd.f32 0.0, %v2156
    %v2158 = vpop.f32.mrb[0].mxu0
    %2159 = vdwg.mxu0
    %v2161 = vsel %vm269, %v2065, 0
    %v2164 = vsel %vm269, %v2070, 0
    %v2167 = vsel %vm269, %v2152, 0
    %v2170 = vsel %vm269, %v2157, 0
    %2172 = vmatprep.subr.mxu0 0.0
    %2173 = vmatpush1.msra.mxu0 %v261
    %2174 = vmatprep.subr.mxu0 0.0
    %2175 = vmatpush1.msra.mxu0 0.0
    %2176 = vmatprep.subr.mxu0 0.0
    %2177 = vmatpush1.msra.mxu0 0.0
    %2178 = vmatprep.subr.mxu0 0.0
    %2179 = vmatpush1.msra.mxu0 0.0
    %2180 = vmatprep.subr.mxu0 0.0
    %2181 = vmatpush1.msra.mxu0 0.0
    %2182 = vmatprep.subr.mxu0 0.0
    %2183 = vmatpush1.msra.mxu0 0.0
    %2184 = vmatprep.subr.mxu0 0.0
    %2185 = vmatpush1.msra.mxu0 0.0
    %2186 = vmatprep.subr.mxu0 0.0
    %2187 = vmatpush1.msra.mxu0 0.0
    %2188 = vmatprep.subr.mxu0 0.0
    %2189 = vmatpush1.msra.mxu0 0.0
    %2190 = vmatprep.subr.mxu0 0.0
    %2191 = vmatpush1.msra.mxu0 0.0
    %2192 = vmatprep.subr.mxu0 0.0
    %2193 = vmatpush1.msra.mxu0 0.0
    %2194 = vmatprep.subr.mxu0 0.0
    %2195 = vmatpush1.msra.mxu0 0.0
    %2196 = vmatprep.subr.mxu0 0.0
    %2197 = vmatpush1.msra.mxu0 0.0
    %2198 = vmatprep.subr.mxu0 0.0
    %2199 = vmatpush1.msra.mxu0 0.0
    %2200 = vmatprep.subr.mxu0 0.0
    %2201 = vmatpush1.msra.mxu0 0.0
    %2202 = vmatprep.subr.mxu0 0.0
    %2203 = vmatpush1.msra.mxu0 0.0
    %2204 = vmatprep.subr.mxu0 0.0
    %2205 = vmatpush1.msra.mxu0 0.0
    %2206 = vmatprep.subr.mxu0 0.0
    %2207 = vmatpush1.msra.mxu0 0.0
    %2208 = vmatprep.subr.mxu0 0.0
    %2209 = vmatpush1.msra.mxu0 0.0
    %2210 = vmatprep.subr.mxu0 0.0
    %2211 = vmatpush1.msra.mxu0 0.0
    %2212 = vmatprep.subr.mxu0 0.0
    %2213 = vmatpush1.msra.mxu0 0.0
    %2214 = vmatprep.subr.mxu0 0.0
    %2215 = vmatpush1.msra.mxu0 0.0
    %2216 = vmatprep.subr.mxu0 0.0
    %2217 = vmatpush1.msra.mxu0 0.0
    %2218 = vmatprep.subr.mxu0 0.0
    %2219 = vmatpush1.msra.mxu0 0.0
    %2220 = vmatprep.subr.mxu0 0.0
    %2221 = vmatpush1.msra.mxu0 0.0
    %2222 = vmatprep.subr.mxu0 0.0
    %2223 = vmatpush1.msra.mxu0 0.0
    %2224 = vmatprep.subr.mxu0 0.0
    %2225 = vmatpush1.msra.mxu0 0.0
    %2226 = vmatprep.subr.mxu0 0.0
    %2227 = vmatpush1.msra.mxu0 0.0
    %2228 = vmatprep.subr.mxu0 0.0
    %2229 = vmatpush1.msra.mxu0 0.0
    %2230 = vmatprep.subr.mxu0 0.0
    %2231 = vmatpush1.msra.mxu0 0.0
    %2232 = vmatprep.subr.mxu0 0.0
    %2233 = vmatpush1.msra.mxu0 0.0
    %2234 = vmatprep.subr.mxu0 0.0
    %2235 = vmatpush1.msra.mxu0 0.0
    %2236 = vmatprep.mubr.f32.mxu0 0.0
    %2237 = vmatmul.mubr.f32.gmra.mrb[0].mxu0 %v2161
    %v2238 = vpop.f32.mrb[0].mxu0
    %v2239 = vadd.f32 0.0, %v2238
    %v2240 = vpop.f32.mrb[0].mxu0
    %2241 = vmatprep.mubr.f32.mxu0 0.0
    %2242 = vmatmul.mubr.f32.gmra.mrb[0].mxu0 %v2164
    %v2243 = vpop.f32.mrb[0].mxu0
    %v2244 = vadd.f32 0.0, %v2243
    %v2245 = vpop.f32.mrb[0].mxu0
    %2246 = vmatprep.mubr.f32.mxu0 0.0
    %2247 = vmatmul.mubr.f32.gmra.mrb[0].mxu0 %v2167
    %v2248 = vpop.f32.mrb[0].mxu0
    %v2249 = vadd.f32 0.0, %v2248
    %v2250 = vpop.f32.mrb[0].mxu0
    %2251 = vmatprep.mubr.f32.mxu0 0.0
    %2252 = vmatmul.mubr.f32.gmra.mrb[0].mxu0 %v2170
    %v2253 = vpop.f32.mrb[0].mxu0
    %v2254 = vadd.f32 0.0, %v2253
    %v2255 = vpop.f32.mrb[0].mxu0
    %2256 = vdwg.mxu0
    %v2257 = vadd.f32 %v1982, %v2239
    %v2258 = vadd.f32 %v1983, %v2244
    %v2259 = vadd.f32 %v1984, %v2249
    %v2260 = vadd.f32 %v1985, %v2254
    %v2261 = vadd.f32 %v21, %v2257
    %v2262 = vadd.f32 %v22, %v2258
    %v2263 = vadd.f32 %v23, %v2259
    %v2264 = vadd.f32 %v24, %v2260
    %v2265 = vsel %vm43, %v2261, 0.0
    %2266 = vadd.xlane.f32.xlu0 %v2265
    %v2267 = vpop.xlane.xlu0 %2266
    %v2268 = vsel %vm43, %v2262, 0.0
    %2269 = vadd.xlane.f32.xlu0 %v2268
    %v2270 = vpop.xlane.xlu0 %2269
    %v2271 = vsel %vm43, %v2263, 0.0
    %2272 = vadd.xlane.f32.xlu0 %v2271
    %v2273 = vpop.xlane.xlu0 %2272
    %v2274 = vsel %vm43, %v2264, 0.0
    %2275 = vadd.xlane.f32.xlu0 %v2274
    %v2276 = vpop.xlane.xlu0 %2275
    %v2277 = vrcp.pop 32.0
    %v2278 = vmul.f32 %v2267, %v2277
    %v2279 = vmul.f32 %v2270, %v2277
    %v2280 = vmul.f32 %v2273, %v2277
    %v2281 = vmul.f32 %v2276, %v2277
    %v2282 = vmul.f32 %v2261, %v2261
    %v2283 = vmul.f32 %v2262, %v2262
    %v2284 = vmul.f32 %v2263, %v2263
    %v2285 = vmul.f32 %v2264, %v2264
    %v2286 = vsel %vm43, %v2282, 0.0
    %2287 = vadd.xlane.f32.xlu0 %v2286
    %v2288 = vpop.xlane.xlu0 %2287
    %v2289 = vsel %vm43, %v2283, 0.0
    %2290 = vadd.xlane.f32.xlu0 %v2289
    %v2291 = vpop.xlane.xlu0 %2290
    %v2292 = vsel %vm43, %v2284, 0.0
    %2293 = vadd.xlane.f32.xlu0 %v2292
    %v2294 = vpop.xlane.xlu0 %2293
    %v2295 = vsel %vm43, %v2285, 0.0
    %2296 = vadd.xlane.f32.xlu0 %v2295
    %v2297 = vpop.xlane.xlu0 %2296
    %v2298 = vmul.f32 %v2288, %v2277
    %v2299 = vmul.f32 %v2291, %v2277
    %v2300 = vmul.f32 %v2294, %v2277
    %v2301 = vmul.f32 %v2297, %v2277
    %v2302 = vmul.f32 %v2278, %v2278
    %v2303 = vmul.f32 %v2279, %v2279
    %v2304 = vmul.f32 %v2280, %v2280
    %v2305 = vmul.f32 %v2281, %v2281
    %v2306 = vsub.f32 %v2298, %v2302
    %v2307 = vsub.f32 %v2299, %v2303
    %v2308 = vsub.f32 %v2300, %v2304
    %v2309 = vsub.f32 %v2301, %v2305
    %v2310 = vsub.f32 %v2261, %v2278
    %v2311 = vsub.f32 %v2262, %v2279
    %v2312 = vsub.f32 %v2263, %v2280
    %v2313 = vsub.f32 %v2264, %v2281
    %v2314 = vadd.f32 %v2306, 1e-05
    %v2315 = vadd.f32 %v2307, 1e-05
    %v2316 = vadd.f32 %v2308, 1e-05
    %v2317 = vadd.f32 %v2309, 1e-05
    %v2318 = vrsqrt.pop %v2314
    %v2319 = vrsqrt.pop %v2315
    %v2320 = vrsqrt.pop %v2316
    %v2321 = vrsqrt.pop %v2317
    %v2322 = vmul.f32 %v2310, %v2318
    %v2323 = vmul.f32 %v2311, %v2319
    %v2324 = vmul.f32 %v2312, %v2320
    %v2325 = vmul.f32 %v2313, %v2321
    %v2326 = vlaneseq
    %v2327 = vshrl.u32 %v2326, 7
    %v2328 = vsub.s32 0, %v2327
    %v2329 = vrot.slane %v33, %v2328
    %v2330 = vmul.f32 %v2322, %v2329
    %v2331 = vmul.f32 %v2323, %v2329
    %v2332 = vmul.f32 %v2324, %v2329
    %v2333 = vmul.f32 %v2325, %v2329
    %v2334 = vlaneseq
    %v2335 = vshrl.u32 %v2334, 7
    %v2336 = vsub.s32 1, %v2335
    %v2337 = vrot.slane %v33, %v2336
    %v2338 = vadd.f32 %v2330, %v2337
    %v2339 = vadd.f32 %v2331, %v2337
    %v2340 = vadd.f32 %v2332, %v2337
    %v2341 = vadd.f32 %v2333, %v2337
    %s2342 = scalar_lea.vmem %s2, 40
    %v2343 = vld [vmem:[%s2342] sm:$0xff]
    %v2344 = vld [vmem:[%s2342 + $0x8] sm:$0xff]
    %v2345 = vld [vmem:[%s2342 + $0x10] sm:$0xff]
    %v2346 = vld [vmem:[%s2342 + $0x18] sm:$0xff]
    %v2347 = vld [vmem:[%s2342 + $0x20] sm:$0xff]
    %v2348 = vadd.f32 %v2338, %v25
    %v2349 = vadd.f32 %v2339, %v26
    %v2350 = vadd.f32 %v2340, %v27
    %v2351 = vadd.f32 %v2341, %v28
    %v2352 = vlaneseq
    %v2353 = vshrl.u32 %v2352, 7
    %v2354 = vsub.s32 0, %v2353
    %v2355 = vrot.slane %v2347, %v2354
    %v2357 = vsel %vm43, %v2348, 0
    %v2360 = vsel %vm43, %v2349, 0
    %v2363 = vsel %vm43, %v2350, 0
    %v2366 = vsel %vm43, %v2351, 0
    %2368 = vmatprep.subr.mxu0 0.0
    %2369 = vmatpush1.msra.mxu0 %v2343
    %2370 = vmatprep.subr.mxu0 0.0
    %2371 = vmatpush1.msra.mxu0 %v2344
    %2372 = vmatprep.subr.mxu0 0.0
    %2373 = vmatpush1.msra.mxu0 %v2345
    %2374 = vmatprep.subr.mxu0 0.0
    %2375 = vmatpush1.msra.mxu0 %v2346
    %2376 = vmatprep.subr.mxu0 0.0
    %2377 = vmatpush1.msra.mxu0 0.0
    %2378 = vmatprep.subr.mxu0 0.0
    %2379 = vmatpush1.msra.mxu0 0.0
    %2380 = vmatprep.subr.mxu0 0.0
    %2381 = vmatpush1.msra.mxu0 0.0
    %2382 = vmatprep.subr.mxu0 0.0
    %2383 = vmatpush1.msra.mxu0 0.0
    %2384 = vmatprep.subr.mxu0 0.0
    %2385 = vmatpush1.msra.mxu0 0.0
    %2386 = vmatprep.subr.mxu0 0.0
    %2387 = vmatpush1.msra.mxu0 0.0
    %2388 = vmatprep.subr.mxu0 0.0
    %2389 = vmatpush1.msra.mxu0 0.0
    %2390 = vmatprep.subr.mxu0 0.0
    %2391 = vmatpush1.msra.mxu0 0.0
    %2392 = vmatprep.subr.mxu0 0.0
    %2393 = vmatpush1.msra.mxu0 0.0
    %2394 = vmatprep.subr.mxu0 0.0
    %2395 = vmatpush1.msra.mxu0 0.0
    %2396 = vmatprep.subr.mxu0 0.0
    %2397 = vmatpush1.msra.mxu0 0.0
    %2398 = vmatprep.subr.mxu0 0.0
    %2399 = vmatpush1.msra.mxu0 0.0
    %2400 = vmatprep.subr.mxu0 0.0
    %2401 = vmatpush1.msra.mxu0 0.0
    %2402 = vmatprep.subr.mxu0 0.0
    %2403 = vmatpush1.msra.mxu0 0.0
    %2404 = vmatprep.subr.mxu0 0.0
    %2405 = vmatpush1.msra.mxu0 0.0
    %2406 = vmatprep.subr.mxu0 0.0
    %2407 = vmatpush1.msra.mxu0 0.0
    %2408 = vmatprep.subr.mxu0 0.0
    %2409 = vmatpush1.msra.mxu0 0.0
    %2410 = vmatprep.subr.mxu0 0.0
    %2411 = vmatpush1.msra.mxu0 0.0
    %2412 = vmatprep.subr.mxu0 0.0
    %2413 = vmatpush1.msra.mxu0 0.0
    %2414 = vmatprep.subr.mxu0 0.0
    %2415 = vmatpush1.msra.mxu0 0.0
    %2416 = vmatprep.subr.mxu0 0.0
    %2417 = vmatpush1.msra.mxu0 0.0
    %2418 = vmatprep.subr.mxu0 0.0
    %2419 = vmatpush1.msra.mxu0 0.0
    %2420 = vmatprep.subr.mxu0 0.0
    %2421 = vmatpush1.msra.mxu0 0.0
    %2422 = vmatprep.subr.mxu0 0.0
    %2423 = vmatpush1.msra.mxu0 0.0
    %2424 = vmatprep.subr.mxu0 0.0
    %2425 = vmatpush1.msra.mxu0 0.0
    %2426 = vmatprep.subr.mxu0 0.0
    %2427 = vmatpush1.msra.mxu0 0.0
    %2428 = vmatprep.subr.mxu0 0.0
    %2429 = vmatpush1.msra.mxu0 0.0
    %2430 = vmatprep.subr.mxu0 0.0
    %2431 = vmatpush1.msra.mxu0 0.0
    %2432 = vmatprep.mubr.f32.mxu0 0.0
    %2433 = vmatmul.mubr.f32.gmra.mrb[0].mxu0 %v2357
    %v2434 = vpop.f32.mrb[0].mxu0
    %v2435 = vadd.f32 %v2355, %v2434
    %v2436 = vpop.f32.mrb[0].mxu0
    %2437 = vmatprep.mubr.f32.mxu0 0.0
    %2438 = vmatmul.mubr.f32.gmra.mrb[0].mxu0 %v2360
    %v2439 = vpop.f32.mrb[0].mxu0
    %v2440 = vadd.f32 %v2355, %v2439
    %v2441 = vpop.f32.mrb[0].mxu0
    %2442 = vmatprep.mubr.f32.mxu0 0.0
    %2443 = vmatmul.mubr.f32.gmra.mrb[0].mxu0 %v2363
    %v2444 = vpop.f32.mrb[0].mxu0
    %v2445 = vadd.f32 %v2355, %v2444
    %v2446 = vpop.f32.mrb[0].mxu0
    %2447 = vmatprep.mubr.f32.mxu0 0.0
    %2448 = vmatmul.mubr.f32.gmra.mrb[0].mxu0 %v2366
    %v2449 = vpop.f32.mrb[0].mxu0
    %v2450 = vadd.f32 %v2355, %v2449
    %v2451 = vpop.f32.mrb[0].mxu0
    %2452 = vdwg.mxu0
    %2457 = vrot.lane.b32.xlu0 %v2343, 96
    %v2458 = vpop.permute.xlu0 %2457
    %2459 = vrot.lane.b32.xlu0 %v2344, 96
    %v2460 = vpop.permute.xlu0 %2459
    %2461 = vrot.lane.b32.xlu0 %v2345, 96
    %v2462 = vpop.permute.xlu0 %2461
    %2463 = vrot.lane.b32.xlu0 %v2346, 96
    %v2464 = vpop.permute.xlu0 %2463
    %2470 = vrot.lane.b32.xlu0 %v2355, 96
    %v2471 = vpop.permute.xlu0 %2470
    %2473 = vmatprep.subr.mxu0 0.0
    %2474 = vmatpush1.msra.mxu0 %v2458
    %2475 = vmatprep.subr.mxu0 0.0
    %2476 = vmatpush1.msra.mxu0 %v2460
    %2477 = vmatprep.subr.mxu0 0.0
    %2478 = vmatpush1.msra.mxu0 %v2462
    %2479 = vmatprep.subr.mxu0 0.0
    %2480 = vmatpush1.msra.mxu0 %v2464
    %2481 = vmatprep.subr.mxu0 0.0
    %2482 = vmatpush1.msra.mxu0 0.0
    %2483 = vmatprep.subr.mxu0 0.0
    %2484 = vmatpush1.msra.mxu0 0.0
    %2485 = vmatprep.subr.mxu0 0.0
    %2486 = vmatpush1.msra.mxu0 0.0
    %2487 = vmatprep.subr.mxu0 0.0
    %2488 = vmatpush1.msra.mxu0 0.0
    %2489 = vmatprep.subr.mxu0 0.0
    %2490 = vmatpush1.msra.mxu0 0.0
    %2491 = vmatprep.subr.mxu0 0.0
    %2492 = vmatpush1.msra.mxu0 0.0
    %2493 = vmatprep.subr.mxu0 0.0
    %2494 = vmatpush1.msra.mxu0 0.0
    %2495 = vmatprep.subr.mxu0 0.0
    %2496 = vmatpush1.msra.mxu0 0.0
    %2497 = vmatprep.subr.mxu0 0.0
    %2498 = vmatpush1.msra.mxu0 0.0
    %2499 = vmatprep.subr.mxu0 0.0
    %2500 = vmatpush1.msra.mxu0 0.0
    %2501 = vmatprep.subr.mxu0 0.0
    %2502 = vmatpush1.msra.mxu0 0.0
    %2503 = vmatprep.subr.mxu0 0.0
    %2504 = vmatpush1.msra.mxu0 0.0
    %2505 = vmatprep.subr.mxu0 0.0
    %2506 = vmatpush1.msra.mxu0 0.0
    %2507 = vmatprep.subr.mxu0 0.0
    %2508 = vmatpush1.msra.mxu0 0.0
    %2509 = vmatprep.subr.mxu0 0.0
    %2510 = vmatpush1.msra.mxu0 0.0
    %2511 = vmatprep.subr.mxu0 0.0
    %2512 = vmatpush1.msra.mxu0 0.0
    %2513 = vmatprep.subr.mxu0 0.0
    %2514 = vmatpush1.msra.mxu0 0.0
    %2515 = vmatprep.subr.mxu0 0.0
    %2516 = vmatpush1.msra.mxu0 0.0
    %2517 = vmatprep.subr.mxu0 0.0
    %2518 = vmatpush1.msra.mxu0 0.0
    %2519 = vmatprep.subr.mxu0 0.0
    %2520 = vmatpush1.msra.mxu0 0.0
    %2521 = vmatprep.subr.mxu0 0.0
    %2522 = vmatpush1.msra.mxu0 0.0
    %2523 = vmatprep.subr.mxu0 0.0
    %2524 = vmatpush1.msra.mxu0 0.0
    %2525 = vmatprep.subr.mxu0 0.0
    %2526 = vmatpush1.msra.mxu0 0.0
    %2527 = vmatprep.subr.mxu0 0.0
    %2528 = vmatpush1.msra.mxu0 0.0
    %2529 = vmatprep.subr.mxu0 0.0
    %2530 = vmatpush1.msra.mxu0 0.0
    %2531 = vmatprep.subr.mxu0 0.0
    %2532 = vmatpush1.msra.mxu0 0.0
    %2533 = vmatprep.subr.mxu0 0.0
    %2534 = vmatpush1.msra.mxu0 0.0
    %2535 = vmatprep.subr.mxu0 0.0
    %2536 = vmatpush1.msra.mxu0 0.0
    %2537 = vmatprep.mubr.f32.mxu0 0.0
    %2538 = vmatmul.mubr.f32.gmra.mrb[0].mxu0 %v45
    %v2539 = vpop.f32.mrb[0].mxu0
    %v2540 = vadd.f32 %v2471, %v2539
    %v2541 = vpop.f32.mrb[0].mxu0
    %2542 = vmatprep.mubr.f32.mxu0 0.0
    %2543 = vmatmul.mubr.f32.gmra.mrb[0].mxu0 %v48
    %v2544 = vpop.f32.mrb[0].mxu0
    %v2545 = vadd.f32 %v2471, %v2544
    %v2546 = vpop.f32.mrb[0].mxu0
    %2547 = vmatprep.mubr.f32.mxu0 0.0
    %2548 = vmatmul.mubr.f32.gmra.mrb[0].mxu0 %v51
    %v2549 = vpop.f32.mrb[0].mxu0
    %v2550 = vadd.f32 %v2471, %v2549
    %v2551 = vpop.f32.mrb[0].mxu0
    %2552 = vmatprep.mubr.f32.mxu0 0.0
    %2553 = vmatmul.mubr.f32.gmra.mrb[0].mxu0 %v54
    %v2554 = vpop.f32.mrb[0].mxu0
    %v2555 = vadd.f32 %v2471, %v2554
    %v2556 = vpop.f32.mrb[0].mxu0
    %2557 = vdwg.mxu0
    %2558 = vrot.lane.b32.xlu0 %v2343, 64
    %v2559 = vpop.permute.xlu0 %2558
    %2560 = vrot.lane.b32.xlu0 %v2344, 64
    %v2561 = vpop.permute.xlu0 %2560
    %2562 = vrot.lane.b32.xlu0 %v2345, 64
    %v2563 = vpop.permute.xlu0 %2562
    %2564 = vrot.lane.b32.xlu0 %v2346, 64
    %v2565 = vpop.permute.xlu0 %2564
    %2570 = vrot.lane.b32.xlu0 %v2355, 64
    %v2571 = vpop.permute.xlu0 %2570
    %2573 = vmatprep.subr.mxu0 0.0
    %2574 = vmatpush1.msra.mxu0 %v2559
    %2575 = vmatprep.subr.mxu0 0.0
    %2576 = vmatpush1.msra.mxu0 %v2561
    %2577 = vmatprep.subr.mxu0 0.0
    %2578 = vmatpush1.msra.mxu0 %v2563
    %2579 = vmatprep.subr.mxu0 0.0
    %2580 = vmatpush1.msra.mxu0 %v2565
    %2581 = vmatprep.subr.mxu0 0.0
    %2582 = vmatpush1.msra.mxu0 0.0
    %2583 = vmatprep.subr.mxu0 0.0
    %2584 = vmatpush1.msra.mxu0 0.0
    %2585 = vmatprep.subr.mxu0 0.0
    %2586 = vmatpush1.msra.mxu0 0.0
    %2587 = vmatprep.subr.mxu0 0.0
    %2588 = vmatpush1.msra.mxu0 0.0
    %2589 = vmatprep.subr.mxu0 0.0
    %2590 = vmatpush1.msra.mxu0 0.0
    %2591 = vmatprep.subr.mxu0 0.0
    %2592 = vmatpush1.msra.mxu0 0.0
    %2593 = vmatprep.subr.mxu0 0.0
    %2594 = vmatpush1.msra.mxu0 0.0
    %2595 = vmatprep.subr.mxu0 0.0
    %2596 = vmatpush1.msra.mxu0 0.0
    %2597 = vmatprep.subr.mxu0 0.0
    %2598 = vmatpush1.msra.mxu0 0.0
    %2599 = vmatprep.subr.mxu0 0.0
    %2600 = vmatpush1.msra.mxu0 0.0
    %2601 = vmatprep.subr.mxu0 0.0
    %2602 = vmatpush1.msra.mxu0 0.0
    %2603 = vmatprep.subr.mxu0 0.0
    %2604 = vmatpush1.msra.mxu0 0.0
    %2605 = vmatprep.subr.mxu0 0.0
    %2606 = vmatpush1.msra.mxu0 0.0
    %2607 = vmatprep.subr.mxu0 0.0
    %2608 = vmatpush1.msra.mxu0 0.0
    %2609 = vmatprep.subr.mxu0 0.0
    %2610 = vmatpush1.msra.mxu0 0.0
    %2611 = vmatprep.subr.mxu0 0.0
    %2612 = vmatpush1.msra.mxu0 0.0
    %2613 = vmatprep.subr.mxu0 0.0
    %2614 = vmatpush1.msra.mxu0 0.0
    %2615 = vmatprep.subr.mxu0 0.0
    %2616 = vmatpush1.msra.mxu0 0.0
    %2617 = vmatprep.subr.mxu0 0.0
    %2618 = vmatpush1.msra.mxu0 0.0
    %2619 = vmatprep.subr.mxu0 0.0
    %2620 = vmatpush1.msra.mxu0 0.0
    %2621 = vmatprep.subr.mxu0 0.0
    %2622 = vmatpush1.msra.mxu0 0.0
    %2623 = vmatprep.subr.mxu0 0.0
    %2624 = vmatpush1.msra.mxu0 0.0
    %2625 = vmatprep.subr.mxu0 0.0
    %2626 = vmatpush1.msra.mxu0 0.0
    %2627 = vmatprep.subr.mxu0 0.0
    %2628 = vmatpush1.msra.mxu0 0.0
    %2629 = vmatprep.subr.mxu0 0.0
    %2630 = vmatpush1.msra.mxu0 0.0
    %2631 = vmatprep.subr.mxu0 0.0
    %2632 = vmatpush1.msra.mxu0 0.0
    %2633 = vmatprep.subr.mxu0 0.0
    %2634 = vmatpush1.msra.mxu0 0.0
    %2635 = vmatprep.subr.mxu0 0.0
    %2636 = vmatpush1.msra.mxu0 0.0
    %2637 = vmatprep.mubr.f32.mxu0 0.0
    %2638 = vmatmul.mubr.f32.gmra.mrb[0].mxu0 %v162
    %v2639 = vpop.f32.mrb[0].mxu0
    %v2640 = vadd.f32 %v2571, %v2639
    %v2641 = vpop.f32.mrb[0].mxu0
    %2642 = vmatprep.mubr.f32.mxu0 0.0
    %2643 = vmatmul.mubr.f32.gmra.mrb[0].mxu0 %v165
    %v2644 = vpop.f32.mrb[0].mxu0
    %v2645 = vadd.f32 %v2571, %v2644
    %v2646 = vpop.f32.mrb[0].mxu0
    %2647 = vmatprep.mubr.f32.mxu0 0.0
    %2648 = vmatmul.mubr.f32.gmra.mrb[0].mxu0 %v168
    %v2649 = vpop.f32.mrb[0].mxu0
    %v2650 = vadd.f32 %v2571, %v2649
    %v2651 = vpop.f32.mrb[0].mxu0
    %2652 = vmatprep.mubr.f32.mxu0 0.0
    %2653 = vmatmul.mubr.f32.gmra.mrb[0].mxu0 %v171
    %v2654 = vpop.f32.mrb[0].mxu0
    %v2655 = vadd.f32 %v2571, %v2654
    %v2656 = vpop.f32.mrb[0].mxu0
    %2657 = vdwg.mxu0
    %v2658 = vld [vmem:[%s3 + $0x28] sm:$0xff]
    %v2659 = vld [vmem:[%s3 + $0x30] sm:$0xff]
    %v2660 = vld [vmem:[%s3 + $0x38] sm:$0xff]
    %v2661 = vld [vmem:[%s3 + $0x40] sm:$0xff]
    %v2662 = vld [vmem:[%s3 + $0x48] sm:$0x1]
    %v2664 = vsel %vm269, %v2435, 0
    %v2667 = vsel %vm269, %v2440, 0
    %v2670 = vsel %vm269, %v2540, 0
    %v2673 = vsel %vm269, %v2545, 0
    %2675 = vmatprep.subr.mxu0 0.0
    %2676 = vmatpush1.xpose.msra.mxu0 %v2670
    %2677 = vmatprep.subr.mxu0 0.0
    %2678 = vmatpush1.xpose.msra.mxu0 %v2673
    %2679 = vmatprep.subr.mxu0 0.0
    %2680 = vmatpush1.xpose.msra.mxu0 0.0
    %2681 = vmatprep.subr.mxu0 0.0
    %2682 = vmatpush1.xpose.msra.mxu0 0.0
    %2683 = vmatprep.subr.mxu0 0.0
    %2684 = vmatpush1.xpose.msra.mxu0 0.0
    %2685 = vmatprep.subr.mxu0 0.0
    %2686 = vmatpush1.xpose.msra.mxu0 0.0
    %2687 = vmatprep.subr.mxu0 0.0
    %2688 = vmatpush1.xpose.msra.mxu0 0.0
    %2689 = vmatprep.subr.mxu0 0.0
    %2690 = vmatpush1.xpose.msra.mxu0 0.0
    %2691 = vmatprep.subr.mxu0 0.0
    %2692 = vmatpush1.xpose.msra.mxu0 0.0
    %2693 = vmatprep.subr.mxu0 0.0
    %2694 = vmatpush1.xpose.msra.mxu0 0.0
    %2695 = vmatprep.subr.mxu0 0.0
    %2696 = vmatpush1.xpose.msra.mxu0 0.0
    %2697 = vmatprep.subr.mxu0 0.0
    %2698 = vmatpush1.xpose.msra.mxu0 0.0
    %2699 = vmatprep.subr.mxu0 0.0
    %2700 = vmatpush1.xpose.msra.mxu0 0.0
    %2701 = vmatprep.subr.mxu0 0.0
    %2702 = vmatpush1.xpose.msra.mxu0 0.0
    %2703 = vmatprep.subr.mxu0 0.0
    %2704 = vmatpush1.xpose.msra.mxu0 0.0
    %2705 = vmatprep.subr.mxu0 0.0
    %2706 = vmatpush1.xpose.msra.mxu0 0.0
    %2707 = vmatprep.subr.mxu0 0.0
    %2708 = vmatpush1.xpose.msra.mxu0 0.0
    %2709 = vmatprep.subr.mxu0 0.0
    %2710 = vmatpush1.xpose.msra.mxu0 0.0
    %2711 = vmatprep.subr.mxu0 0.0
    %2712 = vmatpush1.xpose.msra.mxu0 0.0
    %2713 = vmatprep.subr.mxu0 0.0
    %2714 = vmatpush1.xpose.msra.mxu0 0.0
    %2715 = vmatprep.subr.mxu0 0.0
    %2716 = vmatpush1.xpose.msra.mxu0 0.0
    %2717 = vmatprep.subr.mxu0 0.0
    %2718 = vmatpush1.xpose.msra.mxu0 0.0
    %2719 = vmatprep.subr.mxu0 0.0
    %2720 = vmatpush1.xpose.msra.mxu0 0.0
    %2721 = vmatprep.subr.mxu0 0.0
    %2722 = vmatpush1.xpose.msra.mxu0 0.0
    %2723 = vmatprep.subr.mxu0 0.0
    %2724 = vmatpush1.xpose.msra.mxu0 0.0
    %2725 = vmatprep.subr.mxu0 0.0
    %2726 = vmatpush1.xpose.msra.mxu0 0.0
    %2727 = vmatprep.subr.mxu0 0.0
    %2728 = vmatpush1.xpose.msra.mxu0 0.0
    %2729 = vmatprep.subr.mxu0 0.0
    %2730 = vmatpush1.xpose.msra.mxu0 0.0
    %2731 = vmatprep.subr.mxu0 0.0
    %2732 = vmatpush1.xpose.msra.mxu0 0.0
    %2733 = vmatprep.subr.mxu0 0.0
    %2734 = vmatpush1.xpose.msra.mxu0 0.0
    %2735 = vmatprep.subr.mxu0 0.0
    %2736 = vmatpush1.xpose.msra.mxu0 0.0
    %2737 = vmatprep.subr.mxu0 0.0
    %2738 = vmatpush1.xpose.msra.mxu0 0.0
    %2739 = vmatprep.mubr.f32.mxu0 0.0
    %2740 = vmatmul.mubr.f32.gmra.mrb[0].mxu0 %v2664
    %v2741 = vpop.f32.mrb[0].mxu0
    %v2742 = vadd.f32 0.0, %v2741
    %v2743 = vpop.f32.mrb[0].mxu0
    %2744 = vmatprep.mubr.f32.mxu0 0.0
    %2745 = vmatmul.mubr.f32.gmra.mrb[0].mxu0 %v2667
    %v2746 = vpop.f32.mrb[0].mxu0
    %v2747 = vadd.f32 0.0, %v2746
    %v2748 = vpop.f32.mrb[0].mxu0
    %2749 = vdwg.mxu0
    %v2751 = vsel %vm269, %v2445, 0
    %v2754 = vsel %vm269, %v2450, 0
    %v2757 = vsel %vm269, %v2550, 0
    %v2760 = vsel %vm269, %v2555, 0
    %2762 = vmatprep.subr.mxu0 0.0
    %2763 = vmatpush1.xpose.msra.mxu0 %v2757
    %2764 = vmatprep.subr.mxu0 0.0
    %2765 = vmatpush1.xpose.msra.mxu0 %v2760
    %2766 = vmatprep.subr.mxu0 0.0
    %2767 = vmatpush1.xpose.msra.mxu0 0.0
    %2768 = vmatprep.subr.mxu0 0.0
    %2769 = vmatpush1.xpose.msra.mxu0 0.0
    %2770 = vmatprep.subr.mxu0 0.0
    %2771 = vmatpush1.xpose.msra.mxu0 0.0
    %2772 = vmatprep.subr.mxu0 0.0
    %2773 = vmatpush1.xpose.msra.mxu0 0.0
    %2774 = vmatprep.subr.mxu0 0.0
    %2775 = vmatpush1.xpose.msra.mxu0 0.0
    %2776 = vmatprep.subr.mxu0 0.0
    %2777 = vmatpush1.xpose.msra.mxu0 0.0
    %2778 = vmatprep.subr.mxu0 0.0
    %2779 = vmatpush1.xpose.msra.mxu0 0.0
    %2780 = vmatprep.subr.mxu0 0.0
    %2781 = vmatpush1.xpose.msra.mxu0 0.0
    %2782 = vmatprep.subr.mxu0 0.0
    %2783 = vmatpush1.xpose.msra.mxu0 0.0
    %2784 = vmatprep.subr.mxu0 0.0
    %2785 = vmatpush1.xpose.msra.mxu0 0.0
    %2786 = vmatprep.subr.mxu0 0.0
    %2787 = vmatpush1.xpose.msra.mxu0 0.0
    %2788 = vmatprep.subr.mxu0 0.0
    %2789 = vmatpush1.xpose.msra.mxu0 0.0
    %2790 = vmatprep.subr.mxu0 0.0
    %2791 = vmatpush1.xpose.msra.mxu0 0.0
    %2792 = vmatprep.subr.mxu0 0.0
    %2793 = vmatpush1.xpose.msra.mxu0 0.0
    %2794 = vmatprep.subr.mxu0 0.0
    %2795 = vmatpush1.xpose.msra.mxu0 0.0
    %2796 = vmatprep.subr.mxu0 0.0
    %2797 = vmatpush1.xpose.msra.mxu0 0.0
    %2798 = vmatprep.subr.mxu0 0.0
    %2799 = vmatpush1.xpose.msra.mxu0 0.0
    %2800 = vmatprep.subr.mxu0 0.0
    %2801 = vmatpush1.xpose.msra.mxu0 0.0
    %2802 = vmatprep.subr.mxu0 0.0
    %2803 = vmatpush1.xpose.msra.mxu0 0.0
    %2804 = vmatprep.subr.mxu0 0.0
    %2805 = vmatpush1.xpose.msra.mxu0 0.0
    %2806 = vmatprep.subr.mxu0 0.0
    %2807 = vmatpush1.xpose.msra.mxu0 0.0
    %2808 = vmatprep.subr.mxu0 0.0
    %2809 = vmatpush1.xpose.msra.mxu0 0.0
    %2810 = vmatprep.subr.mxu0 0.0
    %2811 = vmatpush1.xpose.msra.mxu0 0.0
    %2812 = vmatprep.subr.mxu0 0.0
    %2813 = vmatpush1.xpose.msra.mxu0 0.0
    %2814 = vmatprep.subr.mxu0 0.0
    %2815 = vmatpush1.xpose.msra.mxu0 0.0
    %2816 = vmatprep.subr.mxu0 0.0
    %2817 = vmatpush1.xpose.msra.mxu0 0.0
    %2818 = vmatprep.subr.mxu0 0.0
    %2819 = vmatpush1.xpose.msra.mxu0 0.0
    %2820 = vmatprep.subr.mxu0 0.0
    %2821 = vmatpush1.xpose.msra.mxu0 0.0
    %2822 = vmatprep.subr.mxu0 0.0
    %2823 = vmatpush1.xpose.msra.mxu0 0.0
    %2824 = vmatprep.subr.mxu0 0.0
    %2825 = vmatpush1.xpose.msra.mxu0 0.0
    %2826 = vmatprep.mubr.f32.mxu0 0.0
    %2827 = vmatmul.mubr.f32.gmra.mrb[0].mxu0 %v2751
    %v2828 = vpop.f32.mrb[0].mxu0
    %v2829 = vadd.f32 0.0, %v2828
    %v2830 = vpop.f32.mrb[0].mxu0
    %2831 = vmatprep.mubr.f32.mxu0 0.0
    %2832 = vmatmul.mubr.f32.gmra.mrb[0].mxu0 %v2754
    %v2833 = vpop.f32.mrb[0].mxu0
    %v2834 = vadd.f32 0.0, %v2833
    %v2835 = vpop.f32.mrb[0].mxu0
    %2836 = vdwg.mxu0
    %2837 = vrot.lane.b32.xlu0 %v2435, 120
    %v2838 = vpop.permute.xlu0 %2837
    %2839 = vrot.lane.b32.xlu0 %v2440, 120
    %v2840 = vpop.permute.xlu0 %2839
    %2841 = vrot.lane.b32.xlu0 %v2540, 120
    %v2842 = vpop.permute.xlu0 %2841
    %2843 = vrot.lane.b32.xlu0 %v2545, 120
    %v2844 = vpop.permute.xlu0 %2843
    %v2845 = vsel %vm269, %v2838, 0
    %v2847 = vsel %vm269, %v2840, 0
    %v2849 = vsel %vm269, %v2842, 0
    %v2851 = vsel %vm269, %v2844, 0
    %2853 = vmatprep.subr.mxu0 0.0
    %2854 = vmatpush1.xpose.msra.mxu0 %v2849
    %2855 = vmatprep.subr.mxu0 0.0
    %2856 = vmatpush1.xpose.msra.mxu0 %v2851
    %2857 = vmatprep.subr.mxu0 0.0
    %2858 = vmatpush1.xpose.msra.mxu0 0.0
    %2859 = vmatprep.subr.mxu0 0.0
    %2860 = vmatpush1.xpose.msra.mxu0 0.0
    %2861 = vmatprep.subr.mxu0 0.0
    %2862 = vmatpush1.xpose.msra.mxu0 0.0
    %2863 = vmatprep.subr.mxu0 0.0
    %2864 = vmatpush1.xpose.msra.mxu0 0.0
    %2865 = vmatprep.subr.mxu0 0.0
    %2866 = vmatpush1.xpose.msra.mxu0 0.0
    %2867 = vmatprep.subr.mxu0 0.0
    %2868 = vmatpush1.xpose.msra.mxu0 0.0
    %2869 = vmatprep.subr.mxu0 0.0
    %2870 = vmatpush1.xpose.msra.mxu0 0.0
    %2871 = vmatprep.subr.mxu0 0.0
    %2872 = vmatpush1.xpose.msra.mxu0 0.0
    %2873 = vmatprep.subr.mxu0 0.0
    %2874 = vmatpush1.xpose.msra.mxu0 0.0
    %2875 = vmatprep.subr.mxu0 0.0
    %2876 = vmatpush1.xpose.msra.mxu0 0.0
    %2877 = vmatprep.subr.mxu0 0.0
    %2878 = vmatpush1.xpose.msra.mxu0 0.0
    %2879 = vmatprep.subr.mxu0 0.0
    %2880 = vmatpush1.xpose.msra.mxu0 0.0
    %2881 = vmatprep.subr.mxu0 0.0
    %2882 = vmatpush1.xpose.msra.mxu0 0.0
    %2883 = vmatprep.subr.mxu0 0.0
    %2884 = vmatpush1.xpose.msra.mxu0 0.0
    %2885 = vmatprep.subr.mxu0 0.0
    %2886 = vmatpush1.xpose.msra.mxu0 0.0
    %2887 = vmatprep.subr.mxu0 0.0
    %2888 = vmatpush1.xpose.msra.mxu0 0.0
    %2889 = vmatprep.subr.mxu0 0.0
    %2890 = vmatpush1.xpose.msra.mxu0 0.0
    %2891 = vmatprep.subr.mxu0 0.0
    %2892 = vmatpush1.xpose.msra.mxu0 0.0
    %2893 = vmatprep.subr.mxu0 0.0
    %2894 = vmatpush1.xpose.msra.mxu0 0.0
    %2895 = vmatprep.subr.mxu0 0.0
    %2896 = vmatpush1.xpose.msra.mxu0 0.0
    %2897 = vmatprep.subr.mxu0 0.0
    %2898 = vmatpush1.xpose.msra.mxu0 0.0
    %2899 = vmatprep.subr.mxu0 0.0
    %2900 = vmatpush1.xpose.msra.mxu0 0.0
    %2901 = vmatprep.subr.mxu0 0.0
    %2902 = vmatpush1.xpose.msra.mxu0 0.0
    %2903 = vmatprep.subr.mxu0 0.0
    %2904 = vmatpush1.xpose.msra.mxu0 0.0
    %2905 = vmatprep.subr.mxu0 0.0
    %2906 = vmatpush1.xpose.msra.mxu0 0.0
    %2907 = vmatprep.subr.mxu0 0.0
    %2908 = vmatpush1.xpose.msra.mxu0 0.0
    %2909 = vmatprep.subr.mxu0 0.0
    %2910 = vmatpush1.xpose.msra.mxu0 0.0
    %2911 = vmatprep.subr.mxu0 0.0
    %2912 = vmatpush1.xpose.msra.mxu0 0.0
    %2913 = vmatprep.subr.mxu0 0.0
    %2914 = vmatpush1.xpose.msra.mxu0 0.0
    %2915 = vmatprep.subr.mxu0 0.0
    %2916 = vmatpush1.xpose.msra.mxu0 0.0
    %2917 = vmatprep.mubr.f32.mxu0 0.0
    %2918 = vmatmul.mubr.f32.gmra.mrb[0].mxu0 %v2845
    %v2919 = vpop.f32.mrb[0].mxu0
    %v2920 = vadd.f32 0.0, %v2919
    %v2921 = vpop.f32.mrb[0].mxu0
    %2922 = vmatprep.mubr.f32.mxu0 0.0
    %2923 = vmatmul.mubr.f32.gmra.mrb[0].mxu0 %v2847
    %v2924 = vpop.f32.mrb[0].mxu0
    %v2925 = vadd.f32 0.0, %v2924
    %v2926 = vpop.f32.mrb[0].mxu0
    %2927 = vdwg.mxu0
    %2928 = vrot.lane.b32.xlu0 %v2445, 120
    %v2929 = vpop.permute.xlu0 %2928
    %2930 = vrot.lane.b32.xlu0 %v2450, 120
    %v2931 = vpop.permute.xlu0 %2930
    %2932 = vrot.lane.b32.xlu0 %v2550, 120
    %v2933 = vpop.permute.xlu0 %2932
    %2934 = vrot.lane.b32.xlu0 %v2555, 120
    %v2935 = vpop.permute.xlu0 %2934
    %v2936 = vsel %vm269, %v2929, 0
    %v2938 = vsel %vm269, %v2931, 0
    %v2940 = vsel %vm269, %v2933, 0
    %v2942 = vsel %vm269, %v2935, 0
    %2944 = vmatprep.subr.mxu0 0.0
    %2945 = vmatpush1.xpose.msra.mxu0 %v2940
    %2946 = vmatprep.subr.mxu0 0.0
    %2947 = vmatpush1.xpose.msra.mxu0 %v2942
    %2948 = vmatprep.subr.mxu0 0.0
    %2949 = vmatpush1.xpose.msra.mxu0 0.0
    %2950 = vmatprep.subr.mxu0 0.0
    %2951 = vmatpush1.xpose.msra.mxu0 0.0
    %2952 = vmatprep.subr.mxu0 0.0
    %2953 = vmatpush1.xpose.msra.mxu0 0.0
    %2954 = vmatprep.subr.mxu0 0.0
    %2955 = vmatpush1.xpose.msra.mxu0 0.0
    %2956 = vmatprep.subr.mxu0 0.0
    %2957 = vmatpush1.xpose.msra.mxu0 0.0
    %2958 = vmatprep.subr.mxu0 0.0
    %2959 = vmatpush1.xpose.msra.mxu0 0.0
    %2960 = vmatprep.subr.mxu0 0.0
    %2961 = vmatpush1.xpose.msra.mxu0 0.0
    %2962 = vmatprep.subr.mxu0 0.0
    %2963 = vmatpush1.xpose.msra.mxu0 0.0
    %2964 = vmatprep.subr.mxu0 0.0
    %2965 = vmatpush1.xpose.msra.mxu0 0.0
    %2966 = vmatprep.subr.mxu0 0.0
    %2967 = vmatpush1.xpose.msra.mxu0 0.0
    %2968 = vmatprep.subr.mxu0 0.0
    %2969 = vmatpush1.xpose.msra.mxu0 0.0
    %2970 = vmatprep.subr.mxu0 0.0
    %2971 = vmatpush1.xpose.msra.mxu0 0.0
    %2972 = vmatprep.subr.mxu0 0.0
    %2973 = vmatpush1.xpose.msra.mxu0 0.0
    %2974 = vmatprep.subr.mxu0 0.0
    %2975 = vmatpush1.xpose.msra.mxu0 0.0
    %2976 = vmatprep.subr.mxu0 0.0
    %2977 = vmatpush1.xpose.msra.mxu0 0.0
    %2978 = vmatprep.subr.mxu0 0.0
    %2979 = vmatpush1.xpose.msra.mxu0 0.0
    %2980 = vmatprep.subr.mxu0 0.0
    %2981 = vmatpush1.xpose.msra.mxu0 0.0
    %2982 = vmatprep.subr.mxu0 0.0
    %2983 = vmatpush1.xpose.msra.mxu0 0.0
    %2984 = vmatprep.subr.mxu0 0.0
    %2985 = vmatpush1.xpose.msra.mxu0 0.0
    %2986 = vmatprep.subr.mxu0 0.0
    %2987 = vmatpush1.xpose.msra.mxu0 0.0
    %2988 = vmatprep.subr.mxu0 0.0
    %2989 = vmatpush1.xpose.msra.mxu0 0.0
    %2990 = vmatprep.subr.mxu0 0.0
    %2991 = vmatpush1.xpose.msra.mxu0 0.0
    %2992 = vmatprep.subr.mxu0 0.0
    %2993 = vmatpush1.xpose.msra.mxu0 0.0
    %2994 = vmatprep.subr.mxu0 0.0
    %2995 = vmatpush1.xpose.msra.mxu0 0.0
    %2996 = vmatprep.subr.mxu0 0.0
    %2997 = vmatpush1.xpose.msra.mxu0 0.0
    %2998 = vmatprep.subr.mxu0 0.0
    %2999 = vmatpush1.xpose.msra.mxu0 0.0
    %3000 = vmatprep.subr.mxu0 0.0
    %3001 = vmatpush1.xpose.msra.mxu0 0.0
    %3002 = vmatprep.subr.mxu0 0.0
    %3003 = vmatpush1.xpose.msra.mxu0 0.0
    %3004 = vmatprep.subr.mxu0 0.0
    %3005 = vmatpush1.xpose.msra.mxu0 0.0
    %3006 = vmatprep.subr.mxu0 0.0
    %3007 = vmatpush1.xpose.msra.mxu0 0.0
    %3008 = vmatprep.mubr.f32.mxu0 0.0
    %3009 = vmatmul.mubr.f32.gmra.mrb[0].mxu0 %v2936
    %v3010 = vpop.f32.mrb[0].mxu0
    %v3011 = vadd.f32 0.0, %v3010
    %v3012 = vpop.f32.mrb[0].mxu0
    %3013 = vmatprep.mubr.f32.mxu0 0.0
    %3014 = vmatmul.mubr.f32.gmra.mrb[0].mxu0 %v2938
    %v3015 = vpop.f32.mrb[0].mxu0
    %v3016 = vadd.f32 0.0, %v3015
    %v3017 = vpop.f32.mrb[0].mxu0
    %3018 = vdwg.mxu0
    %3019 = vrot.lane.b32.xlu0 %v2435, 112
    %v3020 = vpop.permute.xlu0 %3019
    %3021 = vrot.lane.b32.xlu0 %v2440, 112
    %v3022 = vpop.permute.xlu0 %3021
    %3023 = vrot.lane.b32.xlu0 %v2540, 112
    %v3024 = vpop.permute.xlu0 %3023
    %3025 = vrot.lane.b32.xlu0 %v2545, 112
    %v3026 = vpop.permute.xlu0 %3025
    %v3027 = vsel %vm269, %v3020, 0
    %v3029 = vsel %vm269, %v3022, 0
    %v3031 = vsel %vm269, %v3024, 0
    %v3033 = vsel %vm269, %v3026, 0
    %3035 = vmatprep.subr.mxu0 0.0
    %3036 = vmatpush1.xpose.msra.mxu0 %v3031
    %3037 = vmatprep.subr.mxu0 0.0
    %3038 = vmatpush1.xpose.msra.mxu0 %v3033
    %3039 = vmatprep.subr.mxu0 0.0
    %3040 = vmatpush1.xpose.msra.mxu0 0.0
    %3041 = vmatprep.subr.mxu0 0.0
    %3042 = vmatpush1.xpose.msra.mxu0 0.0
    %3043 = vmatprep.subr.mxu0 0.0
    %3044 = vmatpush1.xpose.msra.mxu0 0.0
    %3045 = vmatprep.subr.mxu0 0.0
    %3046 = vmatpush1.xpose.msra.mxu0 0.0
    %3047 = vmatprep.subr.mxu0 0.0
    %3048 = vmatpush1.xpose.msra.mxu0 0.0
    %3049 = vmatprep.subr.mxu0 0.0
    %3050 = vmatpush1.xpose.msra.mxu0 0.0
    %3051 = vmatprep.subr.mxu0 0.0
    %3052 = vmatpush1.xpose.msra.mxu0 0.0
    %3053 = vmatprep.subr.mxu0 0.0
    %3054 = vmatpush1.xpose.msra.mxu0 0.0
    %3055 = vmatprep.subr.mxu0 0.0
    %3056 = vmatpush1.xpose.msra.mxu0 0.0
    %3057 = vmatprep.subr.mxu0 0.0
    %3058 = vmatpush1.xpose.msra.mxu0 0.0
    %3059 = vmatprep.subr.mxu0 0.0
    %3060 = vmatpush1.xpose.msra.mxu0 0.0
    %3061 = vmatprep.subr.mxu0 0.0
    %3062 = vmatpush1.xpose.msra.mxu0 0.0
    %3063 = vmatprep.subr.mxu0 0.0
    %3064 = vmatpush1.xpose.msra.mxu0 0.0
    %3065 = vmatprep.subr.mxu0 0.0
    %3066 = vmatpush1.xpose.msra.mxu0 0.0
    %3067 = vmatprep.subr.mxu0 0.0
    %3068 = vmatpush1.xpose.msra.mxu0 0.0
    %3069 = vmatprep.subr.mxu0 0.0
    %3070 = vmatpush1.xpose.msra.mxu0 0.0
    %3071 = vmatprep.subr.mxu0 0.0
    %3072 = vmatpush1.xpose.msra.mxu0 0.0
    %3073 = vmatprep.subr.mxu0 0.0
    %3074 = vmatpush1.xpose.msra.mxu0 0.0
    %3075 = vmatprep.subr.mxu0 0.0
    %3076 = vmatpush1.xpose.msra.mxu0 0.0
    %3077 = vmatprep.subr.mxu0 0.0
    %3078 = vmatpush1.xpose.msra.mxu0 0.0
    %3079 = vmatprep.subr.mxu0 0.0
    %3080 = vmatpush1.xpose.msra.mxu0 0.0
    %3081 = vmatprep.subr.mxu0 0.0
    %3082 = vmatpush1.xpose.msra.mxu0 0.0
    %3083 = vmatprep.subr.mxu0 0.0
    %3084 = vmatpush1.xpose.msra.mxu0 0.0
    %3085 = vmatprep.subr.mxu0 0.0
    %3086 = vmatpush1.xpose.msra.mxu0 0.0
    %3087 = vmatprep.subr.mxu0 0.0
    %3088 = vmatpush1.xpose.msra.mxu0 0.0
    %3089 = vmatprep.subr.mxu0 0.0
    %3090 = vmatpush1.xpose.msra.mxu0 0.0
    %3091 = vmatprep.subr.mxu0 0.0
    %3092 = vmatpush1.xpose.msra.mxu0 0.0
    %3093 = vmatprep.subr.mxu0 0.0
    %3094 = vmatpush1.xpose.msra.mxu0 0.0
    %3095 = vmatprep.subr.mxu0 0.0
    %3096 = vmatpush1.xpose.msra.mxu0 0.0
    %3097 = vmatprep.subr.mxu0 0.0
    %3098 = vmatpush1.xpose.msra.mxu0 0.0
    %3099 = vmatprep.mubr.f32.mxu0 0.0
    %3100 = vmatmul.mubr.f32.gmra.mrb[0].mxu0 %v3027
    %v3101 = vpop.f32.mrb[0].mxu0
    %v3102 = vadd.f32 0.0, %v3101
    %v3103 = vpop.f32.mrb[0].mxu0
    %3104 = vmatprep.mubr.f32.mxu0 0.0
    %3105 = vmatmul.mubr.f32.gmra.mrb[0].mxu0 %v3029
    %v3106 = vpop.f32.mrb[0].mxu0
    %v3107 = vadd.f32 0.0, %v3106
    %v3108 = vpop.f32.mrb[0].mxu0
    %3109 = vdwg.mxu0
    %3110 = vrot.lane.b32.xlu0 %v2445, 112
    %v3111 = vpop.permute.xlu0 %3110
    %3112 = vrot.lane.b32.xlu0 %v2450, 112
    %v3113 = vpop.permute.xlu0 %3112
    %3114 = vrot.lane.b32.xlu0 %v2550, 112
    %v3115 = vpop.permute.xlu0 %3114
    %3116 = vrot.lane.b32.xlu0 %v2555, 112
    %v3117 = vpop.permute.xlu0 %3116
    %v3118 = vsel %vm269, %v3111, 0
    %v3120 = vsel %vm269, %v3113, 0
    %v3122 = vsel %vm269, %v3115, 0
    %v3124 = vsel %vm269, %v3117, 0
    %3126 = vmatprep.subr.mxu0 0.0
    %3127 = vmatpush1.xpose.msra.mxu0 %v3122
    %3128 = vmatprep.subr.mxu0 0.0
    %3129 = vmatpush1.xpose.msra.mxu0 %v3124
    %3130 = vmatprep.subr.mxu0 0.0
    %3131 = vmatpush1.xpose.msra.mxu0 0.0
    %3132 = vmatprep.subr.mxu0 0.0
    %3133 = vmatpush1.xpose.msra.mxu0 0.0
    %3134 = vmatprep.subr.mxu0 0.0
    %3135 = vmatpush1.xpose.msra.mxu0 0.0
    %3136 = vmatprep.subr.mxu0 0.0
    %3137 = vmatpush1.xpose.msra.mxu0 0.0
    %3138 = vmatprep.subr.mxu0 0.0
    %3139 = vmatpush1.xpose.msra.mxu0 0.0
    %3140 = vmatprep.subr.mxu0 0.0
    %3141 = vmatpush1.xpose.msra.mxu0 0.0
    %3142 = vmatprep.subr.mxu0 0.0
    %3143 = vmatpush1.xpose.msra.mxu0 0.0
    %3144 = vmatprep.subr.mxu0 0.0
    %3145 = vmatpush1.xpose.msra.mxu0 0.0
    %3146 = vmatprep.subr.mxu0 0.0
    %3147 = vmatpush1.xpose.msra.mxu0 0.0
    %3148 = vmatprep.subr.mxu0 0.0
    %3149 = vmatpush1.xpose.msra.mxu0 0.0
    %3150 = vmatprep.subr.mxu0 0.0
    %3151 = vmatpush1.xpose.msra.mxu0 0.0
    %3152 = vmatprep.subr.mxu0 0.0
    %3153 = vmatpush1.xpose.msra.mxu0 0.0
    %3154 = vmatprep.subr.mxu0 0.0
    %3155 = vmatpush1.xpose.msra.mxu0 0.0
    %3156 = vmatprep.subr.mxu0 0.0
    %3157 = vmatpush1.xpose.msra.mxu0 0.0
    %3158 = vmatprep.subr.mxu0 0.0
    %3159 = vmatpush1.xpose.msra.mxu0 0.0
    %3160 = vmatprep.subr.mxu0 0.0
    %3161 = vmatpush1.xpose.msra.mxu0 0.0
    %3162 = vmatprep.subr.mxu0 0.0
    %3163 = vmatpush1.xpose.msra.mxu0 0.0
    %3164 = vmatprep.subr.mxu0 0.0
    %3165 = vmatpush1.xpose.msra.mxu0 0.0
    %3166 = vmatprep.subr.mxu0 0.0
    %3167 = vmatpush1.xpose.msra.mxu0 0.0
    %3168 = vmatprep.subr.mxu0 0.0
    %3169 = vmatpush1.xpose.msra.mxu0 0.0
    %3170 = vmatprep.subr.mxu0 0.0
    %3171 = vmatpush1.xpose.msra.mxu0 0.0
    %3172 = vmatprep.subr.mxu0 0.0
    %3173 = vmatpush1.xpose.msra.mxu0 0.0
    %3174 = vmatprep.subr.mxu0 0.0
    %3175 = vmatpush1.xpose.msra.mxu0 0.0
    %3176 = vmatprep.subr.mxu0 0.0
    %3177 = vmatpush1.xpose.msra.mxu0 0.0
    %3178 = vmatprep.subr.mxu0 0.0
    %3179 = vmatpush1.xpose.msra.mxu0 0.0
    %3180 = vmatprep.subr.mxu0 0.0
    %3181 = vmatpush1.xpose.msra.mxu0 0.0
    %3182 = vmatprep.subr.mxu0 0.0
    %3183 = vmatpush1.xpose.msra.mxu0 0.0
    %3184 = vmatprep.subr.mxu0 0.0
    %3185 = vmatpush1.xpose.msra.mxu0 0.0
    %3186 = vmatprep.subr.mxu0 0.0
    %3187 = vmatpush1.xpose.msra.mxu0 0.0
    %3188 = vmatprep.subr.mxu0 0.0
    %3189 = vmatpush1.xpose.msra.mxu0 0.0
    %3190 = vmatprep.mubr.f32.mxu0 0.0
    %3191 = vmatmul.mubr.f32.gmra.mrb[0].mxu0 %v3118
    %v3192 = vpop.f32.mrb[0].mxu0
    %v3193 = vadd.f32 0.0, %v3192
    %v3194 = vpop.f32.mrb[0].mxu0
    %3195 = vmatprep.mubr.f32.mxu0 0.0
    %3196 = vmatmul.mubr.f32.gmra.mrb[0].mxu0 %v3120
    %v3197 = vpop.f32.mrb[0].mxu0
    %v3198 = vadd.f32 0.0, %v3197
    %v3199 = vpop.f32.mrb[0].mxu0
    %3200 = vdwg.mxu0
    %3201 = vrot.lane.b32.xlu0 %v2435, 104
    %v3202 = vpop.permute.xlu0 %3201
    %3203 = vrot.lane.b32.xlu0 %v2440, 104
    %v3204 = vpop.permute.xlu0 %3203
    %3205 = vrot.lane.b32.xlu0 %v2540, 104
    %v3206 = vpop.permute.xlu0 %3205
    %3207 = vrot.lane.b32.xlu0 %v2545, 104
    %v3208 = vpop.permute.xlu0 %3207
    %v3209 = vsel %vm269, %v3202, 0
    %v3211 = vsel %vm269, %v3204, 0
    %v3213 = vsel %vm269, %v3206, 0
    %v3215 = vsel %vm269, %v3208, 0
    %3217 = vmatprep.subr.mxu0 0.0
    %3218 = vmatpush1.xpose.msra.mxu0 %v3213
    %3219 = vmatprep.subr.mxu0 0.0
    %3220 = vmatpush1.xpose.msra.mxu0 %v3215
    %3221 = vmatprep.subr.mxu0 0.0
    %3222 = vmatpush1.xpose.msra.mxu0 0.0
    %3223 = vmatprep.subr.mxu0 0.0
    %3224 = vmatpush1.xpose.msra.mxu0 0.0
    %3225 = vmatprep.subr.mxu0 0.0
    %3226 = vmatpush1.xpose.msra.mxu0 0.0
    %3227 = vmatprep.subr.mxu0 0.0
    %3228 = vmatpush1.xpose.msra.mxu0 0.0
    %3229 = vmatprep.subr.mxu0 0.0
    %3230 = vmatpush1.xpose.msra.mxu0 0.0
    %3231 = vmatprep.subr.mxu0 0.0
    %3232 = vmatpush1.xpose.msra.mxu0 0.0
    %3233 = vmatprep.subr.mxu0 0.0
    %3234 = vmatpush1.xpose.msra.mxu0 0.0
    %3235 = vmatprep.subr.mxu0 0.0
    %3236 = vmatpush1.xpose.msra.mxu0 0.0
    %3237 = vmatprep.subr.mxu0 0.0
    %3238 = vmatpush1.xpose.msra.mxu0 0.0
    %3239 = vmatprep.subr.mxu0 0.0
    %3240 = vmatpush1.xpose.msra.mxu0 0.0
    %3241 = vmatprep.subr.mxu0 0.0
    %3242 = vmatpush1.xpose.msra.mxu0 0.0
    %3243 = vmatprep.subr.mxu0 0.0
    %3244 = vmatpush1.xpose.msra.mxu0 0.0
    %3245 = vmatprep.subr.mxu0 0.0
    %3246 = vmatpush1.xpose.msra.mxu0 0.0
    %3247 = vmatprep.subr.mxu0 0.0
    %3248 = vmatpush1.xpose.msra.mxu0 0.0
    %3249 = vmatprep.subr.mxu0 0.0
    %3250 = vmatpush1.xpose.msra.mxu0 0.0
    %3251 = vmatprep.subr.mxu0 0.0
    %3252 = vmatpush1.xpose.msra.mxu0 0.0
    %3253 = vmatprep.subr.mxu0 0.0
    %3254 = vmatpush1.xpose.msra.mxu0 0.0
    %3255 = vmatprep.subr.mxu0 0.0
    %3256 = vmatpush1.xpose.msra.mxu0 0.0
    %3257 = vmatprep.subr.mxu0 0.0
    %3258 = vmatpush1.xpose.msra.mxu0 0.0
    %3259 = vmatprep.subr.mxu0 0.0
    %3260 = vmatpush1.xpose.msra.mxu0 0.0
    %3261 = vmatprep.subr.mxu0 0.0
    %3262 = vmatpush1.xpose.msra.mxu0 0.0
    %3263 = vmatprep.subr.mxu0 0.0
    %3264 = vmatpush1.xpose.msra.mxu0 0.0
    %3265 = vmatprep.subr.mxu0 0.0
    %3266 = vmatpush1.xpose.msra.mxu0 0.0
    %3267 = vmatprep.subr.mxu0 0.0
    %3268 = vmatpush1.xpose.msra.mxu0 0.0
    %3269 = vmatprep.subr.mxu0 0.0
    %3270 = vmatpush1.xpose.msra.mxu0 0.0
    %3271 = vmatprep.subr.mxu0 0.0
    %3272 = vmatpush1.xpose.msra.mxu0 0.0
    %3273 = vmatprep.subr.mxu0 0.0
    %3274 = vmatpush1.xpose.msra.mxu0 0.0
    %3275 = vmatprep.subr.mxu0 0.0
    %3276 = vmatpush1.xpose.msra.mxu0 0.0
    %3277 = vmatprep.subr.mxu0 0.0
    %3278 = vmatpush1.xpose.msra.mxu0 0.0
    %3279 = vmatprep.subr.mxu0 0.0
    %3280 = vmatpush1.xpose.msra.mxu0 0.0
    %3281 = vmatprep.mubr.f32.mxu0 0.0
    %3282 = vmatmul.mubr.f32.gmra.mrb[0].mxu0 %v3209
    %v3283 = vpop.f32.mrb[0].mxu0
    %v3284 = vadd.f32 0.0, %v3283
    %v3285 = vpop.f32.mrb[0].mxu0
    %3286 = vmatprep.mubr.f32.mxu0 0.0
    %3287 = vmatmul.mubr.f32.gmra.mrb[0].mxu0 %v3211
    %v3288 = vpop.f32.mrb[0].mxu0
    %v3289 = vadd.f32 0.0, %v3288
    %v3290 = vpop.f32.mrb[0].mxu0
    %3291 = vdwg.mxu0
    %3292 = vrot.lane.b32.xlu0 %v2445, 104
    %v3293 = vpop.permute.xlu0 %3292
    %3294 = vrot.lane.b32.xlu0 %v2450, 104
    %v3295 = vpop.permute.xlu0 %3294
    %3296 = vrot.lane.b32.xlu0 %v2550, 104
    %v3297 = vpop.permute.xlu0 %3296
    %3298 = vrot.lane.b32.xlu0 %v2555, 104
    %v3299 = vpop.permute.xlu0 %3298
    %v3300 = vsel %vm269, %v3293, 0
    %v3302 = vsel %vm269, %v3295, 0
    %v3304 = vsel %vm269, %v3297, 0
    %v3306 = vsel %vm269, %v3299, 0
    %3308 = vmatprep.subr.mxu0 0.0
    %3309 = vmatpush1.xpose.msra.mxu0 %v3304
    %3310 = vmatprep.subr.mxu0 0.0
    %3311 = vmatpush1.xpose.msra.mxu0 %v3306
    %3312 = vmatprep.subr.mxu0 0.0
    %3313 = vmatpush1.xpose.msra.mxu0 0.0
    %3314 = vmatprep.subr.mxu0 0.0
    %3315 = vmatpush1.xpose.msra.mxu0 0.0
    %3316 = vmatprep.subr.mxu0 0.0
    %3317 = vmatpush1.xpose.msra.mxu0 0.0
    %3318 = vmatprep.subr.mxu0 0.0
    %3319 = vmatpush1.xpose.msra.mxu0 0.0
    %3320 = vmatprep.subr.mxu0 0.0
    %3321 = vmatpush1.xpose.msra.mxu0 0.0
    %3322 = vmatprep.subr.mxu0 0.0
    %3323 = vmatpush1.xpose.msra.mxu0 0.0
    %3324 = vmatprep.subr.mxu0 0.0
    %3325 = vmatpush1.xpose.msra.mxu0 0.0
    %3326 = vmatprep.subr.mxu0 0.0
    %3327 = vmatpush1.xpose.msra.mxu0 0.0
    %3328 = vmatprep.subr.mxu0 0.0
    %3329 = vmatpush1.xpose.msra.mxu0 0.0
    %3330 = vmatprep.subr.mxu0 0.0
    %3331 = vmatpush1.xpose.msra.mxu0 0.0
    %3332 = vmatprep.subr.mxu0 0.0
    %3333 = vmatpush1.xpose.msra.mxu0 0.0
    %3334 = vmatprep.subr.mxu0 0.0
    %3335 = vmatpush1.xpose.msra.mxu0 0.0
    %3336 = vmatprep.subr.mxu0 0.0
    %3337 = vmatpush1.xpose.msra.mxu0 0.0
    %3338 = vmatprep.subr.mxu0 0.0
    %3339 = vmatpush1.xpose.msra.mxu0 0.0
    %3340 = vmatprep.subr.mxu0 0.0
    %3341 = vmatpush1.xpose.msra.mxu0 0.0
    %3342 = vmatprep.subr.mxu0 0.0
    %3343 = vmatpush1.xpose.msra.mxu0 0.0
    %3344 = vmatprep.subr.mxu0 0.0
    %3345 = vmatpush1.xpose.msra.mxu0 0.0
    %3346 = vmatprep.subr.mxu0 0.0
    %3347 = vmatpush1.xpose.msra.mxu0 0.0
    %3348 = vmatprep.subr.mxu0 0.0
    %3349 = vmatpush1.xpose.msra.mxu0 0.0
    %3350 = vmatprep.subr.mxu0 0.0
    %3351 = vmatpush1.xpose.msra.mxu0 0.0
    %3352 = vmatprep.subr.mxu0 0.0
    %3353 = vmatpush1.xpose.msra.mxu0 0.0
    %3354 = vmatprep.subr.mxu0 0.0
    %3355 = vmatpush1.xpose.msra.mxu0 0.0
    %3356 = vmatprep.subr.mxu0 0.0
    %3357 = vmatpush1.xpose.msra.mxu0 0.0
    %3358 = vmatprep.subr.mxu0 0.0
    %3359 = vmatpush1.xpose.msra.mxu0 0.0
    %3360 = vmatprep.subr.mxu0 0.0
    %3361 = vmatpush1.xpose.msra.mxu0 0.0
    %3362 = vmatprep.subr.mxu0 0.0
    %3363 = vmatpush1.xpose.msra.mxu0 0.0
    %3364 = vmatprep.subr.mxu0 0.0
    %3365 = vmatpush1.xpose.msra.mxu0 0.0
    %3366 = vmatprep.subr.mxu0 0.0
    %3367 = vmatpush1.xpose.msra.mxu0 0.0
    %3368 = vmatprep.subr.mxu0 0.0
    %3369 = vmatpush1.xpose.msra.mxu0 0.0
    %3370 = vmatprep.subr.mxu0 0.0
    %3371 = vmatpush1.xpose.msra.mxu0 0.0
    %3372 = vmatprep.mubr.f32.mxu0 0.0
    %3373 = vmatmul.mubr.f32.gmra.mrb[0].mxu0 %v3300
    %v3374 = vpop.f32.mrb[0].mxu0
    %v3375 = vadd.f32 0.0, %v3374
    %v3376 = vpop.f32.mrb[0].mxu0
    %3377 = vmatprep.mubr.f32.mxu0 0.0
    %3378 = vmatmul.mubr.f32.gmra.mrb[0].mxu0 %v3302
    %v3379 = vpop.f32.mrb[0].mxu0
    %v3380 = vadd.f32 0.0, %v3379
    %v3381 = vpop.f32.mrb[0].mxu0
    %3382 = vdwg.mxu0
    %v3383 = vsel %vm988, %v2742, -inf
    %3384 = vmax.xlane.f32.xlu0 %v3383
    %v3385 = vpop.xlane.xlu0 %3384
    %v3386 = vsel %vm988, %v2747, -inf
    %3387 = vmax.xlane.f32.xlu0 %v3386
    %v3388 = vpop.xlane.xlu0 %3387
    %v3389 = vsel %vm988, %v2920, -inf
    %3390 = vmax.xlane.f32.xlu0 %v3389
    %v3391 = vpop.xlane.xlu0 %3390
    %v3392 = vsel %vm988, %v2925, -inf
    %3393 = vmax.xlane.f32.xlu0 %v3392
    %v3394 = vpop.xlane.xlu0 %3393
    %v3395 = vsel %vm988, %v3102, -inf
    %3396 = vmax.xlane.f32.xlu0 %v3395
    %v3397 = vpop.xlane.xlu0 %3396
    %v3398 = vsel %vm988, %v3107, -inf
    %3399 = vmax.xlane.f32.xlu0 %v3398
    %v3400 = vpop.xlane.xlu0 %3399
    %v3401 = vsel %vm988, %v3284, -inf
    %3402 = vmax.xlane.f32.xlu0 %v3401
    %v3403 = vpop.xlane.xlu0 %3402
    %v3404 = vsel %vm988, %v3289, -inf
    %3405 = vmax.xlane.f32.xlu0 %v3404
    %v3406 = vpop.xlane.xlu0 %3405
    %v3407 = vsel %vm988, %v2829, -inf
    %3408 = vmax.xlane.f32.xlu0 %v3407
    %v3409 = vpop.xlane.xlu0 %3408
    %v3410 = vsel %vm988, %v2834, -inf
    %3411 = vmax.xlane.f32.xlu0 %v3410
    %v3412 = vpop.xlane.xlu0 %3411
    %v3413 = vsel %vm988, %v3011, -inf
    %3414 = vmax.xlane.f32.xlu0 %v3413
    %v3415 = vpop.xlane.xlu0 %3414
    %v3416 = vsel %vm988, %v3016, -inf
    %3417 = vmax.xlane.f32.xlu0 %v3416
    %v3418 = vpop.xlane.xlu0 %3417
    %v3419 = vsel %vm988, %v3193, -inf
    %3420 = vmax.xlane.f32.xlu0 %v3419
    %v3421 = vpop.xlane.xlu0 %3420
    %v3422 = vsel %vm988, %v3198, -inf
    %3423 = vmax.xlane.f32.xlu0 %v3422
    %v3424 = vpop.xlane.xlu0 %3423
    %v3425 = vsel %vm988, %v3375, -inf
    %3426 = vmax.xlane.f32.xlu0 %v3425
    %v3427 = vpop.xlane.xlu0 %3426
    %v3428 = vsel %vm988, %v3380, -inf
    %3429 = vmax.xlane.f32.xlu0 %v3428
    %v3430 = vpop.xlane.xlu0 %3429
    %v3431 = vsub.f32 %v2742, %v3385
    %v3432 = vsub.f32 %v2747, %v3388
    %v3433 = vsub.f32 %v2920, %v3391
    %v3434 = vsub.f32 %v2925, %v3394
    %v3435 = vsub.f32 %v3102, %v3397
    %v3436 = vsub.f32 %v3107, %v3400
    %v3437 = vsub.f32 %v3284, %v3403
    %v3438 = vsub.f32 %v3289, %v3406
    %v3439 = vsub.f32 %v2829, %v3409
    %v3440 = vsub.f32 %v2834, %v3412
    %v3441 = vsub.f32 %v3011, %v3415
    %v3442 = vsub.f32 %v3016, %v3418
    %v3443 = vsub.f32 %v3193, %v3421
    %v3444 = vsub.f32 %v3198, %v3424
    %v3445 = vsub.f32 %v3375, %v3427
    %v3446 = vsub.f32 %v3380, %v3430
    %v3447 = vmul.f32 %v3431, 1.442695
    %v3448 = vpow.pop %v3447
    %v3449 = vmul.f32 %v3432, 1.442695
    %v3450 = vpow.pop %v3449
    %v3451 = vmul.f32 %v3433, 1.442695
    %v3452 = vpow.pop %v3451
    %v3453 = vmul.f32 %v3434, 1.442695
    %v3454 = vpow.pop %v3453
    %v3455 = vmul.f32 %v3435, 1.442695
    %v3456 = vpow.pop %v3455
    %v3457 = vmul.f32 %v3436, 1.442695
    %v3458 = vpow.pop %v3457
    %v3459 = vmul.f32 %v3437, 1.442695
    %v3460 = vpow.pop %v3459
    %v3461 = vmul.f32 %v3438, 1.442695
    %v3462 = vpow.pop %v3461
    %v3463 = vmul.f32 %v3439, 1.442695
    %v3464 = vpow.pop %v3463
    %v3465 = vmul.f32 %v3440, 1.442695
    %v3466 = vpow.pop %v3465
    %v3467 = vmul.f32 %v3441, 1.442695
    %v3468 = vpow.pop %v3467
    %v3469 = vmul.f32 %v3442, 1.442695
    %v3470 = vpow.pop %v3469
    %v3471 = vmul.f32 %v3443, 1.442695
    %v3472 = vpow.pop %v3471
    %v3473 = vmul.f32 %v3444, 1.442695
    %v3474 = vpow.pop %v3473
    %v3475 = vmul.f32 %v3445, 1.442695
    %v3476 = vpow.pop %v3475
    %v3477 = vmul.f32 %v3446, 1.442695
    %v3478 = vpow.pop %v3477
    %v3479 = vsel %vm988, %v3448, 0.0
    %3480 = vadd.xlane.f32.xlu0 %v3479
    %v3481 = vpop.xlane.xlu0 %3480
    %v3482 = vsel %vm988, %v3450, 0.0
    %3483 = vadd.xlane.f32.xlu0 %v3482
    %v3484 = vpop.xlane.xlu0 %3483
    %v3485 = vsel %vm988, %v3452, 0.0
    %3486 = vadd.xlane.f32.xlu0 %v3485
    %v3487 = vpop.xlane.xlu0 %3486
    %v3488 = vsel %vm988, %v3454, 0.0
    %3489 = vadd.xlane.f32.xlu0 %v3488
    %v3490 = vpop.xlane.xlu0 %3489
    %v3491 = vsel %vm988, %v3456, 0.0
    %3492 = vadd.xlane.f32.xlu0 %v3491
    %v3493 = vpop.xlane.xlu0 %3492
    %v3494 = vsel %vm988, %v3458, 0.0
    %3495 = vadd.xlane.f32.xlu0 %v3494
    %v3496 = vpop.xlane.xlu0 %3495
    %v3497 = vsel %vm988, %v3460, 0.0
    %3498 = vadd.xlane.f32.xlu0 %v3497
    %v3499 = vpop.xlane.xlu0 %3498
    %v3500 = vsel %vm988, %v3462, 0.0
    %3501 = vadd.xlane.f32.xlu0 %v3500
    %v3502 = vpop.xlane.xlu0 %3501
    %v3503 = vsel %vm988, %v3464, 0.0
    %3504 = vadd.xlane.f32.xlu0 %v3503
    %v3505 = vpop.xlane.xlu0 %3504
    %v3506 = vsel %vm988, %v3466, 0.0
    %3507 = vadd.xlane.f32.xlu0 %v3506
    %v3508 = vpop.xlane.xlu0 %3507
    %v3509 = vsel %vm988, %v3468, 0.0
    %3510 = vadd.xlane.f32.xlu0 %v3509
    %v3511 = vpop.xlane.xlu0 %3510
    %v3512 = vsel %vm988, %v3470, 0.0
    %3513 = vadd.xlane.f32.xlu0 %v3512
    %v3514 = vpop.xlane.xlu0 %3513
    %v3515 = vsel %vm988, %v3472, 0.0
    %3516 = vadd.xlane.f32.xlu0 %v3515
    %v3517 = vpop.xlane.xlu0 %3516
    %v3518 = vsel %vm988, %v3474, 0.0
    %3519 = vadd.xlane.f32.xlu0 %v3518
    %v3520 = vpop.xlane.xlu0 %3519
    %v3521 = vsel %vm988, %v3476, 0.0
    %3522 = vadd.xlane.f32.xlu0 %v3521
    %v3523 = vpop.xlane.xlu0 %3522
    %v3524 = vsel %vm988, %v3478, 0.0
    %3525 = vadd.xlane.f32.xlu0 %v3524
    %v3526 = vpop.xlane.xlu0 %3525
    %v3527 = vrcp.pop %v3481
    %v3528 = vrcp.pop %v3484
    %v3529 = vrcp.pop %v3487
    %v3530 = vrcp.pop %v3490
    %v3531 = vrcp.pop %v3493
    %v3532 = vrcp.pop %v3496
    %v3533 = vrcp.pop %v3499
    %v3534 = vrcp.pop %v3502
    %v3535 = vrcp.pop %v3505
    %v3536 = vrcp.pop %v3508
    %v3537 = vrcp.pop %v3511
    %v3538 = vrcp.pop %v3514
    %v3539 = vrcp.pop %v3517
    %v3540 = vrcp.pop %v3520
    %v3541 = vrcp.pop %v3523
    %v3542 = vrcp.pop %v3526
    %v3543 = vmul.f32 %v3448, %v3527
    %v3544 = vmul.f32 %v3450, %v3528
    %v3545 = vmul.f32 %v3452, %v3529
    %v3546 = vmul.f32 %v3454, %v3530
    %v3547 = vmul.f32 %v3456, %v3531
    %v3548 = vmul.f32 %v3458, %v3532
    %v3549 = vmul.f32 %v3460, %v3533
    %v3550 = vmul.f32 %v3462, %v3534
    %v3551 = vmul.f32 %v3464, %v3535
    %v3552 = vmul.f32 %v3466, %v3536
    %v3553 = vmul.f32 %v3468, %v3537
    %v3554 = vmul.f32 %v3470, %v3538
    %v3555 = vmul.f32 %v3472, %v3539
    %v3556 = vmul.f32 %v3474, %v3540
    %v3557 = vmul.f32 %v3476, %v3541
    %v3558 = vmul.f32 %v3478, %v3542
    %v3560 = vsel %vm988, %v3543, 0
    %v3563 = vsel %vm988, %v3544, 0
    %3565 = vmatprep.subr.mxu0 0.0
    %3566 = vmatpush1.msra.mxu0 %v2640
    %3567 = vmatprep.subr.mxu0 0.0
    %3568 = vmatpush1.msra.mxu0 %v2645
    %3569 = vmatprep.subr.mxu0 0.0
    %3570 = vmatpush1.msra.mxu0 0.0
    %3571 = vmatprep.subr.mxu0 0.0
    %3572 = vmatpush1.msra.mxu0 0.0
    %3573 = vmatprep.subr.mxu0 0.0
    %3574 = vmatpush1.msra.mxu0 0.0
    %3575 = vmatprep.subr.mxu0 0.0
    %3576 = vmatpush1.msra.mxu0 0.0
    %3577 = vmatprep.subr.mxu0 0.0
    %3578 = vmatpush1.msra.mxu0 0.0
    %3579 = vmatprep.subr.mxu0 0.0
    %3580 = vmatpush1.msra.mxu0 0.0
    %3581 = vmatprep.subr.mxu0 0.0
    %3582 = vmatpush1.msra.mxu0 0.0
    %3583 = vmatprep.subr.mxu0 0.0
    %3584 = vmatpush1.msra.mxu0 0.0
    %3585 = vmatprep.subr.mxu0 0.0
    %3586 = vmatpush1.msra.mxu0 0.0
    %3587 = vmatprep.subr.mxu0 0.0
    %3588 = vmatpush1.msra.mxu0 0.0
    %3589 = vmatprep.subr.mxu0 0.0
    %3590 = vmatpush1.msra.mxu0 0.0
    %3591 = vmatprep.subr.mxu0 0.0
    %3592 = vmatpush1.msra.mxu0 0.0
    %3593 = vmatprep.subr.mxu0 0.0
    %3594 = vmatpush1.msra.mxu0 0.0
    %3595 = vmatprep.subr.mxu0 0.0
    %3596 = vmatpush1.msra.mxu0 0.0
    %3597 = vmatprep.subr.mxu0 0.0
    %3598 = vmatpush1.msra.mxu0 0.0
    %3599 = vmatprep.subr.mxu0 0.0
    %3600 = vmatpush1.msra.mxu0 0.0
    %3601 = vmatprep.subr.mxu0 0.0
    %3602 = vmatpush1.msra.mxu0 0.0
    %3603 = vmatprep.subr.mxu0 0.0
    %3604 = vmatpush1.msra.mxu0 0.0
    %3605 = vmatprep.subr.mxu0 0.0
    %3606 = vmatpush1.msra.mxu0 0.0
    %3607 = vmatprep.subr.mxu0 0.0
    %3608 = vmatpush1.msra.mxu0 0.0
    %3609 = vmatprep.subr.mxu0 0.0
    %3610 = vmatpush1.msra.mxu0 0.0
    %3611 = vmatprep.subr.mxu0 0.0
    %3612 = vmatpush1.msra.mxu0 0.0
    %3613 = vmatprep.subr.mxu0 0.0
    %3614 = vmatpush1.msra.mxu0 0.0
    %3615 = vmatprep.subr.mxu0 0.0
    %3616 = vmatpush1.msra.mxu0 0.0
    %3617 = vmatprep.subr.mxu0 0.0
    %3618 = vmatpush1.msra.mxu0 0.0
    %3619 = vmatprep.subr.mxu0 0.0
    %3620 = vmatpush1.msra.mxu0 0.0
    %3621 = vmatprep.subr.mxu0 0.0
    %3622 = vmatpush1.msra.mxu0 0.0
    %3623 = vmatprep.subr.mxu0 0.0
    %3624 = vmatpush1.msra.mxu0 0.0
    %3625 = vmatprep.subr.mxu0 0.0
    %3626 = vmatpush1.msra.mxu0 0.0
    %3627 = vmatprep.subr.mxu0 0.0
    %3628 = vmatpush1.msra.mxu0 0.0
    %3629 = vmatprep.mubr.f32.mxu0 0.0
    %3630 = vmatmul.mubr.f32.gmra.mrb[0].mxu0 %v3560
    %v3631 = vpop.f32.mrb[0].mxu0
    %v3632 = vadd.f32 0.0, %v3631
    %v3633 = vpop.f32.mrb[0].mxu0
    %3634 = vmatprep.mubr.f32.mxu0 0.0
    %3635 = vmatmul.mubr.f32.gmra.mrb[0].mxu0 %v3563
    %v3636 = vpop.f32.mrb[0].mxu0
    %v3637 = vadd.f32 0.0, %v3636
    %v3638 = vpop.f32.mrb[0].mxu0
    %3639 = vdwg.mxu0
    %v3641 = vsel %vm988, %v3551, 0
    %v3644 = vsel %vm988, %v3552, 0
    %3646 = vmatprep.subr.mxu0 0.0
    %3647 = vmatpush1.msra.mxu0 %v2650
    %3648 = vmatprep.subr.mxu0 0.0
    %3649 = vmatpush1.msra.mxu0 %v2655
    %3650 = vmatprep.subr.mxu0 0.0
    %3651 = vmatpush1.msra.mxu0 0.0
    %3652 = vmatprep.subr.mxu0 0.0
    %3653 = vmatpush1.msra.mxu0 0.0
    %3654 = vmatprep.subr.mxu0 0.0
    %3655 = vmatpush1.msra.mxu0 0.0
    %3656 = vmatprep.subr.mxu0 0.0
    %3657 = vmatpush1.msra.mxu0 0.0
    %3658 = vmatprep.subr.mxu0 0.0
    %3659 = vmatpush1.msra.mxu0 0.0
    %3660 = vmatprep.subr.mxu0 0.0
    %3661 = vmatpush1.msra.mxu0 0.0
    %3662 = vmatprep.subr.mxu0 0.0
    %3663 = vmatpush1.msra.mxu0 0.0
    %3664 = vmatprep.subr.mxu0 0.0
    %3665 = vmatpush1.msra.mxu0 0.0
    %3666 = vmatprep.subr.mxu0 0.0
    %3667 = vmatpush1.msra.mxu0 0.0
    %3668 = vmatprep.subr.mxu0 0.0
    %3669 = vmatpush1.msra.mxu0 0.0
    %3670 = vmatprep.subr.mxu0 0.0
    %3671 = vmatpush1.msra.mxu0 0.0
    %3672 = vmatprep.subr.mxu0 0.0
    %3673 = vmatpush1.msra.mxu0 0.0
    %3674 = vmatprep.subr.mxu0 0.0
    %3675 = vmatpush1.msra.mxu0 0.0
    %3676 = vmatprep.subr.mxu0 0.0
    %3677 = vmatpush1.msra.mxu0 0.0
    %3678 = vmatprep.subr.mxu0 0.0
    %3679 = vmatpush1.msra.mxu0 0.0
    %3680 = vmatprep.subr.mxu0 0.0
    %3681 = vmatpush1.msra.mxu0 0.0
    %3682 = vmatprep.subr.mxu0 0.0
    %3683 = vmatpush1.msra.mxu0 0.0
    %3684 = vmatprep.subr.mxu0 0.0
    %3685 = vmatpush1.msra.mxu0 0.0
    %3686 = vmatprep.subr.mxu0 0.0
    %3687 = vmatpush1.msra.mxu0 0.0
    %3688 = vmatprep.subr.mxu0 0.0
    %3689 = vmatpush1.msra.mxu0 0.0
    %3690 = vmatprep.subr.mxu0 0.0
    %3691 = vmatpush1.msra.mxu0 0.0
    %3692 = vmatprep.subr.mxu0 0.0
    %3693 = vmatpush1.msra.mxu0 0.0
    %3694 = vmatprep.subr.mxu0 0.0
    %3695 = vmatpush1.msra.mxu0 0.0
    %3696 = vmatprep.subr.mxu0 0.0
    %3697 = vmatpush1.msra.mxu0 0.0
    %3698 = vmatprep.subr.mxu0 0.0
    %3699 = vmatpush1.msra.mxu0 0.0
    %3700 = vmatprep.subr.mxu0 0.0
    %3701 = vmatpush1.msra.mxu0 0.0
    %3702 = vmatprep.subr.mxu0 0.0
    %3703 = vmatpush1.msra.mxu0 0.0
    %3704 = vmatprep.subr.mxu0 0.0
    %3705 = vmatpush1.msra.mxu0 0.0
    %3706 = vmatprep.subr.mxu0 0.0
    %3707 = vmatpush1.msra.mxu0 0.0
    %3708 = vmatprep.subr.mxu0 0.0
    %3709 = vmatpush1.msra.mxu0 0.0
    %3710 = vmatprep.mubr.f32.mxu0 0.0
    %3711 = vmatmul.mubr.f32.gmra.mrb[0].mxu0 %v3641
    %v3712 = vpop.f32.mrb[0].mxu0
    %v3713 = vadd.f32 0.0, %v3712
    %v3714 = vpop.f32.mrb[0].mxu0
    %3715 = vmatprep.mubr.f32.mxu0 0.0
    %3716 = vmatmul.mubr.f32.gmra.mrb[0].mxu0 %v3644
    %v3717 = vpop.f32.mrb[0].mxu0
    %v3718 = vadd.f32 0.0, %v3717
    %v3719 = vpop.f32.mrb[0].mxu0
    %3720 = vdwg.mxu0
    %v3722 = vsel %vm269, %v3632, 0
    %v3725 = vsel %vm269, %v3637, 0
    %v3728 = vsel %vm269, %v3713, 0
    %v3731 = vsel %vm269, %v3718, 0
    %3733 = vmatprep.subr.mxu0 0.0
    %3734 = vmatpush1.msra.mxu0 %v2658
    %3735 = vmatprep.subr.mxu0 0.0
    %3736 = vmatpush1.msra.mxu0 0.0
    %3737 = vmatprep.subr.mxu0 0.0
    %3738 = vmatpush1.msra.mxu0 0.0
    %3739 = vmatprep.subr.mxu0 0.0
    %3740 = vmatpush1.msra.mxu0 0.0
    %3741 = vmatprep.subr.mxu0 0.0
    %3742 = vmatpush1.msra.mxu0 0.0
    %3743 = vmatprep.subr.mxu0 0.0
    %3744 = vmatpush1.msra.mxu0 0.0
    %3745 = vmatprep.subr.mxu0 0.0
    %3746 = vmatpush1.msra.mxu0 0.0
    %3747 = vmatprep.subr.mxu0 0.0
    %3748 = vmatpush1.msra.mxu0 0.0
    %3749 = vmatprep.subr.mxu0 0.0
    %3750 = vmatpush1.msra.mxu0 0.0
    %3751 = vmatprep.subr.mxu0 0.0
    %3752 = vmatpush1.msra.mxu0 0.0
    %3753 = vmatprep.subr.mxu0 0.0
    %3754 = vmatpush1.msra.mxu0 0.0
    %3755 = vmatprep.subr.mxu0 0.0
    %3756 = vmatpush1.msra.mxu0 0.0
    %3757 = vmatprep.subr.mxu0 0.0
    %3758 = vmatpush1.msra.mxu0 0.0
    %3759 = vmatprep.subr.mxu0 0.0
    %3760 = vmatpush1.msra.mxu0 0.0
    %3761 = vmatprep.subr.mxu0 0.0
    %3762 = vmatpush1.msra.mxu0 0.0
    %3763 = vmatprep.subr.mxu0 0.0
    %3764 = vmatpush1.msra.mxu0 0.0
    %3765 = vmatprep.subr.mxu0 0.0
    %3766 = vmatpush1.msra.mxu0 0.0
    %3767 = vmatprep.subr.mxu0 0.0
    %3768 = vmatpush1.msra.mxu0 0.0
    %3769 = vmatprep.subr.mxu0 0.0
    %3770 = vmatpush1.msra.mxu0 0.0
    %3771 = vmatprep.subr.mxu0 0.0
    %3772 = vmatpush1.msra.mxu0 0.0
    %3773 = vmatprep.subr.mxu0 0.0
    %3774 = vmatpush1.msra.mxu0 0.0
    %3775 = vmatprep.subr.mxu0 0.0
    %3776 = vmatpush1.msra.mxu0 0.0
    %3777 = vmatprep.subr.mxu0 0.0
    %3778 = vmatpush1.msra.mxu0 0.0
    %3779 = vmatprep.subr.mxu0 0.0
    %3780 = vmatpush1.msra.mxu0 0.0
    %3781 = vmatprep.subr.mxu0 0.0
    %3782 = vmatpush1.msra.mxu0 0.0
    %3783 = vmatprep.subr.mxu0 0.0
    %3784 = vmatpush1.msra.mxu0 0.0
    %3785 = vmatprep.subr.mxu0 0.0
    %3786 = vmatpush1.msra.mxu0 0.0
    %3787 = vmatprep.subr.mxu0 0.0
    %3788 = vmatpush1.msra.mxu0 0.0
    %3789 = vmatprep.subr.mxu0 0.0
    %3790 = vmatpush1.msra.mxu0 0.0
    %3791 = vmatprep.subr.mxu0 0.0
    %3792 = vmatpush1.msra.mxu0 0.0
    %3793 = vmatprep.subr.mxu0 0.0
    %3794 = vmatpush1.msra.mxu0 0.0
    %3795 = vmatprep.subr.mxu0 0.0
    %3796 = vmatpush1.msra.mxu0 0.0
    %3797 = vmatprep.mubr.f32.mxu0 0.0
    %3798 = vmatmul.mubr.f32.gmra.mrb[0].mxu0 %v3722
    %v3799 = vpop.f32.mrb[0].mxu0
    %v3800 = vadd.f32 0.0, %v3799
    %v3801 = vpop.f32.mrb[0].mxu0
    %3802 = vmatprep.mubr.f32.mxu0 0.0
    %3803 = vmatmul.mubr.f32.gmra.mrb[0].mxu0 %v3725
    %v3804 = vpop.f32.mrb[0].mxu0
    %v3805 = vadd.f32 0.0, %v3804
    %v3806 = vpop.f32.mrb[0].mxu0
    %3807 = vmatprep.mubr.f32.mxu0 0.0
    %3808 = vmatmul.mubr.f32.gmra.mrb[0].mxu0 %v3728
    %v3809 = vpop.f32.mrb[0].mxu0
    %v3810 = vadd.f32 0.0, %v3809
    %v3811 = vpop.f32.mrb[0].mxu0
    %3812 = vmatprep.mubr.f32.mxu0 0.0
    %3813 = vmatmul.mubr.f32.gmra.mrb[0].mxu0 %v3731
    %v3814 = vpop.f32.mrb[0].mxu0
    %v3815 = vadd.f32 0.0, %v3814
    %v3816 = vpop.f32.mrb[0].mxu0
    %3817 = vdwg.mxu0
    %v3818 = vlaneseq
    %v3819 = vshrl.u32 %v3818, 7
    %v3820 = vsub.s32 0, %v3819
    %v3821 = vrot.slane %v2662, %v3820
    %v3822 = vadd.f32 %v3821, %v3800
    %v3823 = vadd.f32 %v3821, %v3805
    %v3824 = vadd.f32 %v3821, %v3810
    %v3825 = vadd.f32 %v3821, %v3815
    %3828 = vrot.lane.b32.xlu0 %v2640, 120
    %v3829 = vpop.permute.xlu0 %3828
    %3830 = vrot.lane.b32.xlu0 %v2645, 120
    %v3831 = vpop.permute.xlu0 %3830
    %v3835 = vsel %vm988, %v3545, 0
    %v3838 = vsel %vm988, %v3546, 0
    %3840 = vmatprep.subr.mxu0 0.0
    %3841 = vmatpush1.msra.mxu0 %v3829
    %3842 = vmatprep.subr.mxu0 0.0
    %3843 = vmatpush1.msra.mxu0 %v3831
    %3844 = vmatprep.subr.mxu0 0.0
    %3845 = vmatpush1.msra.mxu0 0.0
    %3846 = vmatprep.subr.mxu0 0.0
    %3847 = vmatpush1.msra.mxu0 0.0
    %3848 = vmatprep.subr.mxu0 0.0
    %3849 = vmatpush1.msra.mxu0 0.0
    %3850 = vmatprep.subr.mxu0 0.0
    %3851 = vmatpush1.msra.mxu0 0.0
    %3852 = vmatprep.subr.mxu0 0.0
    %3853 = vmatpush1.msra.mxu0 0.0
    %3854 = vmatprep.subr.mxu0 0.0
    %3855 = vmatpush1.msra.mxu0 0.0
    %3856 = vmatprep.subr.mxu0 0.0
    %3857 = vmatpush1.msra.mxu0 0.0
    %3858 = vmatprep.subr.mxu0 0.0
    %3859 = vmatpush1.msra.mxu0 0.0
    %3860 = vmatprep.subr.mxu0 0.0
    %3861 = vmatpush1.msra.mxu0 0.0
    %3862 = vmatprep.subr.mxu0 0.0
    %3863 = vmatpush1.msra.mxu0 0.0
    %3864 = vmatprep.subr.mxu0 0.0
    %3865 = vmatpush1.msra.mxu0 0.0
    %3866 = vmatprep.subr.mxu0 0.0
    %3867 = vmatpush1.msra.mxu0 0.0
    %3868 = vmatprep.subr.mxu0 0.0
    %3869 = vmatpush1.msra.mxu0 0.0
    %3870 = vmatprep.subr.mxu0 0.0
    %3871 = vmatpush1.msra.mxu0 0.0
    %3872 = vmatprep.subr.mxu0 0.0
    %3873 = vmatpush1.msra.mxu0 0.0
    %3874 = vmatprep.subr.mxu0 0.0
    %3875 = vmatpush1.msra.mxu0 0.0
    %3876 = vmatprep.subr.mxu0 0.0
    %3877 = vmatpush1.msra.mxu0 0.0
    %3878 = vmatprep.subr.mxu0 0.0
    %3879 = vmatpush1.msra.mxu0 0.0
    %3880 = vmatprep.subr.mxu0 0.0
    %3881 = vmatpush1.msra.mxu0 0.0
    %3882 = vmatprep.subr.mxu0 0.0
    %3883 = vmatpush1.msra.mxu0 0.0
    %3884 = vmatprep.subr.mxu0 0.0
    %3885 = vmatpush1.msra.mxu0 0.0
    %3886 = vmatprep.subr.mxu0 0.0
    %3887 = vmatpush1.msra.mxu0 0.0
    %3888 = vmatprep.subr.mxu0 0.0
    %3889 = vmatpush1.msra.mxu0 0.0
    %3890 = vmatprep.subr.mxu0 0.0
    %3891 = vmatpush1.msra.mxu0 0.0
    %3892 = vmatprep.subr.mxu0 0.0
    %3893 = vmatpush1.msra.mxu0 0.0
    %3894 = vmatprep.subr.mxu0 0.0
    %3895 = vmatpush1.msra.mxu0 0.0
    %3896 = vmatprep.subr.mxu0 0.0
    %3897 = vmatpush1.msra.mxu0 0.0
    %3898 = vmatprep.subr.mxu0 0.0
    %3899 = vmatpush1.msra.mxu0 0.0
    %3900 = vmatprep.subr.mxu0 0.0
    %3901 = vmatpush1.msra.mxu0 0.0
    %3902 = vmatprep.subr.mxu0 0.0
    %3903 = vmatpush1.msra.mxu0 0.0
    %3904 = vmatprep.mubr.f32.mxu0 0.0
    %3905 = vmatmul.mubr.f32.gmra.mrb[0].mxu0 %v3835
    %v3906 = vpop.f32.mrb[0].mxu0
    %v3907 = vadd.f32 0.0, %v3906
    %v3908 = vpop.f32.mrb[0].mxu0
    %3909 = vmatprep.mubr.f32.mxu0 0.0
    %3910 = vmatmul.mubr.f32.gmra.mrb[0].mxu0 %v3838
    %v3911 = vpop.f32.mrb[0].mxu0
    %v3912 = vadd.f32 0.0, %v3911
    %v3913 = vpop.f32.mrb[0].mxu0
    %3914 = vdwg.mxu0
    %3917 = vrot.lane.b32.xlu0 %v2650, 120
    %v3918 = vpop.permute.xlu0 %3917
    %3919 = vrot.lane.b32.xlu0 %v2655, 120
    %v3920 = vpop.permute.xlu0 %3919
    %v3924 = vsel %vm988, %v3553, 0
    %v3927 = vsel %vm988, %v3554, 0
    %3929 = vmatprep.subr.mxu0 0.0
    %3930 = vmatpush1.msra.mxu0 %v3918
    %3931 = vmatprep.subr.mxu0 0.0
    %3932 = vmatpush1.msra.mxu0 %v3920
    %3933 = vmatprep.subr.mxu0 0.0
    %3934 = vmatpush1.msra.mxu0 0.0
    %3935 = vmatprep.subr.mxu0 0.0
    %3936 = vmatpush1.msra.mxu0 0.0
    %3937 = vmatprep.subr.mxu0 0.0
    %3938 = vmatpush1.msra.mxu0 0.0
    %3939 = vmatprep.subr.mxu0 0.0
    %3940 = vmatpush1.msra.mxu0 0.0
    %3941 = vmatprep.subr.mxu0 0.0
    %3942 = vmatpush1.msra.mxu0 0.0
    %3943 = vmatprep.subr.mxu0 0.0
    %3944 = vmatpush1.msra.mxu0 0.0
    %3945 = vmatprep.subr.mxu0 0.0
    %3946 = vmatpush1.msra.mxu0 0.0
    %3947 = vmatprep.subr.mxu0 0.0
    %3948 = vmatpush1.msra.mxu0 0.0
    %3949 = vmatprep.subr.mxu0 0.0
    %3950 = vmatpush1.msra.mxu0 0.0
    %3951 = vmatprep.subr.mxu0 0.0
    %3952 = vmatpush1.msra.mxu0 0.0
    %3953 = vmatprep.subr.mxu0 0.0
    %3954 = vmatpush1.msra.mxu0 0.0
    %3955 = vmatprep.subr.mxu0 0.0
    %3956 = vmatpush1.msra.mxu0 0.0
    %3957 = vmatprep.subr.mxu0 0.0
    %3958 = vmatpush1.msra.mxu0 0.0
    %3959 = vmatprep.subr.mxu0 0.0
    %3960 = vmatpush1.msra.mxu0 0.0
    %3961 = vmatprep.subr.mxu0 0.0
    %3962 = vmatpush1.msra.mxu0 0.0
    %3963 = vmatprep.subr.mxu0 0.0
    %3964 = vmatpush1.msra.mxu0 0.0
    %3965 = vmatprep.subr.mxu0 0.0
    %3966 = vmatpush1.msra.mxu0 0.0
    %3967 = vmatprep.subr.mxu0 0.0
    %3968 = vmatpush1.msra.mxu0 0.0
    %3969 = vmatprep.subr.mxu0 0.0
    %3970 = vmatpush1.msra.mxu0 0.0
    %3971 = vmatprep.subr.mxu0 0.0
    %3972 = vmatpush1.msra.mxu0 0.0
    %3973 = vmatprep.subr.mxu0 0.0
    %3974 = vmatpush1.msra.mxu0 0.0
    %3975 = vmatprep.subr.mxu0 0.0
    %3976 = vmatpush1.msra.mxu0 0.0
    %3977 = vmatprep.subr.mxu0 0.0
    %3978 = vmatpush1.msra.mxu0 0.0
    %3979 = vmatprep.subr.mxu0 0.0
    %3980 = vmatpush1.msra.mxu0 0.0
    %3981 = vmatprep.subr.mxu0 0.0
    %3982 = vmatpush1.msra.mxu0 0.0
    %3983 = vmatprep.subr.mxu0 0.0
    %3984 = vmatpush1.msra.mxu0 0.0
    %3985 = vmatprep.subr.mxu0 0.0
    %3986 = vmatpush1.msra.mxu0 0.0
    %3987 = vmatprep.subr.mxu0 0.0
    %3988 = vmatpush1.msra.mxu0 0.0
    %3989 = vmatprep.subr.mxu0 0.0
    %3990 = vmatpush1.msra.mxu0 0.0
    %3991 = vmatprep.subr.mxu0 0.0
    %3992 = vmatpush1.msra.mxu0 0.0
    %3993 = vmatprep.mubr.f32.mxu0 0.0
    %3994 = vmatmul.mubr.f32.gmra.mrb[0].mxu0 %v3924
    %v3995 = vpop.f32.mrb[0].mxu0
    %v3996 = vadd.f32 0.0, %v3995
    %v3997 = vpop.f32.mrb[0].mxu0
    %3998 = vmatprep.mubr.f32.mxu0 0.0
    %3999 = vmatmul.mubr.f32.gmra.mrb[0].mxu0 %v3927
    %v4000 = vpop.f32.mrb[0].mxu0
    %v4001 = vadd.f32 0.0, %v4000
    %v4002 = vpop.f32.mrb[0].mxu0
    %4003 = vdwg.mxu0
    %v4005 = vsel %vm269, %v3907, 0
    %v4008 = vsel %vm269, %v3912, 0
    %v4011 = vsel %vm269, %v3996, 0
    %v4014 = vsel %vm269, %v4001, 0
    %4016 = vmatprep.subr.mxu0 0.0
    %4017 = vmatpush1.msra.mxu0 %v2659
    %4018 = vmatprep.subr.mxu0 0.0
    %4019 = vmatpush1.msra.mxu0 0.0
    %4020 = vmatprep.subr.mxu0 0.0
    %4021 = vmatpush1.msra.mxu0 0.0
    %4022 = vmatprep.subr.mxu0 0.0
    %4023 = vmatpush1.msra.mxu0 0.0
    %4024 = vmatprep.subr.mxu0 0.0
    %4025 = vmatpush1.msra.mxu0 0.0
    %4026 = vmatprep.subr.mxu0 0.0
    %4027 = vmatpush1.msra.mxu0 0.0
    %4028 = vmatprep.subr.mxu0 0.0
    %4029 = vmatpush1.msra.mxu0 0.0
    %4030 = vmatprep.subr.mxu0 0.0
    %4031 = vmatpush1.msra.mxu0 0.0
    %4032 = vmatprep.subr.mxu0 0.0
    %4033 = vmatpush1.msra.mxu0 0.0
    %4034 = vmatprep.subr.mxu0 0.0
    %4035 = vmatpush1.msra.mxu0 0.0
    %4036 = vmatprep.subr.mxu0 0.0
    %4037 = vmatpush1.msra.mxu0 0.0
    %4038 = vmatprep.subr.mxu0 0.0
    %4039 = vmatpush1.msra.mxu0 0.0
    %4040 = vmatprep.subr.mxu0 0.0
    %4041 = vmatpush1.msra.mxu0 0.0
    %4042 = vmatprep.subr.mxu0 0.0
    %4043 = vmatpush1.msra.mxu0 0.0
    %4044 = vmatprep.subr.mxu0 0.0
    %4045 = vmatpush1.msra.mxu0 0.0
    %4046 = vmatprep.subr.mxu0 0.0
    %4047 = vmatpush1.msra.mxu0 0.0
    %4048 = vmatprep.subr.mxu0 0.0
    %4049 = vmatpush1.msra.mxu0 0.0
    %4050 = vmatprep.subr.mxu0 0.0
    %4051 = vmatpush1.msra.mxu0 0.0
    %4052 = vmatprep.subr.mxu0 0.0
    %4053 = vmatpush1.msra.mxu0 0.0
    %4054 = vmatprep.subr.mxu0 0.0
    %4055 = vmatpush1.msra.mxu0 0.0
    %4056 = vmatprep.subr.mxu0 0.0
    %4057 = vmatpush1.msra.mxu0 0.0
    %4058 = vmatprep.subr.mxu0 0.0
    %4059 = vmatpush1.msra.mxu0 0.0
    %4060 = vmatprep.subr.mxu0 0.0
    %4061 = vmatpush1.msra.mxu0 0.0
    %4062 = vmatprep.subr.mxu0 0.0
    %4063 = vmatpush1.msra.mxu0 0.0
    %4064 = vmatprep.subr.mxu0 0.0
    %4065 = vmatpush1.msra.mxu0 0.0
    %4066 = vmatprep.subr.mxu0 0.0
    %4067 = vmatpush1.msra.mxu0 0.0
    %4068 = vmatprep.subr.mxu0 0.0
    %4069 = vmatpush1.msra.mxu0 0.0
    %4070 = vmatprep.subr.mxu0 0.0
    %4071 = vmatpush1.msra.mxu0 0.0
    %4072 = vmatprep.subr.mxu0 0.0
    %4073 = vmatpush1.msra.mxu0 0.0
    %4074 = vmatprep.subr.mxu0 0.0
    %4075 = vmatpush1.msra.mxu0 0.0
    %4076 = vmatprep.subr.mxu0 0.0
    %4077 = vmatpush1.msra.mxu0 0.0
    %4078 = vmatprep.subr.mxu0 0.0
    %4079 = vmatpush1.msra.mxu0 0.0
    %4080 = vmatprep.mubr.f32.mxu0 0.0
    %4081 = vmatmul.mubr.f32.gmra.mrb[0].mxu0 %v4005
    %v4082 = vpop.f32.mrb[0].mxu0
    %v4083 = vadd.f32 0.0, %v4082
    %v4084 = vpop.f32.mrb[0].mxu0
    %4085 = vmatprep.mubr.f32.mxu0 0.0
    %4086 = vmatmul.mubr.f32.gmra.mrb[0].mxu0 %v4008
    %v4087 = vpop.f32.mrb[0].mxu0
    %v4088 = vadd.f32 0.0, %v4087
    %v4089 = vpop.f32.mrb[0].mxu0
    %4090 = vmatprep.mubr.f32.mxu0 0.0
    %4091 = vmatmul.mubr.f32.gmra.mrb[0].mxu0 %v4011
    %v4092 = vpop.f32.mrb[0].mxu0
    %v4093 = vadd.f32 0.0, %v4092
    %v4094 = vpop.f32.mrb[0].mxu0
    %4095 = vmatprep.mubr.f32.mxu0 0.0
    %4096 = vmatmul.mubr.f32.gmra.mrb[0].mxu0 %v4014
    %v4097 = vpop.f32.mrb[0].mxu0
    %v4098 = vadd.f32 0.0, %v4097
    %v4099 = vpop.f32.mrb[0].mxu0
    %4100 = vdwg.mxu0
    %v4101 = vadd.f32 %v3822, %v4083
    %v4102 = vadd.f32 %v3823, %v4088
    %v4103 = vadd.f32 %v3824, %v4093
    %v4104 = vadd.f32 %v3825, %v4098
    %4105 = vrot.lane.b32.xlu0 %v2640, 112
    %v4106 = vpop.permute.xlu0 %4105
    %4107 = vrot.lane.b32.xlu0 %v2645, 112
    %v4108 = vpop.permute.xlu0 %4107
    %v4112 = vsel %vm988, %v3547, 0
    %v4115 = vsel %vm988, %v3548, 0
    %4117 = vmatprep.subr.mxu0 0.0
    %4118 = vmatpush1.msra.mxu0 %v4106
    %4119 = vmatprep.subr.mxu0 0.0
    %4120 = vmatpush1.msra.mxu0 %v4108
    %4121 = vmatprep.subr.mxu0 0.0
    %4122 = vmatpush1.msra.mxu0 0.0
    %4123 = vmatprep.subr.mxu0 0.0
    %4124 = vmatpush1.msra.mxu0 0.0
    %4125 = vmatprep.subr.mxu0 0.0
    %4126 = vmatpush1.msra.mxu0 0.0
    %4127 = vmatprep.subr.mxu0 0.0
    %4128 = vmatpush1.msra.mxu0 0.0
    %4129 = vmatprep.subr.mxu0 0.0
    %4130 = vmatpush1.msra.mxu0 0.0
    %4131 = vmatprep.subr.mxu0 0.0
    %4132 = vmatpush1.msra.mxu0 0.0
    %4133 = vmatprep.subr.mxu0 0.0
    %4134 = vmatpush1.msra.mxu0 0.0
    %4135 = vmatprep.subr.mxu0 0.0
    %4136 = vmatpush1.msra.mxu0 0.0
    %4137 = vmatprep.subr.mxu0 0.0
    %4138 = vmatpush1.msra.mxu0 0.0
    %4139 = vmatprep.subr.mxu0 0.0
    %4140 = vmatpush1.msra.mxu0 0.0
    %4141 = vmatprep.subr.mxu0 0.0
    %4142 = vmatpush1.msra.mxu0 0.0
    %4143 = vmatprep.subr.mxu0 0.0
    %4144 = vmatpush1.msra.mxu0 0.0
    %4145 = vmatprep.subr.mxu0 0.0
    %4146 = vmatpush1.msra.mxu0 0.0
    %4147 = vmatprep.subr.mxu0 0.0
    %4148 = vmatpush1.msra.mxu0 0.0
    %4149 = vmatprep.subr.mxu0 0.0
    %4150 = vmatpush1.msra.mxu0 0.0
    %4151 = vmatprep.subr.mxu0 0.0
    %4152 = vmatpush1.msra.mxu0 0.0
    %4153 = vmatprep.subr.mxu0 0.0
    %4154 = vmatpush1.msra.mxu0 0.0
    %4155 = vmatprep.subr.mxu0 0.0
    %4156 = vmatpush1.msra.mxu0 0.0
    %4157 = vmatprep.subr.mxu0 0.0
    %4158 = vmatpush1.msra.mxu0 0.0
    %4159 = vmatprep.subr.mxu0 0.0
    %4160 = vmatpush1.msra.mxu0 0.0
    %4161 = vmatprep.subr.mxu0 0.0
    %4162 = vmatpush1.msra.mxu0 0.0
    %4163 = vmatprep.subr.mxu0 0.0
    %4164 = vmatpush1.msra.mxu0 0.0
    %4165 = vmatprep.subr.mxu0 0.0
    %4166 = vmatpush1.msra.mxu0 0.0
    %4167 = vmatprep.subr.mxu0 0.0
    %4168 = vmatpush1.msra.mxu0 0.0
    %4169 = vmatprep.subr.mxu0 0.0
    %4170 = vmatpush1.msra.mxu0 0.0
    %4171 = vmatprep.subr.mxu0 0.0
    %4172 = vmatpush1.msra.mxu0 0.0
    %4173 = vmatprep.subr.mxu0 0.0
    %4174 = vmatpush1.msra.mxu0 0.0
    %4175 = vmatprep.subr.mxu0 0.0
    %4176 = vmatpush1.msra.mxu0 0.0
    %4177 = vmatprep.subr.mxu0 0.0
    %4178 = vmatpush1.msra.mxu0 0.0
    %4179 = vmatprep.subr.mxu0 0.0
    %4180 = vmatpush1.msra.mxu0 0.0
    %4181 = vmatprep.mubr.f32.mxu0 0.0
    %4182 = vmatmul.mubr.f32.gmra.mrb[0].mxu0 %v4112
    %v4183 = vpop.f32.mrb[0].mxu0
    %v4184 = vadd.f32 0.0, %v4183
    %v4185 = vpop.f32.mrb[0].mxu0
    %4186 = vmatprep.mubr.f32.mxu0 0.0
    %4187 = vmatmul.mubr.f32.gmra.mrb[0].mxu0 %v4115
    %v4188 = vpop.f32.mrb[0].mxu0
    %v4189 = vadd.f32 0.0, %v4188
    %v4190 = vpop.f32.mrb[0].mxu0
    %4191 = vdwg.mxu0
    %4192 = vrot.lane.b32.xlu0 %v2650, 112
    %v4193 = vpop.permute.xlu0 %4192
    %4194 = vrot.lane.b32.xlu0 %v2655, 112
    %v4195 = vpop.permute.xlu0 %4194
    %v4199 = vsel %vm988, %v3555, 0
    %v4202 = vsel %vm988, %v3556, 0
    %4204 = vmatprep.subr.mxu0 0.0
    %4205 = vmatpush1.msra.mxu0 %v4193
    %4206 = vmatprep.subr.mxu0 0.0
    %4207 = vmatpush1.msra.mxu0 %v4195
    %4208 = vmatprep.subr.mxu0 0.0
    %4209 = vmatpush1.msra.mxu0 0.0
    %4210 = vmatprep.subr.mxu0 0.0
    %4211 = vmatpush1.msra.mxu0 0.0
    %4212 = vmatprep.subr.mxu0 0.0
    %4213 = vmatpush1.msra.mxu0 0.0
    %4214 = vmatprep.subr.mxu0 0.0
    %4215 = vmatpush1.msra.mxu0 0.0
    %4216 = vmatprep.subr.mxu0 0.0
    %4217 = vmatpush1.msra.mxu0 0.0
    %4218 = vmatprep.subr.mxu0 0.0
    %4219 = vmatpush1.msra.mxu0 0.0
    %4220 = vmatprep.subr.mxu0 0.0
    %4221 = vmatpush1.msra.mxu0 0.0
    %4222 = vmatprep.subr.mxu0 0.0
    %4223 = vmatpush1.msra.mxu0 0.0
    %4224 = vmatprep.subr.mxu0 0.0
    %4225 = vmatpush1.msra.mxu0 0.0
    %4226 = vmatprep.subr.mxu0 0.0
    %4227 = vmatpush1.msra.mxu0 0.0
    %4228 = vmatprep.subr.mxu0 0.0
    %4229 = vmatpush1.msra.mxu0 0.0
    %4230 = vmatprep.subr.mxu0 0.0
    %4231 = vmatpush1.msra.mxu0 0.0
    %4232 = vmatprep.subr.mxu0 0.0
    %4233 = vmatpush1.msra.mxu0 0.0
    %4234 = vmatprep.subr.mxu0 0.0
    %4235 = vmatpush1.msra.mxu0 0.0
    %4236 = vmatprep.subr.mxu0 0.0
    %4237 = vmatpush1.msra.mxu0 0.0
    %4238 = vmatprep.subr.mxu0 0.0
    %4239 = vmatpush1.msra.mxu0 0.0
    %4240 = vmatprep.subr.mxu0 0.0
    %4241 = vmatpush1.msra.mxu0 0.0
    %4242 = vmatprep.subr.mxu0 0.0
    %4243 = vmatpush1.msra.mxu0 0.0
    %4244 = vmatprep.subr.mxu0 0.0
    %4245 = vmatpush1.msra.mxu0 0.0
    %4246 = vmatprep.subr.mxu0 0.0
    %4247 = vmatpush1.msra.mxu0 0.0
    %4248 = vmatprep.subr.mxu0 0.0
    %4249 = vmatpush1.msra.mxu0 0.0
    %4250 = vmatprep.subr.mxu0 0.0
    %4251 = vmatpush1.msra.mxu0 0.0
    %4252 = vmatprep.subr.mxu0 0.0
    %4253 = vmatpush1.msra.mxu0 0.0
    %4254 = vmatprep.subr.mxu0 0.0
    %4255 = vmatpush1.msra.mxu0 0.0
    %4256 = vmatprep.subr.mxu0 0.0
    %4257 = vmatpush1.msra.mxu0 0.0
    %4258 = vmatprep.subr.mxu0 0.0
    %4259 = vmatpush1.msra.mxu0 0.0
    %4260 = vmatprep.subr.mxu0 0.0
    %4261 = vmatpush1.msra.mxu0 0.0
    %4262 = vmatprep.subr.mxu0 0.0
    %4263 = vmatpush1.msra.mxu0 0.0
    %4264 = vmatprep.subr.mxu0 0.0
    %4265 = vmatpush1.msra.mxu0 0.0
    %4266 = vmatprep.subr.mxu0 0.0
    %4267 = vmatpush1.msra.mxu0 0.0
    %4268 = vmatprep.mubr.f32.mxu0 0.0
    %4269 = vmatmul.mubr.f32.gmra.mrb[0].mxu0 %v4199
    %v4270 = vpop.f32.mrb[0].mxu0
    %v4271 = vadd.f32 0.0, %v4270
    %v4272 = vpop.f32.mrb[0].mxu0
    %4273 = vmatprep.mubr.f32.mxu0 0.0
    %4274 = vmatmul.mubr.f32.gmra.mrb[0].mxu0 %v4202
    %v4275 = vpop.f32.mrb[0].mxu0
    %v4276 = vadd.f32 0.0, %v4275
    %v4277 = vpop.f32.mrb[0].mxu0
    %4278 = vdwg.mxu0
    %v4280 = vsel %vm269, %v4184, 0
    %v4283 = vsel %vm269, %v4189, 0
    %v4286 = vsel %vm269, %v4271, 0
    %v4289 = vsel %vm269, %v4276, 0
    %4291 = vmatprep.subr.mxu0 0.0
    %4292 = vmatpush1.msra.mxu0 %v2660
    %4293 = vmatprep.subr.mxu0 0.0
    %4294 = vmatpush1.msra.mxu0 0.0
    %4295 = vmatprep.subr.mxu0 0.0
    %4296 = vmatpush1.msra.mxu0 0.0
    %4297 = vmatprep.subr.mxu0 0.0
    %4298 = vmatpush1.msra.mxu0 0.0
    %4299 = vmatprep.subr.mxu0 0.0
    %4300 = vmatpush1.msra.mxu0 0.0
    %4301 = vmatprep.subr.mxu0 0.0
    %4302 = vmatpush1.msra.mxu0 0.0
    %4303 = vmatprep.subr.mxu0 0.0
    %4304 = vmatpush1.msra.mxu0 0.0
    %4305 = vmatprep.subr.mxu0 0.0
    %4306 = vmatpush1.msra.mxu0 0.0
    %4307 = vmatprep.subr.mxu0 0.0
    %4308 = vmatpush1.msra.mxu0 0.0
    %4309 = vmatprep.subr.mxu0 0.0
    %4310 = vmatpush1.msra.mxu0 0.0
    %4311 = vmatprep.subr.mxu0 0.0
    %4312 = vmatpush1.msra.mxu0 0.0
    %4313 = vmatprep.subr.mxu0 0.0
    %4314 = vmatpush1.msra.mxu0 0.0
    %4315 = vmatprep.subr.mxu0 0.0
    %4316 = vmatpush1.msra.mxu0 0.0
    %4317 = vmatprep.subr.mxu0 0.0
    %4318 = vmatpush1.msra.mxu0 0.0
    %4319 = vmatprep.subr.mxu0 0.0
    %4320 = vmatpush1.msra.mxu0 0.0
    %4321 = vmatprep.subr.mxu0 0.0
    %4322 = vmatpush1.msra.mxu0 0.0
    %4323 = vmatprep.subr.mxu0 0.0
    %4324 = vmatpush1.msra.mxu0 0.0
    %4325 = vmatprep.subr.mxu0 0.0
    %4326 = vmatpush1.msra.mxu0 0.0
    %4327 = vmatprep.subr.mxu0 0.0
    %4328 = vmatpush1.msra.mxu0 0.0
    %4329 = vmatprep.subr.mxu0 0.0
    %4330 = vmatpush1.msra.mxu0 0.0
    %4331 = vmatprep.subr.mxu0 0.0
    %4332 = vmatpush1.msra.mxu0 0.0
    %4333 = vmatprep.subr.mxu0 0.0
    %4334 = vmatpush1.msra.mxu0 0.0
    %4335 = vmatprep.subr.mxu0 0.0
    %4336 = vmatpush1.msra.mxu0 0.0
    %4337 = vmatprep.subr.mxu0 0.0
    %4338 = vmatpush1.msra.mxu0 0.0
    %4339 = vmatprep.subr.mxu0 0.0
    %4340 = vmatpush1.msra.mxu0 0.0
    %4341 = vmatprep.subr.mxu0 0.0
    %4342 = vmatpush1.msra.mxu0 0.0
    %4343 = vmatprep.subr.mxu0 0.0
    %4344 = vmatpush1.msra.mxu0 0.0
    %4345 = vmatprep.subr.mxu0 0.0
    %4346 = vmatpush1.msra.mxu0 0.0
    %4347 = vmatprep.subr.mxu0 0.0
    %4348 = vmatpush1.msra.mxu0 0.0
    %4349 = vmatprep.subr.mxu0 0.0
    %4350 = vmatpush1.msra.mxu0 0.0
    %4351 = vmatprep.subr.mxu0 0.0
    %4352 = vmatpush1.msra.mxu0 0.0
    %4353 = vmatprep.subr.mxu0 0.0
    %4354 = vmatpush1.msra.mxu0 0.0
    %4355 = vmatprep.mubr.f32.mxu0 0.0
    %4356 = vmatmul.mubr.f32.gmra.mrb[0].mxu0 %v4280
    %v4357 = vpop.f32.mrb[0].mxu0
    %v4358 = vadd.f32 0.0, %v4357
    %v4359 = vpop.f32.mrb[0].mxu0
    %4360 = vmatprep.mubr.f32.mxu0 0.0
    %4361 = vmatmul.mubr.f32.gmra.mrb[0].mxu0 %v4283
    %v4362 = vpop.f32.mrb[0].mxu0
    %v4363 = vadd.f32 0.0, %v4362
    %v4364 = vpop.f32.mrb[0].mxu0
    %4365 = vmatprep.mubr.f32.mxu0 0.0
    %4366 = vmatmul.mubr.f32.gmra.mrb[0].mxu0 %v4286
    %v4367 = vpop.f32.mrb[0].mxu0
    %v4368 = vadd.f32 0.0, %v4367
    %v4369 = vpop.f32.mrb[0].mxu0
    %4370 = vmatprep.mubr.f32.mxu0 0.0
    %4371 = vmatmul.mubr.f32.gmra.mrb[0].mxu0 %v4289
    %v4372 = vpop.f32.mrb[0].mxu0
    %v4373 = vadd.f32 0.0, %v4372
    %v4374 = vpop.f32.mrb[0].mxu0
    %4375 = vdwg.mxu0
    %v4376 = vadd.f32 %v4101, %v4358
    %v4377 = vadd.f32 %v4102, %v4363
    %v4378 = vadd.f32 %v4103, %v4368
    %v4379 = vadd.f32 %v4104, %v4373
    %4380 = vrot.lane.b32.xlu0 %v2640, 104
    %v4381 = vpop.permute.xlu0 %4380
    %4382 = vrot.lane.b32.xlu0 %v2645, 104
    %v4383 = vpop.permute.xlu0 %4382
    %v4387 = vsel %vm988, %v3549, 0
    %v4390 = vsel %vm988, %v3550, 0
    %4392 = vmatprep.subr.mxu0 0.0
    %4393 = vmatpush1.msra.mxu0 %v4381
    %4394 = vmatprep.subr.mxu0 0.0
    %4395 = vmatpush1.msra.mxu0 %v4383
    %4396 = vmatprep.subr.mxu0 0.0
    %4397 = vmatpush1.msra.mxu0 0.0
    %4398 = vmatprep.subr.mxu0 0.0
    %4399 = vmatpush1.msra.mxu0 0.0
    %4400 = vmatprep.subr.mxu0 0.0
    %4401 = vmatpush1.msra.mxu0 0.0
    %4402 = vmatprep.subr.mxu0 0.0
    %4403 = vmatpush1.msra.mxu0 0.0
    %4404 = vmatprep.subr.mxu0 0.0
    %4405 = vmatpush1.msra.mxu0 0.0
    %4406 = vmatprep.subr.mxu0 0.0
    %4407 = vmatpush1.msra.mxu0 0.0
    %4408 = vmatprep.subr.mxu0 0.0
    %4409 = vmatpush1.msra.mxu0 0.0
    %4410 = vmatprep.subr.mxu0 0.0
    %4411 = vmatpush1.msra.mxu0 0.0
    %4412 = vmatprep.subr.mxu0 0.0
    %4413 = vmatpush1.msra.mxu0 0.0
    %4414 = vmatprep.subr.mxu0 0.0
    %4415 = vmatpush1.msra.mxu0 0.0
    %4416 = vmatprep.subr.mxu0 0.0
    %4417 = vmatpush1.msra.mxu0 0.0
    %4418 = vmatprep.subr.mxu0 0.0
    %4419 = vmatpush1.msra.mxu0 0.0
    %4420 = vmatprep.subr.mxu0 0.0
    %4421 = vmatpush1.msra.mxu0 0.0
    %4422 = vmatprep.subr.mxu0 0.0
    %4423 = vmatpush1.msra.mxu0 0.0
    %4424 = vmatprep.subr.mxu0 0.0
    %4425 = vmatpush1.msra.mxu0 0.0
    %4426 = vmatprep.subr.mxu0 0.0
    %4427 = vmatpush1.msra.mxu0 0.0
    %4428 = vmatprep.subr.mxu0 0.0
    %4429 = vmatpush1.msra.mxu0 0.0
    %4430 = vmatprep.subr.mxu0 0.0
    %4431 = vmatpush1.msra.mxu0 0.0
    %4432 = vmatprep.subr.mxu0 0.0
    %4433 = vmatpush1.msra.mxu0 0.0
    %4434 = vmatprep.subr.mxu0 0.0
    %4435 = vmatpush1.msra.mxu0 0.0
    %4436 = vmatprep.subr.mxu0 0.0
    %4437 = vmatpush1.msra.mxu0 0.0
    %4438 = vmatprep.subr.mxu0 0.0
    %4439 = vmatpush1.msra.mxu0 0.0
    %4440 = vmatprep.subr.mxu0 0.0
    %4441 = vmatpush1.msra.mxu0 0.0
    %4442 = vmatprep.subr.mxu0 0.0
    %4443 = vmatpush1.msra.mxu0 0.0
    %4444 = vmatprep.subr.mxu0 0.0
    %4445 = vmatpush1.msra.mxu0 0.0
    %4446 = vmatprep.subr.mxu0 0.0
    %4447 = vmatpush1.msra.mxu0 0.0
    %4448 = vmatprep.subr.mxu0 0.0
    %4449 = vmatpush1.msra.mxu0 0.0
    %4450 = vmatprep.subr.mxu0 0.0
    %4451 = vmatpush1.msra.mxu0 0.0
    %4452 = vmatprep.subr.mxu0 0.0
    %4453 = vmatpush1.msra.mxu0 0.0
    %4454 = vmatprep.subr.mxu0 0.0
    %4455 = vmatpush1.msra.mxu0 0.0
    %4456 = vmatprep.mubr.f32.mxu0 0.0
    %4457 = vmatmul.mubr.f32.gmra.mrb[0].mxu0 %v4387
    %v4458 = vpop.f32.mrb[0].mxu0
    %v4459 = vadd.f32 0.0, %v4458
    %v4460 = vpop.f32.mrb[0].mxu0
    %4461 = vmatprep.mubr.f32.mxu0 0.0
    %4462 = vmatmul.mubr.f32.gmra.mrb[0].mxu0 %v4390
    %v4463 = vpop.f32.mrb[0].mxu0
    %v4464 = vadd.f32 0.0, %v4463
    %v4465 = vpop.f32.mrb[0].mxu0
    %4466 = vdwg.mxu0
    %4467 = vrot.lane.b32.xlu0 %v2650, 104
    %v4468 = vpop.permute.xlu0 %4467
    %4469 = vrot.lane.b32.xlu0 %v2655, 104
    %v4470 = vpop.permute.xlu0 %4469
    %v4474 = vsel %vm988, %v3557, 0
    %v4477 = vsel %vm988, %v3558, 0
    %4479 = vmatprep.subr.mxu0 0.0
    %4480 = vmatpush1.msra.mxu0 %v4468
    %4481 = vmatprep.subr.mxu0 0.0
    %4482 = vmatpush1.msra.mxu0 %v4470
    %4483 = vmatprep.subr.mxu0 0.0
    %4484 = vmatpush1.msra.mxu0 0.0
    %4485 = vmatprep.subr.mxu0 0.0
    %4486 = vmatpush1.msra.mxu0 0.0
    %4487 = vmatprep.subr.mxu0 0.0
    %4488 = vmatpush1.msra.mxu0 0.0
    %4489 = vmatprep.subr.mxu0 0.0
    %4490 = vmatpush1.msra.mxu0 0.0
    %4491 = vmatprep.subr.mxu0 0.0
    %4492 = vmatpush1.msra.mxu0 0.0
    %4493 = vmatprep.subr.mxu0 0.0
    %4494 = vmatpush1.msra.mxu0 0.0
    %4495 = vmatprep.subr.mxu0 0.0
    %4496 = vmatpush1.msra.mxu0 0.0
    %4497 = vmatprep.subr.mxu0 0.0
    %4498 = vmatpush1.msra.mxu0 0.0
    %4499 = vmatprep.subr.mxu0 0.0
    %4500 = vmatpush1.msra.mxu0 0.0
    %4501 = vmatprep.subr.mxu0 0.0
    %4502 = vmatpush1.msra.mxu0 0.0
    %4503 = vmatprep.subr.mxu0 0.0
    %4504 = vmatpush1.msra.mxu0 0.0
    %4505 = vmatprep.subr.mxu0 0.0
    %4506 = vmatpush1.msra.mxu0 0.0
    %4507 = vmatprep.subr.mxu0 0.0
    %4508 = vmatpush1.msra.mxu0 0.0
    %4509 = vmatprep.subr.mxu0 0.0
    %4510 = vmatpush1.msra.mxu0 0.0
    %4511 = vmatprep.subr.mxu0 0.0
    %4512 = vmatpush1.msra.mxu0 0.0
    %4513 = vmatprep.subr.mxu0 0.0
    %4514 = vmatpush1.msra.mxu0 0.0
    %4515 = vmatprep.subr.mxu0 0.0
    %4516 = vmatpush1.msra.mxu0 0.0
    %4517 = vmatprep.subr.mxu0 0.0
    %4518 = vmatpush1.msra.mxu0 0.0
    %4519 = vmatprep.subr.mxu0 0.0
    %4520 = vmatpush1.msra.mxu0 0.0
    %4521 = vmatprep.subr.mxu0 0.0
    %4522 = vmatpush1.msra.mxu0 0.0
    %4523 = vmatprep.subr.mxu0 0.0
    %4524 = vmatpush1.msra.mxu0 0.0
    %4525 = vmatprep.subr.mxu0 0.0
    %4526 = vmatpush1.msra.mxu0 0.0
    %4527 = vmatprep.subr.mxu0 0.0
    %4528 = vmatpush1.msra.mxu0 0.0
    %4529 = vmatprep.subr.mxu0 0.0
    %4530 = vmatpush1.msra.mxu0 0.0
    %4531 = vmatprep.subr.mxu0 0.0
    %4532 = vmatpush1.msra.mxu0 0.0
    %4533 = vmatprep.subr.mxu0 0.0
    %4534 = vmatpush1.msra.mxu0 0.0
    %4535 = vmatprep.subr.mxu0 0.0
    %4536 = vmatpush1.msra.mxu0 0.0
    %4537 = vmatprep.subr.mxu0 0.0
    %4538 = vmatpush1.msra.mxu0 0.0
    %4539 = vmatprep.subr.mxu0 0.0
    %4540 = vmatpush1.msra.mxu0 0.0
    %4541 = vmatprep.subr.mxu0 0.0
    %4542 = vmatpush1.msra.mxu0 0.0
    %4543 = vmatprep.mubr.f32.mxu0 0.0
    %4544 = vmatmul.mubr.f32.gmra.mrb[0].mxu0 %v4474
    %v4545 = vpop.f32.mrb[0].mxu0
    %v4546 = vadd.f32 0.0, %v4545
    %v4547 = vpop.f32.mrb[0].mxu0
    %4548 = vmatprep.mubr.f32.mxu0 0.0
    %4549 = vmatmul.mubr.f32.gmra.mrb[0].mxu0 %v4477
    %v4550 = vpop.f32.mrb[0].mxu0
    %v4551 = vadd.f32 0.0, %v4550
    %v4552 = vpop.f32.mrb[0].mxu0
    %4553 = vdwg.mxu0
    %v4555 = vsel %vm269, %v4459, 0
    %v4558 = vsel %vm269, %v4464, 0
    %v4561 = vsel %vm269, %v4546, 0
    %v4564 = vsel %vm269, %v4551, 0
    %4566 = vmatprep.subr.mxu0 0.0
    %4567 = vmatpush1.msra.mxu0 %v2661
    %4568 = vmatprep.subr.mxu0 0.0
    %4569 = vmatpush1.msra.mxu0 0.0
    %4570 = vmatprep.subr.mxu0 0.0
    %4571 = vmatpush1.msra.mxu0 0.0
    %4572 = vmatprep.subr.mxu0 0.0
    %4573 = vmatpush1.msra.mxu0 0.0
    %4574 = vmatprep.subr.mxu0 0.0
    %4575 = vmatpush1.msra.mxu0 0.0
    %4576 = vmatprep.subr.mxu0 0.0
    %4577 = vmatpush1.msra.mxu0 0.0
    %4578 = vmatprep.subr.mxu0 0.0
    %4579 = vmatpush1.msra.mxu0 0.0
    %4580 = vmatprep.subr.mxu0 0.0
    %4581 = vmatpush1.msra.mxu0 0.0
    %4582 = vmatprep.subr.mxu0 0.0
    %4583 = vmatpush1.msra.mxu0 0.0
    %4584 = vmatprep.subr.mxu0 0.0
    %4585 = vmatpush1.msra.mxu0 0.0
    %4586 = vmatprep.subr.mxu0 0.0
    %4587 = vmatpush1.msra.mxu0 0.0
    %4588 = vmatprep.subr.mxu0 0.0
    %4589 = vmatpush1.msra.mxu0 0.0
    %4590 = vmatprep.subr.mxu0 0.0
    %4591 = vmatpush1.msra.mxu0 0.0
    %4592 = vmatprep.subr.mxu0 0.0
    %4593 = vmatpush1.msra.mxu0 0.0
    %4594 = vmatprep.subr.mxu0 0.0
    %4595 = vmatpush1.msra.mxu0 0.0
    %4596 = vmatprep.subr.mxu0 0.0
    %4597 = vmatpush1.msra.mxu0 0.0
    %4598 = vmatprep.subr.mxu0 0.0
    %4599 = vmatpush1.msra.mxu0 0.0
    %4600 = vmatprep.subr.mxu0 0.0
    %4601 = vmatpush1.msra.mxu0 0.0
    %4602 = vmatprep.subr.mxu0 0.0
    %4603 = vmatpush1.msra.mxu0 0.0
    %4604 = vmatprep.subr.mxu0 0.0
    %4605 = vmatpush1.msra.mxu0 0.0
    %4606 = vmatprep.subr.mxu0 0.0
    %4607 = vmatpush1.msra.mxu0 0.0
    %4608 = vmatprep.subr.mxu0 0.0
    %4609 = vmatpush1.msra.mxu0 0.0
    %4610 = vmatprep.subr.mxu0 0.0
    %4611 = vmatpush1.msra.mxu0 0.0
    %4612 = vmatprep.subr.mxu0 0.0
    %4613 = vmatpush1.msra.mxu0 0.0
    %4614 = vmatprep.subr.mxu0 0.0
    %4615 = vmatpush1.msra.mxu0 0.0
    %4616 = vmatprep.subr.mxu0 0.0
    %4617 = vmatpush1.msra.mxu0 0.0
    %4618 = vmatprep.subr.mxu0 0.0
    %4619 = vmatpush1.msra.mxu0 0.0
    %4620 = vmatprep.subr.mxu0 0.0
    %4621 = vmatpush1.msra.mxu0 0.0
    %4622 = vmatprep.subr.mxu0 0.0
    %4623 = vmatpush1.msra.mxu0 0.0
    %4624 = vmatprep.subr.mxu0 0.0
    %4625 = vmatpush1.msra.mxu0 0.0
    %4626 = vmatprep.subr.mxu0 0.0
    %4627 = vmatpush1.msra.mxu0 0.0
    %4628 = vmatprep.subr.mxu0 0.0
    %4629 = vmatpush1.msra.mxu0 0.0
    %4630 = vmatprep.mubr.f32.mxu0 0.0
    %4631 = vmatmul.mubr.f32.gmra.mrb[0].mxu0 %v4555
    %v4632 = vpop.f32.mrb[0].mxu0
    %v4633 = vadd.f32 0.0, %v4632
    %v4634 = vpop.f32.mrb[0].mxu0
    %4635 = vmatprep.mubr.f32.mxu0 0.0
    %4636 = vmatmul.mubr.f32.gmra.mrb[0].mxu0 %v4558
    %v4637 = vpop.f32.mrb[0].mxu0
    %v4638 = vadd.f32 0.0, %v4637
    %v4639 = vpop.f32.mrb[0].mxu0
    %4640 = vmatprep.mubr.f32.mxu0 0.0
    %4641 = vmatmul.mubr.f32.gmra.mrb[0].mxu0 %v4561
    %v4642 = vpop.f32.mrb[0].mxu0
    %v4643 = vadd.f32 0.0, %v4642
    %v4644 = vpop.f32.mrb[0].mxu0
    %4645 = vmatprep.mubr.f32.mxu0 0.0
    %4646 = vmatmul.mubr.f32.gmra.mrb[0].mxu0 %v4564
    %v4647 = vpop.f32.mrb[0].mxu0
    %v4648 = vadd.f32 0.0, %v4647
    %v4649 = vpop.f32.mrb[0].mxu0
    %4650 = vdwg.mxu0
    %v4651 = vadd.f32 %v4376, %v4633
    %v4652 = vadd.f32 %v4377, %v4638
    %v4653 = vadd.f32 %v4378, %v4643
    %v4654 = vadd.f32 %v4379, %v4648
    %v4655 = vadd.f32 %v2338, %v4651
    %v4656 = vadd.f32 %v2339, %v4652
    %v4657 = vadd.f32 %v2340, %v4653
    %v4658 = vadd.f32 %v2341, %v4654
    %v4659 = vsel %vm43, %v4655, 0.0
    %4660 = vadd.xlane.f32.xlu0 %v4659
    %v4661 = vpop.xlane.xlu0 %4660
    %v4662 = vsel %vm43, %v4656, 0.0
    %4663 = vadd.xlane.f32.xlu0 %v4662
    %v4664 = vpop.xlane.xlu0 %4663
    %v4665 = vsel %vm43, %v4657, 0.0
    %4666 = vadd.xlane.f32.xlu0 %v4665
    %v4667 = vpop.xlane.xlu0 %4666
    %v4668 = vsel %vm43, %v4658, 0.0
    %4669 = vadd.xlane.f32.xlu0 %v4668
    %v4670 = vpop.xlane.xlu0 %4669
    %v4671 = vmul.f32 %v4661, %v2277
    %v4672 = vmul.f32 %v4664, %v2277
    %v4673 = vmul.f32 %v4667, %v2277
    %v4674 = vmul.f32 %v4670, %v2277
    %v4675 = vmul.f32 %v4655, %v4655
    %v4676 = vmul.f32 %v4656, %v4656
    %v4677 = vmul.f32 %v4657, %v4657
    %v4678 = vmul.f32 %v4658, %v4658
    %v4679 = vsel %vm43, %v4675, 0.0
    %4680 = vadd.xlane.f32.xlu0 %v4679
    %v4681 = vpop.xlane.xlu0 %4680
    %v4682 = vsel %vm43, %v4676, 0.0
    %4683 = vadd.xlane.f32.xlu0 %v4682
    %v4684 = vpop.xlane.xlu0 %4683
    %v4685 = vsel %vm43, %v4677, 0.0
    %4686 = vadd.xlane.f32.xlu0 %v4685
    %v4687 = vpop.xlane.xlu0 %4686
    %v4688 = vsel %vm43, %v4678, 0.0
    %4689 = vadd.xlane.f32.xlu0 %v4688
    %v4690 = vpop.xlane.xlu0 %4689
    %v4691 = vmul.f32 %v4681, %v2277
    %v4692 = vmul.f32 %v4684, %v2277
    %v4693 = vmul.f32 %v4687, %v2277
    %v4694 = vmul.f32 %v4690, %v2277
    %v4695 = vmul.f32 %v4671, %v4671
    %v4696 = vmul.f32 %v4672, %v4672
    %v4697 = vmul.f32 %v4673, %v4673
    %v4698 = vmul.f32 %v4674, %v4674
    %v4699 = vsub.f32 %v4691, %v4695
    %v4700 = vsub.f32 %v4692, %v4696
    %v4701 = vsub.f32 %v4693, %v4697
    %v4702 = vsub.f32 %v4694, %v4698
    %v4703 = vsub.f32 %v4655, %v4671
    %v4704 = vsub.f32 %v4656, %v4672
    %v4705 = vsub.f32 %v4657, %v4673
    %v4706 = vsub.f32 %v4658, %v4674
    %v4707 = vadd.f32 %v4699, 1e-05
    %v4708 = vadd.f32 %v4700, 1e-05
    %v4709 = vadd.f32 %v4701, 1e-05
    %v4710 = vadd.f32 %v4702, 1e-05
    %v4711 = vrsqrt.pop %v4707
    %v4712 = vrsqrt.pop %v4708
    %v4713 = vrsqrt.pop %v4709
    %v4714 = vrsqrt.pop %v4710
    %v4715 = vmul.f32 %v4703, %v4711
    %v4716 = vmul.f32 %v4704, %v4712
    %v4717 = vmul.f32 %v4705, %v4713
    %v4718 = vmul.f32 %v4706, %v4714
    %v4719 = vlaneseq
    %v4720 = vshrl.u32 %v4719, 7
    %v4721 = vsub.s32 2, %v4720
    %v4722 = vrot.slane %v33, %v4721
    %v4723 = vmul.f32 %v4715, %v4722
    %v4724 = vmul.f32 %v4716, %v4722
    %v4725 = vmul.f32 %v4717, %v4722
    %v4726 = vmul.f32 %v4718, %v4722
    %v4727 = vlaneseq
    %v4728 = vshrl.u32 %v4727, 7
    %v4729 = vsub.s32 3, %v4728
    %v4730 = vrot.slane %v33, %v4729
    %v4731 = vadd.f32 %v4723, %v4730
    %v4732 = vadd.f32 %v4724, %v4730
    %v4733 = vadd.f32 %v4725, %v4730
    %v4734 = vadd.f32 %v4726, %v4730
    %v4735 = vld [vmem:[%s4] sm:$0xff]
    %v4736 = vld [vmem:[%s4 + $0x8] sm:$0xff]
    %v4737 = vld [vmem:[%s4 + $0x10] sm:$0xff]
    %v4738 = vld [vmem:[%s4 + $0x18] sm:$0xff]
    %v4739 = vld [vmem:[%s4 + $0x20] sm:$0xff]
    %v4740 = vld [vmem:[%s3 + $0x50] sm:$0xff]
    %v4741 = vld [vmem:[%s3 + $0x58] sm:$0xff]
    %v4742 = vld [vmem:[%s3 + $0x60] sm:$0xff]
    %v4743 = vld [vmem:[%s3 + $0x68] sm:$0xff]
    %v4744 = vld [vmem:[%s3 + $0x70] sm:$0xff]
    %v4745 = vld [vmem:[%s3 + $0x78] sm:$0xff]
    %v4746 = vld [vmem:[%s3 + $0x80] sm:$0xff]
    %v4747 = vld [vmem:[%s3 + $0x88] sm:$0xff]
    %v4748 = vld [vmem:[%s3 + $0x90] sm:$0x1]
    %v4749 = vlaneseq
    %v4750 = vshrl.u32 %v4749, 7
    %v4751 = vsub.s32 0, %v4750
    %v4752 = vrot.slane %v4739, %v4751
    %v4754 = vsel %vm43, %v4731, 0
    %v4757 = vsel %vm43, %v4732, 0
    %v4760 = vsel %vm43, %v4733, 0
    %v4763 = vsel %vm43, %v4734, 0
    %4765 = vmatprep.subr.mxu0 0.0
    %4766 = vmatpush1.msra.mxu0 %v4735
    %4767 = vmatprep.subr.mxu0 0.0
    %4768 = vmatpush1.msra.mxu0 %v4736
    %4769 = vmatprep.subr.mxu0 0.0
    %4770 = vmatpush1.msra.mxu0 %v4737
    %4771 = vmatprep.subr.mxu0 0.0
    %4772 = vmatpush1.msra.mxu0 %v4738
    %4773 = vmatprep.subr.mxu0 0.0
    %4774 = vmatpush1.msra.mxu0 0.0
    %4775 = vmatprep.subr.mxu0 0.0
    %4776 = vmatpush1.msra.mxu0 0.0
    %4777 = vmatprep.subr.mxu0 0.0
    %4778 = vmatpush1.msra.mxu0 0.0
    %4779 = vmatprep.subr.mxu0 0.0
    %4780 = vmatpush1.msra.mxu0 0.0
    %4781 = vmatprep.subr.mxu0 0.0
    %4782 = vmatpush1.msra.mxu0 0.0
    %4783 = vmatprep.subr.mxu0 0.0
    %4784 = vmatpush1.msra.mxu0 0.0
    %4785 = vmatprep.subr.mxu0 0.0
    %4786 = vmatpush1.msra.mxu0 0.0
    %4787 = vmatprep.subr.mxu0 0.0
    %4788 = vmatpush1.msra.mxu0 0.0
    %4789 = vmatprep.subr.mxu0 0.0
    %4790 = vmatpush1.msra.mxu0 0.0
    %4791 = vmatprep.subr.mxu0 0.0
    %4792 = vmatpush1.msra.mxu0 0.0
    %4793 = vmatprep.subr.mxu0 0.0
    %4794 = vmatpush1.msra.mxu0 0.0
    %4795 = vmatprep.subr.mxu0 0.0
    %4796 = vmatpush1.msra.mxu0 0.0
    %4797 = vmatprep.subr.mxu0 0.0
    %4798 = vmatpush1.msra.mxu0 0.0
    %4799 = vmatprep.subr.mxu0 0.0
    %4800 = vmatpush1.msra.mxu0 0.0
    %4801 = vmatprep.subr.mxu0 0.0
    %4802 = vmatpush1.msra.mxu0 0.0
    %4803 = vmatprep.subr.mxu0 0.0
    %4804 = vmatpush1.msra.mxu0 0.0
    %4805 = vmatprep.subr.mxu0 0.0
    %4806 = vmatpush1.msra.mxu0 0.0
    %4807 = vmatprep.subr.mxu0 0.0
    %4808 = vmatpush1.msra.mxu0 0.0
    %4809 = vmatprep.subr.mxu0 0.0
    %4810 = vmatpush1.msra.mxu0 0.0
    %4811 = vmatprep.subr.mxu0 0.0
    %4812 = vmatpush1.msra.mxu0 0.0
    %4813 = vmatprep.subr.mxu0 0.0
    %4814 = vmatpush1.msra.mxu0 0.0
    %4815 = vmatprep.subr.mxu0 0.0
    %4816 = vmatpush1.msra.mxu0 0.0
    %4817 = vmatprep.subr.mxu0 0.0
    %4818 = vmatpush1.msra.mxu0 0.0
    %4819 = vmatprep.subr.mxu0 0.0
    %4820 = vmatpush1.msra.mxu0 0.0
    %4821 = vmatprep.subr.mxu0 0.0
    %4822 = vmatpush1.msra.mxu0 0.0
    %4823 = vmatprep.subr.mxu0 0.0
    %4824 = vmatpush1.msra.mxu0 0.0
    %4825 = vmatprep.subr.mxu0 0.0
    %4826 = vmatpush1.msra.mxu0 0.0
    %4827 = vmatprep.subr.mxu0 0.0
    %4828 = vmatpush1.msra.mxu0 0.0
    %4829 = vmatprep.mubr.f32.mxu0 0.0
    %4830 = vmatmul.mubr.f32.gmra.mrb[0].mxu0 %v4754
    %v4831 = vpop.f32.mrb[0].mxu0
    %v4832 = vadd.f32 %v4752, %v4831
    %v4833 = vpop.f32.mrb[0].mxu0
    %4834 = vmatprep.mubr.f32.mxu0 0.0
    %4835 = vmatmul.mubr.f32.gmra.mrb[0].mxu0 %v4757
    %v4836 = vpop.f32.mrb[0].mxu0
    %v4837 = vadd.f32 %v4752, %v4836
    %v4838 = vpop.f32.mrb[0].mxu0
    %4839 = vmatprep.mubr.f32.mxu0 0.0
    %4840 = vmatmul.mubr.f32.gmra.mrb[0].mxu0 %v4760
    %v4841 = vpop.f32.mrb[0].mxu0
    %v4842 = vadd.f32 %v4752, %v4841
    %v4843 = vpop.f32.mrb[0].mxu0
    %4844 = vmatprep.mubr.f32.mxu0 0.0
    %4845 = vmatmul.mubr.f32.gmra.mrb[0].mxu0 %v4763
    %v4846 = vpop.f32.mrb[0].mxu0
    %v4847 = vadd.f32 %v4752, %v4846
    %v4848 = vpop.f32.mrb[0].mxu0
    %4849 = vdwg.mxu0
    %v4850 = vmax.f32 %v4832, 0.0
    %v4851 = vmax.f32 %v4837, 0.0
    %v4852 = vmax.f32 %v4842, 0.0
    %v4853 = vmax.f32 %v4847, 0.0
    %v4854 = vlaneseq
    %v4855 = vshrl.u32 %v4854, 7
    %v4856 = vsub.s32 0, %v4855
    %v4857 = vrot.slane %v4748, %v4856
    %vm4858 = vcmask 523264
    %v4860 = vsel %vm4858, %v4850, 0
    %v4863 = vsel %vm4858, %v4851, 0
    %v4866 = vsel %vm4858, %v4852, 0
    %v4869 = vsel %vm4858, %v4853, 0
    %4871 = vmatprep.subr.mxu0 0.0
    %4872 = vmatpush1.msra.mxu0 %v4740
    %4873 = vmatprep.subr.mxu0 0.0
    %4874 = vmatpush1.msra.mxu0 %v4741
    %4875 = vmatprep.subr.mxu0 0.0
    %4876 = vmatpush1.msra.mxu0 %v4742
    %4877 = vmatprep.subr.mxu0 0.0
    %4878 = vmatpush1.msra.mxu0 %v4743
    %4879 = vmatprep.subr.mxu0 0.0
    %4880 = vmatpush1.msra.mxu0 %v4744
    %4881 = vmatprep.subr.mxu0 0.0
    %4882 = vmatpush1.msra.mxu0 %v4745
    %4883 = vmatprep.subr.mxu0 0.0
    %4884 = vmatpush1.msra.mxu0 %v4746
    %4885 = vmatprep.subr.mxu0 0.0
    %4886 = vmatpush1.msra.mxu0 %v4747
    %4887 = vmatprep.subr.mxu0 0.0
    %4888 = vmatpush1.msra.mxu0 0.0
    %4889 = vmatprep.subr.mxu0 0.0
    %4890 = vmatpush1.msra.mxu0 0.0
    %4891 = vmatprep.subr.mxu0 0.0
    %4892 = vmatpush1.msra.mxu0 0.0
    %4893 = vmatprep.subr.mxu0 0.0
    %4894 = vmatpush1.msra.mxu0 0.0
    %4895 = vmatprep.subr.mxu0 0.0
    %4896 = vmatpush1.msra.mxu0 0.0
    %4897 = vmatprep.subr.mxu0 0.0
    %4898 = vmatpush1.msra.mxu0 0.0
    %4899 = vmatprep.subr.mxu0 0.0
    %4900 = vmatpush1.msra.mxu0 0.0
    %4901 = vmatprep.subr.mxu0 0.0
    %4902 = vmatpush1.msra.mxu0 0.0
    %4903 = vmatprep.subr.mxu0 0.0
    %4904 = vmatpush1.msra.mxu0 0.0
    %4905 = vmatprep.subr.mxu0 0.0
    %4906 = vmatpush1.msra.mxu0 0.0
    %4907 = vmatprep.subr.mxu0 0.0
    %4908 = vmatpush1.msra.mxu0 0.0
    %4909 = vmatprep.subr.mxu0 0.0
    %4910 = vmatpush1.msra.mxu0 0.0
    %4911 = vmatprep.subr.mxu0 0.0
    %4912 = vmatpush1.msra.mxu0 0.0
    %4913 = vmatprep.subr.mxu0 0.0
    %4914 = vmatpush1.msra.mxu0 0.0
    %4915 = vmatprep.subr.mxu0 0.0
    %4916 = vmatpush1.msra.mxu0 0.0
    %4917 = vmatprep.subr.mxu0 0.0
    %4918 = vmatpush1.msra.mxu0 0.0
    %4919 = vmatprep.subr.mxu0 0.0
    %4920 = vmatpush1.msra.mxu0 0.0
    %4921 = vmatprep.subr.mxu0 0.0
    %4922 = vmatpush1.msra.mxu0 0.0
    %4923 = vmatprep.subr.mxu0 0.0
    %4924 = vmatpush1.msra.mxu0 0.0
    %4925 = vmatprep.subr.mxu0 0.0
    %4926 = vmatpush1.msra.mxu0 0.0
    %4927 = vmatprep.subr.mxu0 0.0
    %4928 = vmatpush1.msra.mxu0 0.0
    %4929 = vmatprep.subr.mxu0 0.0
    %4930 = vmatpush1.msra.mxu0 0.0
    %4931 = vmatprep.subr.mxu0 0.0
    %4932 = vmatpush1.msra.mxu0 0.0
    %4933 = vmatprep.subr.mxu0 0.0
    %4934 = vmatpush1.msra.mxu0 0.0
    %4935 = vmatprep.mubr.f32.mxu0 0.0
    %4936 = vmatmul.mubr.f32.gmra.mrb[0].mxu0 %v4860
    %v4937 = vpop.f32.mrb[0].mxu0
    %v4938 = vadd.f32 %v4857, %v4937
    %v4939 = vpop.f32.mrb[0].mxu0
    %4940 = vmatprep.mubr.f32.mxu0 0.0
    %4941 = vmatmul.mubr.f32.gmra.mrb[0].mxu0 %v4863
    %v4942 = vpop.f32.mrb[0].mxu0
    %v4943 = vadd.f32 %v4857, %v4942
    %v4944 = vpop.f32.mrb[0].mxu0
    %4945 = vmatprep.mubr.f32.mxu0 0.0
    %4946 = vmatmul.mubr.f32.gmra.mrb[0].mxu0 %v4866
    %v4947 = vpop.f32.mrb[0].mxu0
    %v4948 = vadd.f32 %v4857, %v4947
    %v4949 = vpop.f32.mrb[0].mxu0
    %4950 = vmatprep.mubr.f32.mxu0 0.0
    %4951 = vmatmul.mubr.f32.gmra.mrb[0].mxu0 %v4869
    %v4952 = vpop.f32.mrb[0].mxu0
    %v4953 = vadd.f32 %v4857, %v4952
    %v4954 = vpop.f32.mrb[0].mxu0
    %4955 = vdwg.mxu0
    %v4956 = vadd.f32 %v4731, %v4938
    %v4957 = vadd.f32 %v4732, %v4943
    %v4958 = vadd.f32 %v4733, %v4948
    %v4959 = vadd.f32 %v4734, %v4953
    %v4960 = vsel %vm43, %v4956, 0.0
    %4961 = vadd.xlane.f32.xlu0 %v4960
    %v4962 = vpop.xlane.xlu0 %4961
    %v4963 = vsel %vm43, %v4957, 0.0
    %4964 = vadd.xlane.f32.xlu0 %v4963
    %v4965 = vpop.xlane.xlu0 %4964
    %v4966 = vsel %vm43, %v4958, 0.0
    %4967 = vadd.xlane.f32.xlu0 %v4966
    %v4968 = vpop.xlane.xlu0 %4967
    %v4969 = vsel %vm43, %v4959, 0.0
    %4970 = vadd.xlane.f32.xlu0 %v4969
    %v4971 = vpop.xlane.xlu0 %4970
    %v4972 = vmul.f32 %v4962, %v2277
    %v4973 = vmul.f32 %v4965, %v2277
    %v4974 = vmul.f32 %v4968, %v2277
    %v4975 = vmul.f32 %v4971, %v2277
    %v4976 = vmul.f32 %v4956, %v4956
    %v4977 = vmul.f32 %v4957, %v4957
    %v4978 = vmul.f32 %v4958, %v4958
    %v4979 = vmul.f32 %v4959, %v4959
    %v4980 = vsel %vm43, %v4976, 0.0
    %4981 = vadd.xlane.f32.xlu0 %v4980
    %v4982 = vpop.xlane.xlu0 %4981
    %v4983 = vsel %vm43, %v4977, 0.0
    %4984 = vadd.xlane.f32.xlu0 %v4983
    %v4985 = vpop.xlane.xlu0 %4984
    %v4986 = vsel %vm43, %v4978, 0.0
    %4987 = vadd.xlane.f32.xlu0 %v4986
    %v4988 = vpop.xlane.xlu0 %4987
    %v4989 = vsel %vm43, %v4979, 0.0
    %4990 = vadd.xlane.f32.xlu0 %v4989
    %v4991 = vpop.xlane.xlu0 %4990
    %v4992 = vmul.f32 %v4982, %v2277
    %v4993 = vmul.f32 %v4985, %v2277
    %v4994 = vmul.f32 %v4988, %v2277
    %v4995 = vmul.f32 %v4991, %v2277
    %v4996 = vmul.f32 %v4972, %v4972
    %v4997 = vmul.f32 %v4973, %v4973
    %v4998 = vmul.f32 %v4974, %v4974
    %v4999 = vmul.f32 %v4975, %v4975
    %v5000 = vsub.f32 %v4992, %v4996
    %v5001 = vsub.f32 %v4993, %v4997
    %v5002 = vsub.f32 %v4994, %v4998
    %v5003 = vsub.f32 %v4995, %v4999
    %v5004 = vsub.f32 %v4956, %v4972
    %v5005 = vsub.f32 %v4957, %v4973
    %v5006 = vsub.f32 %v4958, %v4974
    %v5007 = vsub.f32 %v4959, %v4975
    %v5008 = vadd.f32 %v5000, 1e-05
    %v5009 = vadd.f32 %v5001, 1e-05
    %v5010 = vadd.f32 %v5002, 1e-05
    %v5011 = vadd.f32 %v5003, 1e-05
    %v5012 = vrsqrt.pop %v5008
    %v5013 = vrsqrt.pop %v5009
    %v5014 = vrsqrt.pop %v5010
    %v5015 = vrsqrt.pop %v5011
    %v5016 = vmul.f32 %v5004, %v5012
    %v5017 = vmul.f32 %v5005, %v5013
    %v5018 = vmul.f32 %v5006, %v5014
    %v5019 = vmul.f32 %v5007, %v5015
    %v5020 = vlaneseq
    %v5021 = vshrl.u32 %v5020, 7
    %v5022 = vsub.s32 4, %v5021
    %v5023 = vrot.slane %v33, %v5022
    %v5024 = vmul.f32 %v5016, %v5023
    %v5025 = vmul.f32 %v5017, %v5023
    %v5026 = vmul.f32 %v5018, %v5023
    %v5027 = vmul.f32 %v5019, %v5023
    %v5028 = vlaneseq
    %v5029 = vshrl.u32 %v5028, 7
    %v5030 = vsub.s32 5, %v5029
    %v5031 = vrot.slane %v33, %v5030
    %v5032 = vadd.f32 %v5024, %v5031
    %v5033 = vadd.f32 %v5025, %v5031
    %v5034 = vadd.f32 %v5026, %v5031
    %v5035 = vadd.f32 %v5027, %v5031
    %v5036 = vld [vmem:[%s3 + $0x138] sm:$0xff]
    %s5037 = scalar_lea.vmem %s2, 80
    %v5038 = vld [vmem:[%s5037] sm:$0xff]
    %v5039 = vld [vmem:[%s5037 + $0x8] sm:$0xff]
    %v5040 = vld [vmem:[%s5037 + $0x10] sm:$0xff]
    %v5041 = vld [vmem:[%s5037 + $0x18] sm:$0xff]
    %v5042 = vld [vmem:[%s5037 + $0x20] sm:$0xff]
    %v5043 = vadd.f32 %v5032, %v25
    %v5044 = vadd.f32 %v5033, %v26
    %v5045 = vadd.f32 %v5034, %v27
    %v5046 = vadd.f32 %v5035, %v28
    %v5047 = vlaneseq
    %v5048 = vshrl.u32 %v5047, 7
    %v5049 = vsub.s32 0, %v5048
    %v5050 = vrot.slane %v5042, %v5049
    %v5052 = vsel %vm43, %v5043, 0
    %v5055 = vsel %vm43, %v5044, 0
    %v5058 = vsel %vm43, %v5045, 0
    %v5061 = vsel %vm43, %v5046, 0
    %5063 = vmatprep.subr.mxu0 0.0
    %5064 = vmatpush1.msra.mxu0 %v5038
    %5065 = vmatprep.subr.mxu0 0.0
    %5066 = vmatpush1.msra.mxu0 %v5039
    %5067 = vmatprep.subr.mxu0 0.0
    %5068 = vmatpush1.msra.mxu0 %v5040
    %5069 = vmatprep.subr.mxu0 0.0
    %5070 = vmatpush1.msra.mxu0 %v5041
    %5071 = vmatprep.subr.mxu0 0.0
    %5072 = vmatpush1.msra.mxu0 0.0
    %5073 = vmatprep.subr.mxu0 0.0
    %5074 = vmatpush1.msra.mxu0 0.0
    %5075 = vmatprep.subr.mxu0 0.0
    %5076 = vmatpush1.msra.mxu0 0.0
    %5077 = vmatprep.subr.mxu0 0.0
    %5078 = vmatpush1.msra.mxu0 0.0
    %5079 = vmatprep.subr.mxu0 0.0
    %5080 = vmatpush1.msra.mxu0 0.0
    %5081 = vmatprep.subr.mxu0 0.0
    %5082 = vmatpush1.msra.mxu0 0.0
    %5083 = vmatprep.subr.mxu0 0.0
    %5084 = vmatpush1.msra.mxu0 0.0
    %5085 = vmatprep.subr.mxu0 0.0
    %5086 = vmatpush1.msra.mxu0 0.0
    %5087 = vmatprep.subr.mxu0 0.0
    %5088 = vmatpush1.msra.mxu0 0.0
    %5089 = vmatprep.subr.mxu0 0.0
    %5090 = vmatpush1.msra.mxu0 0.0
    %5091 = vmatprep.subr.mxu0 0.0
    %5092 = vmatpush1.msra.mxu0 0.0
    %5093 = vmatprep.subr.mxu0 0.0
    %5094 = vmatpush1.msra.mxu0 0.0
    %5095 = vmatprep.subr.mxu0 0.0
    %5096 = vmatpush1.msra.mxu0 0.0
    %5097 = vmatprep.subr.mxu0 0.0
    %5098 = vmatpush1.msra.mxu0 0.0
    %5099 = vmatprep.subr.mxu0 0.0
    %5100 = vmatpush1.msra.mxu0 0.0
    %5101 = vmatprep.subr.mxu0 0.0
    %5102 = vmatpush1.msra.mxu0 0.0
    %5103 = vmatprep.subr.mxu0 0.0
    %5104 = vmatpush1.msra.mxu0 0.0
    %5105 = vmatprep.subr.mxu0 0.0
    %5106 = vmatpush1.msra.mxu0 0.0
    %5107 = vmatprep.subr.mxu0 0.0
    %5108 = vmatpush1.msra.mxu0 0.0
    %5109 = vmatprep.subr.mxu0 0.0
    %5110 = vmatpush1.msra.mxu0 0.0
    %5111 = vmatprep.subr.mxu0 0.0
    %5112 = vmatpush1.msra.mxu0 0.0
    %5113 = vmatprep.subr.mxu0 0.0
    %5114 = vmatpush1.msra.mxu0 0.0
    %5115 = vmatprep.subr.mxu0 0.0
    %5116 = vmatpush1.msra.mxu0 0.0
    %5117 = vmatprep.subr.mxu0 0.0
    %5118 = vmatpush1.msra.mxu0 0.0
    %5119 = vmatprep.subr.mxu0 0.0
    %5120 = vmatpush1.msra.mxu0 0.0
    %5121 = vmatprep.subr.mxu0 0.0
    %5122 = vmatpush1.msra.mxu0 0.0
    %5123 = vmatprep.subr.mxu0 0.0
    %5124 = vmatpush1.msra.mxu0 0.0
    %5125 = vmatprep.subr.mxu0 0.0
    %5126 = vmatpush1.msra.mxu0 0.0
    %5127 = vmatprep.mubr.f32.mxu0 0.0
    %5128 = vmatmul.mubr.f32.gmra.mrb[0].mxu0 %v5052
    %v5129 = vpop.f32.mrb[0].mxu0
    %v5130 = vadd.f32 %v5050, %v5129
    %v5131 = vpop.f32.mrb[0].mxu0
    %5132 = vmatprep.mubr.f32.mxu0 0.0
    %5133 = vmatmul.mubr.f32.gmra.mrb[0].mxu0 %v5055
    %v5134 = vpop.f32.mrb[0].mxu0
    %v5135 = vadd.f32 %v5050, %v5134
    %v5136 = vpop.f32.mrb[0].mxu0
    %5137 = vmatprep.mubr.f32.mxu0 0.0
    %5138 = vmatmul.mubr.f32.gmra.mrb[0].mxu0 %v5058
    %v5139 = vpop.f32.mrb[0].mxu0
    %v5140 = vadd.f32 %v5050, %v5139
    %v5141 = vpop.f32.mrb[0].mxu0
    %5142 = vmatprep.mubr.f32.mxu0 0.0
    %5143 = vmatmul.mubr.f32.gmra.mrb[0].mxu0 %v5061
    %v5144 = vpop.f32.mrb[0].mxu0
    %v5145 = vadd.f32 %v5050, %v5144
    %v5146 = vpop.f32.mrb[0].mxu0
    %5147 = vdwg.mxu0
    %5152 = vrot.lane.b32.xlu0 %v5038, 64
    %v5153 = vpop.permute.xlu0 %5152
    %5154 = vrot.lane.b32.xlu0 %v5039, 64
    %v5155 = vpop.permute.xlu0 %5154
    %5156 = vrot.lane.b32.xlu0 %v5040, 64
    %v5157 = vpop.permute.xlu0 %5156
    %5158 = vrot.lane.b32.xlu0 %v5041, 64
    %v5159 = vpop.permute.xlu0 %5158
    %5165 = vrot.lane.b32.xlu0 %v5050, 64
    %v5166 = vpop.permute.xlu0 %5165
    %v5169 = vsel %vm43, %v5032, 0
    %v5172 = vsel %vm43, %v5033, 0
    %v5175 = vsel %vm43, %v5034, 0
    %v5178 = vsel %vm43, %v5035, 0
    %5180 = vmatprep.subr.mxu0 0.0
    %5181 = vmatpush1.msra.mxu0 %v5153
    %5182 = vmatprep.subr.mxu0 0.0
    %5183 = vmatpush1.msra.mxu0 %v5155
    %5184 = vmatprep.subr.mxu0 0.0
    %5185 = vmatpush1.msra.mxu0 %v5157
    %5186 = vmatprep.subr.mxu0 0.0
    %5187 = vmatpush1.msra.mxu0 %v5159
    %5188 = vmatprep.subr.mxu0 0.0
    %5189 = vmatpush1.msra.mxu0 0.0
    %5190 = vmatprep.subr.mxu0 0.0
    %5191 = vmatpush1.msra.mxu0 0.0
    %5192 = vmatprep.subr.mxu0 0.0
    %5193 = vmatpush1.msra.mxu0 0.0
    %5194 = vmatprep.subr.mxu0 0.0
    %5195 = vmatpush1.msra.mxu0 0.0
    %5196 = vmatprep.subr.mxu0 0.0
    %5197 = vmatpush1.msra.mxu0 0.0
    %5198 = vmatprep.subr.mxu0 0.0
    %5199 = vmatpush1.msra.mxu0 0.0
    %5200 = vmatprep.subr.mxu0 0.0
    %5201 = vmatpush1.msra.mxu0 0.0
    %5202 = vmatprep.subr.mxu0 0.0
    %5203 = vmatpush1.msra.mxu0 0.0
    %5204 = vmatprep.subr.mxu0 0.0
    %5205 = vmatpush1.msra.mxu0 0.0
    %5206 = vmatprep.subr.mxu0 0.0
    %5207 = vmatpush1.msra.mxu0 0.0
    %5208 = vmatprep.subr.mxu0 0.0
    %5209 = vmatpush1.msra.mxu0 0.0
    %5210 = vmatprep.subr.mxu0 0.0
    %5211 = vmatpush1.msra.mxu0 0.0
    %5212 = vmatprep.subr.mxu0 0.0
    %5213 = vmatpush1.msra.mxu0 0.0
    %5214 = vmatprep.subr.mxu0 0.0
    %5215 = vmatpush1.msra.mxu0 0.0
    %5216 = vmatprep.subr.mxu0 0.0
    %5217 = vmatpush1.msra.mxu0 0.0
    %5218 = vmatprep.subr.mxu0 0.0
    %5219 = vmatpush1.msra.mxu0 0.0
    %5220 = vmatprep.subr.mxu0 0.0
    %5221 = vmatpush1.msra.mxu0 0.0
    %5222 = vmatprep.subr.mxu0 0.0
    %5223 = vmatpush1.msra.mxu0 0.0
    %5224 = vmatprep.subr.mxu0 0.0
    %5225 = vmatpush1.msra.mxu0 0.0
    %5226 = vmatprep.subr.mxu0 0.0
    %5227 = vmatpush1.msra.mxu0 0.0
    %5228 = vmatprep.subr.mxu0 0.0
    %5229 = vmatpush1.msra.mxu0 0.0
    %5230 = vmatprep.subr.mxu0 0.0
    %5231 = vmatpush1.msra.mxu0 0.0
    %5232 = vmatprep.subr.mxu0 0.0
    %5233 = vmatpush1.msra.mxu0 0.0
    %5234 = vmatprep.subr.mxu0 0.0
    %5235 = vmatpush1.msra.mxu0 0.0
    %5236 = vmatprep.subr.mxu0 0.0
    %5237 = vmatpush1.msra.mxu0 0.0
    %5238 = vmatprep.subr.mxu0 0.0
    %5239 = vmatpush1.msra.mxu0 0.0
    %5240 = vmatprep.subr.mxu0 0.0
    %5241 = vmatpush1.msra.mxu0 0.0
    %5242 = vmatprep.subr.mxu0 0.0
    %5243 = vmatpush1.msra.mxu0 0.0
    %5244 = vmatprep.mubr.f32.mxu0 0.0
    %5245 = vmatmul.mubr.f32.gmra.mrb[0].mxu0 %v5169
    %v5246 = vpop.f32.mrb[0].mxu0
    %v5247 = vadd.f32 %v5166, %v5246
    %v5248 = vpop.f32.mrb[0].mxu0
    %5249 = vmatprep.mubr.f32.mxu0 0.0
    %5250 = vmatmul.mubr.f32.gmra.mrb[0].mxu0 %v5172
    %v5251 = vpop.f32.mrb[0].mxu0
    %v5252 = vadd.f32 %v5166, %v5251
    %v5253 = vpop.f32.mrb[0].mxu0
    %5254 = vmatprep.mubr.f32.mxu0 0.0
    %5255 = vmatmul.mubr.f32.gmra.mrb[0].mxu0 %v5175
    %v5256 = vpop.f32.mrb[0].mxu0
    %v5257 = vadd.f32 %v5166, %v5256
    %v5258 = vpop.f32.mrb[0].mxu0
    %5259 = vmatprep.mubr.f32.mxu0 0.0
    %5260 = vmatmul.mubr.f32.gmra.mrb[0].mxu0 %v5178
    %v5261 = vpop.f32.mrb[0].mxu0
    %v5262 = vadd.f32 %v5166, %v5261
    %v5263 = vpop.f32.mrb[0].mxu0
    %5264 = vdwg.mxu0
    %v5265 = vld [vmem:[%s3 + $0xa0] sm:$0xff]
    %v5266 = vld [vmem:[%s3 + $0xa8] sm:$0xff]
    %v5267 = vld [vmem:[%s3 + $0xb0] sm:$0xff]
    %v5268 = vld [vmem:[%s3 + $0xb8] sm:$0xff]
    %v5269 = vld [vmem:[%s3 + $0xc0] sm:$0x1]
    %5272 = vrot.lane.b32.xlu0 %v5130, 96
    %v5273 = vpop.permute.xlu0 %5272
    %5274 = vrot.lane.b32.xlu0 %v5135, 96
    %v5275 = vpop.permute.xlu0 %5274
    %v5276 = vsel %vm269, %v5130, 0
    %v5278 = vsel %vm269, %v5135, 0
    %v5280 = vsel %vm269, %v5273, 0
    %v5282 = vsel %vm269, %v5275, 0
    %5284 = vmatprep.subr.mxu0 0.0
    %5285 = vmatpush1.xpose.msra.mxu0 %v5280
    %5286 = vmatprep.subr.mxu0 0.0
    %5287 = vmatpush1.xpose.msra.mxu0 %v5282
    %5288 = vmatprep.subr.mxu0 0.0
    %5289 = vmatpush1.xpose.msra.mxu0 0.0
    %5290 = vmatprep.subr.mxu0 0.0
    %5291 = vmatpush1.xpose.msra.mxu0 0.0
    %5292 = vmatprep.subr.mxu0 0.0
    %5293 = vmatpush1.xpose.msra.mxu0 0.0
    %5294 = vmatprep.subr.mxu0 0.0
    %5295 = vmatpush1.xpose.msra.mxu0 0.0
    %5296 = vmatprep.subr.mxu0 0.0
    %5297 = vmatpush1.xpose.msra.mxu0 0.0
    %5298 = vmatprep.subr.mxu0 0.0
    %5299 = vmatpush1.xpose.msra.mxu0 0.0
    %5300 = vmatprep.subr.mxu0 0.0
    %5301 = vmatpush1.xpose.msra.mxu0 0.0
    %5302 = vmatprep.subr.mxu0 0.0
    %5303 = vmatpush1.xpose.msra.mxu0 0.0
    %5304 = vmatprep.subr.mxu0 0.0
    %5305 = vmatpush1.xpose.msra.mxu0 0.0
    %5306 = vmatprep.subr.mxu0 0.0
    %5307 = vmatpush1.xpose.msra.mxu0 0.0
    %5308 = vmatprep.subr.mxu0 0.0
    %5309 = vmatpush1.xpose.msra.mxu0 0.0
    %5310 = vmatprep.subr.mxu0 0.0
    %5311 = vmatpush1.xpose.msra.mxu0 0.0
    %5312 = vmatprep.subr.mxu0 0.0
    %5313 = vmatpush1.xpose.msra.mxu0 0.0
    %5314 = vmatprep.subr.mxu0 0.0
    %5315 = vmatpush1.xpose.msra.mxu0 0.0
    %5316 = vmatprep.subr.mxu0 0.0
    %5317 = vmatpush1.xpose.msra.mxu0 0.0
    %5318 = vmatprep.subr.mxu0 0.0
    %5319 = vmatpush1.xpose.msra.mxu0 0.0
    %5320 = vmatprep.subr.mxu0 0.0
    %5321 = vmatpush1.xpose.msra.mxu0 0.0
    %5322 = vmatprep.subr.mxu0 0.0
    %5323 = vmatpush1.xpose.msra.mxu0 0.0
    %5324 = vmatprep.subr.mxu0 0.0
    %5325 = vmatpush1.xpose.msra.mxu0 0.0
    %5326 = vmatprep.subr.mxu0 0.0
    %5327 = vmatpush1.xpose.msra.mxu0 0.0
    %5328 = vmatprep.subr.mxu0 0.0
    %5329 = vmatpush1.xpose.msra.mxu0 0.0
    %5330 = vmatprep.subr.mxu0 0.0
    %5331 = vmatpush1.xpose.msra.mxu0 0.0
    %5332 = vmatprep.subr.mxu0 0.0
    %5333 = vmatpush1.xpose.msra.mxu0 0.0
    %5334 = vmatprep.subr.mxu0 0.0
    %5335 = vmatpush1.xpose.msra.mxu0 0.0
    %5336 = vmatprep.subr.mxu0 0.0
    %5337 = vmatpush1.xpose.msra.mxu0 0.0
    %5338 = vmatprep.subr.mxu0 0.0
    %5339 = vmatpush1.xpose.msra.mxu0 0.0
    %5340 = vmatprep.subr.mxu0 0.0
    %5341 = vmatpush1.xpose.msra.mxu0 0.0
    %5342 = vmatprep.subr.mxu0 0.0
    %5343 = vmatpush1.xpose.msra.mxu0 0.0
    %5344 = vmatprep.subr.mxu0 0.0
    %5345 = vmatpush1.xpose.msra.mxu0 0.0
    %5346 = vmatprep.subr.mxu0 0.0
    %5347 = vmatpush1.xpose.msra.mxu0 0.0
    %5348 = vmatprep.mubr.f32.mxu0 0.0
    %5349 = vmatmul.mubr.f32.gmra.mrb[0].mxu0 %v5276
    %v5350 = vpop.f32.mrb[0].mxu0
    %v5351 = vadd.f32 0.0, %v5350
    %v5352 = vpop.f32.mrb[0].mxu0
    %5353 = vmatprep.mubr.f32.mxu0 0.0
    %5354 = vmatmul.mubr.f32.gmra.mrb[0].mxu0 %v5278
    %v5355 = vpop.f32.mrb[0].mxu0
    %v5356 = vadd.f32 0.0, %v5355
    %v5357 = vpop.f32.mrb[0].mxu0
    %5358 = vdwg.mxu0
    %5361 = vrot.lane.b32.xlu0 %v5140, 96
    %v5362 = vpop.permute.xlu0 %5361
    %5363 = vrot.lane.b32.xlu0 %v5145, 96
    %v5364 = vpop.permute.xlu0 %5363
    %v5365 = vsel %vm269, %v5140, 0
    %v5367 = vsel %vm269, %v5145, 0
    %v5369 = vsel %vm269, %v5362, 0
    %v5371 = vsel %vm269, %v5364, 0
    %5373 = vmatprep.subr.mxu0 0.0
    %5374 = vmatpush1.xpose.msra.mxu0 %v5369
    %5375 = vmatprep.subr.mxu0 0.0
    %5376 = vmatpush1.xpose.msra.mxu0 %v5371
    %5377 = vmatprep.subr.mxu0 0.0
    %5378 = vmatpush1.xpose.msra.mxu0 0.0
    %5379 = vmatprep.subr.mxu0 0.0
    %5380 = vmatpush1.xpose.msra.mxu0 0.0
    %5381 = vmatprep.subr.mxu0 0.0
    %5382 = vmatpush1.xpose.msra.mxu0 0.0
    %5383 = vmatprep.subr.mxu0 0.0
    %5384 = vmatpush1.xpose.msra.mxu0 0.0
    %5385 = vmatprep.subr.mxu0 0.0
    %5386 = vmatpush1.xpose.msra.mxu0 0.0
    %5387 = vmatprep.subr.mxu0 0.0
    %5388 = vmatpush1.xpose.msra.mxu0 0.0
    %5389 = vmatprep.subr.mxu0 0.0
    %5390 = vmatpush1.xpose.msra.mxu0 0.0
    %5391 = vmatprep.subr.mxu0 0.0
    %5392 = vmatpush1.xpose.msra.mxu0 0.0
    %5393 = vmatprep.subr.mxu0 0.0
    %5394 = vmatpush1.xpose.msra.mxu0 0.0
    %5395 = vmatprep.subr.mxu0 0.0
    %5396 = vmatpush1.xpose.msra.mxu0 0.0
    %5397 = vmatprep.subr.mxu0 0.0
    %5398 = vmatpush1.xpose.msra.mxu0 0.0
    %5399 = vmatprep.subr.mxu0 0.0
    %5400 = vmatpush1.xpose.msra.mxu0 0.0
    %5401 = vmatprep.subr.mxu0 0.0
    %5402 = vmatpush1.xpose.msra.mxu0 0.0
    %5403 = vmatprep.subr.mxu0 0.0
    %5404 = vmatpush1.xpose.msra.mxu0 0.0
    %5405 = vmatprep.subr.mxu0 0.0
    %5406 = vmatpush1.xpose.msra.mxu0 0.0
    %5407 = vmatprep.subr.mxu0 0.0
    %5408 = vmatpush1.xpose.msra.mxu0 0.0
    %5409 = vmatprep.subr.mxu0 0.0
    %5410 = vmatpush1.xpose.msra.mxu0 0.0
    %5411 = vmatprep.subr.mxu0 0.0
    %5412 = vmatpush1.xpose.msra.mxu0 0.0
    %5413 = vmatprep.subr.mxu0 0.0
    %5414 = vmatpush1.xpose.msra.mxu0 0.0
    %5415 = vmatprep.subr.mxu0 0.0
    %5416 = vmatpush1.xpose.msra.mxu0 0.0
    %5417 = vmatprep.subr.mxu0 0.0
    %5418 = vmatpush1.xpose.msra.mxu0 0.0
    %5419 = vmatprep.subr.mxu0 0.0
    %5420 = vmatpush1.xpose.msra.mxu0 0.0
    %5421 = vmatprep.subr.mxu0 0.0
    %5422 = vmatpush1.xpose.msra.mxu0 0.0
    %5423 = vmatprep.subr.mxu0 0.0
    %5424 = vmatpush1.xpose.msra.mxu0 0.0
    %5425 = vmatprep.subr.mxu0 0.0
    %5426 = vmatpush1.xpose.msra.mxu0 0.0
    %5427 = vmatprep.subr.mxu0 0.0
    %5428 = vmatpush1.xpose.msra.mxu0 0.0
    %5429 = vmatprep.subr.mxu0 0.0
    %5430 = vmatpush1.xpose.msra.mxu0 0.0
    %5431 = vmatprep.subr.mxu0 0.0
    %5432 = vmatpush1.xpose.msra.mxu0 0.0
    %5433 = vmatprep.subr.mxu0 0.0
    %5434 = vmatpush1.xpose.msra.mxu0 0.0
    %5435 = vmatprep.subr.mxu0 0.0
    %5436 = vmatpush1.xpose.msra.mxu0 0.0
    %5437 = vmatprep.mubr.f32.mxu0 0.0
    %5438 = vmatmul.mubr.f32.gmra.mrb[0].mxu0 %v5365
    %v5439 = vpop.f32.mrb[0].mxu0
    %v5440 = vadd.f32 0.0, %v5439
    %v5441 = vpop.f32.mrb[0].mxu0
    %5442 = vmatprep.mubr.f32.mxu0 0.0
    %5443 = vmatmul.mubr.f32.gmra.mrb[0].mxu0 %v5367
    %v5444 = vpop.f32.mrb[0].mxu0
    %v5445 = vadd.f32 0.0, %v5444
    %v5446 = vpop.f32.mrb[0].mxu0
    %5447 = vdwg.mxu0
    %5448 = vrot.lane.b32.xlu0 %v5130, 120
    %v5449 = vpop.permute.xlu0 %5448
    %5450 = vrot.lane.b32.xlu0 %v5135, 120
    %v5451 = vpop.permute.xlu0 %5450
    %5452 = vrot.lane.b32.xlu0 %v5130, 88
    %v5453 = vpop.permute.xlu0 %5452
    %5454 = vrot.lane.b32.xlu0 %v5135, 88
    %v5455 = vpop.permute.xlu0 %5454
    %v5456 = vsel %vm269, %v5449, 0
    %v5458 = vsel %vm269, %v5451, 0
    %v5460 = vsel %vm269, %v5453, 0
    %v5462 = vsel %vm269, %v5455, 0
    %5464 = vmatprep.subr.mxu0 0.0
    %5465 = vmatpush1.xpose.msra.mxu0 %v5460
    %5466 = vmatprep.subr.mxu0 0.0
    %5467 = vmatpush1.xpose.msra.mxu0 %v5462
    %5468 = vmatprep.subr.mxu0 0.0
    %5469 = vmatpush1.xpose.msra.mxu0 0.0
    %5470 = vmatprep.subr.mxu0 0.0
    %5471 = vmatpush1.xpose.msra.mxu0 0.0
    %5472 = vmatprep.subr.mxu0 0.0
    %5473 = vmatpush1.xpose.msra.mxu0 0.0
    %5474 = vmatprep.subr.mxu0 0.0
    %5475 = vmatpush1.xpose.msra.mxu0 0.0
    %5476 = vmatprep.subr.mxu0 0.0
    %5477 = vmatpush1.xpose.msra.mxu0 0.0
    %5478 = vmatprep.subr.mxu0 0.0
    %5479 = vmatpush1.xpose.msra.mxu0 0.0
    %5480 = vmatprep.subr.mxu0 0.0
    %5481 = vmatpush1.xpose.msra.mxu0 0.0
    %5482 = vmatprep.subr.mxu0 0.0
    %5483 = vmatpush1.xpose.msra.mxu0 0.0
    %5484 = vmatprep.subr.mxu0 0.0
    %5485 = vmatpush1.xpose.msra.mxu0 0.0
    %5486 = vmatprep.subr.mxu0 0.0
    %5487 = vmatpush1.xpose.msra.mxu0 0.0
    %5488 = vmatprep.subr.mxu0 0.0
    %5489 = vmatpush1.xpose.msra.mxu0 0.0
    %5490 = vmatprep.subr.mxu0 0.0
    %5491 = vmatpush1.xpose.msra.mxu0 0.0
    %5492 = vmatprep.subr.mxu0 0.0
    %5493 = vmatpush1.xpose.msra.mxu0 0.0
    %5494 = vmatprep.subr.mxu0 0.0
    %5495 = vmatpush1.xpose.msra.mxu0 0.0
    %5496 = vmatprep.subr.mxu0 0.0
    %5497 = vmatpush1.xpose.msra.mxu0 0.0
    %5498 = vmatprep.subr.mxu0 0.0
    %5499 = vmatpush1.xpose.msra.mxu0 0.0
    %5500 = vmatprep.subr.mxu0 0.0
    %5501 = vmatpush1.xpose.msra.mxu0 0.0
    %5502 = vmatprep.subr.mxu0 0.0
    %5503 = vmatpush1.xpose.msra.mxu0 0.0
    %5504 = vmatprep.subr.mxu0 0.0
    %5505 = vmatpush1.xpose.msra.mxu0 0.0
    %5506 = vmatprep.subr.mxu0 0.0
    %5507 = vmatpush1.xpose.msra.mxu0 0.0
    %5508 = vmatprep.subr.mxu0 0.0
    %5509 = vmatpush1.xpose.msra.mxu0 0.0
    %5510 = vmatprep.subr.mxu0 0.0
    %5511 = vmatpush1.xpose.msra.mxu0 0.0
    %5512 = vmatprep.subr.mxu0 0.0
    %5513 = vmatpush1.xpose.msra.mxu0 0.0
    %5514 = vmatprep.subr.mxu0 0.0
    %5515 = vmatpush1.xpose.msra.mxu0 0.0
    %5516 = vmatprep.subr.mxu0 0.0
    %5517 = vmatpush1.xpose.msra.mxu0 0.0
    %5518 = vmatprep.subr.mxu0 0.0
    %5519 = vmatpush1.xpose.msra.mxu0 0.0
    %5520 = vmatprep.subr.mxu0 0.0
    %5521 = vmatpush1.xpose.msra.mxu0 0.0
    %5522 = vmatprep.subr.mxu0 0.0
    %5523 = vmatpush1.xpose.msra.mxu0 0.0
    %5524 = vmatprep.subr.mxu0 0.0
    %5525 = vmatpush1.xpose.msra.mxu0 0.0
    %5526 = vmatprep.subr.mxu0 0.0
    %5527 = vmatpush1.xpose.msra.mxu0 0.0
    %5528 = vmatprep.mubr.f32.mxu0 0.0
    %5529 = vmatmul.mubr.f32.gmra.mrb[0].mxu0 %v5456
    %v5530 = vpop.f32.mrb[0].mxu0
    %v5531 = vadd.f32 0.0, %v5530
    %v5532 = vpop.f32.mrb[0].mxu0
    %5533 = vmatprep.mubr.f32.mxu0 0.0
    %5534 = vmatmul.mubr.f32.gmra.mrb[0].mxu0 %v5458
    %v5535 = vpop.f32.mrb[0].mxu0
    %v5536 = vadd.f32 0.0, %v5535
    %v5537 = vpop.f32.mrb[0].mxu0
    %5538 = vdwg.mxu0
    %5539 = vrot.lane.b32.xlu0 %v5140, 120
    %v5540 = vpop.permute.xlu0 %5539
    %5541 = vrot.lane.b32.xlu0 %v5145, 120
    %v5542 = vpop.permute.xlu0 %5541
    %5543 = vrot.lane.b32.xlu0 %v5140, 88
    %v5544 = vpop.permute.xlu0 %5543
    %5545 = vrot.lane.b32.xlu0 %v5145, 88
    %v5546 = vpop.permute.xlu0 %5545
    %v5547 = vsel %vm269, %v5540, 0
    %v5549 = vsel %vm269, %v5542, 0
    %v5551 = vsel %vm269, %v5544, 0
    %v5553 = vsel %vm269, %v5546, 0
    %5555 = vmatprep.subr.mxu0 0.0
    %5556 = vmatpush1.xpose.msra.mxu0 %v5551
    %5557 = vmatprep.subr.mxu0 0.0
    %5558 = vmatpush1.xpose.msra.mxu0 %v5553
    %5559 = vmatprep.subr.mxu0 0.0
    %5560 = vmatpush1.xpose.msra.mxu0 0.0
    %5561 = vmatprep.subr.mxu0 0.0
    %5562 = vmatpush1.xpose.msra.mxu0 0.0
    %5563 = vmatprep.subr.mxu0 0.0
    %5564 = vmatpush1.xpose.msra.mxu0 0.0
    %5565 = vmatprep.subr.mxu0 0.0
    %5566 = vmatpush1.xpose.msra.mxu0 0.0
    %5567 = vmatprep.subr.mxu0 0.0
    %5568 = vmatpush1.xpose.msra.mxu0 0.0
    %5569 = vmatprep.subr.mxu0 0.0
    %5570 = vmatpush1.xpose.msra.mxu0 0.0
    %5571 = vmatprep.subr.mxu0 0.0
    %5572 = vmatpush1.xpose.msra.mxu0 0.0
    %5573 = vmatprep.subr.mxu0 0.0
    %5574 = vmatpush1.xpose.msra.mxu0 0.0
    %5575 = vmatprep.subr.mxu0 0.0
    %5576 = vmatpush1.xpose.msra.mxu0 0.0
    %5577 = vmatprep.subr.mxu0 0.0
    %5578 = vmatpush1.xpose.msra.mxu0 0.0
    %5579 = vmatprep.subr.mxu0 0.0
    %5580 = vmatpush1.xpose.msra.mxu0 0.0
    %5581 = vmatprep.subr.mxu0 0.0
    %5582 = vmatpush1.xpose.msra.mxu0 0.0
    %5583 = vmatprep.subr.mxu0 0.0
    %5584 = vmatpush1.xpose.msra.mxu0 0.0
    %5585 = vmatprep.subr.mxu0 0.0
    %5586 = vmatpush1.xpose.msra.mxu0 0.0
    %5587 = vmatprep.subr.mxu0 0.0
    %5588 = vmatpush1.xpose.msra.mxu0 0.0
    %5589 = vmatprep.subr.mxu0 0.0
    %5590 = vmatpush1.xpose.msra.mxu0 0.0
    %5591 = vmatprep.subr.mxu0 0.0
    %5592 = vmatpush1.xpose.msra.mxu0 0.0
    %5593 = vmatprep.subr.mxu0 0.0
    %5594 = vmatpush1.xpose.msra.mxu0 0.0
    %5595 = vmatprep.subr.mxu0 0.0
    %5596 = vmatpush1.xpose.msra.mxu0 0.0
    %5597 = vmatprep.subr.mxu0 0.0
    %5598 = vmatpush1.xpose.msra.mxu0 0.0
    %5599 = vmatprep.subr.mxu0 0.0
    %5600 = vmatpush1.xpose.msra.mxu0 0.0
    %5601 = vmatprep.subr.mxu0 0.0
    %5602 = vmatpush1.xpose.msra.mxu0 0.0
    %5603 = vmatprep.subr.mxu0 0.0
    %5604 = vmatpush1.xpose.msra.mxu0 0.0
    %5605 = vmatprep.subr.mxu0 0.0
    %5606 = vmatpush1.xpose.msra.mxu0 0.0
    %5607 = vmatprep.subr.mxu0 0.0
    %5608 = vmatpush1.xpose.msra.mxu0 0.0
    %5609 = vmatprep.subr.mxu0 0.0
    %5610 = vmatpush1.xpose.msra.mxu0 0.0
    %5611 = vmatprep.subr.mxu0 0.0
    %5612 = vmatpush1.xpose.msra.mxu0 0.0
    %5613 = vmatprep.subr.mxu0 0.0
    %5614 = vmatpush1.xpose.msra.mxu0 0.0
    %5615 = vmatprep.subr.mxu0 0.0
    %5616 = vmatpush1.xpose.msra.mxu0 0.0
    %5617 = vmatprep.subr.mxu0 0.0
    %5618 = vmatpush1.xpose.msra.mxu0 0.0
    %5619 = vmatprep.mubr.f32.mxu0 0.0
    %5620 = vmatmul.mubr.f32.gmra.mrb[0].mxu0 %v5547
    %v5621 = vpop.f32.mrb[0].mxu0
    %v5622 = vadd.f32 0.0, %v5621
    %v5623 = vpop.f32.mrb[0].mxu0
    %5624 = vmatprep.mubr.f32.mxu0 0.0
    %5625 = vmatmul.mubr.f32.gmra.mrb[0].mxu0 %v5549
    %v5626 = vpop.f32.mrb[0].mxu0
    %v5627 = vadd.f32 0.0, %v5626
    %v5628 = vpop.f32.mrb[0].mxu0
    %5629 = vdwg.mxu0
    %5630 = vrot.lane.b32.xlu0 %v5130, 112
    %v5631 = vpop.permute.xlu0 %5630
    %5632 = vrot.lane.b32.xlu0 %v5135, 112
    %v5633 = vpop.permute.xlu0 %5632
    %5634 = vrot.lane.b32.xlu0 %v5130, 80
    %v5635 = vpop.permute.xlu0 %5634
    %5636 = vrot.lane.b32.xlu0 %v5135, 80
    %v5637 = vpop.permute.xlu0 %5636
    %v5638 = vsel %vm269, %v5631, 0
    %v5640 = vsel %vm269, %v5633, 0
    %v5642 = vsel %vm269, %v5635, 0
    %v5644 = vsel %vm269, %v5637, 0
    %5646 = vmatprep.subr.mxu0 0.0
    %5647 = vmatpush1.xpose.msra.mxu0 %v5642
    %5648 = vmatprep.subr.mxu0 0.0
    %5649 = vmatpush1.xpose.msra.mxu0 %v5644
    %5650 = vmatprep.subr.mxu0 0.0
    %5651 = vmatpush1.xpose.msra.mxu0 0.0
    %5652 = vmatprep.subr.mxu0 0.0
    %5653 = vmatpush1.xpose.msra.mxu0 0.0
    %5654 = vmatprep.subr.mxu0 0.0
    %5655 = vmatpush1.xpose.msra.mxu0 0.0
    %5656 = vmatprep.subr.mxu0 0.0
    %5657 = vmatpush1.xpose.msra.mxu0 0.0
    %5658 = vmatprep.subr.mxu0 0.0
    %5659 = vmatpush1.xpose.msra.mxu0 0.0
    %5660 = vmatprep.subr.mxu0 0.0
    %5661 = vmatpush1.xpose.msra.mxu0 0.0
    %5662 = vmatprep.subr.mxu0 0.0
    %5663 = vmatpush1.xpose.msra.mxu0 0.0
    %5664 = vmatprep.subr.mxu0 0.0
    %5665 = vmatpush1.xpose.msra.mxu0 0.0
    %5666 = vmatprep.subr.mxu0 0.0
    %5667 = vmatpush1.xpose.msra.mxu0 0.0
    %5668 = vmatprep.subr.mxu0 0.0
    %5669 = vmatpush1.xpose.msra.mxu0 0.0
    %5670 = vmatprep.subr.mxu0 0.0
    %5671 = vmatpush1.xpose.msra.mxu0 0.0
    %5672 = vmatprep.subr.mxu0 0.0
    %5673 = vmatpush1.xpose.msra.mxu0 0.0
    %5674 = vmatprep.subr.mxu0 0.0
    %5675 = vmatpush1.xpose.msra.mxu0 0.0
    %5676 = vmatprep.subr.mxu0 0.0
    %5677 = vmatpush1.xpose.msra.mxu0 0.0
    %5678 = vmatprep.subr.mxu0 0.0
    %5679 = vmatpush1.xpose.msra.mxu0 0.0
    %5680 = vmatprep.subr.mxu0 0.0
    %5681 = vmatpush1.xpose.msra.mxu0 0.0
    %5682 = vmatprep.subr.mxu0 0.0
    %5683 = vmatpush1.xpose.msra.mxu0 0.0
    %5684 = vmatprep.subr.mxu0 0.0
    %5685 = vmatpush1.xpose.msra.mxu0 0.0
    %5686 = vmatprep.subr.mxu0 0.0
    %5687 = vmatpush1.xpose.msra.mxu0 0.0
    %5688 = vmatprep.subr.mxu0 0.0
    %5689 = vmatpush1.xpose.msra.mxu0 0.0
    %5690 = vmatprep.subr.mxu0 0.0
    %5691 = vmatpush1.xpose.msra.mxu0 0.0
    %5692 = vmatprep.subr.mxu0 0.0
    %5693 = vmatpush1.xpose.msra.mxu0 0.0
    %5694 = vmatprep.subr.mxu0 0.0
    %5695 = vmatpush1.xpose.msra.mxu0 0.0
    %5696 = vmatprep.subr.mxu0 0.0
    %5697 = vmatpush1.xpose.msra.mxu0 0.0
    %5698 = vmatprep.subr.mxu0 0.0
    %5699 = vmatpush1.xpose.msra.mxu0 0.0
    %5700 = vmatprep.subr.mxu0 0.0
    %5701 = vmatpush1.xpose.msra.mxu0 0.0
    %5702 = vmatprep.subr.mxu0 0.0
    %5703 = vmatpush1.xpose.msra.mxu0 0.0
    %5704 = vmatprep.subr.mxu0 0.0
    %5705 = vmatpush1.xpose.msra.mxu0 0.0
    %5706 = vmatprep.subr.mxu0 0.0
    %5707 = vmatpush1.xpose.msra.mxu0 0.0
    %5708 = vmatprep.subr.mxu0 0.0
    %5709 = vmatpush1.xpose.msra.mxu0 0.0
    %5710 = vmatprep.mubr.f32.mxu0 0.0
    %5711 = vmatmul.mubr.f32.gmra.mrb[0].mxu0 %v5638
    %v5712 = vpop.f32.mrb[0].mxu0
    %v5713 = vadd.f32 0.0, %v5712
    %v5714 = vpop.f32.mrb[0].mxu0
    %5715 = vmatprep.mubr.f32.mxu0 0.0
    %5716 = vmatmul.mubr.f32.gmra.mrb[0].mxu0 %v5640
    %v5717 = vpop.f32.mrb[0].mxu0
    %v5718 = vadd.f32 0.0, %v5717
    %v5719 = vpop.f32.mrb[0].mxu0
    %5720 = vdwg.mxu0
    %5721 = vrot.lane.b32.xlu0 %v5140, 112
    %v5722 = vpop.permute.xlu0 %5721
    %5723 = vrot.lane.b32.xlu0 %v5145, 112
    %v5724 = vpop.permute.xlu0 %5723
    %5725 = vrot.lane.b32.xlu0 %v5140, 80
    %v5726 = vpop.permute.xlu0 %5725
    %5727 = vrot.lane.b32.xlu0 %v5145, 80
    %v5728 = vpop.permute.xlu0 %5727
    %v5729 = vsel %vm269, %v5722, 0
    %v5731 = vsel %vm269, %v5724, 0
    %v5733 = vsel %vm269, %v5726, 0
    %v5735 = vsel %vm269, %v5728, 0
    %5737 = vmatprep.subr.mxu0 0.0
    %5738 = vmatpush1.xpose.msra.mxu0 %v5733
    %5739 = vmatprep.subr.mxu0 0.0
    %5740 = vmatpush1.xpose.msra.mxu0 %v5735
    %5741 = vmatprep.subr.mxu0 0.0
    %5742 = vmatpush1.xpose.msra.mxu0 0.0
    %5743 = vmatprep.subr.mxu0 0.0
    %5744 = vmatpush1.xpose.msra.mxu0 0.0
    %5745 = vmatprep.subr.mxu0 0.0
    %5746 = vmatpush1.xpose.msra.mxu0 0.0
    %5747 = vmatprep.subr.mxu0 0.0
    %5748 = vmatpush1.xpose.msra.mxu0 0.0
    %5749 = vmatprep.subr.mxu0 0.0
    %5750 = vmatpush1.xpose.msra.mxu0 0.0
    %5751 = vmatprep.subr.mxu0 0.0
    %5752 = vmatpush1.xpose.msra.mxu0 0.0
    %5753 = vmatprep.subr.mxu0 0.0
    %5754 = vmatpush1.xpose.msra.mxu0 0.0
    %5755 = vmatprep.subr.mxu0 0.0
    %5756 = vmatpush1.xpose.msra.mxu0 0.0
    %5757 = vmatprep.subr.mxu0 0.0
    %5758 = vmatpush1.xpose.msra.mxu0 0.0
    %5759 = vmatprep.subr.mxu0 0.0
    %5760 = vmatpush1.xpose.msra.mxu0 0.0
    %5761 = vmatprep.subr.mxu0 0.0
    %5762 = vmatpush1.xpose.msra.mxu0 0.0
    %5763 = vmatprep.subr.mxu0 0.0
    %5764 = vmatpush1.xpose.msra.mxu0 0.0
    %5765 = vmatprep.subr.mxu0 0.0
    %5766 = vmatpush1.xpose.msra.mxu0 0.0
    %5767 = vmatprep.subr.mxu0 0.0
    %5768 = vmatpush1.xpose.msra.mxu0 0.0
    %5769 = vmatprep.subr.mxu0 0.0
    %5770 = vmatpush1.xpose.msra.mxu0 0.0
    %5771 = vmatprep.subr.mxu0 0.0
    %5772 = vmatpush1.xpose.msra.mxu0 0.0
    %5773 = vmatprep.subr.mxu0 0.0
    %5774 = vmatpush1.xpose.msra.mxu0 0.0
    %5775 = vmatprep.subr.mxu0 0.0
    %5776 = vmatpush1.xpose.msra.mxu0 0.0
    %5777 = vmatprep.subr.mxu0 0.0
    %5778 = vmatpush1.xpose.msra.mxu0 0.0
    %5779 = vmatprep.subr.mxu0 0.0
    %5780 = vmatpush1.xpose.msra.mxu0 0.0
    %5781 = vmatprep.subr.mxu0 0.0
    %5782 = vmatpush1.xpose.msra.mxu0 0.0
    %5783 = vmatprep.subr.mxu0 0.0
    %5784 = vmatpush1.xpose.msra.mxu0 0.0
    %5785 = vmatprep.subr.mxu0 0.0
    %5786 = vmatpush1.xpose.msra.mxu0 0.0
    %5787 = vmatprep.subr.mxu0 0.0
    %5788 = vmatpush1.xpose.msra.mxu0 0.0
    %5789 = vmatprep.subr.mxu0 0.0
    %5790 = vmatpush1.xpose.msra.mxu0 0.0
    %5791 = vmatprep.subr.mxu0 0.0
    %5792 = vmatpush1.xpose.msra.mxu0 0.0
    %5793 = vmatprep.subr.mxu0 0.0
    %5794 = vmatpush1.xpose.msra.mxu0 0.0
    %5795 = vmatprep.subr.mxu0 0.0
    %5796 = vmatpush1.xpose.msra.mxu0 0.0
    %5797 = vmatprep.subr.mxu0 0.0
    %5798 = vmatpush1.xpose.msra.mxu0 0.0
    %5799 = vmatprep.subr.mxu0 0.0
    %5800 = vmatpush1.xpose.msra.mxu0 0.0
    %5801 = vmatprep.mubr.f32.mxu0 0.0
    %5802 = vmatmul.mubr.f32.gmra.mrb[0].mxu0 %v5729
    %v5803 = vpop.f32.mrb[0].mxu0
    %v5804 = vadd.f32 0.0, %v5803
    %v5805 = vpop.f32.mrb[0].mxu0
    %5806 = vmatprep.mubr.f32.mxu0 0.0
    %5807 = vmatmul.mubr.f32.gmra.mrb[0].mxu0 %v5731
    %v5808 = vpop.f32.mrb[0].mxu0
    %v5809 = vadd.f32 0.0, %v5808
    %v5810 = vpop.f32.mrb[0].mxu0
    %5811 = vdwg.mxu0
    %5812 = vrot.lane.b32.xlu0 %v5130, 104
    %v5813 = vpop.permute.xlu0 %5812
    %5814 = vrot.lane.b32.xlu0 %v5135, 104
    %v5815 = vpop.permute.xlu0 %5814
    %5816 = vrot.lane.b32.xlu0 %v5130, 72
    %v5817 = vpop.permute.xlu0 %5816
    %5818 = vrot.lane.b32.xlu0 %v5135, 72
    %v5819 = vpop.permute.xlu0 %5818
    %v5820 = vsel %vm269, %v5813, 0
    %v5822 = vsel %vm269, %v5815, 0
    %v5824 = vsel %vm269, %v5817, 0
    %v5826 = vsel %vm269, %v5819, 0
    %5828 = vmatprep.subr.mxu0 0.0
    %5829 = vmatpush1.xpose.msra.mxu0 %v5824
    %5830 = vmatprep.subr.mxu0 0.0
    %5831 = vmatpush1.xpose.msra.mxu0 %v5826
    %5832 = vmatprep.subr.mxu0 0.0
    %5833 = vmatpush1.xpose.msra.mxu0 0.0
    %5834 = vmatprep.subr.mxu0 0.0
    %5835 = vmatpush1.xpose.msra.mxu0 0.0
    %5836 = vmatprep.subr.mxu0 0.0
    %5837 = vmatpush1.xpose.msra.mxu0 0.0
    %5838 = vmatprep.subr.mxu0 0.0
    %5839 = vmatpush1.xpose.msra.mxu0 0.0
    %5840 = vmatprep.subr.mxu0 0.0
    %5841 = vmatpush1.xpose.msra.mxu0 0.0
    %5842 = vmatprep.subr.mxu0 0.0
    %5843 = vmatpush1.xpose.msra.mxu0 0.0
    %5844 = vmatprep.subr.mxu0 0.0
    %5845 = vmatpush1.xpose.msra.mxu0 0.0
    %5846 = vmatprep.subr.mxu0 0.0
    %5847 = vmatpush1.xpose.msra.mxu0 0.0
    %5848 = vmatprep.subr.mxu0 0.0
    %5849 = vmatpush1.xpose.msra.mxu0 0.0
    %5850 = vmatprep.subr.mxu0 0.0
    %5851 = vmatpush1.xpose.msra.mxu0 0.0
    %5852 = vmatprep.subr.mxu0 0.0
    %5853 = vmatpush1.xpose.msra.mxu0 0.0
    %5854 = vmatprep.subr.mxu0 0.0
    %5855 = vmatpush1.xpose.msra.mxu0 0.0
    %5856 = vmatprep.subr.mxu0 0.0
    %5857 = vmatpush1.xpose.msra.mxu0 0.0
    %5858 = vmatprep.subr.mxu0 0.0
    %5859 = vmatpush1.xpose.msra.mxu0 0.0
    %5860 = vmatprep.subr.mxu0 0.0
    %5861 = vmatpush1.xpose.msra.mxu0 0.0
    %5862 = vmatprep.subr.mxu0 0.0
    %5863 = vmatpush1.xpose.msra.mxu0 0.0
    %5864 = vmatprep.subr.mxu0 0.0
    %5865 = vmatpush1.xpose.msra.mxu0 0.0
    %5866 = vmatprep.subr.mxu0 0.0
    %5867 = vmatpush1.xpose.msra.mxu0 0.0
    %5868 = vmatprep.subr.mxu0 0.0
    %5869 = vmatpush1.xpose.msra.mxu0 0.0
    %5870 = vmatprep.subr.mxu0 0.0
    %5871 = vmatpush1.xpose.msra.mxu0 0.0
    %5872 = vmatprep.subr.mxu0 0.0
    %5873 = vmatpush1.xpose.msra.mxu0 0.0
    %5874 = vmatprep.subr.mxu0 0.0
    %5875 = vmatpush1.xpose.msra.mxu0 0.0
    %5876 = vmatprep.subr.mxu0 0.0
    %5877 = vmatpush1.xpose.msra.mxu0 0.0
    %5878 = vmatprep.subr.mxu0 0.0
    %5879 = vmatpush1.xpose.msra.mxu0 0.0
    %5880 = vmatprep.subr.mxu0 0.0
    %5881 = vmatpush1.xpose.msra.mxu0 0.0
    %5882 = vmatprep.subr.mxu0 0.0
    %5883 = vmatpush1.xpose.msra.mxu0 0.0
    %5884 = vmatprep.subr.mxu0 0.0
    %5885 = vmatpush1.xpose.msra.mxu0 0.0
    %5886 = vmatprep.subr.mxu0 0.0
    %5887 = vmatpush1.xpose.msra.mxu0 0.0
    %5888 = vmatprep.subr.mxu0 0.0
    %5889 = vmatpush1.xpose.msra.mxu0 0.0
    %5890 = vmatprep.subr.mxu0 0.0
    %5891 = vmatpush1.xpose.msra.mxu0 0.0
    %5892 = vmatprep.mubr.f32.mxu0 0.0
    %5893 = vmatmul.mubr.f32.gmra.mrb[0].mxu0 %v5820
    %v5894 = vpop.f32.mrb[0].mxu0
    %v5895 = vadd.f32 0.0, %v5894
    %v5896 = vpop.f32.mrb[0].mxu0
    %5897 = vmatprep.mubr.f32.mxu0 0.0
    %5898 = vmatmul.mubr.f32.gmra.mrb[0].mxu0 %v5822
    %v5899 = vpop.f32.mrb[0].mxu0
    %v5900 = vadd.f32 0.0, %v5899
    %v5901 = vpop.f32.mrb[0].mxu0
    %5902 = vdwg.mxu0
    %5903 = vrot.lane.b32.xlu0 %v5140, 104
    %v5904 = vpop.permute.xlu0 %5903
    %5905 = vrot.lane.b32.xlu0 %v5145, 104
    %v5906 = vpop.permute.xlu0 %5905
    %5907 = vrot.lane.b32.xlu0 %v5140, 72
    %v5908 = vpop.permute.xlu0 %5907
    %5909 = vrot.lane.b32.xlu0 %v5145, 72
    %v5910 = vpop.permute.xlu0 %5909
    %v5911 = vsel %vm269, %v5904, 0
    %v5913 = vsel %vm269, %v5906, 0
    %v5915 = vsel %vm269, %v5908, 0
    %v5917 = vsel %vm269, %v5910, 0
    %5919 = vmatprep.subr.mxu0 0.0
    %5920 = vmatpush1.xpose.msra.mxu0 %v5915
    %5921 = vmatprep.subr.mxu0 0.0
    %5922 = vmatpush1.xpose.msra.mxu0 %v5917
    %5923 = vmatprep.subr.mxu0 0.0
    %5924 = vmatpush1.xpose.msra.mxu0 0.0
    %5925 = vmatprep.subr.mxu0 0.0
    %5926 = vmatpush1.xpose.msra.mxu0 0.0
    %5927 = vmatprep.subr.mxu0 0.0
    %5928 = vmatpush1.xpose.msra.mxu0 0.0
    %5929 = vmatprep.subr.mxu0 0.0
    %5930 = vmatpush1.xpose.msra.mxu0 0.0
    %5931 = vmatprep.subr.mxu0 0.0
    %5932 = vmatpush1.xpose.msra.mxu0 0.0
    %5933 = vmatprep.subr.mxu0 0.0
    %5934 = vmatpush1.xpose.msra.mxu0 0.0
    %5935 = vmatprep.subr.mxu0 0.0
    %5936 = vmatpush1.xpose.msra.mxu0 0.0
    %5937 = vmatprep.subr.mxu0 0.0
    %5938 = vmatpush1.xpose.msra.mxu0 0.0
    %5939 = vmatprep.subr.mxu0 0.0
    %5940 = vmatpush1.xpose.msra.mxu0 0.0
    %5941 = vmatprep.subr.mxu0 0.0
    %5942 = vmatpush1.xpose.msra.mxu0 0.0
    %5943 = vmatprep.subr.mxu0 0.0
    %5944 = vmatpush1.xpose.msra.mxu0 0.0
    %5945 = vmatprep.subr.mxu0 0.0
    %5946 = vmatpush1.xpose.msra.mxu0 0.0
    %5947 = vmatprep.subr.mxu0 0.0
    %5948 = vmatpush1.xpose.msra.mxu0 0.0
    %5949 = vmatprep.subr.mxu0 0.0
    %5950 = vmatpush1.xpose.msra.mxu0 0.0
    %5951 = vmatprep.subr.mxu0 0.0
    %5952 = vmatpush1.xpose.msra.mxu0 0.0
    %5953 = vmatprep.subr.mxu0 0.0
    %5954 = vmatpush1.xpose.msra.mxu0 0.0
    %5955 = vmatprep.subr.mxu0 0.0
    %5956 = vmatpush1.xpose.msra.mxu0 0.0
    %5957 = vmatprep.subr.mxu0 0.0
    %5958 = vmatpush1.xpose.msra.mxu0 0.0
    %5959 = vmatprep.subr.mxu0 0.0
    %5960 = vmatpush1.xpose.msra.mxu0 0.0
    %5961 = vmatprep.subr.mxu0 0.0
    %5962 = vmatpush1.xpose.msra.mxu0 0.0
    %5963 = vmatprep.subr.mxu0 0.0
    %5964 = vmatpush1.xpose.msra.mxu0 0.0
    %5965 = vmatprep.subr.mxu0 0.0
    %5966 = vmatpush1.xpose.msra.mxu0 0.0
    %5967 = vmatprep.subr.mxu0 0.0
    %5968 = vmatpush1.xpose.msra.mxu0 0.0
    %5969 = vmatprep.subr.mxu0 0.0
    %5970 = vmatpush1.xpose.msra.mxu0 0.0
    %5971 = vmatprep.subr.mxu0 0.0
    %5972 = vmatpush1.xpose.msra.mxu0 0.0
    %5973 = vmatprep.subr.mxu0 0.0
    %5974 = vmatpush1.xpose.msra.mxu0 0.0
    %5975 = vmatprep.subr.mxu0 0.0
    %5976 = vmatpush1.xpose.msra.mxu0 0.0
    %5977 = vmatprep.subr.mxu0 0.0
    %5978 = vmatpush1.xpose.msra.mxu0 0.0
    %5979 = vmatprep.subr.mxu0 0.0
    %5980 = vmatpush1.xpose.msra.mxu0 0.0
    %5981 = vmatprep.subr.mxu0 0.0
    %5982 = vmatpush1.xpose.msra.mxu0 0.0
    %5983 = vmatprep.mubr.f32.mxu0 0.0
    %5984 = vmatmul.mubr.f32.gmra.mrb[0].mxu0 %v5911
    %v5985 = vpop.f32.mrb[0].mxu0
    %v5986 = vadd.f32 0.0, %v5985
    %v5987 = vpop.f32.mrb[0].mxu0
    %5988 = vmatprep.mubr.f32.mxu0 0.0
    %5989 = vmatmul.mubr.f32.gmra.mrb[0].mxu0 %v5913
    %v5990 = vpop.f32.mrb[0].mxu0
    %v5991 = vadd.f32 0.0, %v5990
    %v5992 = vpop.f32.mrb[0].mxu0
    %5993 = vdwg.mxu0
    %v5994 = vsel %vm988, %v5351, -inf
    %5995 = vmax.xlane.f32.xlu0 %v5994
    %v5996 = vpop.xlane.xlu0 %5995
    %v5997 = vsel %vm988, %v5356, -inf
    %5998 = vmax.xlane.f32.xlu0 %v5997
    %v5999 = vpop.xlane.xlu0 %5998
    %v6000 = vsel %vm988, %v5531, -inf
    %6001 = vmax.xlane.f32.xlu0 %v6000
    %v6002 = vpop.xlane.xlu0 %6001
    %v6003 = vsel %vm988, %v5536, -inf
    %6004 = vmax.xlane.f32.xlu0 %v6003
    %v6005 = vpop.xlane.xlu0 %6004
    %v6006 = vsel %vm988, %v5713, -inf
    %6007 = vmax.xlane.f32.xlu0 %v6006
    %v6008 = vpop.xlane.xlu0 %6007
    %v6009 = vsel %vm988, %v5718, -inf
    %6010 = vmax.xlane.f32.xlu0 %v6009
    %v6011 = vpop.xlane.xlu0 %6010
    %v6012 = vsel %vm988, %v5895, -inf
    %6013 = vmax.xlane.f32.xlu0 %v6012
    %v6014 = vpop.xlane.xlu0 %6013
    %v6015 = vsel %vm988, %v5900, -inf
    %6016 = vmax.xlane.f32.xlu0 %v6015
    %v6017 = vpop.xlane.xlu0 %6016
    %v6018 = vsel %vm988, %v5440, -inf
    %6019 = vmax.xlane.f32.xlu0 %v6018
    %v6020 = vpop.xlane.xlu0 %6019
    %v6021 = vsel %vm988, %v5445, -inf
    %6022 = vmax.xlane.f32.xlu0 %v6021
    %v6023 = vpop.xlane.xlu0 %6022
    %v6024 = vsel %vm988, %v5622, -inf
    %6025 = vmax.xlane.f32.xlu0 %v6024
    %v6026 = vpop.xlane.xlu0 %6025
    %v6027 = vsel %vm988, %v5627, -inf
    %6028 = vmax.xlane.f32.xlu0 %v6027
    %v6029 = vpop.xlane.xlu0 %6028
    %v6030 = vsel %vm988, %v5804, -inf
    %6031 = vmax.xlane.f32.xlu0 %v6030
    %v6032 = vpop.xlane.xlu0 %6031
    %v6033 = vsel %vm988, %v5809, -inf
    %6034 = vmax.xlane.f32.xlu0 %v6033
    %v6035 = vpop.xlane.xlu0 %6034
    %v6036 = vsel %vm988, %v5986, -inf
    %6037 = vmax.xlane.f32.xlu0 %v6036
    %v6038 = vpop.xlane.xlu0 %6037
    %v6039 = vsel %vm988, %v5991, -inf
    %6040 = vmax.xlane.f32.xlu0 %v6039
    %v6041 = vpop.xlane.xlu0 %6040
    %v6042 = vsub.f32 %v5351, %v5996
    %v6043 = vsub.f32 %v5356, %v5999
    %v6044 = vsub.f32 %v5531, %v6002
    %v6045 = vsub.f32 %v5536, %v6005
    %v6046 = vsub.f32 %v5713, %v6008
    %v6047 = vsub.f32 %v5718, %v6011
    %v6048 = vsub.f32 %v5895, %v6014
    %v6049 = vsub.f32 %v5900, %v6017
    %v6050 = vsub.f32 %v5440, %v6020
    %v6051 = vsub.f32 %v5445, %v6023
    %v6052 = vsub.f32 %v5622, %v6026
    %v6053 = vsub.f32 %v5627, %v6029
    %v6054 = vsub.f32 %v5804, %v6032
    %v6055 = vsub.f32 %v5809, %v6035
    %v6056 = vsub.f32 %v5986, %v6038
    %v6057 = vsub.f32 %v5991, %v6041
    %v6058 = vmul.f32 %v6042, 1.442695
    %v6059 = vpow.pop %v6058
    %v6060 = vmul.f32 %v6043, 1.442695
    %v6061 = vpow.pop %v6060
    %v6062 = vmul.f32 %v6044, 1.442695
    %v6063 = vpow.pop %v6062
    %v6064 = vmul.f32 %v6045, 1.442695
    %v6065 = vpow.pop %v6064
    %v6066 = vmul.f32 %v6046, 1.442695
    %v6067 = vpow.pop %v6066
    %v6068 = vmul.f32 %v6047, 1.442695
    %v6069 = vpow.pop %v6068
    %v6070 = vmul.f32 %v6048, 1.442695
    %v6071 = vpow.pop %v6070
    %v6072 = vmul.f32 %v6049, 1.442695
    %v6073 = vpow.pop %v6072
    %v6074 = vmul.f32 %v6050, 1.442695
    %v6075 = vpow.pop %v6074
    %v6076 = vmul.f32 %v6051, 1.442695
    %v6077 = vpow.pop %v6076
    %v6078 = vmul.f32 %v6052, 1.442695
    %v6079 = vpow.pop %v6078
    %v6080 = vmul.f32 %v6053, 1.442695
    %v6081 = vpow.pop %v6080
    %v6082 = vmul.f32 %v6054, 1.442695
    %v6083 = vpow.pop %v6082
    %v6084 = vmul.f32 %v6055, 1.442695
    %v6085 = vpow.pop %v6084
    %v6086 = vmul.f32 %v6056, 1.442695
    %v6087 = vpow.pop %v6086
    %v6088 = vmul.f32 %v6057, 1.442695
    %v6089 = vpow.pop %v6088
    %v6090 = vsel %vm988, %v6059, 0.0
    %6091 = vadd.xlane.f32.xlu0 %v6090
    %v6092 = vpop.xlane.xlu0 %6091
    %v6093 = vsel %vm988, %v6061, 0.0
    %6094 = vadd.xlane.f32.xlu0 %v6093
    %v6095 = vpop.xlane.xlu0 %6094
    %v6096 = vsel %vm988, %v6063, 0.0
    %6097 = vadd.xlane.f32.xlu0 %v6096
    %v6098 = vpop.xlane.xlu0 %6097
    %v6099 = vsel %vm988, %v6065, 0.0
    %6100 = vadd.xlane.f32.xlu0 %v6099
    %v6101 = vpop.xlane.xlu0 %6100
    %v6102 = vsel %vm988, %v6067, 0.0
    %6103 = vadd.xlane.f32.xlu0 %v6102
    %v6104 = vpop.xlane.xlu0 %6103
    %v6105 = vsel %vm988, %v6069, 0.0
    %6106 = vadd.xlane.f32.xlu0 %v6105
    %v6107 = vpop.xlane.xlu0 %6106
    %v6108 = vsel %vm988, %v6071, 0.0
    %6109 = vadd.xlane.f32.xlu0 %v6108
    %v6110 = vpop.xlane.xlu0 %6109
    %v6111 = vsel %vm988, %v6073, 0.0
    %6112 = vadd.xlane.f32.xlu0 %v6111
    %v6113 = vpop.xlane.xlu0 %6112
    %v6114 = vsel %vm988, %v6075, 0.0
    %6115 = vadd.xlane.f32.xlu0 %v6114
    %v6116 = vpop.xlane.xlu0 %6115
    %v6117 = vsel %vm988, %v6077, 0.0
    %6118 = vadd.xlane.f32.xlu0 %v6117
    %v6119 = vpop.xlane.xlu0 %6118
    %v6120 = vsel %vm988, %v6079, 0.0
    %6121 = vadd.xlane.f32.xlu0 %v6120
    %v6122 = vpop.xlane.xlu0 %6121
    %v6123 = vsel %vm988, %v6081, 0.0
    %6124 = vadd.xlane.f32.xlu0 %v6123
    %v6125 = vpop.xlane.xlu0 %6124
    %v6126 = vsel %vm988, %v6083, 0.0
    %6127 = vadd.xlane.f32.xlu0 %v6126
    %v6128 = vpop.xlane.xlu0 %6127
    %v6129 = vsel %vm988, %v6085, 0.0
    %6130 = vadd.xlane.f32.xlu0 %v6129
    %v6131 = vpop.xlane.xlu0 %6130
    %v6132 = vsel %vm988, %v6087, 0.0
    %6133 = vadd.xlane.f32.xlu0 %v6132
    %v6134 = vpop.xlane.xlu0 %6133
    %v6135 = vsel %vm988, %v6089, 0.0
    %6136 = vadd.xlane.f32.xlu0 %v6135
    %v6137 = vpop.xlane.xlu0 %6136
    %v6138 = vrcp.pop %v6092
    %v6139 = vrcp.pop %v6095
    %v6140 = vrcp.pop %v6098
    %v6141 = vrcp.pop %v6101
    %v6142 = vrcp.pop %v6104
    %v6143 = vrcp.pop %v6107
    %v6144 = vrcp.pop %v6110
    %v6145 = vrcp.pop %v6113
    %v6146 = vrcp.pop %v6116
    %v6147 = vrcp.pop %v6119
    %v6148 = vrcp.pop %v6122
    %v6149 = vrcp.pop %v6125
    %v6150 = vrcp.pop %v6128
    %v6151 = vrcp.pop %v6131
    %v6152 = vrcp.pop %v6134
    %v6153 = vrcp.pop %v6137
    %v6154 = vmul.f32 %v6059, %v6138
    %v6155 = vmul.f32 %v6061, %v6139
    %v6156 = vmul.f32 %v6063, %v6140
    %v6157 = vmul.f32 %v6065, %v6141
    %v6158 = vmul.f32 %v6067, %v6142
    %v6159 = vmul.f32 %v6069, %v6143
    %v6160 = vmul.f32 %v6071, %v6144
    %v6161 = vmul.f32 %v6073, %v6145
    %v6162 = vmul.f32 %v6075, %v6146
    %v6163 = vmul.f32 %v6077, %v6147
    %v6164 = vmul.f32 %v6079, %v6148
    %v6165 = vmul.f32 %v6081, %v6149
    %v6166 = vmul.f32 %v6083, %v6150
    %v6167 = vmul.f32 %v6085, %v6151
    %v6168 = vmul.f32 %v6087, %v6152
    %v6169 = vmul.f32 %v6089, %v6153
    %v6171 = vsel %vm988, %v6154, 0
    %v6174 = vsel %vm988, %v6155, 0
    %6176 = vmatprep.subr.mxu0 0.0
    %6177 = vmatpush1.msra.mxu0 %v5247
    %6178 = vmatprep.subr.mxu0 0.0
    %6179 = vmatpush1.msra.mxu0 %v5252
    %6180 = vmatprep.subr.mxu0 0.0
    %6181 = vmatpush1.msra.mxu0 0.0
    %6182 = vmatprep.subr.mxu0 0.0
    %6183 = vmatpush1.msra.mxu0 0.0
    %6184 = vmatprep.subr.mxu0 0.0
    %6185 = vmatpush1.msra.mxu0 0.0
    %6186 = vmatprep.subr.mxu0 0.0
    %6187 = vmatpush1.msra.mxu0 0.0
    %6188 = vmatprep.subr.mxu0 0.0
    %6189 = vmatpush1.msra.mxu0 0.0
    %6190 = vmatprep.subr.mxu0 0.0
    %6191 = vmatpush1.msra.mxu0 0.0
    %6192 = vmatprep.subr.mxu0 0.0
    %6193 = vmatpush1.msra.mxu0 0.0
    %6194 = vmatprep.subr.mxu0 0.0
    %6195 = vmatpush1.msra.mxu0 0.0
    %6196 = vmatprep.subr.mxu0 0.0
    %6197 = vmatpush1.msra.mxu0 0.0
    %6198 = vmatprep.subr.mxu0 0.0
    %6199 = vmatpush1.msra.mxu0 0.0
    %6200 = vmatprep.subr.mxu0 0.0
    %6201 = vmatpush1.msra.mxu0 0.0
    %6202 = vmatprep.subr.mxu0 0.0
    %6203 = vmatpush1.msra.mxu0 0.0
    %6204 = vmatprep.subr.mxu0 0.0
    %6205 = vmatpush1.msra.mxu0 0.0
    %6206 = vmatprep.subr.mxu0 0.0
    %6207 = vmatpush1.msra.mxu0 0.0
    %6208 = vmatprep.subr.mxu0 0.0
    %6209 = vmatpush1.msra.mxu0 0.0
    %6210 = vmatprep.subr.mxu0 0.0
    %6211 = vmatpush1.msra.mxu0 0.0
    %6212 = vmatprep.subr.mxu0 0.0
    %6213 = vmatpush1.msra.mxu0 0.0
    %6214 = vmatprep.subr.mxu0 0.0
    %6215 = vmatpush1.msra.mxu0 0.0
    %6216 = vmatprep.subr.mxu0 0.0
    %6217 = vmatpush1.msra.mxu0 0.0
    %6218 = vmatprep.subr.mxu0 0.0
    %6219 = vmatpush1.msra.mxu0 0.0
    %6220 = vmatprep.subr.mxu0 0.0
    %6221 = vmatpush1.msra.mxu0 0.0
    %6222 = vmatprep.subr.mxu0 0.0
    %6223 = vmatpush1.msra.mxu0 0.0
    %6224 = vmatprep.subr.mxu0 0.0
    %6225 = vmatpush1.msra.mxu0 0.0
    %6226 = vmatprep.subr.mxu0 0.0
    %6227 = vmatpush1.msra.mxu0 0.0
    %6228 = vmatprep.subr.mxu0 0.0
    %6229 = vmatpush1.msra.mxu0 0.0
    %6230 = vmatprep.subr.mxu0 0.0
    %6231 = vmatpush1.msra.mxu0 0.0
    %6232 = vmatprep.subr.mxu0 0.0
    %6233 = vmatpush1.msra.mxu0 0.0
    %6234 = vmatprep.subr.mxu0 0.0
    %6235 = vmatpush1.msra.mxu0 0.0
    %6236 = vmatprep.subr.mxu0 0.0
    %6237 = vmatpush1.msra.mxu0 0.0
    %6238 = vmatprep.subr.mxu0 0.0
    %6239 = vmatpush1.msra.mxu0 0.0
    %6240 = vmatprep.mubr.f32.mxu0 0.0
    %6241 = vmatmul.mubr.f32.gmra.mrb[0].mxu0 %v6171
    %v6242 = vpop.f32.mrb[0].mxu0
    %v6243 = vadd.f32 0.0, %v6242
    %v6244 = vpop.f32.mrb[0].mxu0
    %6245 = vmatprep.mubr.f32.mxu0 0.0
    %6246 = vmatmul.mubr.f32.gmra.mrb[0].mxu0 %v6174
    %v6247 = vpop.f32.mrb[0].mxu0
    %v6248 = vadd.f32 0.0, %v6247
    %v6249 = vpop.f32.mrb[0].mxu0
    %6250 = vdwg.mxu0
    %v6252 = vsel %vm988, %v6162, 0
    %v6255 = vsel %vm988, %v6163, 0
    %6257 = vmatprep.subr.mxu0 0.0
    %6258 = vmatpush1.msra.mxu0 %v5257
    %6259 = vmatprep.subr.mxu0 0.0
    %6260 = vmatpush1.msra.mxu0 %v5262
    %6261 = vmatprep.subr.mxu0 0.0
    %6262 = vmatpush1.msra.mxu0 0.0
    %6263 = vmatprep.subr.mxu0 0.0
    %6264 = vmatpush1.msra.mxu0 0.0
    %6265 = vmatprep.subr.mxu0 0.0
    %6266 = vmatpush1.msra.mxu0 0.0
    %6267 = vmatprep.subr.mxu0 0.0
    %6268 = vmatpush1.msra.mxu0 0.0
    %6269 = vmatprep.subr.mxu0 0.0
    %6270 = vmatpush1.msra.mxu0 0.0
    %6271 = vmatprep.subr.mxu0 0.0
    %6272 = vmatpush1.msra.mxu0 0.0
    %6273 = vmatprep.subr.mxu0 0.0
    %6274 = vmatpush1.msra.mxu0 0.0
    %6275 = vmatprep.subr.mxu0 0.0
    %6276 = vmatpush1.msra.mxu0 0.0
    %6277 = vmatprep.subr.mxu0 0.0
    %6278 = vmatpush1.msra.mxu0 0.0
    %6279 = vmatprep.subr.mxu0 0.0
    %6280 = vmatpush1.msra.mxu0 0.0
    %6281 = vmatprep.subr.mxu0 0.0
    %6282 = vmatpush1.msra.mxu0 0.0
    %6283 = vmatprep.subr.mxu0 0.0
    %6284 = vmatpush1.msra.mxu0 0.0
    %6285 = vmatprep.subr.mxu0 0.0
    %6286 = vmatpush1.msra.mxu0 0.0
    %6287 = vmatprep.subr.mxu0 0.0
    %6288 = vmatpush1.msra.mxu0 0.0
    %6289 = vmatprep.subr.mxu0 0.0
    %6290 = vmatpush1.msra.mxu0 0.0
    %6291 = vmatprep.subr.mxu0 0.0
    %6292 = vmatpush1.msra.mxu0 0.0
    %6293 = vmatprep.subr.mxu0 0.0
    %6294 = vmatpush1.msra.mxu0 0.0
    %6295 = vmatprep.subr.mxu0 0.0
    %6296 = vmatpush1.msra.mxu0 0.0
    %6297 = vmatprep.subr.mxu0 0.0
    %6298 = vmatpush1.msra.mxu0 0.0
    %6299 = vmatprep.subr.mxu0 0.0
    %6300 = vmatpush1.msra.mxu0 0.0
    %6301 = vmatprep.subr.mxu0 0.0
    %6302 = vmatpush1.msra.mxu0 0.0
    %6303 = vmatprep.subr.mxu0 0.0
    %6304 = vmatpush1.msra.mxu0 0.0
    %6305 = vmatprep.subr.mxu0 0.0
    %6306 = vmatpush1.msra.mxu0 0.0
    %6307 = vmatprep.subr.mxu0 0.0
    %6308 = vmatpush1.msra.mxu0 0.0
    %6309 = vmatprep.subr.mxu0 0.0
    %6310 = vmatpush1.msra.mxu0 0.0
    %6311 = vmatprep.subr.mxu0 0.0
    %6312 = vmatpush1.msra.mxu0 0.0
    %6313 = vmatprep.subr.mxu0 0.0
    %6314 = vmatpush1.msra.mxu0 0.0
    %6315 = vmatprep.subr.mxu0 0.0
    %6316 = vmatpush1.msra.mxu0 0.0
    %6317 = vmatprep.subr.mxu0 0.0
    %6318 = vmatpush1.msra.mxu0 0.0
    %6319 = vmatprep.subr.mxu0 0.0
    %6320 = vmatpush1.msra.mxu0 0.0
    %6321 = vmatprep.mubr.f32.mxu0 0.0
    %6322 = vmatmul.mubr.f32.gmra.mrb[0].mxu0 %v6252
    %v6323 = vpop.f32.mrb[0].mxu0
    %v6324 = vadd.f32 0.0, %v6323
    %v6325 = vpop.f32.mrb[0].mxu0
    %6326 = vmatprep.mubr.f32.mxu0 0.0
    %6327 = vmatmul.mubr.f32.gmra.mrb[0].mxu0 %v6255
    %v6328 = vpop.f32.mrb[0].mxu0
    %v6329 = vadd.f32 0.0, %v6328
    %v6330 = vpop.f32.mrb[0].mxu0
    %6331 = vdwg.mxu0
    %v6333 = vsel %vm269, %v6243, 0
    %v6336 = vsel %vm269, %v6248, 0
    %v6339 = vsel %vm269, %v6324, 0
    %v6342 = vsel %vm269, %v6329, 0
    %6344 = vmatprep.subr.mxu0 0.0
    %6345 = vmatpush1.msra.mxu0 %v5265
    %6346 = vmatprep.subr.mxu0 0.0
    %6347 = vmatpush1.msra.mxu0 0.0
    %6348 = vmatprep.subr.mxu0 0.0
    %6349 = vmatpush1.msra.mxu0 0.0
    %6350 = vmatprep.subr.mxu0 0.0
    %6351 = vmatpush1.msra.mxu0 0.0
    %6352 = vmatprep.subr.mxu0 0.0
    %6353 = vmatpush1.msra.mxu0 0.0
    %6354 = vmatprep.subr.mxu0 0.0
    %6355 = vmatpush1.msra.mxu0 0.0
    %6356 = vmatprep.subr.mxu0 0.0
    %6357 = vmatpush1.msra.mxu0 0.0
    %6358 = vmatprep.subr.mxu0 0.0
    %6359 = vmatpush1.msra.mxu0 0.0
    %6360 = vmatprep.subr.mxu0 0.0
    %6361 = vmatpush1.msra.mxu0 0.0
    %6362 = vmatprep.subr.mxu0 0.0
    %6363 = vmatpush1.msra.mxu0 0.0
    %6364 = vmatprep.subr.mxu0 0.0
    %6365 = vmatpush1.msra.mxu0 0.0
    %6366 = vmatprep.subr.mxu0 0.0
    %6367 = vmatpush1.msra.mxu0 0.0
    %6368 = vmatprep.subr.mxu0 0.0
    %6369 = vmatpush1.msra.mxu0 0.0
    %6370 = vmatprep.subr.mxu0 0.0
    %6371 = vmatpush1.msra.mxu0 0.0
    %6372 = vmatprep.subr.mxu0 0.0
    %6373 = vmatpush1.msra.mxu0 0.0
    %6374 = vmatprep.subr.mxu0 0.0
    %6375 = vmatpush1.msra.mxu0 0.0
    %6376 = vmatprep.subr.mxu0 0.0
    %6377 = vmatpush1.msra.mxu0 0.0
    %6378 = vmatprep.subr.mxu0 0.0
    %6379 = vmatpush1.msra.mxu0 0.0
    %6380 = vmatprep.subr.mxu0 0.0
    %6381 = vmatpush1.msra.mxu0 0.0
    %6382 = vmatprep.subr.mxu0 0.0
    %6383 = vmatpush1.msra.mxu0 0.0
    %6384 = vmatprep.subr.mxu0 0.0
    %6385 = vmatpush1.msra.mxu0 0.0
    %6386 = vmatprep.subr.mxu0 0.0
    %6387 = vmatpush1.msra.mxu0 0.0
    %6388 = vmatprep.subr.mxu0 0.0
    %6389 = vmatpush1.msra.mxu0 0.0
    %6390 = vmatprep.subr.mxu0 0.0
    %6391 = vmatpush1.msra.mxu0 0.0
    %6392 = vmatprep.subr.mxu0 0.0
    %6393 = vmatpush1.msra.mxu0 0.0
    %6394 = vmatprep.subr.mxu0 0.0
    %6395 = vmatpush1.msra.mxu0 0.0
    %6396 = vmatprep.subr.mxu0 0.0
    %6397 = vmatpush1.msra.mxu0 0.0
    %6398 = vmatprep.subr.mxu0 0.0
    %6399 = vmatpush1.msra.mxu0 0.0
    %6400 = vmatprep.subr.mxu0 0.0
    %6401 = vmatpush1.msra.mxu0 0.0
    %6402 = vmatprep.subr.mxu0 0.0
    %6403 = vmatpush1.msra.mxu0 0.0
    %6404 = vmatprep.subr.mxu0 0.0
    %6405 = vmatpush1.msra.mxu0 0.0
    %6406 = vmatprep.subr.mxu0 0.0
    %6407 = vmatpush1.msra.mxu0 0.0
    %6408 = vmatprep.mubr.f32.mxu0 0.0
    %6409 = vmatmul.mubr.f32.gmra.mrb[0].mxu0 %v6333
    %v6410 = vpop.f32.mrb[0].mxu0
    %v6411 = vadd.f32 0.0, %v6410
    %v6412 = vpop.f32.mrb[0].mxu0
    %6413 = vmatprep.mubr.f32.mxu0 0.0
    %6414 = vmatmul.mubr.f32.gmra.mrb[0].mxu0 %v6336
    %v6415 = vpop.f32.mrb[0].mxu0
    %v6416 = vadd.f32 0.0, %v6415
    %v6417 = vpop.f32.mrb[0].mxu0
    %6418 = vmatprep.mubr.f32.mxu0 0.0
    %6419 = vmatmul.mubr.f32.gmra.mrb[0].mxu0 %v6339
    %v6420 = vpop.f32.mrb[0].mxu0
    %v6421 = vadd.f32 0.0, %v6420
    %v6422 = vpop.f32.mrb[0].mxu0
    %6423 = vmatprep.mubr.f32.mxu0 0.0
    %6424 = vmatmul.mubr.f32.gmra.mrb[0].mxu0 %v6342
    %v6425 = vpop.f32.mrb[0].mxu0
    %v6426 = vadd.f32 0.0, %v6425
    %v6427 = vpop.f32.mrb[0].mxu0
    %6428 = vdwg.mxu0
    %v6429 = vlaneseq
    %v6430 = vshrl.u32 %v6429, 7
    %v6431 = vsub.s32 0, %v6430
    %v6432 = vrot.slane %v5269, %v6431
    %v6433 = vadd.f32 %v6432, %v6411
    %v6434 = vadd.f32 %v6432, %v6416
    %v6435 = vadd.f32 %v6432, %v6421
    %v6436 = vadd.f32 %v6432, %v6426
    %6439 = vrot.lane.b32.xlu0 %v5247, 120
    %v6440 = vpop.permute.xlu0 %6439
    %6441 = vrot.lane.b32.xlu0 %v5252, 120
    %v6442 = vpop.permute.xlu0 %6441
    %v6446 = vsel %vm988, %v6156, 0
    %v6449 = vsel %vm988, %v6157, 0
    %6451 = vmatprep.subr.mxu0 0.0
    %6452 = vmatpush1.msra.mxu0 %v6440
    %6453 = vmatprep.subr.mxu0 0.0
    %6454 = vmatpush1.msra.mxu0 %v6442
    %6455 = vmatprep.subr.mxu0 0.0
    %6456 = vmatpush1.msra.mxu0 0.0
    %6457 = vmatprep.subr.mxu0 0.0
    %6458 = vmatpush1.msra.mxu0 0.0
    %6459 = vmatprep.subr.mxu0 0.0
    %6460 = vmatpush1.msra.mxu0 0.0
    %6461 = vmatprep.subr.mxu0 0.0
    %6462 = vmatpush1.msra.mxu0 0.0
    %6463 = vmatprep.subr.mxu0 0.0
    %6464 = vmatpush1.msra.mxu0 0.0
    %6465 = vmatprep.subr.mxu0 0.0
    %6466 = vmatpush1.msra.mxu0 0.0
    %6467 = vmatprep.subr.mxu0 0.0
    %6468 = vmatpush1.msra.mxu0 0.0
    %6469 = vmatprep.subr.mxu0 0.0
    %6470 = vmatpush1.msra.mxu0 0.0
    %6471 = vmatprep.subr.mxu0 0.0
    %6472 = vmatpush1.msra.mxu0 0.0
    %6473 = vmatprep.subr.mxu0 0.0
    %6474 = vmatpush1.msra.mxu0 0.0
    %6475 = vmatprep.subr.mxu0 0.0
    %6476 = vmatpush1.msra.mxu0 0.0
    %6477 = vmatprep.subr.mxu0 0.0
    %6478 = vmatpush1.msra.mxu0 0.0
    %6479 = vmatprep.subr.mxu0 0.0
    %6480 = vmatpush1.msra.mxu0 0.0
    %6481 = vmatprep.subr.mxu0 0.0
    %6482 = vmatpush1.msra.mxu0 0.0
    %6483 = vmatprep.subr.mxu0 0.0
    %6484 = vmatpush1.msra.mxu0 0.0
    %6485 = vmatprep.subr.mxu0 0.0
    %6486 = vmatpush1.msra.mxu0 0.0
    %6487 = vmatprep.subr.mxu0 0.0
    %6488 = vmatpush1.msra.mxu0 0.0
    %6489 = vmatprep.subr.mxu0 0.0
    %6490 = vmatpush1.msra.mxu0 0.0
    %6491 = vmatprep.subr.mxu0 0.0
    %6492 = vmatpush1.msra.mxu0 0.0
    %6493 = vmatprep.subr.mxu0 0.0
    %6494 = vmatpush1.msra.mxu0 0.0
    %6495 = vmatprep.subr.mxu0 0.0
    %6496 = vmatpush1.msra.mxu0 0.0
    %6497 = vmatprep.subr.mxu0 0.0
    %6498 = vmatpush1.msra.mxu0 0.0
    %6499 = vmatprep.subr.mxu0 0.0
    %6500 = vmatpush1.msra.mxu0 0.0
    %6501 = vmatprep.subr.mxu0 0.0
    %6502 = vmatpush1.msra.mxu0 0.0
    %6503 = vmatprep.subr.mxu0 0.0
    %6504 = vmatpush1.msra.mxu0 0.0
    %6505 = vmatprep.subr.mxu0 0.0
    %6506 = vmatpush1.msra.mxu0 0.0
    %6507 = vmatprep.subr.mxu0 0.0
    %6508 = vmatpush1.msra.mxu0 0.0
    %6509 = vmatprep.subr.mxu0 0.0
    %6510 = vmatpush1.msra.mxu0 0.0
    %6511 = vmatprep.subr.mxu0 0.0
    %6512 = vmatpush1.msra.mxu0 0.0
    %6513 = vmatprep.subr.mxu0 0.0
    %6514 = vmatpush1.msra.mxu0 0.0
    %6515 = vmatprep.mubr.f32.mxu0 0.0
    %6516 = vmatmul.mubr.f32.gmra.mrb[0].mxu0 %v6446
    %v6517 = vpop.f32.mrb[0].mxu0
    %v6518 = vadd.f32 0.0, %v6517
    %v6519 = vpop.f32.mrb[0].mxu0
    %6520 = vmatprep.mubr.f32.mxu0 0.0
    %6521 = vmatmul.mubr.f32.gmra.mrb[0].mxu0 %v6449
    %v6522 = vpop.f32.mrb[0].mxu0
    %v6523 = vadd.f32 0.0, %v6522
    %v6524 = vpop.f32.mrb[0].mxu0
    %6525 = vdwg.mxu0
    %6528 = vrot.lane.b32.xlu0 %v5257, 120
    %v6529 = vpop.permute.xlu0 %6528
    %6530 = vrot.lane.b32.xlu0 %v5262, 120
    %v6531 = vpop.permute.xlu0 %6530
    %v6535 = vsel %vm988, %v6164, 0
    %v6538 = vsel %vm988, %v6165, 0
    %6540 = vmatprep.subr.mxu0 0.0
    %6541 = vmatpush1.msra.mxu0 %v6529
    %6542 = vmatprep.subr.mxu0 0.0
    %6543 = vmatpush1.msra.mxu0 %v6531
    %6544 = vmatprep.subr.mxu0 0.0
    %6545 = vmatpush1.msra.mxu0 0.0
    %6546 = vmatprep.subr.mxu0 0.0
    %6547 = vmatpush1.msra.mxu0 0.0
    %6548 = vmatprep.subr.mxu0 0.0
    %6549 = vmatpush1.msra.mxu0 0.0
    %6550 = vmatprep.subr.mxu0 0.0
    %6551 = vmatpush1.msra.mxu0 0.0
    %6552 = vmatprep.subr.mxu0 0.0
    %6553 = vmatpush1.msra.mxu0 0.0
    %6554 = vmatprep.subr.mxu0 0.0
    %6555 = vmatpush1.msra.mxu0 0.0
    %6556 = vmatprep.subr.mxu0 0.0
    %6557 = vmatpush1.msra.mxu0 0.0
    %6558 = vmatprep.subr.mxu0 0.0
    %6559 = vmatpush1.msra.mxu0 0.0
    %6560 = vmatprep.subr.mxu0 0.0
    %6561 = vmatpush1.msra.mxu0 0.0
    %6562 = vmatprep.subr.mxu0 0.0
    %6563 = vmatpush1.msra.mxu0 0.0
    %6564 = vmatprep.subr.mxu0 0.0
    %6565 = vmatpush1.msra.mxu0 0.0
    %6566 = vmatprep.subr.mxu0 0.0
    %6567 = vmatpush1.msra.mxu0 0.0
    %6568 = vmatprep.subr.mxu0 0.0
    %6569 = vmatpush1.msra.mxu0 0.0
    %6570 = vmatprep.subr.mxu0 0.0
    %6571 = vmatpush1.msra.mxu0 0.0
    %6572 = vmatprep.subr.mxu0 0.0
    %6573 = vmatpush1.msra.mxu0 0.0
    %6574 = vmatprep.subr.mxu0 0.0
    %6575 = vmatpush1.msra.mxu0 0.0
    %6576 = vmatprep.subr.mxu0 0.0
    %6577 = vmatpush1.msra.mxu0 0.0
    %6578 = vmatprep.subr.mxu0 0.0
    %6579 = vmatpush1.msra.mxu0 0.0
    %6580 = vmatprep.subr.mxu0 0.0
    %6581 = vmatpush1.msra.mxu0 0.0
    %6582 = vmatprep.subr.mxu0 0.0
    %6583 = vmatpush1.msra.mxu0 0.0
    %6584 = vmatprep.subr.mxu0 0.0
    %6585 = vmatpush1.msra.mxu0 0.0
    %6586 = vmatprep.subr.mxu0 0.0
    %6587 = vmatpush1.msra.mxu0 0.0
    %6588 = vmatprep.subr.mxu0 0.0
    %6589 = vmatpush1.msra.mxu0 0.0
    %6590 = vmatprep.subr.mxu0 0.0
    %6591 = vmatpush1.msra.mxu0 0.0
    %6592 = vmatprep.subr.mxu0 0.0
    %6593 = vmatpush1.msra.mxu0 0.0
    %6594 = vmatprep.subr.mxu0 0.0
    %6595 = vmatpush1.msra.mxu0 0.0
    %6596 = vmatprep.subr.mxu0 0.0
    %6597 = vmatpush1.msra.mxu0 0.0
    %6598 = vmatprep.subr.mxu0 0.0
    %6599 = vmatpush1.msra.mxu0 0.0
    %6600 = vmatprep.subr.mxu0 0.0
    %6601 = vmatpush1.msra.mxu0 0.0
    %6602 = vmatprep.subr.mxu0 0.0
    %6603 = vmatpush1.msra.mxu0 0.0
    %6604 = vmatprep.mubr.f32.mxu0 0.0
    %6605 = vmatmul.mubr.f32.gmra.mrb[0].mxu0 %v6535
    %v6606 = vpop.f32.mrb[0].mxu0
    %v6607 = vadd.f32 0.0, %v6606
    %v6608 = vpop.f32.mrb[0].mxu0
    %6609 = vmatprep.mubr.f32.mxu0 0.0
    %6610 = vmatmul.mubr.f32.gmra.mrb[0].mxu0 %v6538
    %v6611 = vpop.f32.mrb[0].mxu0
    %v6612 = vadd.f32 0.0, %v6611
    %v6613 = vpop.f32.mrb[0].mxu0
    %6614 = vdwg.mxu0
    %v6616 = vsel %vm269, %v6518, 0
    %v6619 = vsel %vm269, %v6523, 0
    %v6622 = vsel %vm269, %v6607, 0
    %v6625 = vsel %vm269, %v6612, 0
    %6627 = vmatprep.subr.mxu0 0.0
    %6628 = vmatpush1.msra.mxu0 %v5266
    %6629 = vmatprep.subr.mxu0 0.0
    %6630 = vmatpush1.msra.mxu0 0.0
    %6631 = vmatprep.subr.mxu0 0.0
    %6632 = vmatpush1.msra.mxu0 0.0
    %6633 = vmatprep.subr.mxu0 0.0
    %6634 = vmatpush1.msra.mxu0 0.0
    %6635 = vmatprep.subr.mxu0 0.0
    %6636 = vmatpush1.msra.mxu0 0.0
    %6637 = vmatprep.subr.mxu0 0.0
    %6638 = vmatpush1.msra.mxu0 0.0
    %6639 = vmatprep.subr.mxu0 0.0
    %6640 = vmatpush1.msra.mxu0 0.0
    %6641 = vmatprep.subr.mxu0 0.0
    %6642 = vmatpush1.msra.mxu0 0.0
    %6643 = vmatprep.subr.mxu0 0.0
    %6644 = vmatpush1.msra.mxu0 0.0
    %6645 = vmatprep.subr.mxu0 0.0
    %6646 = vmatpush1.msra.mxu0 0.0
    %6647 = vmatprep.subr.mxu0 0.0
    %6648 = vmatpush1.msra.mxu0 0.0
    %6649 = vmatprep.subr.mxu0 0.0
    %6650 = vmatpush1.msra.mxu0 0.0
    %6651 = vmatprep.subr.mxu0 0.0
    %6652 = vmatpush1.msra.mxu0 0.0
    %6653 = vmatprep.subr.mxu0 0.0
    %6654 = vmatpush1.msra.mxu0 0.0
    %6655 = vmatprep.subr.mxu0 0.0
    %6656 = vmatpush1.msra.mxu0 0.0
    %6657 = vmatprep.subr.mxu0 0.0
    %6658 = vmatpush1.msra.mxu0 0.0
    %6659 = vmatprep.subr.mxu0 0.0
    %6660 = vmatpush1.msra.mxu0 0.0
    %6661 = vmatprep.subr.mxu0 0.0
    %6662 = vmatpush1.msra.mxu0 0.0
    %6663 = vmatprep.subr.mxu0 0.0
    %6664 = vmatpush1.msra.mxu0 0.0
    %6665 = vmatprep.subr.mxu0 0.0
    %6666 = vmatpush1.msra.mxu0 0.0
    %6667 = vmatprep.subr.mxu0 0.0
    %6668 = vmatpush1.msra.mxu0 0.0
    %6669 = vmatprep.subr.mxu0 0.0
    %6670 = vmatpush1.msra.mxu0 0.0
    %6671 = vmatprep.subr.mxu0 0.0
    %6672 = vmatpush1.msra.mxu0 0.0
    %6673 = vmatprep.subr.mxu0 0.0
    %6674 = vmatpush1.msra.mxu0 0.0
    %6675 = vmatprep.subr.mxu0 0.0
    %6676 = vmatpush1.msra.mxu0 0.0
    %6677 = vmatprep.subr.mxu0 0.0
    %6678 = vmatpush1.msra.mxu0 0.0
    %6679 = vmatprep.subr.mxu0 0.0
    %6680 = vmatpush1.msra.mxu0 0.0
    %6681 = vmatprep.subr.mxu0 0.0
    %6682 = vmatpush1.msra.mxu0 0.0
    %6683 = vmatprep.subr.mxu0 0.0
    %6684 = vmatpush1.msra.mxu0 0.0
    %6685 = vmatprep.subr.mxu0 0.0
    %6686 = vmatpush1.msra.mxu0 0.0
    %6687 = vmatprep.subr.mxu0 0.0
    %6688 = vmatpush1.msra.mxu0 0.0
    %6689 = vmatprep.subr.mxu0 0.0
    %6690 = vmatpush1.msra.mxu0 0.0
    %6691 = vmatprep.mubr.f32.mxu0 0.0
    %6692 = vmatmul.mubr.f32.gmra.mrb[0].mxu0 %v6616
    %v6693 = vpop.f32.mrb[0].mxu0
    %v6694 = vadd.f32 0.0, %v6693
    %v6695 = vpop.f32.mrb[0].mxu0
    %6696 = vmatprep.mubr.f32.mxu0 0.0
    %6697 = vmatmul.mubr.f32.gmra.mrb[0].mxu0 %v6619
    %v6698 = vpop.f32.mrb[0].mxu0
    %v6699 = vadd.f32 0.0, %v6698
    %v6700 = vpop.f32.mrb[0].mxu0
    %6701 = vmatprep.mubr.f32.mxu0 0.0
    %6702 = vmatmul.mubr.f32.gmra.mrb[0].mxu0 %v6622
    %v6703 = vpop.f32.mrb[0].mxu0
    %v6704 = vadd.f32 0.0, %v6703
    %v6705 = vpop.f32.mrb[0].mxu0
    %6706 = vmatprep.mubr.f32.mxu0 0.0
    %6707 = vmatmul.mubr.f32.gmra.mrb[0].mxu0 %v6625
    %v6708 = vpop.f32.mrb[0].mxu0
    %v6709 = vadd.f32 0.0, %v6708
    %v6710 = vpop.f32.mrb[0].mxu0
    %6711 = vdwg.mxu0
    %v6712 = vadd.f32 %v6433, %v6694
    %v6713 = vadd.f32 %v6434, %v6699
    %v6714 = vadd.f32 %v6435, %v6704
    %v6715 = vadd.f32 %v6436, %v6709
    %6716 = vrot.lane.b32.xlu0 %v5247, 112
    %v6717 = vpop.permute.xlu0 %6716
    %6718 = vrot.lane.b32.xlu0 %v5252, 112
    %v6719 = vpop.permute.xlu0 %6718
    %v6723 = vsel %vm988, %v6158, 0
    %v6726 = vsel %vm988, %v6159, 0
    %6728 = vmatprep.subr.mxu0 0.0
    %6729 = vmatpush1.msra.mxu0 %v6717
    %6730 = vmatprep.subr.mxu0 0.0
    %6731 = vmatpush1.msra.mxu0 %v6719
    %6732 = vmatprep.subr.mxu0 0.0
    %6733 = vmatpush1.msra.mxu0 0.0
    %6734 = vmatprep.subr.mxu0 0.0
    %6735 = vmatpush1.msra.mxu0 0.0
    %6736 = vmatprep.subr.mxu0 0.0
    %6737 = vmatpush1.msra.mxu0 0.0
    %6738 = vmatprep.subr.mxu0 0.0
    %6739 = vmatpush1.msra.mxu0 0.0
    %6740 = vmatprep.subr.mxu0 0.0
    %6741 = vmatpush1.msra.mxu0 0.0
    %6742 = vmatprep.subr.mxu0 0.0
    %6743 = vmatpush1.msra.mxu0 0.0
    %6744 = vmatprep.subr.mxu0 0.0
    %6745 = vmatpush1.msra.mxu0 0.0
    %6746 = vmatprep.subr.mxu0 0.0
    %6747 = vmatpush1.msra.mxu0 0.0
    %6748 = vmatprep.subr.mxu0 0.0
    %6749 = vmatpush1.msra.mxu0 0.0
    %6750 = vmatprep.subr.mxu0 0.0
    %6751 = vmatpush1.msra.mxu0 0.0
    %6752 = vmatprep.subr.mxu0 0.0
    %6753 = vmatpush1.msra.mxu0 0.0
    %6754 = vmatprep.subr.mxu0 0.0
    %6755 = vmatpush1.msra.mxu0 0.0
    %6756 = vmatprep.subr.mxu0 0.0
    %6757 = vmatpush1.msra.mxu0 0.0
    %6758 = vmatprep.subr.mxu0 0.0
    %6759 = vmatpush1.msra.mxu0 0.0
    %6760 = vmatprep.subr.mxu0 0.0
    %6761 = vmatpush1.msra.mxu0 0.0
    %6762 = vmatprep.subr.mxu0 0.0
    %6763 = vmatpush1.msra.mxu0 0.0
    %6764 = vmatprep.subr.mxu0 0.0
    %6765 = vmatpush1.msra.mxu0 0.0
    %6766 = vmatprep.subr.mxu0 0.0
    %6767 = vmatpush1.msra.mxu0 0.0
    %6768 = vmatprep.subr.mxu0 0.0
    %6769 = vmatpush1.msra.mxu0 0.0
    %6770 = vmatprep.subr.mxu0 0.0
    %6771 = vmatpush1.msra.mxu0 0.0
    %6772 = vmatprep.subr.mxu0 0.0
    %6773 = vmatpush1.msra.mxu0 0.0
    %6774 = vmatprep.subr.mxu0 0.0
    %6775 = vmatpush1.msra.mxu0 0.0
    %6776 = vmatprep.subr.mxu0 0.0
    %6777 = vmatpush1.msra.mxu0 0.0
    %6778 = vmatprep.subr.mxu0 0.0
    %6779 = vmatpush1.msra.mxu0 0.0
    %6780 = vmatprep.subr.mxu0 0.0
    %6781 = vmatpush1.msra.mxu0 0.0
    %6782 = vmatprep.subr.mxu0 0.0
    %6783 = vmatpush1.msra.mxu0 0.0
    %6784 = vmatprep.subr.mxu0 0.0
    %6785 = vmatpush1.msra.mxu0 0.0
    %6786 = vmatprep.subr.mxu0 0.0
    %6787 = vmatpush1.msra.mxu0 0.0
    %6788 = vmatprep.subr.mxu0 0.0
    %6789 = vmatpush1.msra.mxu0 0.0
    %6790 = vmatprep.subr.mxu0 0.0
    %6791 = vmatpush1.msra.mxu0 0.0
    %6792 = vmatprep.mubr.f32.mxu0 0.0
    %6793 = vmatmul.mubr.f32.gmra.mrb[0].mxu0 %v6723
    %v6794 = vpop.f32.mrb[0].mxu0
    %v6795 = vadd.f32 0.0, %v6794
    %v6796 = vpop.f32.mrb[0].mxu0
    %6797 = vmatprep.mubr.f32.mxu0 0.0
    %6798 = vmatmul.mubr.f32.gmra.mrb[0].mxu0 %v6726
    %v6799 = vpop.f32.mrb[0].mxu0
    %v6800 = vadd.f32 0.0, %v6799
    %v6801 = vpop.f32.mrb[0].mxu0
    %6802 = vdwg.mxu0
    %6803 = vrot.lane.b32.xlu0 %v5257, 112
    %v6804 = vpop.permute.xlu0 %6803
    %6805 = vrot.lane.b32.xlu0 %v5262, 112
    %v6806 = vpop.permute.xlu0 %6805
    %v6810 = vsel %vm988, %v6166, 0
    %v6813 = vsel %vm988, %v6167, 0
    %6815 = vmatprep.subr.mxu0 0.0
    %6816 = vmatpush1.msra.mxu0 %v6804
    %6817 = vmatprep.subr.mxu0 0.0
    %6818 = vmatpush1.msra.mxu0 %v6806
    %6819 = vmatprep.subr.mxu0 0.0
    %6820 = vmatpush1.msra.mxu0 0.0
    %6821 = vmatprep.subr.mxu0 0.0
    %6822 = vmatpush1.msra.mxu0 0.0
    %6823 = vmatprep.subr.mxu0 0.0
    %6824 = vmatpush1.msra.mxu0 0.0
    %6825 = vmatprep.subr.mxu0 0.0
    %6826 = vmatpush1.msra.mxu0 0.0
    %6827 = vmatprep.subr.mxu0 0.0
    %6828 = vmatpush1.msra.mxu0 0.0
    %6829 = vmatprep.subr.mxu0 0.0
    %6830 = vmatpush1.msra.mxu0 0.0
    %6831 = vmatprep.subr.mxu0 0.0
    %6832 = vmatpush1.msra.mxu0 0.0
    %6833 = vmatprep.subr.mxu0 0.0
    %6834 = vmatpush1.msra.mxu0 0.0
    %6835 = vmatprep.subr.mxu0 0.0
    %6836 = vmatpush1.msra.mxu0 0.0
    %6837 = vmatprep.subr.mxu0 0.0
    %6838 = vmatpush1.msra.mxu0 0.0
    %6839 = vmatprep.subr.mxu0 0.0
    %6840 = vmatpush1.msra.mxu0 0.0
    %6841 = vmatprep.subr.mxu0 0.0
    %6842 = vmatpush1.msra.mxu0 0.0
    %6843 = vmatprep.subr.mxu0 0.0
    %6844 = vmatpush1.msra.mxu0 0.0
    %6845 = vmatprep.subr.mxu0 0.0
    %6846 = vmatpush1.msra.mxu0 0.0
    %6847 = vmatprep.subr.mxu0 0.0
    %6848 = vmatpush1.msra.mxu0 0.0
    %6849 = vmatprep.subr.mxu0 0.0
    %6850 = vmatpush1.msra.mxu0 0.0
    %6851 = vmatprep.subr.mxu0 0.0
    %6852 = vmatpush1.msra.mxu0 0.0
    %6853 = vmatprep.subr.mxu0 0.0
    %6854 = vmatpush1.msra.mxu0 0.0
    %6855 = vmatprep.subr.mxu0 0.0
    %6856 = vmatpush1.msra.mxu0 0.0
    %6857 = vmatprep.subr.mxu0 0.0
    %6858 = vmatpush1.msra.mxu0 0.0
    %6859 = vmatprep.subr.mxu0 0.0
    %6860 = vmatpush1.msra.mxu0 0.0
    %6861 = vmatprep.subr.mxu0 0.0
    %6862 = vmatpush1.msra.mxu0 0.0
    %6863 = vmatprep.subr.mxu0 0.0
    %6864 = vmatpush1.msra.mxu0 0.0
    %6865 = vmatprep.subr.mxu0 0.0
    %6866 = vmatpush1.msra.mxu0 0.0
    %6867 = vmatprep.subr.mxu0 0.0
    %6868 = vmatpush1.msra.mxu0 0.0
    %6869 = vmatprep.subr.mxu0 0.0
    %6870 = vmatpush1.msra.mxu0 0.0
    %6871 = vmatprep.subr.mxu0 0.0
    %6872 = vmatpush1.msra.mxu0 0.0
    %6873 = vmatprep.subr.mxu0 0.0
    %6874 = vmatpush1.msra.mxu0 0.0
    %6875 = vmatprep.subr.mxu0 0.0
    %6876 = vmatpush1.msra.mxu0 0.0
    %6877 = vmatprep.subr.mxu0 0.0
    %6878 = vmatpush1.msra.mxu0 0.0
    %6879 = vmatprep.mubr.f32.mxu0 0.0
    %6880 = vmatmul.mubr.f32.gmra.mrb[0].mxu0 %v6810
    %v6881 = vpop.f32.mrb[0].mxu0
    %v6882 = vadd.f32 0.0, %v6881
    %v6883 = vpop.f32.mrb[0].mxu0
    %6884 = vmatprep.mubr.f32.mxu0 0.0
    %6885 = vmatmul.mubr.f32.gmra.mrb[0].mxu0 %v6813
    %v6886 = vpop.f32.mrb[0].mxu0
    %v6887 = vadd.f32 0.0, %v6886
    %v6888 = vpop.f32.mrb[0].mxu0
    %6889 = vdwg.mxu0
    %v6891 = vsel %vm269, %v6795, 0
    %v6894 = vsel %vm269, %v6800, 0
    %v6897 = vsel %vm269, %v6882, 0
    %v6900 = vsel %vm269, %v6887, 0
    %6902 = vmatprep.subr.mxu0 0.0
    %6903 = vmatpush1.msra.mxu0 %v5267
    %6904 = vmatprep.subr.mxu0 0.0
    %6905 = vmatpush1.msra.mxu0 0.0
    %6906 = vmatprep.subr.mxu0 0.0
    %6907 = vmatpush1.msra.mxu0 0.0
    %6908 = vmatprep.subr.mxu0 0.0
    %6909 = vmatpush1.msra.mxu0 0.0
    %6910 = vmatprep.subr.mxu0 0.0
    %6911 = vmatpush1.msra.mxu0 0.0
    %6912 = vmatprep.subr.mxu0 0.0
    %6913 = vmatpush1.msra.mxu0 0.0
    %6914 = vmatprep.subr.mxu0 0.0
    %6915 = vmatpush1.msra.mxu0 0.0
    %6916 = vmatprep.subr.mxu0 0.0
    %6917 = vmatpush1.msra.mxu0 0.0
    %6918 = vmatprep.subr.mxu0 0.0
    %6919 = vmatpush1.msra.mxu0 0.0
    %6920 = vmatprep.subr.mxu0 0.0
    %6921 = vmatpush1.msra.mxu0 0.0
    %6922 = vmatprep.subr.mxu0 0.0
    %6923 = vmatpush1.msra.mxu0 0.0
    %6924 = vmatprep.subr.mxu0 0.0
    %6925 = vmatpush1.msra.mxu0 0.0
    %6926 = vmatprep.subr.mxu0 0.0
    %6927 = vmatpush1.msra.mxu0 0.0
    %6928 = vmatprep.subr.mxu0 0.0
    %6929 = vmatpush1.msra.mxu0 0.0
    %6930 = vmatprep.subr.mxu0 0.0
    %6931 = vmatpush1.msra.mxu0 0.0
    %6932 = vmatprep.subr.mxu0 0.0
    %6933 = vmatpush1.msra.mxu0 0.0
    %6934 = vmatprep.subr.mxu0 0.0
    %6935 = vmatpush1.msra.mxu0 0.0
    %6936 = vmatprep.subr.mxu0 0.0
    %6937 = vmatpush1.msra.mxu0 0.0
    %6938 = vmatprep.subr.mxu0 0.0
    %6939 = vmatpush1.msra.mxu0 0.0
    %6940 = vmatprep.subr.mxu0 0.0
    %6941 = vmatpush1.msra.mxu0 0.0
    %6942 = vmatprep.subr.mxu0 0.0
    %6943 = vmatpush1.msra.mxu0 0.0
    %6944 = vmatprep.subr.mxu0 0.0
    %6945 = vmatpush1.msra.mxu0 0.0
    %6946 = vmatprep.subr.mxu0 0.0
    %6947 = vmatpush1.msra.mxu0 0.0
    %6948 = vmatprep.subr.mxu0 0.0
    %6949 = vmatpush1.msra.mxu0 0.0
    %6950 = vmatprep.subr.mxu0 0.0
    %6951 = vmatpush1.msra.mxu0 0.0
    %6952 = vmatprep.subr.mxu0 0.0
    %6953 = vmatpush1.msra.mxu0 0.0
    %6954 = vmatprep.subr.mxu0 0.0
    %6955 = vmatpush1.msra.mxu0 0.0
    %6956 = vmatprep.subr.mxu0 0.0
    %6957 = vmatpush1.msra.mxu0 0.0
    %6958 = vmatprep.subr.mxu0 0.0
    %6959 = vmatpush1.msra.mxu0 0.0
    %6960 = vmatprep.subr.mxu0 0.0
    %6961 = vmatpush1.msra.mxu0 0.0
    %6962 = vmatprep.subr.mxu0 0.0
    %6963 = vmatpush1.msra.mxu0 0.0
    %6964 = vmatprep.subr.mxu0 0.0
    %6965 = vmatpush1.msra.mxu0 0.0
    %6966 = vmatprep.mubr.f32.mxu0 0.0
    %6967 = vmatmul.mubr.f32.gmra.mrb[0].mxu0 %v6891
    %v6968 = vpop.f32.mrb[0].mxu0
    %v6969 = vadd.f32 0.0, %v6968
    %v6970 = vpop.f32.mrb[0].mxu0
    %6971 = vmatprep.mubr.f32.mxu0 0.0
    %6972 = vmatmul.mubr.f32.gmra.mrb[0].mxu0 %v6894
    %v6973 = vpop.f32.mrb[0].mxu0
    %v6974 = vadd.f32 0.0, %v6973
    %v6975 = vpop.f32.mrb[0].mxu0
    %6976 = vmatprep.mubr.f32.mxu0 0.0
    %6977 = vmatmul.mubr.f32.gmra.mrb[0].mxu0 %v6897
    %v6978 = vpop.f32.mrb[0].mxu0
    %v6979 = vadd.f32 0.0, %v6978
    %v6980 = vpop.f32.mrb[0].mxu0
    %6981 = vmatprep.mubr.f32.mxu0 0.0
    %6982 = vmatmul.mubr.f32.gmra.mrb[0].mxu0 %v6900
    %v6983 = vpop.f32.mrb[0].mxu0
    %v6984 = vadd.f32 0.0, %v6983
    %v6985 = vpop.f32.mrb[0].mxu0
    %6986 = vdwg.mxu0
    %v6987 = vadd.f32 %v6712, %v6969
    %v6988 = vadd.f32 %v6713, %v6974
    %v6989 = vadd.f32 %v6714, %v6979
    %v6990 = vadd.f32 %v6715, %v6984
    %6991 = vrot.lane.b32.xlu0 %v5247, 104
    %v6992 = vpop.permute.xlu0 %6991
    %6993 = vrot.lane.b32.xlu0 %v5252, 104
    %v6994 = vpop.permute.xlu0 %6993
    %v6998 = vsel %vm988, %v6160, 0
    %v7001 = vsel %vm988, %v6161, 0
    %7003 = vmatprep.subr.mxu0 0.0
    %7004 = vmatpush1.msra.mxu0 %v6992
    %7005 = vmatprep.subr.mxu0 0.0
    %7006 = vmatpush1.msra.mxu0 %v6994
    %7007 = vmatprep.subr.mxu0 0.0
    %7008 = vmatpush1.msra.mxu0 0.0
    %7009 = vmatprep.subr.mxu0 0.0
    %7010 = vmatpush1.msra.mxu0 0.0
    %7011 = vmatprep.subr.mxu0 0.0
    %7012 = vmatpush1.msra.mxu0 0.0
    %7013 = vmatprep.subr.mxu0 0.0
    %7014 = vmatpush1.msra.mxu0 0.0
    %7015 = vmatprep.subr.mxu0 0.0
    %7016 = vmatpush1.msra.mxu0 0.0
    %7017 = vmatprep.subr.mxu0 0.0
    %7018 = vmatpush1.msra.mxu0 0.0
    %7019 = vmatprep.subr.mxu0 0.0
    %7020 = vmatpush1.msra.mxu0 0.0
    %7021 = vmatprep.subr.mxu0 0.0
    %7022 = vmatpush1.msra.mxu0 0.0
    %7023 = vmatprep.subr.mxu0 0.0
    %7024 = vmatpush1.msra.mxu0 0.0
    %7025 = vmatprep.subr.mxu0 0.0
    %7026 = vmatpush1.msra.mxu0 0.0
    %7027 = vmatprep.subr.mxu0 0.0
    %7028 = vmatpush1.msra.mxu0 0.0
    %7029 = vmatprep.subr.mxu0 0.0
    %7030 = vmatpush1.msra.mxu0 0.0
    %7031 = vmatprep.subr.mxu0 0.0
    %7032 = vmatpush1.msra.mxu0 0.0
    %7033 = vmatprep.subr.mxu0 0.0
    %7034 = vmatpush1.msra.mxu0 0.0
    %7035 = vmatprep.subr.mxu0 0.0
    %7036 = vmatpush1.msra.mxu0 0.0
    %7037 = vmatprep.subr.mxu0 0.0
    %7038 = vmatpush1.msra.mxu0 0.0
    %7039 = vmatprep.subr.mxu0 0.0
    %7040 = vmatpush1.msra.mxu0 0.0
    %7041 = vmatprep.subr.mxu0 0.0
    %7042 = vmatpush1.msra.mxu0 0.0
    %7043 = vmatprep.subr.mxu0 0.0
    %7044 = vmatpush1.msra.mxu0 0.0
    %7045 = vmatprep.subr.mxu0 0.0
    %7046 = vmatpush1.msra.mxu0 0.0
    %7047 = vmatprep.subr.mxu0 0.0
    %7048 = vmatpush1.msra.mxu0 0.0
    %7049 = vmatprep.subr.mxu0 0.0
    %7050 = vmatpush1.msra.mxu0 0.0
    %7051 = vmatprep.subr.mxu0 0.0
    %7052 = vmatpush1.msra.mxu0 0.0
    %7053 = vmatprep.subr.mxu0 0.0
    %7054 = vmatpush1.msra.mxu0 0.0
    %7055 = vmatprep.subr.mxu0 0.0
    %7056 = vmatpush1.msra.mxu0 0.0
    %7057 = vmatprep.subr.mxu0 0.0
    %7058 = vmatpush1.msra.mxu0 0.0
    %7059 = vmatprep.subr.mxu0 0.0
    %7060 = vmatpush1.msra.mxu0 0.0
    %7061 = vmatprep.subr.mxu0 0.0
    %7062 = vmatpush1.msra.mxu0 0.0
    %7063 = vmatprep.subr.mxu0 0.0
    %7064 = vmatpush1.msra.mxu0 0.0
    %7065 = vmatprep.subr.mxu0 0.0
    %7066 = vmatpush1.msra.mxu0 0.0
    %7067 = vmatprep.mubr.f32.mxu0 0.0
    %7068 = vmatmul.mubr.f32.gmra.mrb[0].mxu0 %v6998
    %v7069 = vpop.f32.mrb[0].mxu0
    %v7070 = vadd.f32 0.0, %v7069
    %v7071 = vpop.f32.mrb[0].mxu0
    %7072 = vmatprep.mubr.f32.mxu0 0.0
    %7073 = vmatmul.mubr.f32.gmra.mrb[0].mxu0 %v7001
    %v7074 = vpop.f32.mrb[0].mxu0
    %v7075 = vadd.f32 0.0, %v7074
    %v7076 = vpop.f32.mrb[0].mxu0
    %7077 = vdwg.mxu0
    %7078 = vrot.lane.b32.xlu0 %v5257, 104
    %v7079 = vpop.permute.xlu0 %7078
    %7080 = vrot.lane.b32.xlu0 %v5262, 104
    %v7081 = vpop.permute.xlu0 %7080
    %v7085 = vsel %vm988, %v6168, 0
    %v7088 = vsel %vm988, %v6169, 0
    %7090 = vmatprep.subr.mxu0 0.0
    %7091 = vmatpush1.msra.mxu0 %v7079
    %7092 = vmatprep.subr.mxu0 0.0
    %7093 = vmatpush1.msra.mxu0 %v7081
    %7094 = vmatprep.subr.mxu0 0.0
    %7095 = vmatpush1.msra.mxu0 0.0
    %7096 = vmatprep.subr.mxu0 0.0
    %7097 = vmatpush1.msra.mxu0 0.0
    %7098 = vmatprep.subr.mxu0 0.0
    %7099 = vmatpush1.msra.mxu0 0.0
    %7100 = vmatprep.subr.mxu0 0.0
    %7101 = vmatpush1.msra.mxu0 0.0
    %7102 = vmatprep.subr.mxu0 0.0
    %7103 = vmatpush1.msra.mxu0 0.0
    %7104 = vmatprep.subr.mxu0 0.0
    %7105 = vmatpush1.msra.mxu0 0.0
    %7106 = vmatprep.subr.mxu0 0.0
    %7107 = vmatpush1.msra.mxu0 0.0
    %7108 = vmatprep.subr.mxu0 0.0
    %7109 = vmatpush1.msra.mxu0 0.0
    %7110 = vmatprep.subr.mxu0 0.0
    %7111 = vmatpush1.msra.mxu0 0.0
    %7112 = vmatprep.subr.mxu0 0.0
    %7113 = vmatpush1.msra.mxu0 0.0
    %7114 = vmatprep.subr.mxu0 0.0
    %7115 = vmatpush1.msra.mxu0 0.0
    %7116 = vmatprep.subr.mxu0 0.0
    %7117 = vmatpush1.msra.mxu0 0.0
    %7118 = vmatprep.subr.mxu0 0.0
    %7119 = vmatpush1.msra.mxu0 0.0
    %7120 = vmatprep.subr.mxu0 0.0
    %7121 = vmatpush1.msra.mxu0 0.0
    %7122 = vmatprep.subr.mxu0 0.0
    %7123 = vmatpush1.msra.mxu0 0.0
    %7124 = vmatprep.subr.mxu0 0.0
    %7125 = vmatpush1.msra.mxu0 0.0
    %7126 = vmatprep.subr.mxu0 0.0
    %7127 = vmatpush1.msra.mxu0 0.0
    %7128 = vmatprep.subr.mxu0 0.0
    %7129 = vmatpush1.msra.mxu0 0.0
    %7130 = vmatprep.subr.mxu0 0.0
    %7131 = vmatpush1.msra.mxu0 0.0
    %7132 = vmatprep.subr.mxu0 0.0
    %7133 = vmatpush1.msra.mxu0 0.0
    %7134 = vmatprep.subr.mxu0 0.0
    %7135 = vmatpush1.msra.mxu0 0.0
    %7136 = vmatprep.subr.mxu0 0.0
    %7137 = vmatpush1.msra.mxu0 0.0
    %7138 = vmatprep.subr.mxu0 0.0
    %7139 = vmatpush1.msra.mxu0 0.0
    %7140 = vmatprep.subr.mxu0 0.0
    %7141 = vmatpush1.msra.mxu0 0.0
    %7142 = vmatprep.subr.mxu0 0.0
    %7143 = vmatpush1.msra.mxu0 0.0
    %7144 = vmatprep.subr.mxu0 0.0
    %7145 = vmatpush1.msra.mxu0 0.0
    %7146 = vmatprep.subr.mxu0 0.0
    %7147 = vmatpush1.msra.mxu0 0.0
    %7148 = vmatprep.subr.mxu0 0.0
    %7149 = vmatpush1.msra.mxu0 0.0
    %7150 = vmatprep.subr.mxu0 0.0
    %7151 = vmatpush1.msra.mxu0 0.0
    %7152 = vmatprep.subr.mxu0 0.0
    %7153 = vmatpush1.msra.mxu0 0.0
    %7154 = vmatprep.mubr.f32.mxu0 0.0
    %7155 = vmatmul.mubr.f32.gmra.mrb[0].mxu0 %v7085
    %v7156 = vpop.f32.mrb[0].mxu0
    %v7157 = vadd.f32 0.0, %v7156
    %v7158 = vpop.f32.mrb[0].mxu0
    %7159 = vmatprep.mubr.f32.mxu0 0.0
    %7160 = vmatmul.mubr.f32.gmra.mrb[0].mxu0 %v7088
    %v7161 = vpop.f32.mrb[0].mxu0
    %v7162 = vadd.f32 0.0, %v7161
    %v7163 = vpop.f32.mrb[0].mxu0
    %7164 = vdwg.mxu0
    %v7166 = vsel %vm269, %v7070, 0
    %v7169 = vsel %vm269, %v7075, 0
    %v7172 = vsel %vm269, %v7157, 0
    %v7175 = vsel %vm269, %v7162, 0
    %7177 = vmatprep.subr.mxu0 0.0
    %7178 = vmatpush1.msra.mxu0 %v5268
    %7179 = vmatprep.subr.mxu0 0.0
    %7180 = vmatpush1.msra.mxu0 0.0
    %7181 = vmatprep.subr.mxu0 0.0
    %7182 = vmatpush1.msra.mxu0 0.0
    %7183 = vmatprep.subr.mxu0 0.0
    %7184 = vmatpush1.msra.mxu0 0.0
    %7185 = vmatprep.subr.mxu0 0.0
    %7186 = vmatpush1.msra.mxu0 0.0
    %7187 = vmatprep.subr.mxu0 0.0
    %7188 = vmatpush1.msra.mxu0 0.0
    %7189 = vmatprep.subr.mxu0 0.0
    %7190 = vmatpush1.msra.mxu0 0.0
    %7191 = vmatprep.subr.mxu0 0.0
    %7192 = vmatpush1.msra.mxu0 0.0
    %7193 = vmatprep.subr.mxu0 0.0
    %7194 = vmatpush1.msra.mxu0 0.0
    %7195 = vmatprep.subr.mxu0 0.0
    %7196 = vmatpush1.msra.mxu0 0.0
    %7197 = vmatprep.subr.mxu0 0.0
    %7198 = vmatpush1.msra.mxu0 0.0
    %7199 = vmatprep.subr.mxu0 0.0
    %7200 = vmatpush1.msra.mxu0 0.0
    %7201 = vmatprep.subr.mxu0 0.0
    %7202 = vmatpush1.msra.mxu0 0.0
    %7203 = vmatprep.subr.mxu0 0.0
    %7204 = vmatpush1.msra.mxu0 0.0
    %7205 = vmatprep.subr.mxu0 0.0
    %7206 = vmatpush1.msra.mxu0 0.0
    %7207 = vmatprep.subr.mxu0 0.0
    %7208 = vmatpush1.msra.mxu0 0.0
    %7209 = vmatprep.subr.mxu0 0.0
    %7210 = vmatpush1.msra.mxu0 0.0
    %7211 = vmatprep.subr.mxu0 0.0
    %7212 = vmatpush1.msra.mxu0 0.0
    %7213 = vmatprep.subr.mxu0 0.0
    %7214 = vmatpush1.msra.mxu0 0.0
    %7215 = vmatprep.subr.mxu0 0.0
    %7216 = vmatpush1.msra.mxu0 0.0
    %7217 = vmatprep.subr.mxu0 0.0
    %7218 = vmatpush1.msra.mxu0 0.0
    %7219 = vmatprep.subr.mxu0 0.0
    %7220 = vmatpush1.msra.mxu0 0.0
    %7221 = vmatprep.subr.mxu0 0.0
    %7222 = vmatpush1.msra.mxu0 0.0
    %7223 = vmatprep.subr.mxu0 0.0
    %7224 = vmatpush1.msra.mxu0 0.0
    %7225 = vmatprep.subr.mxu0 0.0
    %7226 = vmatpush1.msra.mxu0 0.0
    %7227 = vmatprep.subr.mxu0 0.0
    %7228 = vmatpush1.msra.mxu0 0.0
    %7229 = vmatprep.subr.mxu0 0.0
    %7230 = vmatpush1.msra.mxu0 0.0
    %7231 = vmatprep.subr.mxu0 0.0
    %7232 = vmatpush1.msra.mxu0 0.0
    %7233 = vmatprep.subr.mxu0 0.0
    %7234 = vmatpush1.msra.mxu0 0.0
    %7235 = vmatprep.subr.mxu0 0.0
    %7236 = vmatpush1.msra.mxu0 0.0
    %7237 = vmatprep.subr.mxu0 0.0
    %7238 = vmatpush1.msra.mxu0 0.0
    %7239 = vmatprep.subr.mxu0 0.0
    %7240 = vmatpush1.msra.mxu0 0.0
    %7241 = vmatprep.mubr.f32.mxu0 0.0
    %7242 = vmatmul.mubr.f32.gmra.mrb[0].mxu0 %v7166
    %v7243 = vpop.f32.mrb[0].mxu0
    %v7244 = vadd.f32 0.0, %v7243
    %v7245 = vpop.f32.mrb[0].mxu0
    %7246 = vmatprep.mubr.f32.mxu0 0.0
    %7247 = vmatmul.mubr.f32.gmra.mrb[0].mxu0 %v7169
    %v7248 = vpop.f32.mrb[0].mxu0
    %v7249 = vadd.f32 0.0, %v7248
    %v7250 = vpop.f32.mrb[0].mxu0
    %7251 = vmatprep.mubr.f32.mxu0 0.0
    %7252 = vmatmul.mubr.f32.gmra.mrb[0].mxu0 %v7172
    %v7253 = vpop.f32.mrb[0].mxu0
    %v7254 = vadd.f32 0.0, %v7253
    %v7255 = vpop.f32.mrb[0].mxu0
    %7256 = vmatprep.mubr.f32.mxu0 0.0
    %7257 = vmatmul.mubr.f32.gmra.mrb[0].mxu0 %v7175
    %v7258 = vpop.f32.mrb[0].mxu0
    %v7259 = vadd.f32 0.0, %v7258
    %v7260 = vpop.f32.mrb[0].mxu0
    %7261 = vdwg.mxu0
    %v7262 = vadd.f32 %v6987, %v7244
    %v7263 = vadd.f32 %v6988, %v7249
    %v7264 = vadd.f32 %v6989, %v7254
    %v7265 = vadd.f32 %v6990, %v7259
    %v7266 = vadd.f32 %v5032, %v7262
    %v7267 = vadd.f32 %v5033, %v7263
    %v7268 = vadd.f32 %v5034, %v7264
    %v7269 = vadd.f32 %v5035, %v7265
    %v7270 = vsel %vm43, %v7266, 0.0
    %7271 = vadd.xlane.f32.xlu0 %v7270
    %v7272 = vpop.xlane.xlu0 %7271
    %v7273 = vsel %vm43, %v7267, 0.0
    %7274 = vadd.xlane.f32.xlu0 %v7273
    %v7275 = vpop.xlane.xlu0 %7274
    %v7276 = vsel %vm43, %v7268, 0.0
    %7277 = vadd.xlane.f32.xlu0 %v7276
    %v7278 = vpop.xlane.xlu0 %7277
    %v7279 = vsel %vm43, %v7269, 0.0
    %7280 = vadd.xlane.f32.xlu0 %v7279
    %v7281 = vpop.xlane.xlu0 %7280
    %v7282 = vmul.f32 %v7272, %v2277
    %v7283 = vmul.f32 %v7275, %v2277
    %v7284 = vmul.f32 %v7278, %v2277
    %v7285 = vmul.f32 %v7281, %v2277
    %v7286 = vmul.f32 %v7266, %v7266
    %v7287 = vmul.f32 %v7267, %v7267
    %v7288 = vmul.f32 %v7268, %v7268
    %v7289 = vmul.f32 %v7269, %v7269
    %v7290 = vsel %vm43, %v7286, 0.0
    %7291 = vadd.xlane.f32.xlu0 %v7290
    %v7292 = vpop.xlane.xlu0 %7291
    %v7293 = vsel %vm43, %v7287, 0.0
    %7294 = vadd.xlane.f32.xlu0 %v7293
    %v7295 = vpop.xlane.xlu0 %7294
    %v7296 = vsel %vm43, %v7288, 0.0
    %7297 = vadd.xlane.f32.xlu0 %v7296
    %v7298 = vpop.xlane.xlu0 %7297
    %v7299 = vsel %vm43, %v7289, 0.0
    %7300 = vadd.xlane.f32.xlu0 %v7299
    %v7301 = vpop.xlane.xlu0 %7300
    %v7302 = vmul.f32 %v7292, %v2277
    %v7303 = vmul.f32 %v7295, %v2277
    %v7304 = vmul.f32 %v7298, %v2277
    %v7305 = vmul.f32 %v7301, %v2277
    %v7306 = vmul.f32 %v7282, %v7282
    %v7307 = vmul.f32 %v7283, %v7283
    %v7308 = vmul.f32 %v7284, %v7284
    %v7309 = vmul.f32 %v7285, %v7285
    %v7310 = vsub.f32 %v7302, %v7306
    %v7311 = vsub.f32 %v7303, %v7307
    %v7312 = vsub.f32 %v7304, %v7308
    %v7313 = vsub.f32 %v7305, %v7309
    %v7314 = vsub.f32 %v7266, %v7282
    %v7315 = vsub.f32 %v7267, %v7283
    %v7316 = vsub.f32 %v7268, %v7284
    %v7317 = vsub.f32 %v7269, %v7285
    %v7318 = vadd.f32 %v7310, 1e-05
    %v7319 = vadd.f32 %v7311, 1e-05
    %v7320 = vadd.f32 %v7312, 1e-05
    %v7321 = vadd.f32 %v7313, 1e-05
    %v7322 = vrsqrt.pop %v7318
    %v7323 = vrsqrt.pop %v7319
    %v7324 = vrsqrt.pop %v7320
    %v7325 = vrsqrt.pop %v7321
    %v7326 = vmul.f32 %v7314, %v7322
    %v7327 = vmul.f32 %v7315, %v7323
    %v7328 = vmul.f32 %v7316, %v7324
    %v7329 = vmul.f32 %v7317, %v7325
    %v7330 = vlaneseq
    %v7331 = vshrl.u32 %v7330, 7
    %v7332 = vsub.s32 0, %v7331
    %v7333 = vrot.slane %v5036, %v7332
    %v7334 = vmul.f32 %v7326, %v7333
    %v7335 = vmul.f32 %v7327, %v7333
    %v7336 = vmul.f32 %v7328, %v7333
    %v7337 = vmul.f32 %v7329, %v7333
    %v7338 = vlaneseq
    %v7339 = vshrl.u32 %v7338, 7
    %v7340 = vsub.s32 1, %v7339
    %v7341 = vrot.slane %v5036, %v7340
    %v7342 = vadd.f32 %v7334, %v7341
    %v7343 = vadd.f32 %v7335, %v7341
    %v7344 = vadd.f32 %v7336, %v7341
    %v7345 = vadd.f32 %v7337, %v7341
    %s7346 = scalar_lea.vmem %s2, 120
    %v7347 = vld [vmem:[%s7346] sm:$0xff]
    %v7348 = vld [vmem:[%s7346 + $0x8] sm:$0xff]
    %v7349 = vld [vmem:[%s7346 + $0x10] sm:$0xff]
    %v7350 = vld [vmem:[%s7346 + $0x18] sm:$0xff]
    %v7351 = vld [vmem:[%s7346 + $0x20] sm:$0xff]
    %v7352 = vadd.f32 %v7342, %v25
    %v7353 = vadd.f32 %v7343, %v26
    %v7354 = vadd.f32 %v7344, %v27
    %v7355 = vadd.f32 %v7345, %v28
    %v7356 = vlaneseq
    %v7357 = vshrl.u32 %v7356, 7
    %v7358 = vsub.s32 0, %v7357
    %v7359 = vrot.slane %v7351, %v7358
    %v7361 = vsel %vm43, %v7352, 0
    %v7364 = vsel %vm43, %v7353, 0
    %v7367 = vsel %vm43, %v7354, 0
    %v7370 = vsel %vm43, %v7355, 0
    %7372 = vmatprep.subr.mxu0 0.0
    %7373 = vmatpush1.msra.mxu0 %v7347
    %7374 = vmatprep.subr.mxu0 0.0
    %7375 = vmatpush1.msra.mxu0 %v7348
    %7376 = vmatprep.subr.mxu0 0.0
    %7377 = vmatpush1.msra.mxu0 %v7349
    %7378 = vmatprep.subr.mxu0 0.0
    %7379 = vmatpush1.msra.mxu0 %v7350
    %7380 = vmatprep.subr.mxu0 0.0
    %7381 = vmatpush1.msra.mxu0 0.0
    %7382 = vmatprep.subr.mxu0 0.0
    %7383 = vmatpush1.msra.mxu0 0.0
    %7384 = vmatprep.subr.mxu0 0.0
    %7385 = vmatpush1.msra.mxu0 0.0
    %7386 = vmatprep.subr.mxu0 0.0
    %7387 = vmatpush1.msra.mxu0 0.0
    %7388 = vmatprep.subr.mxu0 0.0
    %7389 = vmatpush1.msra.mxu0 0.0
    %7390 = vmatprep.subr.mxu0 0.0
    %7391 = vmatpush1.msra.mxu0 0.0
    %7392 = vmatprep.subr.mxu0 0.0
    %7393 = vmatpush1.msra.mxu0 0.0
    %7394 = vmatprep.subr.mxu0 0.0
    %7395 = vmatpush1.msra.mxu0 0.0
    %7396 = vmatprep.subr.mxu0 0.0
    %7397 = vmatpush1.msra.mxu0 0.0
    %7398 = vmatprep.subr.mxu0 0.0
    %7399 = vmatpush1.msra.mxu0 0.0
    %7400 = vmatprep.subr.mxu0 0.0
    %7401 = vmatpush1.msra.mxu0 0.0
    %7402 = vmatprep.subr.mxu0 0.0
    %7403 = vmatpush1.msra.mxu0 0.0
    %7404 = vmatprep.subr.mxu0 0.0
    %7405 = vmatpush1.msra.mxu0 0.0
    %7406 = vmatprep.subr.mxu0 0.0
    %7407 = vmatpush1.msra.mxu0 0.0
    %7408 = vmatprep.subr.mxu0 0.0
    %7409 = vmatpush1.msra.mxu0 0.0
    %7410 = vmatprep.subr.mxu0 0.0
    %7411 = vmatpush1.msra.mxu0 0.0
    %7412 = vmatprep.subr.mxu0 0.0
    %7413 = vmatpush1.msra.mxu0 0.0
    %7414 = vmatprep.subr.mxu0 0.0
    %7415 = vmatpush1.msra.mxu0 0.0
    %7416 = vmatprep.subr.mxu0 0.0
    %7417 = vmatpush1.msra.mxu0 0.0
    %7418 = vmatprep.subr.mxu0 0.0
    %7419 = vmatpush1.msra.mxu0 0.0
    %7420 = vmatprep.subr.mxu0 0.0
    %7421 = vmatpush1.msra.mxu0 0.0
    %7422 = vmatprep.subr.mxu0 0.0
    %7423 = vmatpush1.msra.mxu0 0.0
    %7424 = vmatprep.subr.mxu0 0.0
    %7425 = vmatpush1.msra.mxu0 0.0
    %7426 = vmatprep.subr.mxu0 0.0
    %7427 = vmatpush1.msra.mxu0 0.0
    %7428 = vmatprep.subr.mxu0 0.0
    %7429 = vmatpush1.msra.mxu0 0.0
    %7430 = vmatprep.subr.mxu0 0.0
    %7431 = vmatpush1.msra.mxu0 0.0
    %7432 = vmatprep.subr.mxu0 0.0
    %7433 = vmatpush1.msra.mxu0 0.0
    %7434 = vmatprep.subr.mxu0 0.0
    %7435 = vmatpush1.msra.mxu0 0.0
    %7436 = vmatprep.mubr.f32.mxu0 0.0
    %7437 = vmatmul.mubr.f32.gmra.mrb[0].mxu0 %v7361
    %v7438 = vpop.f32.mrb[0].mxu0
    %v7439 = vadd.f32 %v7359, %v7438
    %v7440 = vpop.f32.mrb[0].mxu0
    %7441 = vmatprep.mubr.f32.mxu0 0.0
    %7442 = vmatmul.mubr.f32.gmra.mrb[0].mxu0 %v7364
    %v7443 = vpop.f32.mrb[0].mxu0
    %v7444 = vadd.f32 %v7359, %v7443
    %v7445 = vpop.f32.mrb[0].mxu0
    %7446 = vmatprep.mubr.f32.mxu0 0.0
    %7447 = vmatmul.mubr.f32.gmra.mrb[0].mxu0 %v7367
    %v7448 = vpop.f32.mrb[0].mxu0
    %v7449 = vadd.f32 %v7359, %v7448
    %v7450 = vpop.f32.mrb[0].mxu0
    %7451 = vmatprep.mubr.f32.mxu0 0.0
    %7452 = vmatmul.mubr.f32.gmra.mrb[0].mxu0 %v7370
    %v7453 = vpop.f32.mrb[0].mxu0
    %v7454 = vadd.f32 %v7359, %v7453
    %v7455 = vpop.f32.mrb[0].mxu0
    %7456 = vdwg.mxu0
    %7461 = vrot.lane.b32.xlu0 %v7347, 96
    %v7462 = vpop.permute.xlu0 %7461
    %7463 = vrot.lane.b32.xlu0 %v7348, 96
    %v7464 = vpop.permute.xlu0 %7463
    %7465 = vrot.lane.b32.xlu0 %v7349, 96
    %v7466 = vpop.permute.xlu0 %7465
    %7467 = vrot.lane.b32.xlu0 %v7350, 96
    %v7468 = vpop.permute.xlu0 %7467
    %7474 = vrot.lane.b32.xlu0 %v7359, 96
    %v7475 = vpop.permute.xlu0 %7474
    %7477 = vmatprep.subr.mxu0 0.0
    %7478 = vmatpush1.msra.mxu0 %v7462
    %7479 = vmatprep.subr.mxu0 0.0
    %7480 = vmatpush1.msra.mxu0 %v7464
    %7481 = vmatprep.subr.mxu0 0.0
    %7482 = vmatpush1.msra.mxu0 %v7466
    %7483 = vmatprep.subr.mxu0 0.0
    %7484 = vmatpush1.msra.mxu0 %v7468
    %7485 = vmatprep.subr.mxu0 0.0
    %7486 = vmatpush1.msra.mxu0 0.0
    %7487 = vmatprep.subr.mxu0 0.0
    %7488 = vmatpush1.msra.mxu0 0.0
    %7489 = vmatprep.subr.mxu0 0.0
    %7490 = vmatpush1.msra.mxu0 0.0
    %7491 = vmatprep.subr.mxu0 0.0
    %7492 = vmatpush1.msra.mxu0 0.0
    %7493 = vmatprep.subr.mxu0 0.0
    %7494 = vmatpush1.msra.mxu0 0.0
    %7495 = vmatprep.subr.mxu0 0.0
    %7496 = vmatpush1.msra.mxu0 0.0
    %7497 = vmatprep.subr.mxu0 0.0
    %7498 = vmatpush1.msra.mxu0 0.0
    %7499 = vmatprep.subr.mxu0 0.0
    %7500 = vmatpush1.msra.mxu0 0.0
    %7501 = vmatprep.subr.mxu0 0.0
    %7502 = vmatpush1.msra.mxu0 0.0
    %7503 = vmatprep.subr.mxu0 0.0
    %7504 = vmatpush1.msra.mxu0 0.0
    %7505 = vmatprep.subr.mxu0 0.0
    %7506 = vmatpush1.msra.mxu0 0.0
    %7507 = vmatprep.subr.mxu0 0.0
    %7508 = vmatpush1.msra.mxu0 0.0
    %7509 = vmatprep.subr.mxu0 0.0
    %7510 = vmatpush1.msra.mxu0 0.0
    %7511 = vmatprep.subr.mxu0 0.0
    %7512 = vmatpush1.msra.mxu0 0.0
    %7513 = vmatprep.subr.mxu0 0.0
    %7514 = vmatpush1.msra.mxu0 0.0
    %7515 = vmatprep.subr.mxu0 0.0
    %7516 = vmatpush1.msra.mxu0 0.0
    %7517 = vmatprep.subr.mxu0 0.0
    %7518 = vmatpush1.msra.mxu0 0.0
    %7519 = vmatprep.subr.mxu0 0.0
    %7520 = vmatpush1.msra.mxu0 0.0
    %7521 = vmatprep.subr.mxu0 0.0
    %7522 = vmatpush1.msra.mxu0 0.0
    %7523 = vmatprep.subr.mxu0 0.0
    %7524 = vmatpush1.msra.mxu0 0.0
    %7525 = vmatprep.subr.mxu0 0.0
    %7526 = vmatpush1.msra.mxu0 0.0
    %7527 = vmatprep.subr.mxu0 0.0
    %7528 = vmatpush1.msra.mxu0 0.0
    %7529 = vmatprep.subr.mxu0 0.0
    %7530 = vmatpush1.msra.mxu0 0.0
    %7531 = vmatprep.subr.mxu0 0.0
    %7532 = vmatpush1.msra.mxu0 0.0
    %7533 = vmatprep.subr.mxu0 0.0
    %7534 = vmatpush1.msra.mxu0 0.0
    %7535 = vmatprep.subr.mxu0 0.0
    %7536 = vmatpush1.msra.mxu0 0.0
    %7537 = vmatprep.subr.mxu0 0.0
    %7538 = vmatpush1.msra.mxu0 0.0
    %7539 = vmatprep.subr.mxu0 0.0
    %7540 = vmatpush1.msra.mxu0 0.0
    %7541 = vmatprep.mubr.f32.mxu0 0.0
    %7542 = vmatmul.mubr.f32.gmra.mrb[0].mxu0 %v45
    %v7543 = vpop.f32.mrb[0].mxu0
    %v7544 = vadd.f32 %v7475, %v7543
    %v7545 = vpop.f32.mrb[0].mxu0
    %7546 = vmatprep.mubr.f32.mxu0 0.0
    %7547 = vmatmul.mubr.f32.gmra.mrb[0].mxu0 %v48
    %v7548 = vpop.f32.mrb[0].mxu0
    %v7549 = vadd.f32 %v7475, %v7548
    %v7550 = vpop.f32.mrb[0].mxu0
    %7551 = vmatprep.mubr.f32.mxu0 0.0
    %7552 = vmatmul.mubr.f32.gmra.mrb[0].mxu0 %v51
    %v7553 = vpop.f32.mrb[0].mxu0
    %v7554 = vadd.f32 %v7475, %v7553
    %v7555 = vpop.f32.mrb[0].mxu0
    %7556 = vmatprep.mubr.f32.mxu0 0.0
    %7557 = vmatmul.mubr.f32.gmra.mrb[0].mxu0 %v54
    %v7558 = vpop.f32.mrb[0].mxu0
    %v7559 = vadd.f32 %v7475, %v7558
    %v7560 = vpop.f32.mrb[0].mxu0
    %7561 = vdwg.mxu0
    %7562 = vrot.lane.b32.xlu0 %v7347, 64
    %v7563 = vpop.permute.xlu0 %7562
    %7564 = vrot.lane.b32.xlu0 %v7348, 64
    %v7565 = vpop.permute.xlu0 %7564
    %7566 = vrot.lane.b32.xlu0 %v7349, 64
    %v7567 = vpop.permute.xlu0 %7566
    %7568 = vrot.lane.b32.xlu0 %v7350, 64
    %v7569 = vpop.permute.xlu0 %7568
    %7574 = vrot.lane.b32.xlu0 %v7359, 64
    %v7575 = vpop.permute.xlu0 %7574
    %7577 = vmatprep.subr.mxu0 0.0
    %7578 = vmatpush1.msra.mxu0 %v7563
    %7579 = vmatprep.subr.mxu0 0.0
    %7580 = vmatpush1.msra.mxu0 %v7565
    %7581 = vmatprep.subr.mxu0 0.0
    %7582 = vmatpush1.msra.mxu0 %v7567
    %7583 = vmatprep.subr.mxu0 0.0
    %7584 = vmatpush1.msra.mxu0 %v7569
    %7585 = vmatprep.subr.mxu0 0.0
    %7586 = vmatpush1.msra.mxu0 0.0
    %7587 = vmatprep.subr.mxu0 0.0
    %7588 = vmatpush1.msra.mxu0 0.0
    %7589 = vmatprep.subr.mxu0 0.0
    %7590 = vmatpush1.msra.mxu0 0.0
    %7591 = vmatprep.subr.mxu0 0.0
    %7592 = vmatpush1.msra.mxu0 0.0
    %7593 = vmatprep.subr.mxu0 0.0
    %7594 = vmatpush1.msra.mxu0 0.0
    %7595 = vmatprep.subr.mxu0 0.0
    %7596 = vmatpush1.msra.mxu0 0.0
    %7597 = vmatprep.subr.mxu0 0.0
    %7598 = vmatpush1.msra.mxu0 0.0
    %7599 = vmatprep.subr.mxu0 0.0
    %7600 = vmatpush1.msra.mxu0 0.0
    %7601 = vmatprep.subr.mxu0 0.0
    %7602 = vmatpush1.msra.mxu0 0.0
    %7603 = vmatprep.subr.mxu0 0.0
    %7604 = vmatpush1.msra.mxu0 0.0
    %7605 = vmatprep.subr.mxu0 0.0
    %7606 = vmatpush1.msra.mxu0 0.0
    %7607 = vmatprep.subr.mxu0 0.0
    %7608 = vmatpush1.msra.mxu0 0.0
    %7609 = vmatprep.subr.mxu0 0.0
    %7610 = vmatpush1.msra.mxu0 0.0
    %7611 = vmatprep.subr.mxu0 0.0
    %7612 = vmatpush1.msra.mxu0 0.0
    %7613 = vmatprep.subr.mxu0 0.0
    %7614 = vmatpush1.msra.mxu0 0.0
    %7615 = vmatprep.subr.mxu0 0.0
    %7616 = vmatpush1.msra.mxu0 0.0
    %7617 = vmatprep.subr.mxu0 0.0
    %7618 = vmatpush1.msra.mxu0 0.0
    %7619 = vmatprep.subr.mxu0 0.0
    %7620 = vmatpush1.msra.mxu0 0.0
    %7621 = vmatprep.subr.mxu0 0.0
    %7622 = vmatpush1.msra.mxu0 0.0
    %7623 = vmatprep.subr.mxu0 0.0
    %7624 = vmatpush1.msra.mxu0 0.0
    %7625 = vmatprep.subr.mxu0 0.0
    %7626 = vmatpush1.msra.mxu0 0.0
    %7627 = vmatprep.subr.mxu0 0.0
    %7628 = vmatpush1.msra.mxu0 0.0
    %7629 = vmatprep.subr.mxu0 0.0
    %7630 = vmatpush1.msra.mxu0 0.0
    %7631 = vmatprep.subr.mxu0 0.0
    %7632 = vmatpush1.msra.mxu0 0.0
    %7633 = vmatprep.subr.mxu0 0.0
    %7634 = vmatpush1.msra.mxu0 0.0
    %7635 = vmatprep.subr.mxu0 0.0
    %7636 = vmatpush1.msra.mxu0 0.0
    %7637 = vmatprep.subr.mxu0 0.0
    %7638 = vmatpush1.msra.mxu0 0.0
    %7639 = vmatprep.subr.mxu0 0.0
    %7640 = vmatpush1.msra.mxu0 0.0
    %7641 = vmatprep.mubr.f32.mxu0 0.0
    %7642 = vmatmul.mubr.f32.gmra.mrb[0].mxu0 %v162
    %v7643 = vpop.f32.mrb[0].mxu0
    %v7644 = vadd.f32 %v7575, %v7643
    %v7645 = vpop.f32.mrb[0].mxu0
    %7646 = vmatprep.mubr.f32.mxu0 0.0
    %7647 = vmatmul.mubr.f32.gmra.mrb[0].mxu0 %v165
    %v7648 = vpop.f32.mrb[0].mxu0
    %v7649 = vadd.f32 %v7575, %v7648
    %v7650 = vpop.f32.mrb[0].mxu0
    %7651 = vmatprep.mubr.f32.mxu0 0.0
    %7652 = vmatmul.mubr.f32.gmra.mrb[0].mxu0 %v168
    %v7653 = vpop.f32.mrb[0].mxu0
    %v7654 = vadd.f32 %v7575, %v7653
    %v7655 = vpop.f32.mrb[0].mxu0
    %7656 = vmatprep.mubr.f32.mxu0 0.0
    %7657 = vmatmul.mubr.f32.gmra.mrb[0].mxu0 %v171
    %v7658 = vpop.f32.mrb[0].mxu0
    %v7659 = vadd.f32 %v7575, %v7658
    %v7660 = vpop.f32.mrb[0].mxu0
    %7661 = vdwg.mxu0
    %v7662 = vld [vmem:[%s3 + $0xc8] sm:$0xff]
    %v7663 = vld [vmem:[%s3 + $0xd0] sm:$0xff]
    %v7664 = vld [vmem:[%s3 + $0xd8] sm:$0xff]
    %v7665 = vld [vmem:[%s3 + $0xe0] sm:$0xff]
    %v7666 = vld [vmem:[%s3 + $0xe8] sm:$0x1]
    %v7668 = vsel %vm269, %v7439, 0
    %v7671 = vsel %vm269, %v7444, 0
    %v7674 = vsel %vm269, %v7544, 0
    %v7677 = vsel %vm269, %v7549, 0
    %7679 = vmatprep.subr.mxu0 0.0
    %7680 = vmatpush1.xpose.msra.mxu0 %v7674
    %7681 = vmatprep.subr.mxu0 0.0
    %7682 = vmatpush1.xpose.msra.mxu0 %v7677
    %7683 = vmatprep.subr.mxu0 0.0
    %7684 = vmatpush1.xpose.msra.mxu0 0.0
    %7685 = vmatprep.subr.mxu0 0.0
    %7686 = vmatpush1.xpose.msra.mxu0 0.0
    %7687 = vmatprep.subr.mxu0 0.0
    %7688 = vmatpush1.xpose.msra.mxu0 0.0
    %7689 = vmatprep.subr.mxu0 0.0
    %7690 = vmatpush1.xpose.msra.mxu0 0.0
    %7691 = vmatprep.subr.mxu0 0.0
    %7692 = vmatpush1.xpose.msra.mxu0 0.0
    %7693 = vmatprep.subr.mxu0 0.0
    %7694 = vmatpush1.xpose.msra.mxu0 0.0
    %7695 = vmatprep.subr.mxu0 0.0
    %7696 = vmatpush1.xpose.msra.mxu0 0.0
    %7697 = vmatprep.subr.mxu0 0.0
    %7698 = vmatpush1.xpose.msra.mxu0 0.0
    %7699 = vmatprep.subr.mxu0 0.0
    %7700 = vmatpush1.xpose.msra.mxu0 0.0
    %7701 = vmatprep.subr.mxu0 0.0
    %7702 = vmatpush1.xpose.msra.mxu0 0.0
    %7703 = vmatprep.subr.mxu0 0.0
    %7704 = vmatpush1.xpose.msra.mxu0 0.0
    %7705 = vmatprep.subr.mxu0 0.0
    %7706 = vmatpush1.xpose.msra.mxu0 0.0
    %7707 = vmatprep.subr.mxu0 0.0
    %7708 = vmatpush1.xpose.msra.mxu0 0.0
    %7709 = vmatprep.subr.mxu0 0.0
    %7710 = vmatpush1.xpose.msra.mxu0 0.0
    %7711 = vmatprep.subr.mxu0 0.0
    %7712 = vmatpush1.xpose.msra.mxu0 0.0
    %7713 = vmatprep.subr.mxu0 0.0
    %7714 = vmatpush1.xpose.msra.mxu0 0.0
    %7715 = vmatprep.subr.mxu0 0.0
    %7716 = vmatpush1.xpose.msra.mxu0 0.0
    %7717 = vmatprep.subr.mxu0 0.0
    %7718 = vmatpush1.xpose.msra.mxu0 0.0
    %7719 = vmatprep.subr.mxu0 0.0
    %7720 = vmatpush1.xpose.msra.mxu0 0.0
    %7721 = vmatprep.subr.mxu0 0.0
    %7722 = vmatpush1.xpose.msra.mxu0 0.0
    %7723 = vmatprep.subr.mxu0 0.0
    %7724 = vmatpush1.xpose.msra.mxu0 0.0
    %7725 = vmatprep.subr.mxu0 0.0
    %7726 = vmatpush1.xpose.msra.mxu0 0.0
    %7727 = vmatprep.subr.mxu0 0.0
    %7728 = vmatpush1.xpose.msra.mxu0 0.0
    %7729 = vmatprep.subr.mxu0 0.0
    %7730 = vmatpush1.xpose.msra.mxu0 0.0
    %7731 = vmatprep.subr.mxu0 0.0
    %7732 = vmatpush1.xpose.msra.mxu0 0.0
    %7733 = vmatprep.subr.mxu0 0.0
    %7734 = vmatpush1.xpose.msra.mxu0 0.0
    %7735 = vmatprep.subr.mxu0 0.0
    %7736 = vmatpush1.xpose.msra.mxu0 0.0
    %7737 = vmatprep.subr.mxu0 0.0
    %7738 = vmatpush1.xpose.msra.mxu0 0.0
    %7739 = vmatprep.subr.mxu0 0.0
    %7740 = vmatpush1.xpose.msra.mxu0 0.0
    %7741 = vmatprep.subr.mxu0 0.0
    %7742 = vmatpush1.xpose.msra.mxu0 0.0
    %7743 = vmatprep.mubr.f32.mxu0 0.0
    %7744 = vmatmul.mubr.f32.gmra.mrb[0].mxu0 %v7668
    %v7745 = vpop.f32.mrb[0].mxu0
    %v7746 = vadd.f32 0.0, %v7745
    %v7747 = vpop.f32.mrb[0].mxu0
    %7748 = vmatprep.mubr.f32.mxu0 0.0
    %7749 = vmatmul.mubr.f32.gmra.mrb[0].mxu0 %v7671
    %v7750 = vpop.f32.mrb[0].mxu0
    %v7751 = vadd.f32 0.0, %v7750
    %v7752 = vpop.f32.mrb[0].mxu0
    %7753 = vdwg.mxu0
    %v7755 = vsel %vm269, %v7449, 0
    %v7758 = vsel %vm269, %v7454, 0
    %v7761 = vsel %vm269, %v7554, 0
    %v7764 = vsel %vm269, %v7559, 0
    %7766 = vmatprep.subr.mxu0 0.0
    %7767 = vmatpush1.xpose.msra.mxu0 %v7761
    %7768 = vmatprep.subr.mxu0 0.0
    %7769 = vmatpush1.xpose.msra.mxu0 %v7764
    %7770 = vmatprep.subr.mxu0 0.0
    %7771 = vmatpush1.xpose.msra.mxu0 0.0
    %7772 = vmatprep.subr.mxu0 0.0
    %7773 = vmatpush1.xpose.msra.mxu0 0.0
    %7774 = vmatprep.subr.mxu0 0.0
    %7775 = vmatpush1.xpose.msra.mxu0 0.0
    %7776 = vmatprep.subr.mxu0 0.0
    %7777 = vmatpush1.xpose.msra.mxu0 0.0
    %7778 = vmatprep.subr.mxu0 0.0
    %7779 = vmatpush1.xpose.msra.mxu0 0.0
    %7780 = vmatprep.subr.mxu0 0.0
    %7781 = vmatpush1.xpose.msra.mxu0 0.0
    %7782 = vmatprep.subr.mxu0 0.0
    %7783 = vmatpush1.xpose.msra.mxu0 0.0
    %7784 = vmatprep.subr.mxu0 0.0
    %7785 = vmatpush1.xpose.msra.mxu0 0.0
    %7786 = vmatprep.subr.mxu0 0.0
    %7787 = vmatpush1.xpose.msra.mxu0 0.0
    %7788 = vmatprep.subr.mxu0 0.0
    %7789 = vmatpush1.xpose.msra.mxu0 0.0
    %7790 = vmatprep.subr.mxu0 0.0
    %7791 = vmatpush1.xpose.msra.mxu0 0.0
    %7792 = vmatprep.subr.mxu0 0.0
    %7793 = vmatpush1.xpose.msra.mxu0 0.0
    %7794 = vmatprep.subr.mxu0 0.0
    %7795 = vmatpush1.xpose.msra.mxu0 0.0
    %7796 = vmatprep.subr.mxu0 0.0
    %7797 = vmatpush1.xpose.msra.mxu0 0.0
    %7798 = vmatprep.subr.mxu0 0.0
    %7799 = vmatpush1.xpose.msra.mxu0 0.0
    %7800 = vmatprep.subr.mxu0 0.0
    %7801 = vmatpush1.xpose.msra.mxu0 0.0
    %7802 = vmatprep.subr.mxu0 0.0
    %7803 = vmatpush1.xpose.msra.mxu0 0.0
    %7804 = vmatprep.subr.mxu0 0.0
    %7805 = vmatpush1.xpose.msra.mxu0 0.0
    %7806 = vmatprep.subr.mxu0 0.0
    %7807 = vmatpush1.xpose.msra.mxu0 0.0
    %7808 = vmatprep.subr.mxu0 0.0
    %7809 = vmatpush1.xpose.msra.mxu0 0.0
    %7810 = vmatprep.subr.mxu0 0.0
    %7811 = vmatpush1.xpose.msra.mxu0 0.0
    %7812 = vmatprep.subr.mxu0 0.0
    %7813 = vmatpush1.xpose.msra.mxu0 0.0
    %7814 = vmatprep.subr.mxu0 0.0
    %7815 = vmatpush1.xpose.msra.mxu0 0.0
    %7816 = vmatprep.subr.mxu0 0.0
    %7817 = vmatpush1.xpose.msra.mxu0 0.0
    %7818 = vmatprep.subr.mxu0 0.0
    %7819 = vmatpush1.xpose.msra.mxu0 0.0
    %7820 = vmatprep.subr.mxu0 0.0
    %7821 = vmatpush1.xpose.msra.mxu0 0.0
    %7822 = vmatprep.subr.mxu0 0.0
    %7823 = vmatpush1.xpose.msra.mxu0 0.0
    %7824 = vmatprep.subr.mxu0 0.0
    %7825 = vmatpush1.xpose.msra.mxu0 0.0
    %7826 = vmatprep.subr.mxu0 0.0
    %7827 = vmatpush1.xpose.msra.mxu0 0.0
    %7828 = vmatprep.subr.mxu0 0.0
    %7829 = vmatpush1.xpose.msra.mxu0 0.0
    %7830 = vmatprep.mubr.f32.mxu0 0.0
    %7831 = vmatmul.mubr.f32.gmra.mrb[0].mxu0 %v7755
    %v7832 = vpop.f32.mrb[0].mxu0
    %v7833 = vadd.f32 0.0, %v7832
    %v7834 = vpop.f32.mrb[0].mxu0
    %7835 = vmatprep.mubr.f32.mxu0 0.0
    %7836 = vmatmul.mubr.f32.gmra.mrb[0].mxu0 %v7758
    %v7837 = vpop.f32.mrb[0].mxu0
    %v7838 = vadd.f32 0.0, %v7837
    %v7839 = vpop.f32.mrb[0].mxu0
    %7840 = vdwg.mxu0
    %7841 = vrot.lane.b32.xlu0 %v7439, 120
    %v7842 = vpop.permute.xlu0 %7841
    %7843 = vrot.lane.b32.xlu0 %v7444, 120
    %v7844 = vpop.permute.xlu0 %7843
    %7845 = vrot.lane.b32.xlu0 %v7544, 120
    %v7846 = vpop.permute.xlu0 %7845
    %7847 = vrot.lane.b32.xlu0 %v7549, 120
    %v7848 = vpop.permute.xlu0 %7847
    %v7849 = vsel %vm269, %v7842, 0
    %v7851 = vsel %vm269, %v7844, 0
    %v7853 = vsel %vm269, %v7846, 0
    %v7855 = vsel %vm269, %v7848, 0
    %7857 = vmatprep.subr.mxu0 0.0
    %7858 = vmatpush1.xpose.msra.mxu0 %v7853
    %7859 = vmatprep.subr.mxu0 0.0
    %7860 = vmatpush1.xpose.msra.mxu0 %v7855
    %7861 = vmatprep.subr.mxu0 0.0
    %7862 = vmatpush1.xpose.msra.mxu0 0.0
    %7863 = vmatprep.subr.mxu0 0.0
    %7864 = vmatpush1.xpose.msra.mxu0 0.0
    %7865 = vmatprep.subr.mxu0 0.0
    %7866 = vmatpush1.xpose.msra.mxu0 0.0
    %7867 = vmatprep.subr.mxu0 0.0
    %7868 = vmatpush1.xpose.msra.mxu0 0.0
    %7869 = vmatprep.subr.mxu0 0.0
    %7870 = vmatpush1.xpose.msra.mxu0 0.0
    %7871 = vmatprep.subr.mxu0 0.0
    %7872 = vmatpush1.xpose.msra.mxu0 0.0
    %7873 = vmatprep.subr.mxu0 0.0
    %7874 = vmatpush1.xpose.msra.mxu0 0.0
    %7875 = vmatprep.subr.mxu0 0.0
    %7876 = vmatpush1.xpose.msra.mxu0 0.0
    %7877 = vmatprep.subr.mxu0 0.0
    %7878 = vmatpush1.xpose.msra.mxu0 0.0
    %7879 = vmatprep.subr.mxu0 0.0
    %7880 = vmatpush1.xpose.msra.mxu0 0.0
    %7881 = vmatprep.subr.mxu0 0.0
    %7882 = vmatpush1.xpose.msra.mxu0 0.0
    %7883 = vmatprep.subr.mxu0 0.0
    %7884 = vmatpush1.xpose.msra.mxu0 0.0
    %7885 = vmatprep.subr.mxu0 0.0
    %7886 = vmatpush1.xpose.msra.mxu0 0.0
    %7887 = vmatprep.subr.mxu0 0.0
    %7888 = vmatpush1.xpose.msra.mxu0 0.0
    %7889 = vmatprep.subr.mxu0 0.0
    %7890 = vmatpush1.xpose.msra.mxu0 0.0
    %7891 = vmatprep.subr.mxu0 0.0
    %7892 = vmatpush1.xpose.msra.mxu0 0.0
    %7893 = vmatprep.subr.mxu0 0.0
    %7894 = vmatpush1.xpose.msra.mxu0 0.0
    %7895 = vmatprep.subr.mxu0 0.0
    %7896 = vmatpush1.xpose.msra.mxu0 0.0
    %7897 = vmatprep.subr.mxu0 0.0
    %7898 = vmatpush1.xpose.msra.mxu0 0.0
    %7899 = vmatprep.subr.mxu0 0.0
    %7900 = vmatpush1.xpose.msra.mxu0 0.0
    %7901 = vmatprep.subr.mxu0 0.0
    %7902 = vmatpush1.xpose.msra.mxu0 0.0
    %7903 = vmatprep.subr.mxu0 0.0
    %7904 = vmatpush1.xpose.msra.mxu0 0.0
    %7905 = vmatprep.subr.mxu0 0.0
    %7906 = vmatpush1.xpose.msra.mxu0 0.0
    %7907 = vmatprep.subr.mxu0 0.0
    %7908 = vmatpush1.xpose.msra.mxu0 0.0
    %7909 = vmatprep.subr.mxu0 0.0
    %7910 = vmatpush1.xpose.msra.mxu0 0.0
    %7911 = vmatprep.subr.mxu0 0.0
    %7912 = vmatpush1.xpose.msra.mxu0 0.0
    %7913 = vmatprep.subr.mxu0 0.0
    %7914 = vmatpush1.xpose.msra.mxu0 0.0
    %7915 = vmatprep.subr.mxu0 0.0
    %7916 = vmatpush1.xpose.msra.mxu0 0.0
    %7917 = vmatprep.subr.mxu0 0.0
    %7918 = vmatpush1.xpose.msra.mxu0 0.0
    %7919 = vmatprep.subr.mxu0 0.0
    %7920 = vmatpush1.xpose.msra.mxu0 0.0
    %7921 = vmatprep.mubr.f32.mxu0 0.0
    %7922 = vmatmul.mubr.f32.gmra.mrb[0].mxu0 %v7849
    %v7923 = vpop.f32.mrb[0].mxu0
    %v7924 = vadd.f32 0.0, %v7923
    %v7925 = vpop.f32.mrb[0].mxu0
    %7926 = vmatprep.mubr.f32.mxu0 0.0
    %7927 = vmatmul.mubr.f32.gmra.mrb[0].mxu0 %v7851
    %v7928 = vpop.f32.mrb[0].mxu0
    %v7929 = vadd.f32 0.0, %v7928
    %v7930 = vpop.f32.mrb[0].mxu0
    %7931 = vdwg.mxu0
    %7932 = vrot.lane.b32.xlu0 %v7449, 120
    %v7933 = vpop.permute.xlu0 %7932
    %7934 = vrot.lane.b32.xlu0 %v7454, 120
    %v7935 = vpop.permute.xlu0 %7934
    %7936 = vrot.lane.b32.xlu0 %v7554, 120
    %v7937 = vpop.permute.xlu0 %7936
    %7938 = vrot.lane.b32.xlu0 %v7559, 120
    %v7939 = vpop.permute.xlu0 %7938
    %v7940 = vsel %vm269, %v7933, 0
    %v7942 = vsel %vm269, %v7935, 0
    %v7944 = vsel %vm269, %v7937, 0
    %v7946 = vsel %vm269, %v7939, 0
    %7948 = vmatprep.subr.mxu0 0.0
    %7949 = vmatpush1.xpose.msra.mxu0 %v7944
    %7950 = vmatprep.subr.mxu0 0.0
    %7951 = vmatpush1.xpose.msra.mxu0 %v7946
    %7952 = vmatprep.subr.mxu0 0.0
    %7953 = vmatpush1.xpose.msra.mxu0 0.0
    %7954 = vmatprep.subr.mxu0 0.0
    %7955 = vmatpush1.xpose.msra.mxu0 0.0
    %7956 = vmatprep.subr.mxu0 0.0
    %7957 = vmatpush1.xpose.msra.mxu0 0.0
    %7958 = vmatprep.subr.mxu0 0.0
    %7959 = vmatpush1.xpose.msra.mxu0 0.0
    %7960 = vmatprep.subr.mxu0 0.0
    %7961 = vmatpush1.xpose.msra.mxu0 0.0
    %7962 = vmatprep.subr.mxu0 0.0
    %7963 = vmatpush1.xpose.msra.mxu0 0.0
    %7964 = vmatprep.subr.mxu0 0.0
    %7965 = vmatpush1.xpose.msra.mxu0 0.0
    %7966 = vmatprep.subr.mxu0 0.0
    %7967 = vmatpush1.xpose.msra.mxu0 0.0
    %7968 = vmatprep.subr.mxu0 0.0
    %7969 = vmatpush1.xpose.msra.mxu0 0.0
    %7970 = vmatprep.subr.mxu0 0.0
    %7971 = vmatpush1.xpose.msra.mxu0 0.0
    %7972 = vmatprep.subr.mxu0 0.0
    %7973 = vmatpush1.xpose.msra.mxu0 0.0
    %7974 = vmatprep.subr.mxu0 0.0
    %7975 = vmatpush1.xpose.msra.mxu0 0.0
    %7976 = vmatprep.subr.mxu0 0.0
    %7977 = vmatpush1.xpose.msra.mxu0 0.0
    %7978 = vmatprep.subr.mxu0 0.0
    %7979 = vmatpush1.xpose.msra.mxu0 0.0
    %7980 = vmatprep.subr.mxu0 0.0
    %7981 = vmatpush1.xpose.msra.mxu0 0.0
    %7982 = vmatprep.subr.mxu0 0.0
    %7983 = vmatpush1.xpose.msra.mxu0 0.0
    %7984 = vmatprep.subr.mxu0 0.0
    %7985 = vmatpush1.xpose.msra.mxu0 0.0
    %7986 = vmatprep.subr.mxu0 0.0
    %7987 = vmatpush1.xpose.msra.mxu0 0.0
    %7988 = vmatprep.subr.mxu0 0.0
    %7989 = vmatpush1.xpose.msra.mxu0 0.0
    %7990 = vmatprep.subr.mxu0 0.0
    %7991 = vmatpush1.xpose.msra.mxu0 0.0
    %7992 = vmatprep.subr.mxu0 0.0
    %7993 = vmatpush1.xpose.msra.mxu0 0.0
    %7994 = vmatprep.subr.mxu0 0.0
    %7995 = vmatpush1.xpose.msra.mxu0 0.0
    %7996 = vmatprep.subr.mxu0 0.0
    %7997 = vmatpush1.xpose.msra.mxu0 0.0
    %7998 = vmatprep.subr.mxu0 0.0
    %7999 = vmatpush1.xpose.msra.mxu0 0.0
    %8000 = vmatprep.subr.mxu0 0.0
    %8001 = vmatpush1.xpose.msra.mxu0 0.0
    %8002 = vmatprep.subr.mxu0 0.0
    %8003 = vmatpush1.xpose.msra.mxu0 0.0
    %8004 = vmatprep.subr.mxu0 0.0
    %8005 = vmatpush1.xpose.msra.mxu0 0.0
    %8006 = vmatprep.subr.mxu0 0.0
    %8007 = vmatpush1.xpose.msra.mxu0 0.0
    %8008 = vmatprep.subr.mxu0 0.0
    %8009 = vmatpush1.xpose.msra.mxu0 0.0
    %8010 = vmatprep.subr.mxu0 0.0
    %8011 = vmatpush1.xpose.msra.mxu0 0.0
    %8012 = vmatprep.mubr.f32.mxu0 0.0
    %8013 = vmatmul.mubr.f32.gmra.mrb[0].mxu0 %v7940
    %v8014 = vpop.f32.mrb[0].mxu0
    %v8015 = vadd.f32 0.0, %v8014
    %v8016 = vpop.f32.mrb[0].mxu0
    %8017 = vmatprep.mubr.f32.mxu0 0.0
    %8018 = vmatmul.mubr.f32.gmra.mrb[0].mxu0 %v7942
    %v8019 = vpop.f32.mrb[0].mxu0
    %v8020 = vadd.f32 0.0, %v8019
    %v8021 = vpop.f32.mrb[0].mxu0
    %8022 = vdwg.mxu0
    %8023 = vrot.lane.b32.xlu0 %v7439, 112
    %v8024 = vpop.permute.xlu0 %8023
    %8025 = vrot.lane.b32.xlu0 %v7444, 112
    %v8026 = vpop.permute.xlu0 %8025
    %8027 = vrot.lane.b32.xlu0 %v7544, 112
    %v8028 = vpop.permute.xlu0 %8027
    %8029 = vrot.lane.b32.xlu0 %v7549, 112
    %v8030 = vpop.permute.xlu0 %8029
    %v8031 = vsel %vm269, %v8024, 0
    %v8033 = vsel %vm269, %v8026, 0
    %v8035 = vsel %vm269, %v8028, 0
    %v8037 = vsel %vm269, %v8030, 0
    %8039 = vmatprep.subr.mxu0 0.0
    %8040 = vmatpush1.xpose.msra.mxu0 %v8035
    %8041 = vmatprep.subr.mxu0 0.0
    %8042 = vmatpush1.xpose.msra.mxu0 %v8037
    %8043 = vmatprep.subr.mxu0 0.0
    %8044 = vmatpush1.xpose.msra.mxu0 0.0
    %8045 = vmatprep.subr.mxu0 0.0
    %8046 = vmatpush1.xpose.msra.mxu0 0.0
    %8047 = vmatprep.subr.mxu0 0.0
    %8048 = vmatpush1.xpose.msra.mxu0 0.0
    %8049 = vmatprep.subr.mxu0 0.0
    %8050 = vmatpush1.xpose.msra.mxu0 0.0
    %8051 = vmatprep.subr.mxu0 0.0
    %8052 = vmatpush1.xpose.msra.mxu0 0.0
    %8053 = vmatprep.subr.mxu0 0.0
    %8054 = vmatpush1.xpose.msra.mxu0 0.0
    %8055 = vmatprep.subr.mxu0 0.0
    %8056 = vmatpush1.xpose.msra.mxu0 0.0
    %8057 = vmatprep.subr.mxu0 0.0
    %8058 = vmatpush1.xpose.msra.mxu0 0.0
    %8059 = vmatprep.subr.mxu0 0.0
    %8060 = vmatpush1.xpose.msra.mxu0 0.0
    %8061 = vmatprep.subr.mxu0 0.0
    %8062 = vmatpush1.xpose.msra.mxu0 0.0
    %8063 = vmatprep.subr.mxu0 0.0
    %8064 = vmatpush1.xpose.msra.mxu0 0.0
    %8065 = vmatprep.subr.mxu0 0.0
    %8066 = vmatpush1.xpose.msra.mxu0 0.0
    %8067 = vmatprep.subr.mxu0 0.0
    %8068 = vmatpush1.xpose.msra.mxu0 0.0
    %8069 = vmatprep.subr.mxu0 0.0
    %8070 = vmatpush1.xpose.msra.mxu0 0.0
    %8071 = vmatprep.subr.mxu0 0.0
    %8072 = vmatpush1.xpose.msra.mxu0 0.0
    %8073 = vmatprep.subr.mxu0 0.0
    %8074 = vmatpush1.xpose.msra.mxu0 0.0
    %8075 = vmatprep.subr.mxu0 0.0
    %8076 = vmatpush1.xpose.msra.mxu0 0.0
    %8077 = vmatprep.subr.mxu0 0.0
    %8078 = vmatpush1.xpose.msra.mxu0 0.0
    %8079 = vmatprep.subr.mxu0 0.0
    %8080 = vmatpush1.xpose.msra.mxu0 0.0
    %8081 = vmatprep.subr.mxu0 0.0
    %8082 = vmatpush1.xpose.msra.mxu0 0.0
    %8083 = vmatprep.subr.mxu0 0.0
    %8084 = vmatpush1.xpose.msra.mxu0 0.0
    %8085 = vmatprep.subr.mxu0 0.0
    %8086 = vmatpush1.xpose.msra.mxu0 0.0
    %8087 = vmatprep.subr.mxu0 0.0
    %8088 = vmatpush1.xpose.msra.mxu0 0.0
    %8089 = vmatprep.subr.mxu0 0.0
    %8090 = vmatpush1.xpose.msra.mxu0 0.0
    %8091 = vmatprep.subr.mxu0 0.0
    %8092 = vmatpush1.xpose.msra.mxu0 0.0
    %8093 = vmatprep.subr.mxu0 0.0
    %8094 = vmatpush1.xpose.msra.mxu0 0.0
    %8095 = vmatprep.subr.mxu0 0.0
    %8096 = vmatpush1.xpose.msra.mxu0 0.0
    %8097 = vmatprep.subr.mxu0 0.0
    %8098 = vmatpush1.xpose.msra.mxu0 0.0
    %8099 = vmatprep.subr.mxu0 0.0
    %8100 = vmatpush1.xpose.msra.mxu0 0.0
    %8101 = vmatprep.subr.mxu0 0.0
    %8102 = vmatpush1.xpose.msra.mxu0 0.0
    %8103 = vmatprep.mubr.f32.mxu0 0.0
    %8104 = vmatmul.mubr.f32.gmra.mrb[0].mxu0 %v8031
    %v8105 = vpop.f32.mrb[0].mxu0
    %v8106 = vadd.f32 0.0, %v8105
    %v8107 = vpop.f32.mrb[0].mxu0
    %8108 = vmatprep.mubr.f32.mxu0 0.0
    %8109 = vmatmul.mubr.f32.gmra.mrb[0].mxu0 %v8033
    %v8110 = vpop.f32.mrb[0].mxu0
    %v8111 = vadd.f32 0.0, %v8110
    %v8112 = vpop.f32.mrb[0].mxu0
    %8113 = vdwg.mxu0
    %8114 = vrot.lane.b32.xlu0 %v7449, 112
    %v8115 = vpop.permute.xlu0 %8114
    %8116 = vrot.lane.b32.xlu0 %v7454, 112
    %v8117 = vpop.permute.xlu0 %8116
    %8118 = vrot.lane.b32.xlu0 %v7554, 112
    %v8119 = vpop.permute.xlu0 %8118
    %8120 = vrot.lane.b32.xlu0 %v7559, 112
    %v8121 = vpop.permute.xlu0 %8120
    %v8122 = vsel %vm269, %v8115, 0
    %v8124 = vsel %vm269, %v8117, 0
    %v8126 = vsel %vm269, %v8119, 0
    %v8128 = vsel %vm269, %v8121, 0
    %8130 = vmatprep.subr.mxu0 0.0
    %8131 = vmatpush1.xpose.msra.mxu0 %v8126
    %8132 = vmatprep.subr.mxu0 0.0
    %8133 = vmatpush1.xpose.msra.mxu0 %v8128
    %8134 = vmatprep.subr.mxu0 0.0
    %8135 = vmatpush1.xpose.msra.mxu0 0.0
    %8136 = vmatprep.subr.mxu0 0.0
    %8137 = vmatpush1.xpose.msra.mxu0 0.0
    %8138 = vmatprep.subr.mxu0 0.0
    %8139 = vmatpush1.xpose.msra.mxu0 0.0
    %8140 = vmatprep.subr.mxu0 0.0
    %8141 = vmatpush1.xpose.msra.mxu0 0.0
    %8142 = vmatprep.subr.mxu0 0.0
    %8143 = vmatpush1.xpose.msra.mxu0 0.0
    %8144 = vmatprep.subr.mxu0 0.0
    %8145 = vmatpush1.xpose.msra.mxu0 0.0
    %8146 = vmatprep.subr.mxu0 0.0
    %8147 = vmatpush1.xpose.msra.mxu0 0.0
    %8148 = vmatprep.subr.mxu0 0.0
    %8149 = vmatpush1.xpose.msra.mxu0 0.0
    %8150 = vmatprep.subr.mxu0 0.0
    %8151 = vmatpush1.xpose.msra.mxu0 0.0
    %8152 = vmatprep.subr.mxu0 0.0
    %8153 = vmatpush1.xpose.msra.mxu0 0.0
    %8154 = vmatprep.subr.mxu0 0.0
    %8155 = vmatpush1.xpose.msra.mxu0 0.0
    %8156 = vmatprep.subr.mxu0 0.0
    %8157 = vmatpush1.xpose.msra.mxu0 0.0
    %8158 = vmatprep.subr.mxu0 0.0
    %8159 = vmatpush1.xpose.msra.mxu0 0.0
    %8160 = vmatprep.subr.mxu0 0.0
    %8161 = vmatpush1.xpose.msra.mxu0 0.0
    %8162 = vmatprep.subr.mxu0 0.0
    %8163 = vmatpush1.xpose.msra.mxu0 0.0
    %8164 = vmatprep.subr.mxu0 0.0
    %8165 = vmatpush1.xpose.msra.mxu0 0.0
    %8166 = vmatprep.subr.mxu0 0.0
    %8167 = vmatpush1.xpose.msra.mxu0 0.0
    %8168 = vmatprep.subr.mxu0 0.0
    %8169 = vmatpush1.xpose.msra.mxu0 0.0
    %8170 = vmatprep.subr.mxu0 0.0
    %8171 = vmatpush1.xpose.msra.mxu0 0.0
    %8172 = vmatprep.subr.mxu0 0.0
    %8173 = vmatpush1.xpose.msra.mxu0 0.0
    %8174 = vmatprep.subr.mxu0 0.0
    %8175 = vmatpush1.xpose.msra.mxu0 0.0
    %8176 = vmatprep.subr.mxu0 0.0
    %8177 = vmatpush1.xpose.msra.mxu0 0.0
    %8178 = vmatprep.subr.mxu0 0.0
    %8179 = vmatpush1.xpose.msra.mxu0 0.0
    %8180 = vmatprep.subr.mxu0 0.0
    %8181 = vmatpush1.xpose.msra.mxu0 0.0
    %8182 = vmatprep.subr.mxu0 0.0
    %8183 = vmatpush1.xpose.msra.mxu0 0.0
    %8184 = vmatprep.subr.mxu0 0.0
    %8185 = vmatpush1.xpose.msra.mxu0 0.0
    %8186 = vmatprep.subr.mxu0 0.0
    %8187 = vmatpush1.xpose.msra.mxu0 0.0
    %8188 = vmatprep.subr.mxu0 0.0
    %8189 = vmatpush1.xpose.msra.mxu0 0.0
    %8190 = vmatprep.subr.mxu0 0.0
    %8191 = vmatpush1.xpose.msra.mxu0 0.0
    %8192 = vmatprep.subr.mxu0 0.0
    %8193 = vmatpush1.xpose.msra.mxu0 0.0
    %8194 = vmatprep.mubr.f32.mxu0 0.0
    %8195 = vmatmul.mubr.f32.gmra.mrb[0].mxu0 %v8122
    %v8196 = vpop.f32.mrb[0].mxu0
    %v8197 = vadd.f32 0.0, %v8196
    %v8198 = vpop.f32.mrb[0].mxu0
    %8199 = vmatprep.mubr.f32.mxu0 0.0
    %8200 = vmatmul.mubr.f32.gmra.mrb[0].mxu0 %v8124
    %v8201 = vpop.f32.mrb[0].mxu0
    %v8202 = vadd.f32 0.0, %v8201
    %v8203 = vpop.f32.mrb[0].mxu0
    %8204 = vdwg.mxu0
    %8205 = vrot.lane.b32.xlu0 %v7439, 104
    %v8206 = vpop.permute.xlu0 %8205
    %8207 = vrot.lane.b32.xlu0 %v7444, 104
    %v8208 = vpop.permute.xlu0 %8207
    %8209 = vrot.lane.b32.xlu0 %v7544, 104
    %v8210 = vpop.permute.xlu0 %8209
    %8211 = vrot.lane.b32.xlu0 %v7549, 104
    %v8212 = vpop.permute.xlu0 %8211
    %v8213 = vsel %vm269, %v8206, 0
    %v8215 = vsel %vm269, %v8208, 0
    %v8217 = vsel %vm269, %v8210, 0
    %v8219 = vsel %vm269, %v8212, 0
    %8221 = vmatprep.subr.mxu0 0.0
    %8222 = vmatpush1.xpose.msra.mxu0 %v8217
    %8223 = vmatprep.subr.mxu0 0.0
    %8224 = vmatpush1.xpose.msra.mxu0 %v8219
    %8225 = vmatprep.subr.mxu0 0.0
    %8226 = vmatpush1.xpose.msra.mxu0 0.0
    %8227 = vmatprep.subr.mxu0 0.0
    %8228 = vmatpush1.xpose.msra.mxu0 0.0
    %8229 = vmatprep.subr.mxu0 0.0
    %8230 = vmatpush1.xpose.msra.mxu0 0.0
    %8231 = vmatprep.subr.mxu0 0.0
    %8232 = vmatpush1.xpose.msra.mxu0 0.0
    %8233 = vmatprep.subr.mxu0 0.0
    %8234 = vmatpush1.xpose.msra.mxu0 0.0
    %8235 = vmatprep.subr.mxu0 0.0
    %8236 = vmatpush1.xpose.msra.mxu0 0.0
    %8237 = vmatprep.subr.mxu0 0.0
    %8238 = vmatpush1.xpose.msra.mxu0 0.0
    %8239 = vmatprep.subr.mxu0 0.0
    %8240 = vmatpush1.xpose.msra.mxu0 0.0
    %8241 = vmatprep.subr.mxu0 0.0
    %8242 = vmatpush1.xpose.msra.mxu0 0.0
    %8243 = vmatprep.subr.mxu0 0.0
    %8244 = vmatpush1.xpose.msra.mxu0 0.0
    %8245 = vmatprep.subr.mxu0 0.0
    %8246 = vmatpush1.xpose.msra.mxu0 0.0
    %8247 = vmatprep.subr.mxu0 0.0
    %8248 = vmatpush1.xpose.msra.mxu0 0.0
    %8249 = vmatprep.subr.mxu0 0.0
    %8250 = vmatpush1.xpose.msra.mxu0 0.0
    %8251 = vmatprep.subr.mxu0 0.0
    %8252 = vmatpush1.xpose.msra.mxu0 0.0
    %8253 = vmatprep.subr.mxu0 0.0
    %8254 = vmatpush1.xpose.msra.mxu0 0.0
    %8255 = vmatprep.subr.mxu0 0.0
    %8256 = vmatpush1.xpose.msra.mxu0 0.0
    %8257 = vmatprep.subr.mxu0 0.0
    %8258 = vmatpush1.xpose.msra.mxu0 0.0
    %8259 = vmatprep.subr.mxu0 0.0
    %8260 = vmatpush1.xpose.msra.mxu0 0.0
    %8261 = vmatprep.subr.mxu0 0.0
    %8262 = vmatpush1.xpose.msra.mxu0 0.0
    %8263 = vmatprep.subr.mxu0 0.0
    %8264 = vmatpush1.xpose.msra.mxu0 0.0
    %8265 = vmatprep.subr.mxu0 0.0
    %8266 = vmatpush1.xpose.msra.mxu0 0.0
    %8267 = vmatprep.subr.mxu0 0.0
    %8268 = vmatpush1.xpose.msra.mxu0 0.0
    %8269 = vmatprep.subr.mxu0 0.0
    %8270 = vmatpush1.xpose.msra.mxu0 0.0
    %8271 = vmatprep.subr.mxu0 0.0
    %8272 = vmatpush1.xpose.msra.mxu0 0.0
    %8273 = vmatprep.subr.mxu0 0.0
    %8274 = vmatpush1.xpose.msra.mxu0 0.0
    %8275 = vmatprep.subr.mxu0 0.0
    %8276 = vmatpush1.xpose.msra.mxu0 0.0
    %8277 = vmatprep.subr.mxu0 0.0
    %8278 = vmatpush1.xpose.msra.mxu0 0.0
    %8279 = vmatprep.subr.mxu0 0.0
    %8280 = vmatpush1.xpose.msra.mxu0 0.0
    %8281 = vmatprep.subr.mxu0 0.0
    %8282 = vmatpush1.xpose.msra.mxu0 0.0
    %8283 = vmatprep.subr.mxu0 0.0
    %8284 = vmatpush1.xpose.msra.mxu0 0.0
    %8285 = vmatprep.mubr.f32.mxu0 0.0
    %8286 = vmatmul.mubr.f32.gmra.mrb[0].mxu0 %v8213
    %v8287 = vpop.f32.mrb[0].mxu0
    %v8288 = vadd.f32 0.0, %v8287
    %v8289 = vpop.f32.mrb[0].mxu0
    %8290 = vmatprep.mubr.f32.mxu0 0.0
    %8291 = vmatmul.mubr.f32.gmra.mrb[0].mxu0 %v8215
    %v8292 = vpop.f32.mrb[0].mxu0
    %v8293 = vadd.f32 0.0, %v8292
    %v8294 = vpop.f32.mrb[0].mxu0
    %8295 = vdwg.mxu0
    %8296 = vrot.lane.b32.xlu0 %v7449, 104
    %v8297 = vpop.permute.xlu0 %8296
    %8298 = vrot.lane.b32.xlu0 %v7454, 104
    %v8299 = vpop.permute.xlu0 %8298
    %8300 = vrot.lane.b32.xlu0 %v7554, 104
    %v8301 = vpop.permute.xlu0 %8300
    %8302 = vrot.lane.b32.xlu0 %v7559, 104
    %v8303 = vpop.permute.xlu0 %8302
    %v8304 = vsel %vm269, %v8297, 0
    %v8306 = vsel %vm269, %v8299, 0
    %v8308 = vsel %vm269, %v8301, 0
    %v8310 = vsel %vm269, %v8303, 0
    %8312 = vmatprep.subr.mxu0 0.0
    %8313 = vmatpush1.xpose.msra.mxu0 %v8308
    %8314 = vmatprep.subr.mxu0 0.0
    %8315 = vmatpush1.xpose.msra.mxu0 %v8310
    %8316 = vmatprep.subr.mxu0 0.0
    %8317 = vmatpush1.xpose.msra.mxu0 0.0
    %8318 = vmatprep.subr.mxu0 0.0
    %8319 = vmatpush1.xpose.msra.mxu0 0.0
    %8320 = vmatprep.subr.mxu0 0.0
    %8321 = vmatpush1.xpose.msra.mxu0 0.0
    %8322 = vmatprep.subr.mxu0 0.0
    %8323 = vmatpush1.xpose.msra.mxu0 0.0
    %8324 = vmatprep.subr.mxu0 0.0
    %8325 = vmatpush1.xpose.msra.mxu0 0.0
    %8326 = vmatprep.subr.mxu0 0.0
    %8327 = vmatpush1.xpose.msra.mxu0 0.0
    %8328 = vmatprep.subr.mxu0 0.0
    %8329 = vmatpush1.xpose.msra.mxu0 0.0
    %8330 = vmatprep.subr.mxu0 0.0
    %8331 = vmatpush1.xpose.msra.mxu0 0.0
    %8332 = vmatprep.subr.mxu0 0.0
    %8333 = vmatpush1.xpose.msra.mxu0 0.0
    %8334 = vmatprep.subr.mxu0 0.0
    %8335 = vmatpush1.xpose.msra.mxu0 0.0
    %8336 = vmatprep.subr.mxu0 0.0
    %8337 = vmatpush1.xpose.msra.mxu0 0.0
    %8338 = vmatprep.subr.mxu0 0.0
    %8339 = vmatpush1.xpose.msra.mxu0 0.0
    %8340 = vmatprep.subr.mxu0 0.0
    %8341 = vmatpush1.xpose.msra.mxu0 0.0
    %8342 = vmatprep.subr.mxu0 0.0
    %8343 = vmatpush1.xpose.msra.mxu0 0.0
    %8344 = vmatprep.subr.mxu0 0.0
    %8345 = vmatpush1.xpose.msra.mxu0 0.0
    %8346 = vmatprep.subr.mxu0 0.0
    %8347 = vmatpush1.xpose.msra.mxu0 0.0
    %8348 = vmatprep.subr.mxu0 0.0
    %8349 = vmatpush1.xpose.msra.mxu0 0.0
    %8350 = vmatprep.subr.mxu0 0.0
    %8351 = vmatpush1.xpose.msra.mxu0 0.0
    %8352 = vmatprep.subr.mxu0 0.0
    %8353 = vmatpush1.xpose.msra.mxu0 0.0
    %8354 = vmatprep.subr.mxu0 0.0
    %8355 = vmatpush1.xpose.msra.mxu0 0.0
    %8356 = vmatprep.subr.mxu0 0.0
    %8357 = vmatpush1.xpose.msra.mxu0 0.0
    %8358 = vmatprep.subr.mxu0 0.0
    %8359 = vmatpush1.xpose.msra.mxu0 0.0
    %8360 = vmatprep.subr.mxu0 0.0
    %8361 = vmatpush1.xpose.msra.mxu0 0.0
    %8362 = vmatprep.subr.mxu0 0.0
    %8363 = vmatpush1.xpose.msra.mxu0 0.0
    %8364 = vmatprep.subr.mxu0 0.0
    %8365 = vmatpush1.xpose.msra.mxu0 0.0
    %8366 = vmatprep.subr.mxu0 0.0
    %8367 = vmatpush1.xpose.msra.mxu0 0.0
    %8368 = vmatprep.subr.mxu0 0.0
    %8369 = vmatpush1.xpose.msra.mxu0 0.0
    %8370 = vmatprep.subr.mxu0 0.0
    %8371 = vmatpush1.xpose.msra.mxu0 0.0
    %8372 = vmatprep.subr.mxu0 0.0
    %8373 = vmatpush1.xpose.msra.mxu0 0.0
    %8374 = vmatprep.subr.mxu0 0.0
    %8375 = vmatpush1.xpose.msra.mxu0 0.0
    %8376 = vmatprep.mubr.f32.mxu0 0.0
    %8377 = vmatmul.mubr.f32.gmra.mrb[0].mxu0 %v8304
    %v8378 = vpop.f32.mrb[0].mxu0
    %v8379 = vadd.f32 0.0, %v8378
    %v8380 = vpop.f32.mrb[0].mxu0
    %8381 = vmatprep.mubr.f32.mxu0 0.0
    %8382 = vmatmul.mubr.f32.gmra.mrb[0].mxu0 %v8306
    %v8383 = vpop.f32.mrb[0].mxu0
    %v8384 = vadd.f32 0.0, %v8383
    %v8385 = vpop.f32.mrb[0].mxu0
    %8386 = vdwg.mxu0
    %v8387 = vsel %vm988, %v7746, -inf
    %8388 = vmax.xlane.f32.xlu0 %v8387
    %v8389 = vpop.xlane.xlu0 %8388
    %v8390 = vsel %vm988, %v7751, -inf
    %8391 = vmax.xlane.f32.xlu0 %v8390
    %v8392 = vpop.xlane.xlu0 %8391
    %v8393 = vsel %vm988, %v7924, -inf
    %8394 = vmax.xlane.f32.xlu0 %v8393
    %v8395 = vpop.xlane.xlu0 %8394
    %v8396 = vsel %vm988, %v7929, -inf
    %8397 = vmax.xlane.f32.xlu0 %v8396
    %v8398 = vpop.xlane.xlu0 %8397
    %v8399 = vsel %vm988, %v8106, -inf
    %8400 = vmax.xlane.f32.xlu0 %v8399
    %v8401 = vpop.xlane.xlu0 %8400
    %v8402 = vsel %vm988, %v8111, -inf
    %8403 = vmax.xlane.f32.xlu0 %v8402
    %v8404 = vpop.xlane.xlu0 %8403
    %v8405 = vsel %vm988, %v8288, -inf
    %8406 = vmax.xlane.f32.xlu0 %v8405
    %v8407 = vpop.xlane.xlu0 %8406
    %v8408 = vsel %vm988, %v8293, -inf
    %8409 = vmax.xlane.f32.xlu0 %v8408
    %v8410 = vpop.xlane.xlu0 %8409
    %v8411 = vsel %vm988, %v7833, -inf
    %8412 = vmax.xlane.f32.xlu0 %v8411
    %v8413 = vpop.xlane.xlu0 %8412
    %v8414 = vsel %vm988, %v7838, -inf
    %8415 = vmax.xlane.f32.xlu0 %v8414
    %v8416 = vpop.xlane.xlu0 %8415
    %v8417 = vsel %vm988, %v8015, -inf
    %8418 = vmax.xlane.f32.xlu0 %v8417
    %v8419 = vpop.xlane.xlu0 %8418
    %v8420 = vsel %vm988, %v8020, -inf
    %8421 = vmax.xlane.f32.xlu0 %v8420
    %v8422 = vpop.xlane.xlu0 %8421
    %v8423 = vsel %vm988, %v8197, -inf
    %8424 = vmax.xlane.f32.xlu0 %v8423
    %v8425 = vpop.xlane.xlu0 %8424
    %v8426 = vsel %vm988, %v8202, -inf
    %8427 = vmax.xlane.f32.xlu0 %v8426
    %v8428 = vpop.xlane.xlu0 %8427
    %v8429 = vsel %vm988, %v8379, -inf
    %8430 = vmax.xlane.f32.xlu0 %v8429
    %v8431 = vpop.xlane.xlu0 %8430
    %v8432 = vsel %vm988, %v8384, -inf
    %8433 = vmax.xlane.f32.xlu0 %v8432
    %v8434 = vpop.xlane.xlu0 %8433
    %v8435 = vsub.f32 %v7746, %v8389
    %v8436 = vsub.f32 %v7751, %v8392
    %v8437 = vsub.f32 %v7924, %v8395
    %v8438 = vsub.f32 %v7929, %v8398
    %v8439 = vsub.f32 %v8106, %v8401
    %v8440 = vsub.f32 %v8111, %v8404
    %v8441 = vsub.f32 %v8288, %v8407
    %v8442 = vsub.f32 %v8293, %v8410
    %v8443 = vsub.f32 %v7833, %v8413
    %v8444 = vsub.f32 %v7838, %v8416
    %v8445 = vsub.f32 %v8015, %v8419
    %v8446 = vsub.f32 %v8020, %v8422
    %v8447 = vsub.f32 %v8197, %v8425
    %v8448 = vsub.f32 %v8202, %v8428
    %v8449 = vsub.f32 %v8379, %v8431
    %v8450 = vsub.f32 %v8384, %v8434
    %v8451 = vmul.f32 %v8435, 1.442695
    %v8452 = vpow.pop %v8451
    %v8453 = vmul.f32 %v8436, 1.442695
    %v8454 = vpow.pop %v8453
    %v8455 = vmul.f32 %v8437, 1.442695
    %v8456 = vpow.pop %v8455
    %v8457 = vmul.f32 %v8438, 1.442695
    %v8458 = vpow.pop %v8457
    %v8459 = vmul.f32 %v8439, 1.442695
    %v8460 = vpow.pop %v8459
    %v8461 = vmul.f32 %v8440, 1.442695
    %v8462 = vpow.pop %v8461
    %v8463 = vmul.f32 %v8441, 1.442695
    %v8464 = vpow.pop %v8463
    %v8465 = vmul.f32 %v8442, 1.442695
    %v8466 = vpow.pop %v8465
    %v8467 = vmul.f32 %v8443, 1.442695
    %v8468 = vpow.pop %v8467
    %v8469 = vmul.f32 %v8444, 1.442695
    %v8470 = vpow.pop %v8469
    %v8471 = vmul.f32 %v8445, 1.442695
    %v8472 = vpow.pop %v8471
    %v8473 = vmul.f32 %v8446, 1.442695
    %v8474 = vpow.pop %v8473
    %v8475 = vmul.f32 %v8447, 1.442695
    %v8476 = vpow.pop %v8475
    %v8477 = vmul.f32 %v8448, 1.442695
    %v8478 = vpow.pop %v8477
    %v8479 = vmul.f32 %v8449, 1.442695
    %v8480 = vpow.pop %v8479
    %v8481 = vmul.f32 %v8450, 1.442695
    %v8482 = vpow.pop %v8481
    %v8483 = vsel %vm988, %v8452, 0.0
    %8484 = vadd.xlane.f32.xlu0 %v8483
    %v8485 = vpop.xlane.xlu0 %8484
    %v8486 = vsel %vm988, %v8454, 0.0
    %8487 = vadd.xlane.f32.xlu0 %v8486
    %v8488 = vpop.xlane.xlu0 %8487
    %v8489 = vsel %vm988, %v8456, 0.0
    %8490 = vadd.xlane.f32.xlu0 %v8489
    %v8491 = vpop.xlane.xlu0 %8490
    %v8492 = vsel %vm988, %v8458, 0.0
    %8493 = vadd.xlane.f32.xlu0 %v8492
    %v8494 = vpop.xlane.xlu0 %8493
    %v8495 = vsel %vm988, %v8460, 0.0
    %8496 = vadd.xlane.f32.xlu0 %v8495
    %v8497 = vpop.xlane.xlu0 %8496
    %v8498 = vsel %vm988, %v8462, 0.0
    %8499 = vadd.xlane.f32.xlu0 %v8498
    %v8500 = vpop.xlane.xlu0 %8499
    %v8501 = vsel %vm988, %v8464, 0.0
    %8502 = vadd.xlane.f32.xlu0 %v8501
    %v8503 = vpop.xlane.xlu0 %8502
    %v8504 = vsel %vm988, %v8466, 0.0
    %8505 = vadd.xlane.f32.xlu0 %v8504
    %v8506 = vpop.xlane.xlu0 %8505
    %v8507 = vsel %vm988, %v8468, 0.0
    %8508 = vadd.xlane.f32.xlu0 %v8507
    %v8509 = vpop.xlane.xlu0 %8508
    %v8510 = vsel %vm988, %v8470, 0.0
    %8511 = vadd.xlane.f32.xlu0 %v8510
    %v8512 = vpop.xlane.xlu0 %8511
    %v8513 = vsel %vm988, %v8472, 0.0
    %8514 = vadd.xlane.f32.xlu0 %v8513
    %v8515 = vpop.xlane.xlu0 %8514
    %v8516 = vsel %vm988, %v8474, 0.0
    %8517 = vadd.xlane.f32.xlu0 %v8516
    %v8518 = vpop.xlane.xlu0 %8517
    %v8519 = vsel %vm988, %v8476, 0.0
    %8520 = vadd.xlane.f32.xlu0 %v8519
    %v8521 = vpop.xlane.xlu0 %8520
    %v8522 = vsel %vm988, %v8478, 0.0
    %8523 = vadd.xlane.f32.xlu0 %v8522
    %v8524 = vpop.xlane.xlu0 %8523
    %v8525 = vsel %vm988, %v8480, 0.0
    %8526 = vadd.xlane.f32.xlu0 %v8525
    %v8527 = vpop.xlane.xlu0 %8526
    %v8528 = vsel %vm988, %v8482, 0.0
    %8529 = vadd.xlane.f32.xlu0 %v8528
    %v8530 = vpop.xlane.xlu0 %8529
    %v8531 = vrcp.pop %v8485
    %v8532 = vrcp.pop %v8488
    %v8533 = vrcp.pop %v8491
    %v8534 = vrcp.pop %v8494
    %v8535 = vrcp.pop %v8497
    %v8536 = vrcp.pop %v8500
    %v8537 = vrcp.pop %v8503
    %v8538 = vrcp.pop %v8506
    %v8539 = vrcp.pop %v8509
    %v8540 = vrcp.pop %v8512
    %v8541 = vrcp.pop %v8515
    %v8542 = vrcp.pop %v8518
    %v8543 = vrcp.pop %v8521
    %v8544 = vrcp.pop %v8524
    %v8545 = vrcp.pop %v8527
    %v8546 = vrcp.pop %v8530
    %v8547 = vmul.f32 %v8452, %v8531
    %v8548 = vmul.f32 %v8454, %v8532
    %v8549 = vmul.f32 %v8456, %v8533
    %v8550 = vmul.f32 %v8458, %v8534
    %v8551 = vmul.f32 %v8460, %v8535
    %v8552 = vmul.f32 %v8462, %v8536
    %v8553 = vmul.f32 %v8464, %v8537
    %v8554 = vmul.f32 %v8466, %v8538
    %v8555 = vmul.f32 %v8468, %v8539
    %v8556 = vmul.f32 %v8470, %v8540
    %v8557 = vmul.f32 %v8472, %v8541
    %v8558 = vmul.f32 %v8474, %v8542
    %v8559 = vmul.f32 %v8476, %v8543
    %v8560 = vmul.f32 %v8478, %v8544
    %v8561 = vmul.f32 %v8480, %v8545
    %v8562 = vmul.f32 %v8482, %v8546
    %v8564 = vsel %vm988, %v8547, 0
    %v8567 = vsel %vm988, %v8548, 0
    %8569 = vmatprep.subr.mxu0 0.0
    %8570 = vmatpush1.msra.mxu0 %v7644
    %8571 = vmatprep.subr.mxu0 0.0
    %8572 = vmatpush1.msra.mxu0 %v7649
    %8573 = vmatprep.subr.mxu0 0.0
    %8574 = vmatpush1.msra.mxu0 0.0
    %8575 = vmatprep.subr.mxu0 0.0
    %8576 = vmatpush1.msra.mxu0 0.0
    %8577 = vmatprep.subr.mxu0 0.0
    %8578 = vmatpush1.msra.mxu0 0.0
    %8579 = vmatprep.subr.mxu0 0.0
    %8580 = vmatpush1.msra.mxu0 0.0
    %8581 = vmatprep.subr.mxu0 0.0
    %8582 = vmatpush1.msra.mxu0 0.0
    %8583 = vmatprep.subr.mxu0 0.0
    %8584 = vmatpush1.msra.mxu0 0.0
    %8585 = vmatprep.subr.mxu0 0.0
    %8586 = vmatpush1.msra.mxu0 0.0
    %8587 = vmatprep.subr.mxu0 0.0
    %8588 = vmatpush1.msra.mxu0 0.0
    %8589 = vmatprep.subr.mxu0 0.0
    %8590 = vmatpush1.msra.mxu0 0.0
    %8591 = vmatprep.subr.mxu0 0.0
    %8592 = vmatpush1.msra.mxu0 0.0
    %8593 = vmatprep.subr.mxu0 0.0
    %8594 = vmatpush1.msra.mxu0 0.0
    %8595 = vmatprep.subr.mxu0 0.0
    %8596 = vmatpush1.msra.mxu0 0.0
    %8597 = vmatprep.subr.mxu0 0.0
    %8598 = vmatpush1.msra.mxu0 0.0
    %8599 = vmatprep.subr.mxu0 0.0
    %8600 = vmatpush1.msra.mxu0 0.0
    %8601 = vmatprep.subr.mxu0 0.0
    %8602 = vmatpush1.msra.mxu0 0.0
    %8603 = vmatprep.subr.mxu0 0.0
    %8604 = vmatpush1.msra.mxu0 0.0
    %8605 = vmatprep.subr.mxu0 0.0
    %8606 = vmatpush1.msra.mxu0 0.0
    %8607 = vmatprep.subr.mxu0 0.0
    %8608 = vmatpush1.msra.mxu0 0.0
    %8609 = vmatprep.subr.mxu0 0.0
    %8610 = vmatpush1.msra.mxu0 0.0
    %8611 = vmatprep.subr.mxu0 0.0
    %8612 = vmatpush1.msra.mxu0 0.0
    %8613 = vmatprep.subr.mxu0 0.0
    %8614 = vmatpush1.msra.mxu0 0.0
    %8615 = vmatprep.subr.mxu0 0.0
    %8616 = vmatpush1.msra.mxu0 0.0
    %8617 = vmatprep.subr.mxu0 0.0
    %8618 = vmatpush1.msra.mxu0 0.0
    %8619 = vmatprep.subr.mxu0 0.0
    %8620 = vmatpush1.msra.mxu0 0.0
    %8621 = vmatprep.subr.mxu0 0.0
    %8622 = vmatpush1.msra.mxu0 0.0
    %8623 = vmatprep.subr.mxu0 0.0
    %8624 = vmatpush1.msra.mxu0 0.0
    %8625 = vmatprep.subr.mxu0 0.0
    %8626 = vmatpush1.msra.mxu0 0.0
    %8627 = vmatprep.subr.mxu0 0.0
    %8628 = vmatpush1.msra.mxu0 0.0
    %8629 = vmatprep.subr.mxu0 0.0
    %8630 = vmatpush1.msra.mxu0 0.0
    %8631 = vmatprep.subr.mxu0 0.0
    %8632 = vmatpush1.msra.mxu0 0.0
    %8633 = vmatprep.mubr.f32.mxu0 0.0
    %8634 = vmatmul.mubr.f32.gmra.mrb[0].mxu0 %v8564
    %v8635 = vpop.f32.mrb[0].mxu0
    %v8636 = vadd.f32 0.0, %v8635
    %v8637 = vpop.f32.mrb[0].mxu0
    %8638 = vmatprep.mubr.f32.mxu0 0.0
    %8639 = vmatmul.mubr.f32.gmra.mrb[0].mxu0 %v8567
    %v8640 = vpop.f32.mrb[0].mxu0
    %v8641 = vadd.f32 0.0, %v8640
    %v8642 = vpop.f32.mrb[0].mxu0
    %8643 = vdwg.mxu0
    %v8645 = vsel %vm988, %v8555, 0
    %v8648 = vsel %vm988, %v8556, 0
    %8650 = vmatprep.subr.mxu0 0.0
    %8651 = vmatpush1.msra.mxu0 %v7654
    %8652 = vmatprep.subr.mxu0 0.0
    %8653 = vmatpush1.msra.mxu0 %v7659
    %8654 = vmatprep.subr.mxu0 0.0
    %8655 = vmatpush1.msra.mxu0 0.0
    %8656 = vmatprep.subr.mxu0 0.0
    %8657 = vmatpush1.msra.mxu0 0.0
    %8658 = vmatprep.subr.mxu0 0.0
    %8659 = vmatpush1.msra.mxu0 0.0
    %8660 = vmatprep.subr.mxu0 0.0
    %8661 = vmatpush1.msra.mxu0 0.0
    %8662 = vmatprep.subr.mxu0 0.0
    %8663 = vmatpush1.msra.mxu0 0.0
    %8664 = vmatprep.subr.mxu0 0.0
    %8665 = vmatpush1.msra.mxu0 0.0
    %8666 = vmatprep.subr.mxu0 0.0
    %8667 = vmatpush1.msra.mxu0 0.0
    %8668 = vmatprep.subr.mxu0 0.0
    %8669 = vmatpush1.msra.mxu0 0.0
    %8670 = vmatprep.subr.mxu0 0.0
    %8671 = vmatpush1.msra.mxu0 0.0
    %8672 = vmatprep.subr.mxu0 0.0
    %8673 = vmatpush1.msra.mxu0 0.0
    %8674 = vmatprep.subr.mxu0 0.0
    %8675 = vmatpush1.msra.mxu0 0.0
    %8676 = vmatprep.subr.mxu0 0.0
    %8677 = vmatpush1.msra.mxu0 0.0
    %8678 = vmatprep.subr.mxu0 0.0
    %8679 = vmatpush1.msra.mxu0 0.0
    %8680 = vmatprep.subr.mxu0 0.0
    %8681 = vmatpush1.msra.mxu0 0.0
    %8682 = vmatprep.subr.mxu0 0.0
    %8683 = vmatpush1.msra.mxu0 0.0
    %8684 = vmatprep.subr.mxu0 0.0
    %8685 = vmatpush1.msra.mxu0 0.0
    %8686 = vmatprep.subr.mxu0 0.0
    %8687 = vmatpush1.msra.mxu0 0.0
    %8688 = vmatprep.subr.mxu0 0.0
    %8689 = vmatpush1.msra.mxu0 0.0
    %8690 = vmatprep.subr.mxu0 0.0
    %8691 = vmatpush1.msra.mxu0 0.0
    %8692 = vmatprep.subr.mxu0 0.0
    %8693 = vmatpush1.msra.mxu0 0.0
    %8694 = vmatprep.subr.mxu0 0.0
    %8695 = vmatpush1.msra.mxu0 0.0
    %8696 = vmatprep.subr.mxu0 0.0
    %8697 = vmatpush1.msra.mxu0 0.0
    %8698 = vmatprep.subr.mxu0 0.0
    %8699 = vmatpush1.msra.mxu0 0.0
    %8700 = vmatprep.subr.mxu0 0.0
    %8701 = vmatpush1.msra.mxu0 0.0
    %8702 = vmatprep.subr.mxu0 0.0
    %8703 = vmatpush1.msra.mxu0 0.0
    %8704 = vmatprep.subr.mxu0 0.0
    %8705 = vmatpush1.msra.mxu0 0.0
    %8706 = vmatprep.subr.mxu0 0.0
    %8707 = vmatpush1.msra.mxu0 0.0
    %8708 = vmatprep.subr.mxu0 0.0
    %8709 = vmatpush1.msra.mxu0 0.0
    %8710 = vmatprep.subr.mxu0 0.0
    %8711 = vmatpush1.msra.mxu0 0.0
    %8712 = vmatprep.subr.mxu0 0.0
    %8713 = vmatpush1.msra.mxu0 0.0
    %8714 = vmatprep.mubr.f32.mxu0 0.0
    %8715 = vmatmul.mubr.f32.gmra.mrb[0].mxu0 %v8645
    %v8716 = vpop.f32.mrb[0].mxu0
    %v8717 = vadd.f32 0.0, %v8716
    %v8718 = vpop.f32.mrb[0].mxu0
    %8719 = vmatprep.mubr.f32.mxu0 0.0
    %8720 = vmatmul.mubr.f32.gmra.mrb[0].mxu0 %v8648
    %v8721 = vpop.f32.mrb[0].mxu0
    %v8722 = vadd.f32 0.0, %v8721
    %v8723 = vpop.f32.mrb[0].mxu0
    %8724 = vdwg.mxu0
    %v8726 = vsel %vm269, %v8636, 0
    %v8729 = vsel %vm269, %v8641, 0
    %v8732 = vsel %vm269, %v8717, 0
    %v8735 = vsel %vm269, %v8722, 0
    %8737 = vmatprep.subr.mxu0 0.0
    %8738 = vmatpush1.msra.mxu0 %v7662
    %8739 = vmatprep.subr.mxu0 0.0
    %8740 = vmatpush1.msra.mxu0 0.0
    %8741 = vmatprep.subr.mxu0 0.0
    %8742 = vmatpush1.msra.mxu0 0.0
    %8743 = vmatprep.subr.mxu0 0.0
    %8744 = vmatpush1.msra.mxu0 0.0
    %8745 = vmatprep.subr.mxu0 0.0
    %8746 = vmatpush1.msra.mxu0 0.0
    %8747 = vmatprep.subr.mxu0 0.0
    %8748 = vmatpush1.msra.mxu0 0.0
    %8749 = vmatprep.subr.mxu0 0.0
    %8750 = vmatpush1.msra.mxu0 0.0
    %8751 = vmatprep.subr.mxu0 0.0
    %8752 = vmatpush1.msra.mxu0 0.0
    %8753 = vmatprep.subr.mxu0 0.0
    %8754 = vmatpush1.msra.mxu0 0.0
    %8755 = vmatprep.subr.mxu0 0.0
    %8756 = vmatpush1.msra.mxu0 0.0
    %8757 = vmatprep.subr.mxu0 0.0
    %8758 = vmatpush1.msra.mxu0 0.0
    %8759 = vmatprep.subr.mxu0 0.0
    %8760 = vmatpush1.msra.mxu0 0.0
    %8761 = vmatprep.subr.mxu0 0.0
    %8762 = vmatpush1.msra.mxu0 0.0
    %8763 = vmatprep.subr.mxu0 0.0
    %8764 = vmatpush1.msra.mxu0 0.0
    %8765 = vmatprep.subr.mxu0 0.0
    %8766 = vmatpush1.msra.mxu0 0.0
    %8767 = vmatprep.subr.mxu0 0.0
    %8768 = vmatpush1.msra.mxu0 0.0
    %8769 = vmatprep.subr.mxu0 0.0
    %8770 = vmatpush1.msra.mxu0 0.0
    %8771 = vmatprep.subr.mxu0 0.0
    %8772 = vmatpush1.msra.mxu0 0.0
    %8773 = vmatprep.subr.mxu0 0.0
    %8774 = vmatpush1.msra.mxu0 0.0
    %8775 = vmatprep.subr.mxu0 0.0
    %8776 = vmatpush1.msra.mxu0 0.0
    %8777 = vmatprep.subr.mxu0 0.0
    %8778 = vmatpush1.msra.mxu0 0.0
    %8779 = vmatprep.subr.mxu0 0.0
    %8780 = vmatpush1.msra.mxu0 0.0
    %8781 = vmatprep.subr.mxu0 0.0
    %8782 = vmatpush1.msra.mxu0 0.0
    %8783 = vmatprep.subr.mxu0 0.0
    %8784 = vmatpush1.msra.mxu0 0.0
    %8785 = vmatprep.subr.mxu0 0.0
    %8786 = vmatpush1.msra.mxu0 0.0
    %8787 = vmatprep.subr.mxu0 0.0
    %8788 = vmatpush1.msra.mxu0 0.0
    %8789 = vmatprep.subr.mxu0 0.0
    %8790 = vmatpush1.msra.mxu0 0.0
    %8791 = vmatprep.subr.mxu0 0.0
    %8792 = vmatpush1.msra.mxu0 0.0
    %8793 = vmatprep.subr.mxu0 0.0
    %8794 = vmatpush1.msra.mxu0 0.0
    %8795 = vmatprep.subr.mxu0 0.0
    %8796 = vmatpush1.msra.mxu0 0.0
    %8797 = vmatprep.subr.mxu0 0.0
    %8798 = vmatpush1.msra.mxu0 0.0
    %8799 = vmatprep.subr.mxu0 0.0
    %8800 = vmatpush1.msra.mxu0 0.0
    %8801 = vmatprep.mubr.f32.mxu0 0.0
    %8802 = vmatmul.mubr.f32.gmra.mrb[0].mxu0 %v8726
    %v8803 = vpop.f32.mrb[0].mxu0
    %v8804 = vadd.f32 0.0, %v8803
    %v8805 = vpop.f32.mrb[0].mxu0
    %8806 = vmatprep.mubr.f32.mxu0 0.0
    %8807 = vmatmul.mubr.f32.gmra.mrb[0].mxu0 %v8729
    %v8808 = vpop.f32.mrb[0].mxu0
    %v8809 = vadd.f32 0.0, %v8808
    %v8810 = vpop.f32.mrb[0].mxu0
    %8811 = vmatprep.mubr.f32.mxu0 0.0
    %8812 = vmatmul.mubr.f32.gmra.mrb[0].mxu0 %v8732
    %v8813 = vpop.f32.mrb[0].mxu0
    %v8814 = vadd.f32 0.0, %v8813
    %v8815 = vpop.f32.mrb[0].mxu0
    %8816 = vmatprep.mubr.f32.mxu0 0.0
    %8817 = vmatmul.mubr.f32.gmra.mrb[0].mxu0 %v8735
    %v8818 = vpop.f32.mrb[0].mxu0
    %v8819 = vadd.f32 0.0, %v8818
    %v8820 = vpop.f32.mrb[0].mxu0
    %8821 = vdwg.mxu0
    %v8822 = vlaneseq
    %v8823 = vshrl.u32 %v8822, 7
    %v8824 = vsub.s32 0, %v8823
    %v8825 = vrot.slane %v7666, %v8824
    %v8826 = vadd.f32 %v8825, %v8804
    %v8827 = vadd.f32 %v8825, %v8809
    %v8828 = vadd.f32 %v8825, %v8814
    %v8829 = vadd.f32 %v8825, %v8819
    %8832 = vrot.lane.b32.xlu0 %v7644, 120
    %v8833 = vpop.permute.xlu0 %8832
    %8834 = vrot.lane.b32.xlu0 %v7649, 120
    %v8835 = vpop.permute.xlu0 %8834
    %v8839 = vsel %vm988, %v8549, 0
    %v8842 = vsel %vm988, %v8550, 0
    %8844 = vmatprep.subr.mxu0 0.0
    %8845 = vmatpush1.msra.mxu0 %v8833
    %8846 = vmatprep.subr.mxu0 0.0
    %8847 = vmatpush1.msra.mxu0 %v8835
    %8848 = vmatprep.subr.mxu0 0.0
    %8849 = vmatpush1.msra.mxu0 0.0
    %8850 = vmatprep.subr.mxu0 0.0
    %8851 = vmatpush1.msra.mxu0 0.0
    %8852 = vmatprep.subr.mxu0 0.0
    %8853 = vmatpush1.msra.mxu0 0.0
    %8854 = vmatprep.subr.mxu0 0.0
    %8855 = vmatpush1.msra.mxu0 0.0
    %8856 = vmatprep.subr.mxu0 0.0
    %8857 = vmatpush1.msra.mxu0 0.0
    %8858 = vmatprep.subr.mxu0 0.0
    %8859 = vmatpush1.msra.mxu0 0.0
    %8860 = vmatprep.subr.mxu0 0.0
    %8861 = vmatpush1.msra.mxu0 0.0
    %8862 = vmatprep.subr.mxu0 0.0
    %8863 = vmatpush1.msra.mxu0 0.0
    %8864 = vmatprep.subr.mxu0 0.0
    %8865 = vmatpush1.msra.mxu0 0.0
    %8866 = vmatprep.subr.mxu0 0.0
    %8867 = vmatpush1.msra.mxu0 0.0
    %8868 = vmatprep.subr.mxu0 0.0
    %8869 = vmatpush1.msra.mxu0 0.0
    %8870 = vmatprep.subr.mxu0 0.0
    %8871 = vmatpush1.msra.mxu0 0.0
    %8872 = vmatprep.subr.mxu0 0.0
    %8873 = vmatpush1.msra.mxu0 0.0
    %8874 = vmatprep.subr.mxu0 0.0
    %8875 = vmatpush1.msra.mxu0 0.0
    %8876 = vmatprep.subr.mxu0 0.0
    %8877 = vmatpush1.msra.mxu0 0.0
    %8878 = vmatprep.subr.mxu0 0.0
    %8879 = vmatpush1.msra.mxu0 0.0
    %8880 = vmatprep.subr.mxu0 0.0
    %8881 = vmatpush1.msra.mxu0 0.0
    %8882 = vmatprep.subr.mxu0 0.0
    %8883 = vmatpush1.msra.mxu0 0.0
    %8884 = vmatprep.subr.mxu0 0.0
    %8885 = vmatpush1.msra.mxu0 0.0
    %8886 = vmatprep.subr.mxu0 0.0
    %8887 = vmatpush1.msra.mxu0 0.0
    %8888 = vmatprep.subr.mxu0 0.0
    %8889 = vmatpush1.msra.mxu0 0.0
    %8890 = vmatprep.subr.mxu0 0.0
    %8891 = vmatpush1.msra.mxu0 0.0
    %8892 = vmatprep.subr.mxu0 0.0
    %8893 = vmatpush1.msra.mxu0 0.0
    %8894 = vmatprep.subr.mxu0 0.0
    %8895 = vmatpush1.msra.mxu0 0.0
    %8896 = vmatprep.subr.mxu0 0.0
    %8897 = vmatpush1.msra.mxu0 0.0
    %8898 = vmatprep.subr.mxu0 0.0
    %8899 = vmatpush1.msra.mxu0 0.0
    %8900 = vmatprep.subr.mxu0 0.0
    %8901 = vmatpush1.msra.mxu0 0.0
    %8902 = vmatprep.subr.mxu0 0.0
    %8903 = vmatpush1.msra.mxu0 0.0
    %8904 = vmatprep.subr.mxu0 0.0
    %8905 = vmatpush1.msra.mxu0 0.0
    %8906 = vmatprep.subr.mxu0 0.0
    %8907 = vmatpush1.msra.mxu0 0.0
    %8908 = vmatprep.mubr.f32.mxu0 0.0
    %8909 = vmatmul.mubr.f32.gmra.mrb[0].mxu0 %v8839
    %v8910 = vpop.f32.mrb[0].mxu0
    %v8911 = vadd.f32 0.0, %v8910
    %v8912 = vpop.f32.mrb[0].mxu0
    %8913 = vmatprep.mubr.f32.mxu0 0.0
    %8914 = vmatmul.mubr.f32.gmra.mrb[0].mxu0 %v8842
    %v8915 = vpop.f32.mrb[0].mxu0
    %v8916 = vadd.f32 0.0, %v8915
    %v8917 = vpop.f32.mrb[0].mxu0
    %8918 = vdwg.mxu0
    %8921 = vrot.lane.b32.xlu0 %v7654, 120
    %v8922 = vpop.permute.xlu0 %8921
    %8923 = vrot.lane.b32.xlu0 %v7659, 120
    %v8924 = vpop.permute.xlu0 %8923
    %v8928 = vsel %vm988, %v8557, 0
    %v8931 = vsel %vm988, %v8558, 0
    %8933 = vmatprep.subr.mxu0 0.0
    %8934 = vmatpush1.msra.mxu0 %v8922
    %8935 = vmatprep.subr.mxu0 0.0
    %8936 = vmatpush1.msra.mxu0 %v8924
    %8937 = vmatprep.subr.mxu0 0.0
    %8938 = vmatpush1.msra.mxu0 0.0
    %8939 = vmatprep.subr.mxu0 0.0
    %8940 = vmatpush1.msra.mxu0 0.0
    %8941 = vmatprep.subr.mxu0 0.0
    %8942 = vmatpush1.msra.mxu0 0.0
    %8943 = vmatprep.subr.mxu0 0.0
    %8944 = vmatpush1.msra.mxu0 0.0
    %8945 = vmatprep.subr.mxu0 0.0
    %8946 = vmatpush1.msra.mxu0 0.0
    %8947 = vmatprep.subr.mxu0 0.0
    %8948 = vmatpush1.msra.mxu0 0.0
    %8949 = vmatprep.subr.mxu0 0.0
    %8950 = vmatpush1.msra.mxu0 0.0
    %8951 = vmatprep.subr.mxu0 0.0
    %8952 = vmatpush1.msra.mxu0 0.0
    %8953 = vmatprep.subr.mxu0 0.0
    %8954 = vmatpush1.msra.mxu0 0.0
    %8955 = vmatprep.subr.mxu0 0.0
    %8956 = vmatpush1.msra.mxu0 0.0
    %8957 = vmatprep.subr.mxu0 0.0
    %8958 = vmatpush1.msra.mxu0 0.0
    %8959 = vmatprep.subr.mxu0 0.0
    %8960 = vmatpush1.msra.mxu0 0.0
    %8961 = vmatprep.subr.mxu0 0.0
    %8962 = vmatpush1.msra.mxu0 0.0
    %8963 = vmatprep.subr.mxu0 0.0
    %8964 = vmatpush1.msra.mxu0 0.0
    %8965 = vmatprep.subr.mxu0 0.0
    %8966 = vmatpush1.msra.mxu0 0.0
    %8967 = vmatprep.subr.mxu0 0.0
    %8968 = vmatpush1.msra.mxu0 0.0
    %8969 = vmatprep.subr.mxu0 0.0
    %8970 = vmatpush1.msra.mxu0 0.0
    %8971 = vmatprep.subr.mxu0 0.0
    %8972 = vmatpush1.msra.mxu0 0.0
    %8973 = vmatprep.subr.mxu0 0.0
    %8974 = vmatpush1.msra.mxu0 0.0
    %8975 = vmatprep.subr.mxu0 0.0
    %8976 = vmatpush1.msra.mxu0 0.0
    %8977 = vmatprep.subr.mxu0 0.0
    %8978 = vmatpush1.msra.mxu0 0.0
    %8979 = vmatprep.subr.mxu0 0.0
    %8980 = vmatpush1.msra.mxu0 0.0
    %8981 = vmatprep.subr.mxu0 0.0
    %8982 = vmatpush1.msra.mxu0 0.0
    %8983 = vmatprep.subr.mxu0 0.0
    %8984 = vmatpush1.msra.mxu0 0.0
    %8985 = vmatprep.subr.mxu0 0.0
    %8986 = vmatpush1.msra.mxu0 0.0
    %8987 = vmatprep.subr.mxu0 0.0
    %8988 = vmatpush1.msra.mxu0 0.0
    %8989 = vmatprep.subr.mxu0 0.0
    %8990 = vmatpush1.msra.mxu0 0.0
    %8991 = vmatprep.subr.mxu0 0.0
    %8992 = vmatpush1.msra.mxu0 0.0
    %8993 = vmatprep.subr.mxu0 0.0
    %8994 = vmatpush1.msra.mxu0 0.0
    %8995 = vmatprep.subr.mxu0 0.0
    %8996 = vmatpush1.msra.mxu0 0.0
    %8997 = vmatprep.mubr.f32.mxu0 0.0
    %8998 = vmatmul.mubr.f32.gmra.mrb[0].mxu0 %v8928
    %v8999 = vpop.f32.mrb[0].mxu0
    %v9000 = vadd.f32 0.0, %v8999
    %v9001 = vpop.f32.mrb[0].mxu0
    %9002 = vmatprep.mubr.f32.mxu0 0.0
    %9003 = vmatmul.mubr.f32.gmra.mrb[0].mxu0 %v8931
    %v9004 = vpop.f32.mrb[0].mxu0
    %v9005 = vadd.f32 0.0, %v9004
    %v9006 = vpop.f32.mrb[0].mxu0
    %9007 = vdwg.mxu0
    %v9009 = vsel %vm269, %v8911, 0
    %v9012 = vsel %vm269, %v8916, 0
    %v9015 = vsel %vm269, %v9000, 0
    %v9018 = vsel %vm269, %v9005, 0
    %9020 = vmatprep.subr.mxu0 0.0
    %9021 = vmatpush1.msra.mxu0 %v7663
    %9022 = vmatprep.subr.mxu0 0.0
    %9023 = vmatpush1.msra.mxu0 0.0
    %9024 = vmatprep.subr.mxu0 0.0
    %9025 = vmatpush1.msra.mxu0 0.0
    %9026 = vmatprep.subr.mxu0 0.0
    %9027 = vmatpush1.msra.mxu0 0.0
    %9028 = vmatprep.subr.mxu0 0.0
    %9029 = vmatpush1.msra.mxu0 0.0
    %9030 = vmatprep.subr.mxu0 0.0
    %9031 = vmatpush1.msra.mxu0 0.0
    %9032 = vmatprep.subr.mxu0 0.0
    %9033 = vmatpush1.msra.mxu0 0.0
    %9034 = vmatprep.subr.mxu0 0.0
    %9035 = vmatpush1.msra.mxu0 0.0
    %9036 = vmatprep.subr.mxu0 0.0
    %9037 = vmatpush1.msra.mxu0 0.0
    %9038 = vmatprep.subr.mxu0 0.0
    %9039 = vmatpush1.msra.mxu0 0.0
    %9040 = vmatprep.subr.mxu0 0.0
    %9041 = vmatpush1.msra.mxu0 0.0
    %9042 = vmatprep.subr.mxu0 0.0
    %9043 = vmatpush1.msra.mxu0 0.0
    %9044 = vmatprep.subr.mxu0 0.0
    %9045 = vmatpush1.msra.mxu0 0.0
    %9046 = vmatprep.subr.mxu0 0.0
    %9047 = vmatpush1.msra.mxu0 0.0
    %9048 = vmatprep.subr.mxu0 0.0
    %9049 = vmatpush1.msra.mxu0 0.0
    %9050 = vmatprep.subr.mxu0 0.0
    %9051 = vmatpush1.msra.mxu0 0.0
    %9052 = vmatprep.subr.mxu0 0.0
    %9053 = vmatpush1.msra.mxu0 0.0
    %9054 = vmatprep.subr.mxu0 0.0
    %9055 = vmatpush1.msra.mxu0 0.0
    %9056 = vmatprep.subr.mxu0 0.0
    %9057 = vmatpush1.msra.mxu0 0.0
    %9058 = vmatprep.subr.mxu0 0.0
    %9059 = vmatpush1.msra.mxu0 0.0
    %9060 = vmatprep.subr.mxu0 0.0
    %9061 = vmatpush1.msra.mxu0 0.0
    %9062 = vmatprep.subr.mxu0 0.0
    %9063 = vmatpush1.msra.mxu0 0.0
    %9064 = vmatprep.subr.mxu0 0.0
    %9065 = vmatpush1.msra.mxu0 0.0
    %9066 = vmatprep.subr.mxu0 0.0
    %9067 = vmatpush1.msra.mxu0 0.0
    %9068 = vmatprep.subr.mxu0 0.0
    %9069 = vmatpush1.msra.mxu0 0.0
    %9070 = vmatprep.subr.mxu0 0.0
    %9071 = vmatpush1.msra.mxu0 0.0
    %9072 = vmatprep.subr.mxu0 0.0
    %9073 = vmatpush1.msra.mxu0 0.0
    %9074 = vmatprep.subr.mxu0 0.0
    %9075 = vmatpush1.msra.mxu0 0.0
    %9076 = vmatprep.subr.mxu0 0.0
    %9077 = vmatpush1.msra.mxu0 0.0
    %9078 = vmatprep.subr.mxu0 0.0
    %9079 = vmatpush1.msra.mxu0 0.0
    %9080 = vmatprep.subr.mxu0 0.0
    %9081 = vmatpush1.msra.mxu0 0.0
    %9082 = vmatprep.subr.mxu0 0.0
    %9083 = vmatpush1.msra.mxu0 0.0
    %9084 = vmatprep.mubr.f32.mxu0 0.0
    %9085 = vmatmul.mubr.f32.gmra.mrb[0].mxu0 %v9009
    %v9086 = vpop.f32.mrb[0].mxu0
    %v9087 = vadd.f32 0.0, %v9086
    %v9088 = vpop.f32.mrb[0].mxu0
    %9089 = vmatprep.mubr.f32.mxu0 0.0
    %9090 = vmatmul.mubr.f32.gmra.mrb[0].mxu0 %v9012
    %v9091 = vpop.f32.mrb[0].mxu0
    %v9092 = vadd.f32 0.0, %v9091
    %v9093 = vpop.f32.mrb[0].mxu0
    %9094 = vmatprep.mubr.f32.mxu0 0.0
    %9095 = vmatmul.mubr.f32.gmra.mrb[0].mxu0 %v9015
    %v9096 = vpop.f32.mrb[0].mxu0
    %v9097 = vadd.f32 0.0, %v9096
    %v9098 = vpop.f32.mrb[0].mxu0
    %9099 = vmatprep.mubr.f32.mxu0 0.0
    %9100 = vmatmul.mubr.f32.gmra.mrb[0].mxu0 %v9018
    %v9101 = vpop.f32.mrb[0].mxu0
    %v9102 = vadd.f32 0.0, %v9101
    %v9103 = vpop.f32.mrb[0].mxu0
    %9104 = vdwg.mxu0
    %v9105 = vadd.f32 %v8826, %v9087
    %v9106 = vadd.f32 %v8827, %v9092
    %v9107 = vadd.f32 %v8828, %v9097
    %v9108 = vadd.f32 %v8829, %v9102
    %9109 = vrot.lane.b32.xlu0 %v7644, 112
    %v9110 = vpop.permute.xlu0 %9109
    %9111 = vrot.lane.b32.xlu0 %v7649, 112
    %v9112 = vpop.permute.xlu0 %9111
    %v9116 = vsel %vm988, %v8551, 0
    %v9119 = vsel %vm988, %v8552, 0
    %9121 = vmatprep.subr.mxu0 0.0
    %9122 = vmatpush1.msra.mxu0 %v9110
    %9123 = vmatprep.subr.mxu0 0.0
    %9124 = vmatpush1.msra.mxu0 %v9112
    %9125 = vmatprep.subr.mxu0 0.0
    %9126 = vmatpush1.msra.mxu0 0.0
    %9127 = vmatprep.subr.mxu0 0.0
    %9128 = vmatpush1.msra.mxu0 0.0
    %9129 = vmatprep.subr.mxu0 0.0
    %9130 = vmatpush1.msra.mxu0 0.0
    %9131 = vmatprep.subr.mxu0 0.0
    %9132 = vmatpush1.msra.mxu0 0.0
    %9133 = vmatprep.subr.mxu0 0.0
    %9134 = vmatpush1.msra.mxu0 0.0
    %9135 = vmatprep.subr.mxu0 0.0
    %9136 = vmatpush1.msra.mxu0 0.0
    %9137 = vmatprep.subr.mxu0 0.0
    %9138 = vmatpush1.msra.mxu0 0.0
    %9139 = vmatprep.subr.mxu0 0.0
    %9140 = vmatpush1.msra.mxu0 0.0
    %9141 = vmatprep.subr.mxu0 0.0
    %9142 = vmatpush1.msra.mxu0 0.0
    %9143 = vmatprep.subr.mxu0 0.0
    %9144 = vmatpush1.msra.mxu0 0.0
    %9145 = vmatprep.subr.mxu0 0.0
    %9146 = vmatpush1.msra.mxu0 0.0
    %9147 = vmatprep.subr.mxu0 0.0
    %9148 = vmatpush1.msra.mxu0 0.0
    %9149 = vmatprep.subr.mxu0 0.0
    %9150 = vmatpush1.msra.mxu0 0.0
    %9151 = vmatprep.subr.mxu0 0.0
    %9152 = vmatpush1.msra.mxu0 0.0
    %9153 = vmatprep.subr.mxu0 0.0
    %9154 = vmatpush1.msra.mxu0 0.0
    %9155 = vmatprep.subr.mxu0 0.0
    %9156 = vmatpush1.msra.mxu0 0.0
    %9157 = vmatprep.subr.mxu0 0.0
    %9158 = vmatpush1.msra.mxu0 0.0
    %9159 = vmatprep.subr.mxu0 0.0
    %9160 = vmatpush1.msra.mxu0 0.0
    %9161 = vmatprep.subr.mxu0 0.0
    %9162 = vmatpush1.msra.mxu0 0.0
    %9163 = vmatprep.subr.mxu0 0.0
    %9164 = vmatpush1.msra.mxu0 0.0
    %9165 = vmatprep.subr.mxu0 0.0
    %9166 = vmatpush1.msra.mxu0 0.0
    %9167 = vmatprep.subr.mxu0 0.0
    %9168 = vmatpush1.msra.mxu0 0.0
    %9169 = vmatprep.subr.mxu0 0.0
    %9170 = vmatpush1.msra.mxu0 0.0
    %9171 = vmatprep.subr.mxu0 0.0
    %9172 = vmatpush1.msra.mxu0 0.0
    %9173 = vmatprep.subr.mxu0 0.0
    %9174 = vmatpush1.msra.mxu0 0.0
    %9175 = vmatprep.subr.mxu0 0.0
    %9176 = vmatpush1.msra.mxu0 0.0
    %9177 = vmatprep.subr.mxu0 0.0
    %9178 = vmatpush1.msra.mxu0 0.0
    %9179 = vmatprep.subr.mxu0 0.0
    %9180 = vmatpush1.msra.mxu0 0.0
    %9181 = vmatprep.subr.mxu0 0.0
    %9182 = vmatpush1.msra.mxu0 0.0
    %9183 = vmatprep.subr.mxu0 0.0
    %9184 = vmatpush1.msra.mxu0 0.0
    %9185 = vmatprep.mubr.f32.mxu0 0.0
    %9186 = vmatmul.mubr.f32.gmra.mrb[0].mxu0 %v9116
    %v9187 = vpop.f32.mrb[0].mxu0
    %v9188 = vadd.f32 0.0, %v9187
    %v9189 = vpop.f32.mrb[0].mxu0
    %9190 = vmatprep.mubr.f32.mxu0 0.0
    %9191 = vmatmul.mubr.f32.gmra.mrb[0].mxu0 %v9119
    %v9192 = vpop.f32.mrb[0].mxu0
    %v9193 = vadd.f32 0.0, %v9192
    %v9194 = vpop.f32.mrb[0].mxu0
    %9195 = vdwg.mxu0
    %9196 = vrot.lane.b32.xlu0 %v7654, 112
    %v9197 = vpop.permute.xlu0 %9196
    %9198 = vrot.lane.b32.xlu0 %v7659, 112
    %v9199 = vpop.permute.xlu0 %9198
    %v9203 = vsel %vm988, %v8559, 0
    %v9206 = vsel %vm988, %v8560, 0
    %9208 = vmatprep.subr.mxu0 0.0
    %9209 = vmatpush1.msra.mxu0 %v9197
    %9210 = vmatprep.subr.mxu0 0.0
    %9211 = vmatpush1.msra.mxu0 %v9199
    %9212 = vmatprep.subr.mxu0 0.0
    %9213 = vmatpush1.msra.mxu0 0.0
    %9214 = vmatprep.subr.mxu0 0.0
    %9215 = vmatpush1.msra.mxu0 0.0
    %9216 = vmatprep.subr.mxu0 0.0
    %9217 = vmatpush1.msra.mxu0 0.0
    %9218 = vmatprep.subr.mxu0 0.0
    %9219 = vmatpush1.msra.mxu0 0.0
    %9220 = vmatprep.subr.mxu0 0.0
    %9221 = vmatpush1.msra.mxu0 0.0
    %9222 = vmatprep.subr.mxu0 0.0
    %9223 = vmatpush1.msra.mxu0 0.0
    %9224 = vmatprep.subr.mxu0 0.0
    %9225 = vmatpush1.msra.mxu0 0.0
    %9226 = vmatprep.subr.mxu0 0.0
    %9227 = vmatpush1.msra.mxu0 0.0
    %9228 = vmatprep.subr.mxu0 0.0
    %9229 = vmatpush1.msra.mxu0 0.0
    %9230 = vmatprep.subr.mxu0 0.0
    %9231 = vmatpush1.msra.mxu0 0.0
    %9232 = vmatprep.subr.mxu0 0.0
    %9233 = vmatpush1.msra.mxu0 0.0
    %9234 = vmatprep.subr.mxu0 0.0
    %9235 = vmatpush1.msra.mxu0 0.0
    %9236 = vmatprep.subr.mxu0 0.0
    %9237 = vmatpush1.msra.mxu0 0.0
    %9238 = vmatprep.subr.mxu0 0.0
    %9239 = vmatpush1.msra.mxu0 0.0
    %9240 = vmatprep.subr.mxu0 0.0
    %9241 = vmatpush1.msra.mxu0 0.0
    %9242 = vmatprep.subr.mxu0 0.0
    %9243 = vmatpush1.msra.mxu0 0.0
    %9244 = vmatprep.subr.mxu0 0.0
    %9245 = vmatpush1.msra.mxu0 0.0
    %9246 = vmatprep.subr.mxu0 0.0
    %9247 = vmatpush1.msra.mxu0 0.0
    %9248 = vmatprep.subr.mxu0 0.0
    %9249 = vmatpush1.msra.mxu0 0.0
    %9250 = vmatprep.subr.mxu0 0.0
    %9251 = vmatpush1.msra.mxu0 0.0
    %9252 = vmatprep.subr.mxu0 0.0
    %9253 = vmatpush1.msra.mxu0 0.0
    %9254 = vmatprep.subr.mxu0 0.0
    %9255 = vmatpush1.msra.mxu0 0.0
    %9256 = vmatprep.subr.mxu0 0.0
    %9257 = vmatpush1.msra.mxu0 0.0
    %9258 = vmatprep.subr.mxu0 0.0
    %9259 = vmatpush1.msra.mxu0 0.0
    %9260 = vmatprep.subr.mxu0 0.0
    %9261 = vmatpush1.msra.mxu0 0.0
    %9262 = vmatprep.subr.mxu0 0.0
    %9263 = vmatpush1.msra.mxu0 0.0
    %9264 = vmatprep.subr.mxu0 0.0
    %9265 = vmatpush1.msra.mxu0 0.0
    %9266 = vmatprep.subr.mxu0 0.0
    %9267 = vmatpush1.msra.mxu0 0.0
    %9268 = vmatprep.subr.mxu0 0.0
    %9269 = vmatpush1.msra.mxu0 0.0
    %9270 = vmatprep.subr.mxu0 0.0
    %9271 = vmatpush1.msra.mxu0 0.0
    %9272 = vmatprep.mubr.f32.mxu0 0.0
    %9273 = vmatmul.mubr.f32.gmra.mrb[0].mxu0 %v9203
    %v9274 = vpop.f32.mrb[0].mxu0
    %v9275 = vadd.f32 0.0, %v9274
    %v9276 = vpop.f32.mrb[0].mxu0
    %9277 = vmatprep.mubr.f32.mxu0 0.0
    %9278 = vmatmul.mubr.f32.gmra.mrb[0].mxu0 %v9206
    %v9279 = vpop.f32.mrb[0].mxu0
    %v9280 = vadd.f32 0.0, %v9279
    %v9281 = vpop.f32.mrb[0].mxu0
    %9282 = vdwg.mxu0
    %v9284 = vsel %vm269, %v9188, 0
    %v9287 = vsel %vm269, %v9193, 0
    %v9290 = vsel %vm269, %v9275, 0
    %v9293 = vsel %vm269, %v9280, 0
    %9295 = vmatprep.subr.mxu0 0.0
    %9296 = vmatpush1.msra.mxu0 %v7664
    %9297 = vmatprep.subr.mxu0 0.0
    %9298 = vmatpush1.msra.mxu0 0.0
    %9299 = vmatprep.subr.mxu0 0.0
    %9300 = vmatpush1.msra.mxu0 0.0
    %9301 = vmatprep.subr.mxu0 0.0
    %9302 = vmatpush1.msra.mxu0 0.0
    %9303 = vmatprep.subr.mxu0 0.0
    %9304 = vmatpush1.msra.mxu0 0.0
    %9305 = vmatprep.subr.mxu0 0.0
    %9306 = vmatpush1.msra.mxu0 0.0
    %9307 = vmatprep.subr.mxu0 0.0
    %9308 = vmatpush1.msra.mxu0 0.0
    %9309 = vmatprep.subr.mxu0 0.0
    %9310 = vmatpush1.msra.mxu0 0.0
    %9311 = vmatprep.subr.mxu0 0.0
    %9312 = vmatpush1.msra.mxu0 0.0
    %9313 = vmatprep.subr.mxu0 0.0
    %9314 = vmatpush1.msra.mxu0 0.0
    %9315 = vmatprep.subr.mxu0 0.0
    %9316 = vmatpush1.msra.mxu0 0.0
    %9317 = vmatprep.subr.mxu0 0.0
    %9318 = vmatpush1.msra.mxu0 0.0
    %9319 = vmatprep.subr.mxu0 0.0
    %9320 = vmatpush1.msra.mxu0 0.0
    %9321 = vmatprep.subr.mxu0 0.0
    %9322 = vmatpush1.msra.mxu0 0.0
    %9323 = vmatprep.subr.mxu0 0.0
    %9324 = vmatpush1.msra.mxu0 0.0
    %9325 = vmatprep.subr.mxu0 0.0
    %9326 = vmatpush1.msra.mxu0 0.0
    %9327 = vmatprep.subr.mxu0 0.0
    %9328 = vmatpush1.msra.mxu0 0.0
    %9329 = vmatprep.subr.mxu0 0.0
    %9330 = vmatpush1.msra.mxu0 0.0
    %9331 = vmatprep.subr.mxu0 0.0
    %9332 = vmatpush1.msra.mxu0 0.0
    %9333 = vmatprep.subr.mxu0 0.0
    %9334 = vmatpush1.msra.mxu0 0.0
    %9335 = vmatprep.subr.mxu0 0.0
    %9336 = vmatpush1.msra.mxu0 0.0
    %9337 = vmatprep.subr.mxu0 0.0
    %9338 = vmatpush1.msra.mxu0 0.0
    %9339 = vmatprep.subr.mxu0 0.0
    %9340 = vmatpush1.msra.mxu0 0.0
    %9341 = vmatprep.subr.mxu0 0.0
    %9342 = vmatpush1.msra.mxu0 0.0
    %9343 = vmatprep.subr.mxu0 0.0
    %9344 = vmatpush1.msra.mxu0 0.0
    %9345 = vmatprep.subr.mxu0 0.0
    %9346 = vmatpush1.msra.mxu0 0.0
    %9347 = vmatprep.subr.mxu0 0.0
    %9348 = vmatpush1.msra.mxu0 0.0
    %9349 = vmatprep.subr.mxu0 0.0
    %9350 = vmatpush1.msra.mxu0 0.0
    %9351 = vmatprep.subr.mxu0 0.0
    %9352 = vmatpush1.msra.mxu0 0.0
    %9353 = vmatprep.subr.mxu0 0.0
    %9354 = vmatpush1.msra.mxu0 0.0
    %9355 = vmatprep.subr.mxu0 0.0
    %9356 = vmatpush1.msra.mxu0 0.0
    %9357 = vmatprep.subr.mxu0 0.0
    %9358 = vmatpush1.msra.mxu0 0.0
    %9359 = vmatprep.mubr.f32.mxu0 0.0
    %9360 = vmatmul.mubr.f32.gmra.mrb[0].mxu0 %v9284
    %v9361 = vpop.f32.mrb[0].mxu0
    %v9362 = vadd.f32 0.0, %v9361
    %v9363 = vpop.f32.mrb[0].mxu0
    %9364 = vmatprep.mubr.f32.mxu0 0.0
    %9365 = vmatmul.mubr.f32.gmra.mrb[0].mxu0 %v9287
    %v9366 = vpop.f32.mrb[0].mxu0
    %v9367 = vadd.f32 0.0, %v9366
    %v9368 = vpop.f32.mrb[0].mxu0
    %9369 = vmatprep.mubr.f32.mxu0 0.0
    %9370 = vmatmul.mubr.f32.gmra.mrb[0].mxu0 %v9290
    %v9371 = vpop.f32.mrb[0].mxu0
    %v9372 = vadd.f32 0.0, %v9371
    %v9373 = vpop.f32.mrb[0].mxu0
    %9374 = vmatprep.mubr.f32.mxu0 0.0
    %9375 = vmatmul.mubr.f32.gmra.mrb[0].mxu0 %v9293
    %v9376 = vpop.f32.mrb[0].mxu0
    %v9377 = vadd.f32 0.0, %v9376
    %v9378 = vpop.f32.mrb[0].mxu0
    %9379 = vdwg.mxu0
    %v9380 = vadd.f32 %v9105, %v9362
    %v9381 = vadd.f32 %v9106, %v9367
    %v9382 = vadd.f32 %v9107, %v9372
    %v9383 = vadd.f32 %v9108, %v9377
    %9384 = vrot.lane.b32.xlu0 %v7644, 104
    %v9385 = vpop.permute.xlu0 %9384
    %9386 = vrot.lane.b32.xlu0 %v7649, 104
    %v9387 = vpop.permute.xlu0 %9386
    %v9391 = vsel %vm988, %v8553, 0
    %v9394 = vsel %vm988, %v8554, 0
    %9396 = vmatprep.subr.mxu0 0.0
    %9397 = vmatpush1.msra.mxu0 %v9385
    %9398 = vmatprep.subr.mxu0 0.0
    %9399 = vmatpush1.msra.mxu0 %v9387
    %9400 = vmatprep.subr.mxu0 0.0
    %9401 = vmatpush1.msra.mxu0 0.0
    %9402 = vmatprep.subr.mxu0 0.0
    %9403 = vmatpush1.msra.mxu0 0.0
    %9404 = vmatprep.subr.mxu0 0.0
    %9405 = vmatpush1.msra.mxu0 0.0
    %9406 = vmatprep.subr.mxu0 0.0
    %9407 = vmatpush1.msra.mxu0 0.0
    %9408 = vmatprep.subr.mxu0 0.0
    %9409 = vmatpush1.msra.mxu0 0.0
    %9410 = vmatprep.subr.mxu0 0.0
    %9411 = vmatpush1.msra.mxu0 0.0
    %9412 = vmatprep.subr.mxu0 0.0
    %9413 = vmatpush1.msra.mxu0 0.0
    %9414 = vmatprep.subr.mxu0 0.0
    %9415 = vmatpush1.msra.mxu0 0.0
    %9416 = vmatprep.subr.mxu0 0.0
    %9417 = vmatpush1.msra.mxu0 0.0
    %9418 = vmatprep.subr.mxu0 0.0
    %9419 = vmatpush1.msra.mxu0 0.0
    %9420 = vmatprep.subr.mxu0 0.0
    %9421 = vmatpush1.msra.mxu0 0.0
    %9422 = vmatprep.subr.mxu0 0.0
    %9423 = vmatpush1.msra.mxu0 0.0
    %9424 = vmatprep.subr.mxu0 0.0
    %9425 = vmatpush1.msra.mxu0 0.0
    %9426 = vmatprep.subr.mxu0 0.0
    %9427 = vmatpush1.msra.mxu0 0.0
    %9428 = vmatprep.subr.mxu0 0.0
    %9429 = vmatpush1.msra.mxu0 0.0
    %9430 = vmatprep.subr.mxu0 0.0
    %9431 = vmatpush1.msra.mxu0 0.0
    %9432 = vmatprep.subr.mxu0 0.0
    %9433 = vmatpush1.msra.mxu0 0.0
    %9434 = vmatprep.subr.mxu0 0.0
    %9435 = vmatpush1.msra.mxu0 0.0
    %9436 = vmatprep.subr.mxu0 0.0
    %9437 = vmatpush1.msra.mxu0 0.0
    %9438 = vmatprep.subr.mxu0 0.0
    %9439 = vmatpush1.msra.mxu0 0.0
    %9440 = vmatprep.subr.mxu0 0.0
    %9441 = vmatpush1.msra.mxu0 0.0
    %9442 = vmatprep.subr.mxu0 0.0
    %9443 = vmatpush1.msra.mxu0 0.0
    %9444 = vmatprep.subr.mxu0 0.0
    %9445 = vmatpush1.msra.mxu0 0.0
    %9446 = vmatprep.subr.mxu0 0.0
    %9447 = vmatpush1.msra.mxu0 0.0
    %9448 = vmatprep.subr.mxu0 0.0
    %9449 = vmatpush1.msra.mxu0 0.0
    %9450 = vmatprep.subr.mxu0 0.0
    %9451 = vmatpush1.msra.mxu0 0.0
    %9452 = vmatprep.subr.mxu0 0.0
    %9453 = vmatpush1.msra.mxu0 0.0
    %9454 = vmatprep.subr.mxu0 0.0
    %9455 = vmatpush1.msra.mxu0 0.0
    %9456 = vmatprep.subr.mxu0 0.0
    %9457 = vmatpush1.msra.mxu0 0.0
    %9458 = vmatprep.subr.mxu0 0.0
    %9459 = vmatpush1.msra.mxu0 0.0
    %9460 = vmatprep.mubr.f32.mxu0 0.0
    %9461 = vmatmul.mubr.f32.gmra.mrb[0].mxu0 %v9391
    %v9462 = vpop.f32.mrb[0].mxu0
    %v9463 = vadd.f32 0.0, %v9462
    %v9464 = vpop.f32.mrb[0].mxu0
    %9465 = vmatprep.mubr.f32.mxu0 0.0
    %9466 = vmatmul.mubr.f32.gmra.mrb[0].mxu0 %v9394
    %v9467 = vpop.f32.mrb[0].mxu0
    %v9468 = vadd.f32 0.0, %v9467
    %v9469 = vpop.f32.mrb[0].mxu0
    %9470 = vdwg.mxu0
    %9471 = vrot.lane.b32.xlu0 %v7654, 104
    %v9472 = vpop.permute.xlu0 %9471
    %9473 = vrot.lane.b32.xlu0 %v7659, 104
    %v9474 = vpop.permute.xlu0 %9473
    %v9478 = vsel %vm988, %v8561, 0
    %v9481 = vsel %vm988, %v8562, 0
    %9483 = vmatprep.subr.mxu0 0.0
    %9484 = vmatpush1.msra.mxu0 %v9472
    %9485 = vmatprep.subr.mxu0 0.0
    %9486 = vmatpush1.msra.mxu0 %v9474
    %9487 = vmatprep.subr.mxu0 0.0
    %9488 = vmatpush1.msra.mxu0 0.0
    %9489 = vmatprep.subr.mxu0 0.0
    %9490 = vmatpush1.msra.mxu0 0.0
    %9491 = vmatprep.subr.mxu0 0.0
    %9492 = vmatpush1.msra.mxu0 0.0
    %9493 = vmatprep.subr.mxu0 0.0
    %9494 = vmatpush1.msra.mxu0 0.0
    %9495 = vmatprep.subr.mxu0 0.0
    %9496 = vmatpush1.msra.mxu0 0.0
    %9497 = vmatprep.subr.mxu0 0.0
    %9498 = vmatpush1.msra.mxu0 0.0
    %9499 = vmatprep.subr.mxu0 0.0
    %9500 = vmatpush1.msra.mxu0 0.0
    %9501 = vmatprep.subr.mxu0 0.0
    %9502 = vmatpush1.msra.mxu0 0.0
    %9503 = vmatprep.subr.mxu0 0.0
    %9504 = vmatpush1.msra.mxu0 0.0
    %9505 = vmatprep.subr.mxu0 0.0
    %9506 = vmatpush1.msra.mxu0 0.0
    %9507 = vmatprep.subr.mxu0 0.0
    %9508 = vmatpush1.msra.mxu0 0.0
    %9509 = vmatprep.subr.mxu0 0.0
    %9510 = vmatpush1.msra.mxu0 0.0
    %9511 = vmatprep.subr.mxu0 0.0
    %9512 = vmatpush1.msra.mxu0 0.0
    %9513 = vmatprep.subr.mxu0 0.0
    %9514 = vmatpush1.msra.mxu0 0.0
    %9515 = vmatprep.subr.mxu0 0.0
    %9516 = vmatpush1.msra.mxu0 0.0
    %9517 = vmatprep.subr.mxu0 0.0
    %9518 = vmatpush1.msra.mxu0 0.0
    %9519 = vmatprep.subr.mxu0 0.0
    %9520 = vmatpush1.msra.mxu0 0.0
    %9521 = vmatprep.subr.mxu0 0.0
    %9522 = vmatpush1.msra.mxu0 0.0
    %9523 = vmatprep.subr.mxu0 0.0
    %9524 = vmatpush1.msra.mxu0 0.0
    %9525 = vmatprep.subr.mxu0 0.0
    %9526 = vmatpush1.msra.mxu0 0.0
    %9527 = vmatprep.subr.mxu0 0.0
    %9528 = vmatpush1.msra.mxu0 0.0
    %9529 = vmatprep.subr.mxu0 0.0
    %9530 = vmatpush1.msra.mxu0 0.0
    %9531 = vmatprep.subr.mxu0 0.0
    %9532 = vmatpush1.msra.mxu0 0.0
    %9533 = vmatprep.subr.mxu0 0.0
    %9534 = vmatpush1.msra.mxu0 0.0
    %9535 = vmatprep.subr.mxu0 0.0
    %9536 = vmatpush1.msra.mxu0 0.0
    %9537 = vmatprep.subr.mxu0 0.0
    %9538 = vmatpush1.msra.mxu0 0.0
    %9539 = vmatprep.subr.mxu0 0.0
    %9540 = vmatpush1.msra.mxu0 0.0
    %9541 = vmatprep.subr.mxu0 0.0
    %9542 = vmatpush1.msra.mxu0 0.0
    %9543 = vmatprep.subr.mxu0 0.0
    %9544 = vmatpush1.msra.mxu0 0.0
    %9545 = vmatprep.subr.mxu0 0.0
    %9546 = vmatpush1.msra.mxu0 0.0
    %9547 = vmatprep.mubr.f32.mxu0 0.0
    %9548 = vmatmul.mubr.f32.gmra.mrb[0].mxu0 %v9478
    %v9549 = vpop.f32.mrb[0].mxu0
    %v9550 = vadd.f32 0.0, %v9549
    %v9551 = vpop.f32.mrb[0].mxu0
    %9552 = vmatprep.mubr.f32.mxu0 0.0
    %9553 = vmatmul.mubr.f32.gmra.mrb[0].mxu0 %v9481
    %v9554 = vpop.f32.mrb[0].mxu0
    %v9555 = vadd.f32 0.0, %v9554
    %v9556 = vpop.f32.mrb[0].mxu0
    %9557 = vdwg.mxu0
    %v9559 = vsel %vm269, %v9463, 0
    %v9562 = vsel %vm269, %v9468, 0
    %v9565 = vsel %vm269, %v9550, 0
    %v9568 = vsel %vm269, %v9555, 0
    %9570 = vmatprep.subr.mxu0 0.0
    %9571 = vmatpush1.msra.mxu0 %v7665
    %9572 = vmatprep.subr.mxu0 0.0
    %9573 = vmatpush1.msra.mxu0 0.0
    %9574 = vmatprep.subr.mxu0 0.0
    %9575 = vmatpush1.msra.mxu0 0.0
    %9576 = vmatprep.subr.mxu0 0.0
    %9577 = vmatpush1.msra.mxu0 0.0
    %9578 = vmatprep.subr.mxu0 0.0
    %9579 = vmatpush1.msra.mxu0 0.0
    %9580 = vmatprep.subr.mxu0 0.0
    %9581 = vmatpush1.msra.mxu0 0.0
    %9582 = vmatprep.subr.mxu0 0.0
    %9583 = vmatpush1.msra.mxu0 0.0
    %9584 = vmatprep.subr.mxu0 0.0
    %9585 = vmatpush1.msra.mxu0 0.0
    %9586 = vmatprep.subr.mxu0 0.0
    %9587 = vmatpush1.msra.mxu0 0.0
    %9588 = vmatprep.subr.mxu0 0.0
    %9589 = vmatpush1.msra.mxu0 0.0
    %9590 = vmatprep.subr.mxu0 0.0
    %9591 = vmatpush1.msra.mxu0 0.0
    %9592 = vmatprep.subr.mxu0 0.0
    %9593 = vmatpush1.msra.mxu0 0.0
    %9594 = vmatprep.subr.mxu0 0.0
    %9595 = vmatpush1.msra.mxu0 0.0
    %9596 = vmatprep.subr.mxu0 0.0
    %9597 = vmatpush1.msra.mxu0 0.0
    %9598 = vmatprep.subr.mxu0 0.0
    %9599 = vmatpush1.msra.mxu0 0.0
    %9600 = vmatprep.subr.mxu0 0.0
    %9601 = vmatpush1.msra.mxu0 0.0
    %9602 = vmatprep.subr.mxu0 0.0
    %9603 = vmatpush1.msra.mxu0 0.0
    %9604 = vmatprep.subr.mxu0 0.0
    %9605 = vmatpush1.msra.mxu0 0.0
    %9606 = vmatprep.subr.mxu0 0.0
    %9607 = vmatpush1.msra.mxu0 0.0
    %9608 = vmatprep.subr.mxu0 0.0
    %9609 = vmatpush1.msra.mxu0 0.0
    %9610 = vmatprep.subr.mxu0 0.0
    %9611 = vmatpush1.msra.mxu0 0.0
    %9612 = vmatprep.subr.mxu0 0.0
    %9613 = vmatpush1.msra.mxu0 0.0
    %9614 = vmatprep.subr.mxu0 0.0
    %9615 = vmatpush1.msra.mxu0 0.0
    %9616 = vmatprep.subr.mxu0 0.0
    %9617 = vmatpush1.msra.mxu0 0.0
    %9618 = vmatprep.subr.mxu0 0.0
    %9619 = vmatpush1.msra.mxu0 0.0
    %9620 = vmatprep.subr.mxu0 0.0
    %9621 = vmatpush1.msra.mxu0 0.0
    %9622 = vmatprep.subr.mxu0 0.0
    %9623 = vmatpush1.msra.mxu0 0.0
    %9624 = vmatprep.subr.mxu0 0.0
    %9625 = vmatpush1.msra.mxu0 0.0
    %9626 = vmatprep.subr.mxu0 0.0
    %9627 = vmatpush1.msra.mxu0 0.0
    %9628 = vmatprep.subr.mxu0 0.0
    %9629 = vmatpush1.msra.mxu0 0.0
    %9630 = vmatprep.subr.mxu0 0.0
    %9631 = vmatpush1.msra.mxu0 0.0
    %9632 = vmatprep.subr.mxu0 0.0
    %9633 = vmatpush1.msra.mxu0 0.0
    %9634 = vmatprep.mubr.f32.mxu0 0.0
    %9635 = vmatmul.mubr.f32.gmra.mrb[0].mxu0 %v9559
    %v9636 = vpop.f32.mrb[0].mxu0
    %v9637 = vadd.f32 0.0, %v9636
    %v9638 = vpop.f32.mrb[0].mxu0
    %9639 = vmatprep.mubr.f32.mxu0 0.0
    %9640 = vmatmul.mubr.f32.gmra.mrb[0].mxu0 %v9562
    %v9641 = vpop.f32.mrb[0].mxu0
    %v9642 = vadd.f32 0.0, %v9641
    %v9643 = vpop.f32.mrb[0].mxu0
    %9644 = vmatprep.mubr.f32.mxu0 0.0
    %9645 = vmatmul.mubr.f32.gmra.mrb[0].mxu0 %v9565
    %v9646 = vpop.f32.mrb[0].mxu0
    %v9647 = vadd.f32 0.0, %v9646
    %v9648 = vpop.f32.mrb[0].mxu0
    %9649 = vmatprep.mubr.f32.mxu0 0.0
    %9650 = vmatmul.mubr.f32.gmra.mrb[0].mxu0 %v9568
    %v9651 = vpop.f32.mrb[0].mxu0
    %v9652 = vadd.f32 0.0, %v9651
    %v9653 = vpop.f32.mrb[0].mxu0
    %9654 = vdwg.mxu0
    %v9655 = vadd.f32 %v9380, %v9637
    %v9656 = vadd.f32 %v9381, %v9642
    %v9657 = vadd.f32 %v9382, %v9647
    %v9658 = vadd.f32 %v9383, %v9652
    %v9659 = vadd.f32 %v7342, %v9655
    %v9660 = vadd.f32 %v7343, %v9656
    %v9661 = vadd.f32 %v7344, %v9657
    %v9662 = vadd.f32 %v7345, %v9658
    %v9663 = vsel %vm43, %v9659, 0.0
    %9664 = vadd.xlane.f32.xlu0 %v9663
    %v9665 = vpop.xlane.xlu0 %9664
    %v9666 = vsel %vm43, %v9660, 0.0
    %9667 = vadd.xlane.f32.xlu0 %v9666
    %v9668 = vpop.xlane.xlu0 %9667
    %v9669 = vsel %vm43, %v9661, 0.0
    %9670 = vadd.xlane.f32.xlu0 %v9669
    %v9671 = vpop.xlane.xlu0 %9670
    %v9672 = vsel %vm43, %v9662, 0.0
    %9673 = vadd.xlane.f32.xlu0 %v9672
    %v9674 = vpop.xlane.xlu0 %9673
    %v9675 = vmul.f32 %v9665, %v2277
    %v9676 = vmul.f32 %v9668, %v2277
    %v9677 = vmul.f32 %v9671, %v2277
    %v9678 = vmul.f32 %v9674, %v2277
    %v9679 = vmul.f32 %v9659, %v9659
    %v9680 = vmul.f32 %v9660, %v9660
    %v9681 = vmul.f32 %v9661, %v9661
    %v9682 = vmul.f32 %v9662, %v9662
    %v9683 = vsel %vm43, %v9679, 0.0
    %9684 = vadd.xlane.f32.xlu0 %v9683
    %v9685 = vpop.xlane.xlu0 %9684
    %v9686 = vsel %vm43, %v9680, 0.0
    %9687 = vadd.xlane.f32.xlu0 %v9686
    %v9688 = vpop.xlane.xlu0 %9687
    %v9689 = vsel %vm43, %v9681, 0.0
    %9690 = vadd.xlane.f32.xlu0 %v9689
    %v9691 = vpop.xlane.xlu0 %9690
    %v9692 = vsel %vm43, %v9682, 0.0
    %9693 = vadd.xlane.f32.xlu0 %v9692
    %v9694 = vpop.xlane.xlu0 %9693
    %v9695 = vmul.f32 %v9685, %v2277
    %v9696 = vmul.f32 %v9688, %v2277
    %v9697 = vmul.f32 %v9691, %v2277
    %v9698 = vmul.f32 %v9694, %v2277
    %v9699 = vmul.f32 %v9675, %v9675
    %v9700 = vmul.f32 %v9676, %v9676
    %v9701 = vmul.f32 %v9677, %v9677
    %v9702 = vmul.f32 %v9678, %v9678
    %v9703 = vsub.f32 %v9695, %v9699
    %v9704 = vsub.f32 %v9696, %v9700
    %v9705 = vsub.f32 %v9697, %v9701
    %v9706 = vsub.f32 %v9698, %v9702
    %v9707 = vsub.f32 %v9659, %v9675
    %v9708 = vsub.f32 %v9660, %v9676
    %v9709 = vsub.f32 %v9661, %v9677
    %v9710 = vsub.f32 %v9662, %v9678
    %v9711 = vadd.f32 %v9703, 1e-05
    %v9712 = vadd.f32 %v9704, 1e-05
    %v9713 = vadd.f32 %v9705, 1e-05
    %v9714 = vadd.f32 %v9706, 1e-05
    %v9715 = vrsqrt.pop %v9711
    %v9716 = vrsqrt.pop %v9712
    %v9717 = vrsqrt.pop %v9713
    %v9718 = vrsqrt.pop %v9714
    %v9719 = vmul.f32 %v9707, %v9715
    %v9720 = vmul.f32 %v9708, %v9716
    %v9721 = vmul.f32 %v9709, %v9717
    %v9722 = vmul.f32 %v9710, %v9718
    %v9723 = vlaneseq
    %v9724 = vshrl.u32 %v9723, 7
    %v9725 = vsub.s32 2, %v9724
    %v9726 = vrot.slane %v5036, %v9725
    %v9727 = vmul.f32 %v9719, %v9726
    %v9728 = vmul.f32 %v9720, %v9726
    %v9729 = vmul.f32 %v9721, %v9726
    %v9730 = vmul.f32 %v9722, %v9726
    %v9731 = vlaneseq
    %v9732 = vshrl.u32 %v9731, 7
    %v9733 = vsub.s32 3, %v9732
    %v9734 = vrot.slane %v5036, %v9733
    %v9735 = vadd.f32 %v9727, %v9734
    %v9736 = vadd.f32 %v9728, %v9734
    %v9737 = vadd.f32 %v9729, %v9734
    %v9738 = vadd.f32 %v9730, %v9734
    %s9739 = scalar_lea.vmem %s4, 40
    %v9740 = vld [vmem:[%s9739] sm:$0xff]
    %v9741 = vld [vmem:[%s9739 + $0x8] sm:$0xff]
    %v9742 = vld [vmem:[%s9739 + $0x10] sm:$0xff]
    %v9743 = vld [vmem:[%s9739 + $0x18] sm:$0xff]
    %v9744 = vld [vmem:[%s9739 + $0x20] sm:$0xff]
    %v9745 = vld [vmem:[%s3 + $0xf0] sm:$0xff]
    %v9746 = vld [vmem:[%s3 + $0xf8] sm:$0xff]
    %v9747 = vld [vmem:[%s3 + $0x100] sm:$0xff]
    %v9748 = vld [vmem:[%s3 + $0x108] sm:$0xff]
    %v9749 = vld [vmem:[%s3 + $0x110] sm:$0xff]
    %v9750 = vld [vmem:[%s3 + $0x118] sm:$0xff]
    %v9751 = vld [vmem:[%s3 + $0x120] sm:$0xff]
    %v9752 = vld [vmem:[%s3 + $0x128] sm:$0xff]
    %v9753 = vld [vmem:[%s3 + $0x130] sm:$0x1]
    %v9754 = vlaneseq
    %v9755 = vshrl.u32 %v9754, 7
    %v9756 = vsub.s32 0, %v9755
    %v9757 = vrot.slane %v9744, %v9756
    %v9759 = vsel %vm43, %v9735, 0
    %v9762 = vsel %vm43, %v9736, 0
    %v9765 = vsel %vm43, %v9737, 0
    %v9768 = vsel %vm43, %v9738, 0
    %9770 = vmatprep.subr.mxu0 0.0
    %9771 = vmatpush1.msra.mxu0 %v9740
    %9772 = vmatprep.subr.mxu0 0.0
    %9773 = vmatpush1.msra.mxu0 %v9741
    %9774 = vmatprep.subr.mxu0 0.0
    %9775 = vmatpush1.msra.mxu0 %v9742
    %9776 = vmatprep.subr.mxu0 0.0
    %9777 = vmatpush1.msra.mxu0 %v9743
    %9778 = vmatprep.subr.mxu0 0.0
    %9779 = vmatpush1.msra.mxu0 0.0
    %9780 = vmatprep.subr.mxu0 0.0
    %9781 = vmatpush1.msra.mxu0 0.0
    %9782 = vmatprep.subr.mxu0 0.0
    %9783 = vmatpush1.msra.mxu0 0.0
    %9784 = vmatprep.subr.mxu0 0.0
    %9785 = vmatpush1.msra.mxu0 0.0
    %9786 = vmatprep.subr.mxu0 0.0
    %9787 = vmatpush1.msra.mxu0 0.0
    %9788 = vmatprep.subr.mxu0 0.0
    %9789 = vmatpush1.msra.mxu0 0.0
    %9790 = vmatprep.subr.mxu0 0.0
    %9791 = vmatpush1.msra.mxu0 0.0
    %9792 = vmatprep.subr.mxu0 0.0
    %9793 = vmatpush1.msra.mxu0 0.0
    %9794 = vmatprep.subr.mxu0 0.0
    %9795 = vmatpush1.msra.mxu0 0.0
    %9796 = vmatprep.subr.mxu0 0.0
    %9797 = vmatpush1.msra.mxu0 0.0
    %9798 = vmatprep.subr.mxu0 0.0
    %9799 = vmatpush1.msra.mxu0 0.0
    %9800 = vmatprep.subr.mxu0 0.0
    %9801 = vmatpush1.msra.mxu0 0.0
    %9802 = vmatprep.subr.mxu0 0.0
    %9803 = vmatpush1.msra.mxu0 0.0
    %9804 = vmatprep.subr.mxu0 0.0
    %9805 = vmatpush1.msra.mxu0 0.0
    %9806 = vmatprep.subr.mxu0 0.0
    %9807 = vmatpush1.msra.mxu0 0.0
    %9808 = vmatprep.subr.mxu0 0.0
    %9809 = vmatpush1.msra.mxu0 0.0
    %9810 = vmatprep.subr.mxu0 0.0
    %9811 = vmatpush1.msra.mxu0 0.0
    %9812 = vmatprep.subr.mxu0 0.0
    %9813 = vmatpush1.msra.mxu0 0.0
    %9814 = vmatprep.subr.mxu0 0.0
    %9815 = vmatpush1.msra.mxu0 0.0
    %9816 = vmatprep.subr.mxu0 0.0
    %9817 = vmatpush1.msra.mxu0 0.0
    %9818 = vmatprep.subr.mxu0 0.0
    %9819 = vmatpush1.msra.mxu0 0.0
    %9820 = vmatprep.subr.mxu0 0.0
    %9821 = vmatpush1.msra.mxu0 0.0
    %9822 = vmatprep.subr.mxu0 0.0
    %9823 = vmatpush1.msra.mxu0 0.0
    %9824 = vmatprep.subr.mxu0 0.0
    %9825 = vmatpush1.msra.mxu0 0.0
    %9826 = vmatprep.subr.mxu0 0.0
    %9827 = vmatpush1.msra.mxu0 0.0
    %9828 = vmatprep.subr.mxu0 0.0
    %9829 = vmatpush1.msra.mxu0 0.0
    %9830 = vmatprep.subr.mxu0 0.0
    %9831 = vmatpush1.msra.mxu0 0.0
    %9832 = vmatprep.subr.mxu0 0.0
    %9833 = vmatpush1.msra.mxu0 0.0
    %9834 = vmatprep.mubr.f32.mxu0 0.0
    %9835 = vmatmul.mubr.f32.gmra.mrb[0].mxu0 %v9759
    %v9836 = vpop.f32.mrb[0].mxu0
    %v9837 = vadd.f32 %v9757, %v9836
    %v9838 = vpop.f32.mrb[0].mxu0
    %9839 = vmatprep.mubr.f32.mxu0 0.0
    %9840 = vmatmul.mubr.f32.gmra.mrb[0].mxu0 %v9762
    %v9841 = vpop.f32.mrb[0].mxu0
    %v9842 = vadd.f32 %v9757, %v9841
    %v9843 = vpop.f32.mrb[0].mxu0
    %9844 = vmatprep.mubr.f32.mxu0 0.0
    %9845 = vmatmul.mubr.f32.gmra.mrb[0].mxu0 %v9765
    %v9846 = vpop.f32.mrb[0].mxu0
    %v9847 = vadd.f32 %v9757, %v9846
    %v9848 = vpop.f32.mrb[0].mxu0
    %9849 = vmatprep.mubr.f32.mxu0 0.0
    %9850 = vmatmul.mubr.f32.gmra.mrb[0].mxu0 %v9768
    %v9851 = vpop.f32.mrb[0].mxu0
    %v9852 = vadd.f32 %v9757, %v9851
    %v9853 = vpop.f32.mrb[0].mxu0
    %9854 = vdwg.mxu0
    %v9855 = vmax.f32 %v9837, 0.0
    %v9856 = vmax.f32 %v9842, 0.0
    %v9857 = vmax.f32 %v9847, 0.0
    %v9858 = vmax.f32 %v9852, 0.0
    %v9859 = vlaneseq
    %v9860 = vshrl.u32 %v9859, 7
    %v9861 = vsub.s32 0, %v9860
    %v9862 = vrot.slane %v9753, %v9861
    %v9864 = vsel %vm4858, %v9855, 0
    %v9867 = vsel %vm4858, %v9856, 0
    %v9870 = vsel %vm4858, %v9857, 0
    %v9873 = vsel %vm4858, %v9858, 0
    %9875 = vmatprep.subr.mxu0 0.0
    %9876 = vmatpush1.msra.mxu0 %v9745
    %9877 = vmatprep.subr.mxu0 0.0
    %9878 = vmatpush1.msra.mxu0 %v9746
    %9879 = vmatprep.subr.mxu0 0.0
    %9880 = vmatpush1.msra.mxu0 %v9747
    %9881 = vmatprep.subr.mxu0 0.0
    %9882 = vmatpush1.msra.mxu0 %v9748
    %9883 = vmatprep.subr.mxu0 0.0
    %9884 = vmatpush1.msra.mxu0 %v9749
    %9885 = vmatprep.subr.mxu0 0.0
    %9886 = vmatpush1.msra.mxu0 %v9750
    %9887 = vmatprep.subr.mxu0 0.0
    %9888 = vmatpush1.msra.mxu0 %v9751
    %9889 = vmatprep.subr.mxu0 0.0
    %9890 = vmatpush1.msra.mxu0 %v9752
    %9891 = vmatprep.subr.mxu0 0.0
    %9892 = vmatpush1.msra.mxu0 0.0
    %9893 = vmatprep.subr.mxu0 0.0
    %9894 = vmatpush1.msra.mxu0 0.0
    %9895 = vmatprep.subr.mxu0 0.0
    %9896 = vmatpush1.msra.mxu0 0.0
    %9897 = vmatprep.subr.mxu0 0.0
    %9898 = vmatpush1.msra.mxu0 0.0
    %9899 = vmatprep.subr.mxu0 0.0
    %9900 = vmatpush1.msra.mxu0 0.0
    %9901 = vmatprep.subr.mxu0 0.0
    %9902 = vmatpush1.msra.mxu0 0.0
    %9903 = vmatprep.subr.mxu0 0.0
    %9904 = vmatpush1.msra.mxu0 0.0
    %9905 = vmatprep.subr.mxu0 0.0
    %9906 = vmatpush1.msra.mxu0 0.0
    %9907 = vmatprep.subr.mxu0 0.0
    %9908 = vmatpush1.msra.mxu0 0.0
    %9909 = vmatprep.subr.mxu0 0.0
    %9910 = vmatpush1.msra.mxu0 0.0
    %9911 = vmatprep.subr.mxu0 0.0
    %9912 = vmatpush1.msra.mxu0 0.0
    %9913 = vmatprep.subr.mxu0 0.0
    %9914 = vmatpush1.msra.mxu0 0.0
    %9915 = vmatprep.subr.mxu0 0.0
    %9916 = vmatpush1.msra.mxu0 0.0
    %9917 = vmatprep.subr.mxu0 0.0
    %9918 = vmatpush1.msra.mxu0 0.0
    %9919 = vmatprep.subr.mxu0 0.0
    %9920 = vmatpush1.msra.mxu0 0.0
    %9921 = vmatprep.subr.mxu0 0.0
    %9922 = vmatpush1.msra.mxu0 0.0
    %9923 = vmatprep.subr.mxu0 0.0
    %9924 = vmatpush1.msra.mxu0 0.0
    %9925 = vmatprep.subr.mxu0 0.0
    %9926 = vmatpush1.msra.mxu0 0.0
    %9927 = vmatprep.subr.mxu0 0.0
    %9928 = vmatpush1.msra.mxu0 0.0
    %9929 = vmatprep.subr.mxu0 0.0
    %9930 = vmatpush1.msra.mxu0 0.0
    %9931 = vmatprep.subr.mxu0 0.0
    %9932 = vmatpush1.msra.mxu0 0.0
    %9933 = vmatprep.subr.mxu0 0.0
    %9934 = vmatpush1.msra.mxu0 0.0
    %9935 = vmatprep.subr.mxu0 0.0
    %9936 = vmatpush1.msra.mxu0 0.0
    %9937 = vmatprep.subr.mxu0 0.0
    %9938 = vmatpush1.msra.mxu0 0.0
    %9939 = vmatprep.mubr.f32.mxu0 0.0
    %9940 = vmatmul.mubr.f32.gmra.mrb[0].mxu0 %v9864
    %v9941 = vpop.f32.mrb[0].mxu0
    %v9942 = vadd.f32 %v9862, %v9941
    %v9943 = vpop.f32.mrb[0].mxu0
    %9944 = vmatprep.mubr.f32.mxu0 0.0
    %9945 = vmatmul.mubr.f32.gmra.mrb[0].mxu0 %v9867
    %v9946 = vpop.f32.mrb[0].mxu0
    %v9947 = vadd.f32 %v9862, %v9946
    %v9948 = vpop.f32.mrb[0].mxu0
    %9949 = vmatprep.mubr.f32.mxu0 0.0
    %9950 = vmatmul.mubr.f32.gmra.mrb[0].mxu0 %v9870
    %v9951 = vpop.f32.mrb[0].mxu0
    %v9952 = vadd.f32 %v9862, %v9951
    %v9953 = vpop.f32.mrb[0].mxu0
    %9954 = vmatprep.mubr.f32.mxu0 0.0
    %9955 = vmatmul.mubr.f32.gmra.mrb[0].mxu0 %v9873
    %v9956 = vpop.f32.mrb[0].mxu0
    %v9957 = vadd.f32 %v9862, %v9956
    %v9958 = vpop.f32.mrb[0].mxu0
    %9959 = vdwg.mxu0
    %v9960 = vadd.f32 %v9735, %v9942
    %v9961 = vadd.f32 %v9736, %v9947
    %v9962 = vadd.f32 %v9737, %v9952
    %v9963 = vadd.f32 %v9738, %v9957
    %v9964 = vsel %vm43, %v9960, 0.0
    %9965 = vadd.xlane.f32.xlu0 %v9964
    %v9966 = vpop.xlane.xlu0 %9965
    %v9967 = vsel %vm43, %v9961, 0.0
    %9968 = vadd.xlane.f32.xlu0 %v9967
    %v9969 = vpop.xlane.xlu0 %9968
    %v9970 = vsel %vm43, %v9962, 0.0
    %9971 = vadd.xlane.f32.xlu0 %v9970
    %v9972 = vpop.xlane.xlu0 %9971
    %v9973 = vsel %vm43, %v9963, 0.0
    %9974 = vadd.xlane.f32.xlu0 %v9973
    %v9975 = vpop.xlane.xlu0 %9974
    %v9976 = vmul.f32 %v9966, %v2277
    %v9977 = vmul.f32 %v9969, %v2277
    %v9978 = vmul.f32 %v9972, %v2277
    %v9979 = vmul.f32 %v9975, %v2277
    %v9980 = vmul.f32 %v9960, %v9960
    %v9981 = vmul.f32 %v9961, %v9961
    %v9982 = vmul.f32 %v9962, %v9962
    %v9983 = vmul.f32 %v9963, %v9963
    %v9984 = vsel %vm43, %v9980, 0.0
    %9985 = vadd.xlane.f32.xlu0 %v9984
    %v9986 = vpop.xlane.xlu0 %9985
    %v9987 = vsel %vm43, %v9981, 0.0
    %9988 = vadd.xlane.f32.xlu0 %v9987
    %v9989 = vpop.xlane.xlu0 %9988
    %v9990 = vsel %vm43, %v9982, 0.0
    %9991 = vadd.xlane.f32.xlu0 %v9990
    %v9992 = vpop.xlane.xlu0 %9991
    %v9993 = vsel %vm43, %v9983, 0.0
    %9994 = vadd.xlane.f32.xlu0 %v9993
    %v9995 = vpop.xlane.xlu0 %9994
    %v9996 = vmul.f32 %v9986, %v2277
    %v9997 = vmul.f32 %v9989, %v2277
    %v9998 = vmul.f32 %v9992, %v2277
    %v9999 = vmul.f32 %v9995, %v2277
    %v10000 = vmul.f32 %v9976, %v9976
    %v10001 = vmul.f32 %v9977, %v9977
    %v10002 = vmul.f32 %v9978, %v9978
    %v10003 = vmul.f32 %v9979, %v9979
    %v10004 = vsub.f32 %v9996, %v10000
    %v10005 = vsub.f32 %v9997, %v10001
    %v10006 = vsub.f32 %v9998, %v10002
    %v10007 = vsub.f32 %v9999, %v10003
    %v10008 = vsub.f32 %v9960, %v9976
    %v10009 = vsub.f32 %v9961, %v9977
    %v10010 = vsub.f32 %v9962, %v9978
    %v10011 = vsub.f32 %v9963, %v9979
    %v10012 = vadd.f32 %v10004, 1e-05
    %v10013 = vadd.f32 %v10005, 1e-05
    %v10014 = vadd.f32 %v10006, 1e-05
    %v10015 = vadd.f32 %v10007, 1e-05
    %v10016 = vrsqrt.pop %v10012
    %v10017 = vrsqrt.pop %v10013
    %v10018 = vrsqrt.pop %v10014
    %v10019 = vrsqrt.pop %v10015
    %v10020 = vmul.f32 %v10008, %v10016
    %v10021 = vmul.f32 %v10009, %v10017
    %v10022 = vmul.f32 %v10010, %v10018
    %v10023 = vmul.f32 %v10011, %v10019
    %v10024 = vlaneseq
    %v10025 = vshrl.u32 %v10024, 7
    %v10026 = vsub.s32 4, %v10025
    %v10027 = vrot.slane %v5036, %v10026
    %v10028 = vmul.f32 %v10020, %v10027
    %v10029 = vmul.f32 %v10021, %v10027
    %v10030 = vmul.f32 %v10022, %v10027
    %v10031 = vmul.f32 %v10023, %v10027
    %v10032 = vlaneseq
    %v10033 = vshrl.u32 %v10032, 7
    %v10034 = vsub.s32 5, %v10033
    %v10035 = vrot.slane %v5036, %v10034
    %v10036 = vadd.f32 %v10028, %v10035
    %v10037 = vadd.f32 %v10029, %v10035
    %v10038 = vadd.f32 %v10030, %v10035
    %v10039 = vadd.f32 %v10031, %v10035
    %v10040 = vld [vmem:[%s3 + $0x140] sm:$0x3]
    %v10041 = vsel %vm43, %v10036, 0.0
    %10042 = vadd.xlane.f32.xlu0 %v10041
    %v10043 = vpop.xlane.xlu0 %10042
    %v10044 = vsel %vm43, %v10037, 0.0
    %10045 = vadd.xlane.f32.xlu0 %v10044
    %v10046 = vpop.xlane.xlu0 %10045
    %v10047 = vsel %vm43, %v10038, 0.0
    %10048 = vadd.xlane.f32.xlu0 %v10047
    %v10049 = vpop.xlane.xlu0 %10048
    %v10050 = vsel %vm43, %v10039, 0.0
    %10051 = vadd.xlane.f32.xlu0 %v10050
    %v10052 = vpop.xlane.xlu0 %10051
    %v10053 = vmul.f32 %v10043, %v2277
    %v10054 = vmul.f32 %v10046, %v2277
    %v10055 = vmul.f32 %v10049, %v2277
    %v10056 = vmul.f32 %v10052, %v2277
    %v10057 = vmul.f32 %v10036, %v10036
    %v10058 = vmul.f32 %v10037, %v10037
    %v10059 = vmul.f32 %v10038, %v10038
    %v10060 = vmul.f32 %v10039, %v10039
    %v10061 = vsel %vm43, %v10057, 0.0
    %10062 = vadd.xlane.f32.xlu0 %v10061
    %v10063 = vpop.xlane.xlu0 %10062
    %v10064 = vsel %vm43, %v10058, 0.0
    %10065 = vadd.xlane.f32.xlu0 %v10064
    %v10066 = vpop.xlane.xlu0 %10065
    %v10067 = vsel %vm43, %v10059, 0.0
    %10068 = vadd.xlane.f32.xlu0 %v10067
    %v10069 = vpop.xlane.xlu0 %10068
    %v10070 = vsel %vm43, %v10060, 0.0
    %10071 = vadd.xlane.f32.xlu0 %v10070
    %v10072 = vpop.xlane.xlu0 %10071
    %v10073 = vmul.f32 %v10063, %v2277
    %v10074 = vmul.f32 %v10066, %v2277
    %v10075 = vmul.f32 %v10069, %v2277
    %v10076 = vmul.f32 %v10072, %v2277
    %v10077 = vmul.f32 %v10053, %v10053
    %v10078 = vmul.f32 %v10054, %v10054
    %v10079 = vmul.f32 %v10055, %v10055
    %v10080 = vmul.f32 %v10056, %v10056
    %v10081 = vsub.f32 %v10073, %v10077
    %v10082 = vsub.f32 %v10074, %v10078
    %v10083 = vsub.f32 %v10075, %v10079
    %v10084 = vsub.f32 %v10076, %v10080
    %v10085 = vsub.f32 %v10036, %v10053
    %v10086 = vsub.f32 %v10037, %v10054
    %v10087 = vsub.f32 %v10038, %v10055
    %v10088 = vsub.f32 %v10039, %v10056
    %v10089 = vadd.f32 %v10081, 1e-05
    %v10090 = vadd.f32 %v10082, 1e-05
    %v10091 = vadd.f32 %v10083, 1e-05
    %v10092 = vadd.f32 %v10084, 1e-05
    %v10093 = vrsqrt.pop %v10089
    %v10094 = vrsqrt.pop %v10090
    %v10095 = vrsqrt.pop %v10091
    %v10096 = vrsqrt.pop %v10092
    %v10097 = vmul.f32 %v10085, %v10093
    %v10098 = vmul.f32 %v10086, %v10094
    %v10099 = vmul.f32 %v10087, %v10095
    %v10100 = vmul.f32 %v10088, %v10096
    %v10101 = vlaneseq
    %v10102 = vshrl.u32 %v10101, 7
    %v10103 = vsub.s32 0, %v10102
    %v10104 = vrot.slane %v10040, %v10103
    %v10105 = vmul.f32 %v10097, %v10104
    %v10106 = vmul.f32 %v10098, %v10104
    %v10107 = vmul.f32 %v10099, %v10104
    %v10108 = vmul.f32 %v10100, %v10104
    %v10109 = vlaneseq
    %v10110 = vshrl.u32 %v10109, 7
    %v10111 = vsub.s32 1, %v10110
    %v10112 = vrot.slane %v10040, %v10111
    %v10113 = vadd.f32 %v10105, %v10112
    %v10114 = vadd.f32 %v10106, %v10112
    %v10115 = vadd.f32 %v10107, %v10112
    %v10116 = vadd.f32 %v10108, %v10112
    %10117 = vst.msk [vmem:[#allocation2] sm:$0xff] %vm43, %v10113
    %10118 = vst.msk [vmem:[#allocation2 + $0x8] sm:$0xff] %vm43, %v10114
    %10119 = vst.msk [vmem:[#allocation2 + $0x10] sm:$0xff] %vm43, %v10115
    %10120 = vst.msk [vmem:[#allocation2 + $0x18] sm:$0xff] %vm43, %v10116
    // Predicated region
    $region22: #{tpu_custom_call.1} parent=1 // pred_check
      _
    $region23: #{tpu_custom_call.1} parent=1 // pred_check_branch
      %10122 = sbr.rel (0) target = $region25
    $region24: #{tpu_custom_call.1} parent=1 // pred_region
      %s10124 = ssub.s32 512, 512
      %10125 = vsyncadd [#allocation3], %s10124
      %s10126 = sshll.u32 [#allocation2], 4
      %s10127 = int_to_ptr.vmem [resolvable:$true] %s10126
      %10132 = dma.vmem_to_hbm [thread:$0]  %s10127, 512, %s5, [#allocation3], 128, 128, 8
    $region25: #{tpu_custom_call.1} parent=1 // pred_fallthru
      _
    // Predicated region
    $region26: #{tpu_custom_call.1} parent=1 // pred_check
      _
    $region27: #{tpu_custom_call.1} parent=1 // pred_check_branch
      %10134 = sbr.rel (0) target = $region29
    $region28: #{tpu_custom_call.1} parent=1 // pred_region
      %10135 = dma.done [#allocation3], 512
    $region29: #{tpu_custom_call.1} parent=1 // pred_fallthru
      _
    %10136 = vsyncpa [#allocation3], 1

</llo_original>
